<compile_context>
chip_gen: v7x
topology: tpu7x:2x2x1
jax: 0.10.0
libtpu: 0.0.40
codegen_flags: <defaults>
</compile_context>

<pallas_src>
import jax
import jax.numpy as jnp
from jax.experimental import pallas as pl
from jax.experimental.pallas import tpu as pltpu

IN_F = 3072
HID = 2048
OUT_F = 10
BN_EPS = 1e-5
N_SPLITS = 2  # leading "parallel" grid axis (2 TCs on v7x; harmless on v5e/v6e)


def classifier_kernel(x_ref, w1_ref, scale_ref, offset_ref, w2_ref, out_ref):
    j = pl.program_id(1)  # hidden-tile (reduction) index within this split

    # fc1 partial on the MXU: bf16 x bf16 -> f32.  (B, IN_F) @ (IN_F, tile_h)
    h = jnp.dot(x_ref[...], w1_ref[...], preferred_element_type=jnp.float32)

    # Linear bias + BatchNorm1d (eval) pre-fused into one scale/offset FMA,
    # then ReLU.  scale/offset arrive as BlockSpec-tiled (1, 1, tile_h) blocks.
    h = h * scale_ref[0] + offset_ref[0]          # (B, tile_h) * (1, tile_h)
    h = jnp.maximum(h, 0.0)

    # fc2 partial from this hidden tile: bf16 x bf16 -> f32 single-pass MXU.
    # (B, tile_h) @ (tile_h, OUT_F)
    contrib = jnp.dot(h.astype(jnp.bfloat16), w2_ref[...],
                      preferred_element_type=jnp.float32)

    @pl.when(j == 0)
    def _():
        out_ref[...] = contrib[None]

    @pl.when(j > 0)
    def _():
        out_ref[...] += contrib[None]


def classifier_forward(x, params, *, tile_h=1024, n_splits=N_SPLITS):
    B = x.shape[0]
    assert x.shape[1] == IN_F
    assert HID % (n_splits * tile_h) == 0
    steps = HID // (n_splits * tile_h)      # reduction steps per split (1 at default)
    n_tiles = HID // tile_h                 # total hidden tiles

    w1, b1, gamma, beta, run_mean, run_var, w2, b2 = params

    # Pre-fuse fc1 bias + BatchNorm(eval) into a single per-channel scale/offset:
    #   bn(x@W1 + b1) = (x@W1) * scale + offset
    scale = gamma * jax.lax.rsqrt(run_var + BN_EPS)          # (1, HID)
    offset = beta + (b1 - run_mean) * scale                  # (1, HID)
    # One (1, tile_h) row per hidden tile; leading axis indexed by the BlockSpec.
    scale_t = scale.reshape(n_tiles, 1, tile_h)
    offset_t = offset.reshape(n_tiles, 1, tile_h)

    x_bf16 = x.astype(jnp.bfloat16)
    w1_bf16 = w1.astype(jnp.bfloat16)   # no-op if already stored as bf16
    w2_bf16 = w2.astype(jnp.bfloat16)   # fc2 weights streamed as bf16 tiles

    grid_spec = pltpu.PrefetchScalarGridSpec(
        num_scalar_prefetch=0,
        grid=(n_splits, steps),
        in_specs=[
            # x: fully resident in VMEM (tiny), same block every step.
            pl.BlockSpec((B, IN_F), lambda c, j: (0, 0)),
            # W1: the dominant HBM stream, one bf16 column-tile per step.
            pl.BlockSpec((IN_F, tile_h), lambda c, j: (0, c * steps + j)),
            # Fused BN scale / offset: tiny tiled DMAs, no in-kernel dyn slice.
            pl.BlockSpec((1, 1, tile_h), lambda c, j: (c * steps + j, 0, 0)),
            pl.BlockSpec((1, 1, tile_h), lambda c, j: (c * steps + j, 0, 0)),
            # W2: bf16 row-tile matching the current hidden tile.
            pl.BlockSpec((tile_h, OUT_F), lambda c, j: (c * steps + j, 0)),
        ],
        out_specs=pl.BlockSpec((1, B, OUT_F), lambda c, j: (c, 0, 0)),  # per-split partial
    )

    partials = pl.pallas_call(
        classifier_kernel,
        out_shape=jax.ShapeDtypeStruct((n_splits, B, OUT_F), jnp.float32),
        grid_spec=grid_spec,
        compiler_params=pltpu.CompilerParams(
            dimension_semantics=("parallel", "arbitrary"),
            vmem_limit_bytes=32 * 1024 * 1024),
    )(x_bf16, w1_bf16, scale_t, offset_t, w2_bf16)

    # Combine the hidden-split partials and add the fc2 bias (tiny (B,10) op).
    return jnp.sum(partials, axis=0) + b2


def init_params(key):
    """Deterministic parameter init (mirrors the nn.Module's shapes).
    W1 is stored in bf16 (dominant HBM stream); everything else in f32."""
    k1, k2, k3, k4, k5, k6, k7 = jax.random.split(key, 7)
    lim1 = 1.0 / jnp.sqrt(IN_F)
    w1 = jax.random.uniform(k1, (IN_F, HID), jnp.float32, -lim1, lim1)
    w1 = w1.astype(jnp.bfloat16)
    b1 = jax.random.uniform(k2, (1, HID), jnp.float32, -lim1, lim1)
    # BatchNorm1d(2048): weight, bias, running_mean, running_var (eval mode).
    gamma = 1.0 + 0.1 * jax.random.normal(k3, (1, HID), jnp.float32)
    beta = 0.1 * jax.random.normal(k4, (1, HID), jnp.float32)
    run_mean = 0.05 * jax.random.normal(k5, (1, HID), jnp.float32)
    run_var = jax.nn.softplus(jax.random.normal(k6, (1, HID), jnp.float32)) + 0.5
    lim2 = 1.0 / jnp.sqrt(HID)
    w2 = jax.random.uniform(k7, (HID, OUT_F), jnp.float32, -lim2, lim2)
    b2 = jnp.linspace(-0.1, 0.1, OUT_F, dtype=jnp.float32).reshape(1, OUT_F)
    return (w1, b1, gamma, beta, run_mean, run_var, w2, b2)


def reference_forward(x, params):
    """Pure-JAX reference with the same mixed-precision policy as the kernel:
    bf16 fc1 inputs, f32 BN/ReLU, bf16 fc2 inputs, f32 accumulation."""
    w1, b1, gamma, beta, run_mean, run_var, w2, b2 = params
    h = jnp.dot(x.astype(jnp.bfloat16), w1.astype(jnp.bfloat16),
                preferred_element_type=jnp.float32) + b1
    h = (h - run_mean) * jax.lax.rsqrt(run_var + BN_EPS) * gamma + beta
    h = jnp.maximum(h, 0.0)
    return jnp.dot(h.astype(jnp.bfloat16), w2.astype(jnp.bfloat16),
                   preferred_element_type=jnp.float32) + b2


if __name__ == "__main__":
    key = jax.random.PRNGKey(0)
    kx, kp = jax.random.split(key)
    B = 8  # small batch (sublane multiple); kernel stays W1-DMA-bound for much larger B
    x = jax.random.normal(kx, (B, IN_F), jnp.float32)
    params = init_params(kp)

    out = classifier_forward(x, params)
    out = jax.block_until_ready(out)

    ref = reference_forward(x, params)
    assert out.shape == (B, OUT_F)
    assert jnp.allclose(out, ref, atol=2e-3, rtol=2e-3), "mismatch vs reference"
    print("KERNEL_OK")
</pallas_src>

<mosaic_0001>
module attributes {stable_mosaic.version = 11 : i64} {
  func.func @classifier_kernel(%arg0: i32, %arg1: i32, %arg2: memref<8x3072xbf16, #tpu.memory_space<vmem>>, %arg3: memref<3072x1024xbf16, #tpu.memory_space<vmem>>, %arg4: memref<1x1x1024xf32, #tpu.memory_space<vmem>>, %arg5: memref<1x1x1024xf32, #tpu.memory_space<vmem>>, %arg6: memref<1024x10xbf16, #tpu.memory_space<vmem>>, %arg7: memref<1x8x10xf32, #tpu.memory_space<vmem>>) attributes {dimension_semantics = [#tpu.dimension_semantics<parallel>, #tpu.dimension_semantics<arbitrary>], iteration_bounds = array<i64: 2, 1>, scalar_prefetch = 0 : i64, scratch_operands = 0 : i64, tpu.core_type = #tpu.core_type<tc>, window_params = [{pipeline_mode = #tpu.pipeline_mode<synchronous>, transform_indices = @transform_0, window_bounds = array<i64: 8, 3072>}, {transform_indices = @transform_1, window_bounds = array<i64: 3072, 1024>}, {transform_indices = @transform_2, window_bounds = array<i64: 1, 1, 1024>}, {transform_indices = @transform_3, window_bounds = array<i64: 1, 1, 1024>}, {transform_indices = @transform_4, window_bounds = array<i64: 1024, 10>}, {transform_indices = @transform_5, window_bounds = array<i64: 1, 8, 10>}]} {
    %c0 = arith.constant 0 : index
    %c0_0 = arith.constant 0 : index
    %0 = vector.load %arg2[%c0, %c0_0] : memref<8x3072xbf16, #tpu.memory_space<vmem>>, vector<8x3072xbf16>
    %c0_1 = arith.constant 0 : index
    %c0_2 = arith.constant 0 : index
    %1 = vector.load %arg3[%c0_1, %c0_2] : memref<3072x1024xbf16, #tpu.memory_space<vmem>>, vector<3072x1024xbf16>
    %cst = arith.constant dense<0.000000e+00> : vector<8x1024xf32>
    %2 = tpu.matmul %0, %1, %cst {dimension_numbers = #tpu.dot_dimension_numbers<[1], [0], [0], [1], [0, 0, 1, 1], [], []>} : vector<8x3072xbf16>, vector<3072x1024xbf16>, vector<8x1024xf32> -> vector<8x1024xf32>
    %c0_3 = arith.constant 0 : index
    %c0_4 = arith.constant 0 : index
    %c0_5 = arith.constant 0 : index
    %3 = vector.load %arg4[%c0_3, %c0_4, %c0_5] : memref<1x1x1024xf32, #tpu.memory_space<vmem>>, vector<1x1x1024xf32>
    %4 = vector.shape_cast %3 : vector<1x1x1024xf32> to vector<1x1024xf32>
    %5 = vector.broadcast %4 : vector<1x1024xf32> to vector<8x1024xf32>
    %6 = arith.mulf %2, %5 : vector<8x1024xf32>
    %c0_6 = arith.constant 0 : index
    %c0_7 = arith.constant 0 : index
    %c0_8 = arith.constant 0 : index
    %7 = vector.load %arg5[%c0_6, %c0_7, %c0_8] : memref<1x1x1024xf32, #tpu.memory_space<vmem>>, vector<1x1x1024xf32>
    %8 = vector.shape_cast %7 : vector<1x1x1024xf32> to vector<1x1024xf32>
    %9 = vector.broadcast %8 : vector<1x1024xf32> to vector<8x1024xf32>
    %10 = arith.addf %6, %9 : vector<8x1024xf32>
    %cst_9 = arith.constant 0.000000e+00 : f32
    %11 = vector.broadcast %cst_9 : f32 to vector<8x1024xf32>
    %12 = arith.maximumf %10, %11 : vector<8x1024xf32>
    %13 = arith.truncf %12 : vector<8x1024xf32> to vector<8x1024xbf16>
    %c0_10 = arith.constant 0 : index
    %c0_11 = arith.constant 0 : index
    %14 = vector.load %arg6[%c0_10, %c0_11] : memref<1024x10xbf16, #tpu.memory_space<vmem>>, vector<1024x10xbf16>
    %cst_12 = arith.constant dense<0.000000e+00> : vector<8x10xf32>
    %15 = tpu.matmul %13, %14, %cst_12 {dimension_numbers = #tpu.dot_dimension_numbers<[1], [0], [0], [1], [0, 0, 1, 1], [], []>} : vector<8x1024xbf16>, vector<1024x10xbf16>, vector<8x10xf32> -> vector<8x10xf32>
    %c0_i32 = arith.constant 0 : i32
    %16 = arith.cmpi eq, %arg1, %c0_i32 : i32
    %17 = arith.extui %16 : i1 to i32
    %c0_i32_13 = arith.constant 0 : i32
    %18 = arith.cmpi ne, %17, %c0_i32_13 : i32
    scf.if %18 {
      %22 = vector.shape_cast %15 : vector<8x10xf32> to vector<1x8x10xf32>
      %c0_16 = arith.constant 0 : index
      %c0_17 = arith.constant 0 : index
      %c0_18 = arith.constant 0 : index
      %23 = vector.load %arg7[%c0_16, %c0_17, %c0_18] : memref<1x8x10xf32, #tpu.memory_space<vmem>>, vector<1x8x10xf32>
      tpu.vector_store %arg7[%c0_16, %c0_17, %c0_18], %22 {strides = array<i32>} : memref<1x8x10xf32, #tpu.memory_space<vmem>>, vector<1x8x10xf32>,
    } else {
    }
    %c0_i32_14 = arith.constant 0 : i32
    %19 = arith.cmpi sgt, %arg1, %c0_i32_14 : i32
    %20 = arith.extui %19 : i1 to i32
    %c0_i32_15 = arith.constant 0 : i32
    %21 = arith.cmpi ne, %20, %c0_i32_15 : i32
    scf.if %21 {
      %c0_16 = arith.constant 0 : index
      %c0_17 = arith.constant 0 : index
      %c0_18 = arith.constant 0 : index
      %22 = vector.load %arg7[%c0_16, %c0_17, %c0_18] : memref<1x8x10xf32, #tpu.memory_space<vmem>>, vector<1x8x10xf32>
      %23 = vector.shape_cast %15 : vector<8x10xf32> to vector<1x8x10xf32>
      %24 = arith.addf %22, %23 : vector<1x8x10xf32>
      %c0_19 = arith.constant 0 : index
      %c0_20 = arith.constant 0 : index
      %c0_21 = arith.constant 0 : index
      %25 = vector.load %arg7[%c0_19, %c0_20, %c0_21] : memref<1x8x10xf32, #tpu.memory_space<vmem>>, vector<1x8x10xf32>
      tpu.vector_store %arg7[%c0_19, %c0_20, %c0_21], %24 {strides = array<i32>} : memref<1x8x10xf32, #tpu.memory_space<vmem>>, vector<1x8x10xf32>,
    } else {
    }
    return
  }
  func.func @transform_0(%arg0: i32, %arg1: i32) -> (i32, i32) {
    %c0_i32 = arith.constant 0 : i32
    %c0_i32_0 = arith.constant 0 : i32
    %c0_i32_1 = arith.constant 0 : i32
    return %c0_i32, %c0_i32_0 : i32, i32
  }
  func.func @transform_1(%arg0: i32, %arg1: i32) -> (i32, i32) {
    %c1_i32 = arith.constant 1 : i32
    %0 = arith.muli %arg0, %c1_i32 : i32
    %1 = arith.addi %0, %arg1 : i32
    %c0_i32 = arith.constant 0 : i32
    %c0_i32_0 = arith.constant 0 : i32
    return %c0_i32, %1 : i32, i32
  }
  func.func @transform_2(%arg0: i32, %arg1: i32) -> (i32, i32, i32) {
    %c1_i32 = arith.constant 1 : i32
    %0 = arith.muli %arg0, %c1_i32 : i32
    %1 = arith.addi %0, %arg1 : i32
    %c0_i32 = arith.constant 0 : i32
    %c0_i32_0 = arith.constant 0 : i32
    %c0_i32_1 = arith.constant 0 : i32
    return %1, %c0_i32, %c0_i32_0 : i32, i32, i32
  }
  func.func @transform_3(%arg0: i32, %arg1: i32) -> (i32, i32, i32) {
    %c1_i32 = arith.constant 1 : i32
    %0 = arith.muli %arg0, %c1_i32 : i32
    %1 = arith.addi %0, %arg1 : i32
    %c0_i32 = arith.constant 0 : i32
    %c0_i32_0 = arith.constant 0 : i32
    %c0_i32_1 = arith.constant 0 : i32
    return %1, %c0_i32, %c0_i32_0 : i32, i32, i32
  }
  func.func @transform_4(%arg0: i32, %arg1: i32) -> (i32, i32) {
    %c1_i32 = arith.constant 1 : i32
    %0 = arith.muli %arg0, %c1_i32 : i32
    %1 = arith.addi %0, %arg1 : i32
    %c0_i32 = arith.constant 0 : i32
    %c0_i32_0 = arith.constant 0 : i32
    return %1, %c0_i32 : i32, i32
  }
  func.func @transform_5(%arg0: i32, %arg1: i32) -> (i32, i32, i32) {
    %c0_i32 = arith.constant 0 : i32
    %c0_i32_0 = arith.constant 0 : i32
    %c0_i32_1 = arith.constant 0 : i32
    return %arg0, %c0_i32, %c0_i32_0 : i32, i32, i32
  }
}

</mosaic_0001>

<llo_original>
// kernel: tpu_custom_call.1
$region0: #{tpu_custom_call.1}
  #allocation0 [shape = 'u32[]', space=smem, size = 0x4, offset = 0x4, fixed_abs, tag = 'smem constant byte address 0x4 - core index']
  #allocation1 [shape = 'u32[144,128]{1,0:T(1,128)}', space=vmem, size = 0x12000, scoped, tag = 'internal scratch']
  %s0 = inlined_call_operand.hbm [shape: bf16[8,3072], index: 0, kind: input, shape index: {}]
  %s1 = inlined_call_operand.hbm [shape: bf16[3072,2048], index: 1, kind: input, shape index: {}]
  %s2 = inlined_call_operand.hbm [shape: f32[2,1,1024], index: 2, kind: input, shape index: {}]
  %s3 = inlined_call_operand.hbm [shape: f32[2,1,1024], index: 3, kind: input, shape index: {}]
  %s4 = inlined_call_operand.vmem [shape: bf16[2048,10], index: 4, kind: input, shape index: {}]
  %s5 = inlined_call_operand.hbm [shape: f32[2,8,10], index: 5, kind: output, shape index: {}]
  %s6 = sld [smem:[#allocation0]]
  $region77: #{tpu_custom_call.1} parent=0
    _
  %s8 = ssub.s32 1, %s6
  %s9 = scalar_select 0, %s8, %s6
  $region1: #{tpu_custom_call.1} parent=0
    #allocation2 [shape = 'u8[49152]{0}', space=vmem, size = 0xc000, scoped, tag = 'input window, operand 0, single buffered']
    #allocation3 [shape = 's32[2]{0}', space=sflag, size = 0x8, scoped, tag = 'scoped memory for tpu_custom_call.1']
    #allocation4 [shape = 's32[2]{0}', space=sflag, size = 0x8, scoped, tag = 'scoped memory for tpu_custom_call.1']
    #allocation5 [shape = 'u8[12582912]{0}', space=vmem, size = 0xc00000, scoped, tag = 'input window, operand 1']
    #allocation6 [shape = 's32[2]{0}', space=sflag, size = 0x8, scoped, tag = 'scoped memory for tpu_custom_call.1']
    #allocation7 [shape = 'u8[8192]{0}', space=vmem, size = 0x2000, scoped, tag = 'input window, operand 2']
    #allocation8 [shape = 'u8[8192]{0}', space=vmem, size = 0x2000, scoped, tag = 'input window, operand 3']
    #allocation9 [shape = 's32[2]{0}', space=sflag, size = 0x8, scoped, tag = 'scoped memory for tpu_custom_call.1']
    #allocation10 [shape = 'u8[8192]{0}', space=vmem, size = 0x2000, scoped, tag = 'output window, operand 0']
    %10 = vsyncpa [#allocation3], 0
    %11 = vsyncpa [#allocation6], 0
    %s12 = scalar_lea.sflag [#allocation6], 1
    %13 = vsyncpa %s12, 0
    %14 = vsyncpa [#allocation9], 0
    %s15 = scalar_lea.sflag [#allocation9], 1
    %16 = vsyncpa %s15, 0
    %17 = vsyncpa [#allocation4], 0
    %s18 = scalar_lea.sflag [#allocation4], 1
    %19 = vsyncpa %s18, 0
    loop: start=0, step=1, limit=4
    $region2: #{tpu_custom_call.1} parent=1 // loop_pre_header
      _
    $region3: #{tpu_custom_call.1} parent=1 // loop_header
      %s21 = sphi 0, %s25
      %p22 = scmp.ge.s32.totalorder %s21, 4
      %s28 = sphi 0, %s40
      %s29 = sphi 0, %s36
      %s30 = sphi 0, %s28
      %s31 = sphi 0, %s29
      %s32 = sphi 0, %s30
      %s33 = sphi 0, %s31
      %s41 = sphi 0, %s41
      %s43 = sphi 0, %s41
      %s44 = sphi 0, %s43
      %s58 = sphi 0, %s44
      %s66 = sphi 0, %s68
      %s69 = sphi 0, %s66
      %s70 = sphi 0, %s69
      %s86 = sphi 0, %s70
      %s94 = sphi 0, %s96
      %s97 = sphi 0, %s94
      %s98 = sphi 0, %s97
      %s114 = sphi 0, %s98
      %s122 = sphi 0, %s124
      %s125 = sphi 0, %s122
      %s126 = sphi 0, %s125
      %s142 = sphi 0, %s126
      %s150 = sphi 0, %s152
      %s153 = sphi 0, %s150
      %s154 = sphi 0, %s153
      %s170 = sphi 0, %s154
      %s176 = sphi 0, %s178
      %s179 = sphi 0, %s176
      %s180 = sphi 0, %s179
      %s196 = sphi 0, %s180
    $region4: #{tpu_custom_call.1} parent=1 // loop_header_branch
      %24 = sbr.rel (%p22) target = $region8
    $region5: #{tpu_custom_call.1} parent=1 // loop_body
      %s26 = ssub.s32 %s21, 1
      %s27 = ssub.s32 %s21, 2
      %s34 = sadd.s32 1, %s29
      %p35 = scmp.ge.s32.totalorder %s34, 1
      %s36 = scalar_select %p35, 0, %s34
      %s37 = sadd.s32 1, %s28
      %s38 = scalar_select %p35, %s37, %s28
      %p39 = scmp.ge.s32.totalorder %s38, 2
      %s40 = scalar_select %p39, 0, %s38
      %s42 = sadd.s32 %s41, 1
      %p45 = scmp.eq.s32.totalorder %s21, 1
      %p46 = scmp.ne.s32.totalorder %s41, %s43
      %p47 = scmp.eq.s32.totalorder %s21, 0
      %p48 = por %p46, %p47
      %p49 = scmp.ne.s32.totalorder %s41, %s43
      %p50 = scmp.eq.s32.totalorder %s26, 1
      %p51 = por %p49, %p50
      %p52 = scmp.ne.s32.totalorder %s43, %s44
      %p53 = scmp.eq.s32.totalorder %s26, 0
      %p54 = por %p52, %p53
      %p55 = scmp.ne.s32.totalorder %s43, %s44
      %p56 = scmp.eq.s32.totalorder %s27, 1
      %p57 = por %p55, %p56
      %p59 = scmp.ne.s32.totalorder %s44, %s58
      %p60 = scmp.eq.s32.totalorder %s27, 0
      %p61 = por %p59, %p60
      %s62 = sadd.s32 %s28, %s29
      %s63 = sadd.s32 %s40, %s36
      %s64 = ssub.s32 %s62, %s63
      %p65 = scmp.eq.s32.totalorder %s64, 0
      %s67 = sadd.s32 %s66, 1
      %s68 = scalar_select %p65, %s66, %s67
      %p71 = pneg %p65
      %p72 = scmp.eq.s32.totalorder %s21, 1
      %p73 = por %p71, %p72
      %p74 = scmp.ne.s32.totalorder %s66, %s69
      %p75 = scmp.eq.s32.totalorder %s21, 0
      %p76 = por %p74, %p75
      %p77 = scmp.ne.s32.totalorder %s66, %s69
      %p78 = scmp.eq.s32.totalorder %s26, 1
      %p79 = por %p77, %p78
      %p80 = scmp.ne.s32.totalorder %s69, %s70
      %p81 = scmp.eq.s32.totalorder %s26, 0
      %p82 = por %p80, %p81
      %p83 = scmp.ne.s32.totalorder %s69, %s70
      %p84 = scmp.eq.s32.totalorder %s27, 1
      %p85 = por %p83, %p84
      %p87 = scmp.ne.s32.totalorder %s70, %s86
      %p88 = scmp.eq.s32.totalorder %s27, 0
      %p89 = por %p87, %p88
      %s90 = sadd.s32 %s28, %s29
      %s91 = sadd.s32 %s40, %s36
      %s92 = ssub.s32 %s90, %s91
      %p93 = scmp.eq.s32.totalorder %s92, 0
      %s95 = sadd.s32 %s94, 1
      %s96 = scalar_select %p93, %s94, %s95
      %p99 = pneg %p93
      %p100 = scmp.eq.s32.totalorder %s21, 1
      %p101 = por %p99, %p100
      %p102 = scmp.ne.s32.totalorder %s94, %s97
      %p103 = scmp.eq.s32.totalorder %s21, 0
      %p104 = por %p102, %p103
      %p105 = scmp.ne.s32.totalorder %s94, %s97
      %p106 = scmp.eq.s32.totalorder %s26, 1
      %p107 = por %p105, %p106
      %p108 = scmp.ne.s32.totalorder %s97, %s98
      %p109 = scmp.eq.s32.totalorder %s26, 0
      %p110 = por %p108, %p109
      %p111 = scmp.ne.s32.totalorder %s97, %s98
      %p112 = scmp.eq.s32.totalorder %s27, 1
      %p113 = por %p111, %p112
      %p115 = scmp.ne.s32.totalorder %s98, %s114
      %p116 = scmp.eq.s32.totalorder %s27, 0
      %p117 = por %p115, %p116
      %s118 = sadd.s32 %s28, %s29
      %s119 = sadd.s32 %s40, %s36
      %s120 = ssub.s32 %s118, %s119
      %p121 = scmp.eq.s32.totalorder %s120, 0
      %s123 = sadd.s32 %s122, 1
      %s124 = scalar_select %p121, %s122, %s123
      %p127 = pneg %p121
      %p128 = scmp.eq.s32.totalorder %s21, 1
      %p129 = por %p127, %p128
      %p130 = scmp.ne.s32.totalorder %s122, %s125
      %p131 = scmp.eq.s32.totalorder %s21, 0
      %p132 = por %p130, %p131
      %p133 = scmp.ne.s32.totalorder %s122, %s125
      %p134 = scmp.eq.s32.totalorder %s26, 1
      %p135 = por %p133, %p134
      %p136 = scmp.ne.s32.totalorder %s125, %s126
      %p137 = scmp.eq.s32.totalorder %s26, 0
      %p138 = por %p136, %p137
      %p139 = scmp.ne.s32.totalorder %s125, %s126
      %p140 = scmp.eq.s32.totalorder %s27, 1
      %p141 = por %p139, %p140
      %p143 = scmp.ne.s32.totalorder %s126, %s142
      %p144 = scmp.eq.s32.totalorder %s27, 0
      %p145 = por %p143, %p144
      %s146 = sadd.s32 %s28, %s29
      %s147 = sadd.s32 %s40, %s36
      %s148 = ssub.s32 %s146, %s147
      %p149 = scmp.eq.s32.totalorder %s148, 0
      %s151 = sadd.s32 %s150, 1
      %s152 = scalar_select %p149, %s150, %s151
      %p155 = pneg %p149
      %p156 = scmp.eq.s32.totalorder %s21, 1
      %p157 = por %p155, %p156
      %p158 = scmp.ne.s32.totalorder %s150, %s153
      %p159 = scmp.eq.s32.totalorder %s21, 0
      %p160 = por %p158, %p159
      %p161 = scmp.ne.s32.totalorder %s150, %s153
      %p162 = scmp.eq.s32.totalorder %s26, 1
      %p163 = por %p161, %p162
      %p164 = scmp.ne.s32.totalorder %s153, %s154
      %p165 = scmp.eq.s32.totalorder %s26, 0
      %p166 = por %p164, %p165
      %p167 = scmp.ne.s32.totalorder %s153, %s154
      %p168 = scmp.eq.s32.totalorder %s27, 1
      %p169 = por %p167, %p168
      %p171 = scmp.ne.s32.totalorder %s154, %s170
      %p172 = scmp.eq.s32.totalorder %s27, 0
      %p173 = por %p171, %p172
      %s174 = ssub.s32 %s28, %s40
      %p175 = scmp.eq.s32.totalorder %s174, 0
      %s177 = sadd.s32 %s176, 1
      %s178 = scalar_select %p175, %s176, %s177
      %p181 = pneg %p175
      %p182 = scmp.eq.s32.totalorder %s21, 1
      %p183 = por %p181, %p182
      %p184 = scmp.ne.s32.totalorder %s176, %s179
      %p185 = scmp.eq.s32.totalorder %s21, 0
      %p186 = por %p184, %p185
      %p187 = scmp.ne.s32.totalorder %s176, %s179
      %p188 = scmp.eq.s32.totalorder %s26, 1
      %p189 = por %p187, %p188
      %p190 = scmp.ne.s32.totalorder %s179, %s180
      %p191 = scmp.eq.s32.totalorder %s26, 0
      %p192 = por %p190, %p191
      %p193 = scmp.ne.s32.totalorder %s179, %s180
      %p194 = scmp.eq.s32.totalorder %s27, 1
      %p195 = por %p193, %p194
      %p197 = scmp.ne.s32.totalorder %s180, %s196
      %p198 = scmp.eq.s32.totalorder %s27, 0
      %p199 = por %p197, %p198
      %p200 = scmp.le.s32.totalorder 1, %s21
      %p201 = scmp.lt.s32.totalorder %s21, 3
      %p202 = pnand %p200, %p201
      %p203 = pneg %p202
      // Predicated region
      $region9: #{tpu_custom_call.1} parent=5 // pred_check
        _
      $region10: #{tpu_custom_call.1} parent=5 // pred_check_branch
        %205 = sbr.rel (%p202) target = $region12
      $region11: #{tpu_custom_call.1} parent=5 // pred_region
        %s206 = ssub.s32 %s21, 1
        // Predicated region
        $region13: #{tpu_custom_call.1} parent=11 // pred_check
          %p207 = pneg %p54
        $region14: #{tpu_custom_call.1} parent=11 // pred_check_branch
          %209 = sbr.rel (%p207) target = $region16
        $region15: #{tpu_custom_call.1} parent=11 // pred_region
          %s211 = ssub.s32 1536, 1536
          %212 = vsyncadd [#allocation3], %s211
          %s214 = sshll.u32 [#allocation2], 4
          %s215 = int_to_ptr.vmem [resolvable:$true] %s214
          %217 = dma.hbm_to_vmem [thread:$0]  %s0, 1536, %s215, [#allocation3]
        $region16: #{tpu_custom_call.1} parent=11 // pred_fallthru
          _
      $region12: #{tpu_custom_call.1} parent=5 // pred_fallthru
        _
      %p218 = scmp.lt.s32.totalorder %s21, 2
      // Predicated region
      $region17: #{tpu_custom_call.1} parent=5 // pred_check
        %p219 = pneg %p218
      $region18: #{tpu_custom_call.1} parent=5 // pred_check_branch
        %221 = sbr.rel (%p219) target = $region20
      $region19: #{tpu_custom_call.1} parent=5 // pred_region
        // Predicated region
        $region21: #{tpu_custom_call.1} parent=19 // pred_check
          %p222 = pneg %p76
        $region22: #{tpu_custom_call.1} parent=19 // pred_check_branch
          %224 = sbr.rel (%p222) target = $region24
        $region23: #{tpu_custom_call.1} parent=19 // pred_region
          %s225 = sand.u32 %s21, 1
          %s226 = scalar_lea.sflag [#allocation6], %s225
          %s227 = sand.u32 %s66, 1
          %s228 = smul.addr %s227, 12288
          %s229 = scalar_lea.vmem [#allocation5], %s228
          %s230 = sadd.s32 %s28, %s29
          %s231 = smul.u32 8, %s230
          %s233 = ssub.s32 196608, 196608
          %234 = vsyncadd %s226, %s233
          %s235 = smul.addr %s231, 64
          %s236 = scalar_lea.hbm %s1, %s235
          %s237 = sshll.u32 %s229, 4
          %s238 = int_to_ptr.vmem [resolvable:$true] %s237
          %243 = dma.hbm_to_vmem [thread:$0]  %s236, 196608, %s238, %s226, 1024, 512, 32
        $region24: #{tpu_custom_call.1} parent=19 // pred_fallthru
          _
        // Predicated region
        $region25: #{tpu_custom_call.1} parent=19 // pred_check
          %p244 = pneg %p104
        $region26: #{tpu_custom_call.1} parent=19 // pred_check_branch
          %246 = sbr.rel (%p244) target = $region28
        $region27: #{tpu_custom_call.1} parent=19 // pred_region
          %s247 = sand.u32 %s21, 1
          %s248 = scalar_lea.sflag [#allocation6], %s247
          %s249 = sand.u32 %s94, 1
          %s250 = smul.addr %s249, 8
          %s251 = scalar_lea.vmem [#allocation7], %s250
          %s252 = sadd.s32 %s28, %s29
          %s254 = ssub.s32 128, 128
          %255 = vsyncadd %s248, %s254
          %s256 = smul.addr %s252, 8
          %s257 = smul.addr %s256, 16
          %s258 = scalar_lea.hbm %s2, %s257
          %s260 = sshll.u32 %s251, 4
          %s261 = int_to_ptr.vmem [resolvable:$true] %s260
          %263 = dma.hbm_to_vmem [thread:$0]  %s258, 128, %s261, %s248
        $region28: #{tpu_custom_call.1} parent=19 // pred_fallthru
          _
        // Predicated region
        $region29: #{tpu_custom_call.1} parent=19 // pred_check
          %p264 = pneg %p132
        $region30: #{tpu_custom_call.1} parent=19 // pred_check_branch
          %266 = sbr.rel (%p264) target = $region32
        $region31: #{tpu_custom_call.1} parent=19 // pred_region
          %s267 = sand.u32 %s122, 1
          %s268 = scalar_lea.sflag [#allocation9], %s267
          %s269 = sand.u32 %s122, 1
          %s270 = smul.addr %s269, 8
          %s271 = scalar_lea.vmem [#allocation8], %s270
          %s272 = sadd.s32 %s28, %s29
          %s274 = ssub.s32 128, 128
          %275 = vsyncadd %s268, %s274
          %s276 = smul.addr %s272, 8
          %s277 = smul.addr %s276, 16
          %s278 = scalar_lea.hbm %s3, %s277
          %s280 = sshll.u32 %s271, 4
          %s281 = int_to_ptr.vmem [resolvable:$true] %s280
          %283 = dma.hbm_to_vmem [thread:$0]  %s278, 128, %s281, %s268
        $region32: #{tpu_custom_call.1} parent=19 // pred_fallthru
          _
        // Predicated region
        $region33: #{tpu_custom_call.1} parent=19 // pred_check
          %p284 = pneg %p160
        $region34: #{tpu_custom_call.1} parent=19 // pred_check_branch
          %286 = sbr.rel (%p284) target = $region36
        $region35: #{tpu_custom_call.1} parent=19 // pred_region
          %s287 = sadd.s32 %s28, %s29
          %s288 = smul.u32 128, %s287
          %p289 = scmp.lt.s32.totalorder %s288, 255
          %s290 = scalar_select %p289, %s288, 255
          %s291 = smul.addr %s290, 4
          %s292 = scalar_lea.vmem %s4, %s291
          %s293 = sadd.s32 %s28, %s29
          %s294 = smul.u32 128, %s293
        $region36: #{tpu_custom_call.1} parent=19 // pred_fallthru
          _
      $region20: #{tpu_custom_call.1} parent=5 // pred_fallthru
        _
      %p295 = scmp.le.s32.totalorder 1, %s21
      %p296 = scmp.lt.s32.totalorder %s21, 3
      %p297 = pnand %p295, %p296
      %p298 = pneg %p297
      // Predicated region
      $region37: #{tpu_custom_call.1} parent=5 // pred_check
        _
      $region38: #{tpu_custom_call.1} parent=5 // pred_check_branch
        %300 = sbr.rel (%p297) target = $region40
      $region39: #{tpu_custom_call.1} parent=5 // pred_region
        %s301 = ssub.s32 %s21, 1
        // Predicated region
        $region41: #{tpu_custom_call.1} parent=39 // pred_check
          %p302 = pneg %p54
        $region42: #{tpu_custom_call.1} parent=39 // pred_check_branch
          %304 = sbr.rel (%p302) target = $region44
        $region43: #{tpu_custom_call.1} parent=39 // pred_region
          %305 = dma.done [#allocation3], 1536
        $region44: #{tpu_custom_call.1} parent=39 // pred_fallthru
          _
        %s306 = sand.u32 %s26, 1
        %s307 = scalar_lea.sflag [#allocation6], %s306
        %s308 = sand.u32 %s69, 1
        %s309 = smul.addr %s308, 12288
        %s310 = scalar_lea.vmem [#allocation5], %s309
        // Predicated region
        $region45: #{tpu_custom_call.1} parent=39 // pred_check
          %p311 = pneg %p82
        $region46: #{tpu_custom_call.1} parent=39 // pred_check_branch
          %313 = sbr.rel (%p311) target = $region48
        $region47: #{tpu_custom_call.1} parent=39 // pred_region
          %314 = dma.done %s307, 196608
        $region48: #{tpu_custom_call.1} parent=39 // pred_fallthru
          _
        %s315 = sand.u32 %s26, 1
        %s316 = scalar_lea.sflag [#allocation6], %s315
        %s317 = sand.u32 %s97, 1
        %s318 = smul.addr %s317, 8
        %s319 = scalar_lea.vmem [#allocation7], %s318
        // Predicated region
        $region49: #{tpu_custom_call.1} parent=39 // pred_check
          %p320 = pneg %p110
        $region50: #{tpu_custom_call.1} parent=39 // pred_check_branch
          %322 = sbr.rel (%p320) target = $region52
        $region51: #{tpu_custom_call.1} parent=39 // pred_region
          %323 = dma.done %s316, 128
        $region52: #{tpu_custom_call.1} parent=39 // pred_fallthru
          _
        %s324 = sand.u32 %s125, 1
        %s325 = scalar_lea.sflag [#allocation9], %s324
        %s326 = sand.u32 %s125, 1
        %s327 = smul.addr %s326, 8
        %s328 = scalar_lea.vmem [#allocation8], %s327
        // Predicated region
        $region53: #{tpu_custom_call.1} parent=39 // pred_check
          %p329 = pneg %p138
        $region54: #{tpu_custom_call.1} parent=39 // pred_check_branch
          %331 = sbr.rel (%p329) target = $region56
        $region55: #{tpu_custom_call.1} parent=39 // pred_region
          %332 = dma.done %s325, 128
        $region56: #{tpu_custom_call.1} parent=39 // pred_fallthru
          _
        %p333 = pneg %p54
        %p334 = pneg %p51
        %s335 = sand.u32 %s26, 1
        %s336 = scalar_lea.sflag [#allocation6], %s335
        %s337 = sand.u32 %s69, 1
        %s338 = smul.addr %s337, 12288
        %s339 = scalar_lea.vmem [#allocation5], %s338
        %p340 = pneg %p82
        %p341 = pneg %p79
        %s342 = sand.u32 %s26, 1
        %s343 = scalar_lea.sflag [#allocation6], %s342
        %s344 = sand.u32 %s97, 1
        %s345 = smul.addr %s344, 8
        %s346 = scalar_lea.vmem [#allocation7], %s345
        %p347 = pneg %p110
        %p348 = pneg %p107
        %s349 = sand.u32 %s125, 1
        %s350 = scalar_lea.sflag [#allocation9], %s349
        %s351 = sand.u32 %s125, 1
        %s352 = smul.addr %s351, 8
        %s353 = scalar_lea.vmem [#allocation8], %s352
        %p354 = pneg %p138
        %p355 = pneg %p135
        %s356 = sadd.s32 %s30, %s31
        %s357 = smul.u32 128, %s356
        %p358 = scmp.lt.s32.totalorder %s357, 255
        %s359 = scalar_select %p358, %s357, 255
        %s360 = smul.addr %s359, 4
        %s361 = scalar_lea.vmem %s4, %s360
        %p362 = pneg %p166
        %p363 = pneg %p163
        %p364 = pneg %p192
        %p365 = pneg %p189
        %s366 = sand.u32 %s179, 1
        %s367 = scalar_lea.sflag [#allocation4], %s366
        %s368 = sand.u32 %s179, 1
        %s369 = smul.addr %s368, 8
        %s370 = scalar_lea.vmem [#allocation10], %s369
        %s371 = sadd.s32 %s30, %s31
        %s372 = smul.u32 8, %s371
        %s373 = sadd.s32 %s30, %s31
        %s374 = sadd.s32 %s30, %s31
        %s375 = sadd.s32 %s30, %s31
        %s376 = smul.u32 128, %s375
        %p377 = scmp.lt.s32.totalorder %s376, 255
        %s378 = scalar_select %p377, %s376, 255
        %s379 = smul.addr %s378, 4
        %s380 = scalar_lea.vmem %s4, %s379
        %s381 = sadd.s32 %s30, %s31
        %s382 = smul.u32 128, %s381
        %v384 = vld [vmem:[#allocation2] sm:$0xff]
        %v385 = vld [vmem:[#allocation2 + $0x8] sm:$0xff]
        %v386 = vld [vmem:[#allocation2 + $0x10] sm:$0xff]
        %v387 = vld [vmem:[#allocation2 + $0x18] sm:$0xff]
        %v388 = vld [vmem:[#allocation2 + $0x20] sm:$0xff]
        %v389 = vld [vmem:[#allocation2 + $0x28] sm:$0xff]
        %v390 = vld [vmem:[#allocation2 + $0x30] sm:$0xff]
        %v391 = vld [vmem:[#allocation2 + $0x38] sm:$0xff]
        %v392 = vld [vmem:[#allocation2 + $0x40] sm:$0xff]
        %v393 = vld [vmem:[#allocation2 + $0x48] sm:$0xff]
        %v394 = vld [vmem:[#allocation2 + $0x50] sm:$0xff]
        %v395 = vld [vmem:[#allocation2 + $0x58] sm:$0xff]
        %v396 = vld [vmem:[%s310] sm:$0xff]
        %v397 = vld [vmem:[%s310 + $0x8] sm:$0xff]
        %v398 = vld [vmem:[%s310 + $0x10] sm:$0xff]
        %v399 = vld [vmem:[%s310 + $0x18] sm:$0xff]
        %v400 = vld [vmem:[%s310 + $0x20] sm:$0xff]
        %v401 = vld [vmem:[%s310 + $0x28] sm:$0xff]
        %v402 = vld [vmem:[%s310 + $0x30] sm:$0xff]
        %v403 = vld [vmem:[%s310 + $0x38] sm:$0xff]
        %v404 = vld [vmem:[%s310 + $0x40] sm:$0xff]
        %v405 = vld [vmem:[%s310 + $0x48] sm:$0xff]
        %v406 = vld [vmem:[%s310 + $0x50] sm:$0xff]
        %v407 = vld [vmem:[%s310 + $0x58] sm:$0xff]
        %v408 = vld [vmem:[%s310 + $0x60] sm:$0xff]
        %v409 = vld [vmem:[%s310 + $0x68] sm:$0xff]
        %v410 = vld [vmem:[%s310 + $0x70] sm:$0xff]
        %v411 = vld [vmem:[%s310 + $0x78] sm:$0xff]
        %v412 = vld [vmem:[%s310 + $0x80] sm:$0xff]
        %v413 = vld [vmem:[%s310 + $0x88] sm:$0xff]
        %v414 = vld [vmem:[%s310 + $0x90] sm:$0xff]
        %v415 = vld [vmem:[%s310 + $0x98] sm:$0xff]
        %v416 = vld [vmem:[%s310 + $0xa0] sm:$0xff]
        %v417 = vld [vmem:[%s310 + $0xa8] sm:$0xff]
        %v418 = vld [vmem:[%s310 + $0xb0] sm:$0xff]
        %v419 = vld [vmem:[%s310 + $0xb8] sm:$0xff]
        %v420 = vld [vmem:[%s310 + $0xc0] sm:$0xff]
        %v421 = vld [vmem:[%s310 + $0xc8] sm:$0xff]
        %v422 = vld [vmem:[%s310 + $0xd0] sm:$0xff]
        %v423 = vld [vmem:[%s310 + $0xd8] sm:$0xff]
        %v424 = vld [vmem:[%s310 + $0xe0] sm:$0xff]
        %v425 = vld [vmem:[%s310 + $0xe8] sm:$0xff]
        %v426 = vld [vmem:[%s310 + $0xf0] sm:$0xff]
        %v427 = vld [vmem:[%s310 + $0xf8] sm:$0xff]
        %v428 = vld [vmem:[%s310 + $0x100] sm:$0xff]
        %v429 = vld [vmem:[%s310 + $0x108] sm:$0xff]
        %v430 = vld [vmem:[%s310 + $0x110] sm:$0xff]
        %v431 = vld [vmem:[%s310 + $0x118] sm:$0xff]
        %v432 = vld [vmem:[%s310 + $0x120] sm:$0xff]
        %v433 = vld [vmem:[%s310 + $0x128] sm:$0xff]
        %v434 = vld [vmem:[%s310 + $0x130] sm:$0xff]
        %v435 = vld [vmem:[%s310 + $0x138] sm:$0xff]
        %v436 = vld [vmem:[%s310 + $0x140] sm:$0xff]
        %v437 = vld [vmem:[%s310 + $0x148] sm:$0xff]
        %v438 = vld [vmem:[%s310 + $0x150] sm:$0xff]
        %v439 = vld [vmem:[%s310 + $0x158] sm:$0xff]
        %v440 = vld [vmem:[%s310 + $0x160] sm:$0xff]
        %v441 = vld [vmem:[%s310 + $0x168] sm:$0xff]
        %v442 = vld [vmem:[%s310 + $0x170] sm:$0xff]
        %v443 = vld [vmem:[%s310 + $0x178] sm:$0xff]
        %v444 = vld [vmem:[%s310 + $0x180] sm:$0xff]
        %v445 = vld [vmem:[%s310 + $0x188] sm:$0xff]
        %v446 = vld [vmem:[%s310 + $0x190] sm:$0xff]
        %v447 = vld [vmem:[%s310 + $0x198] sm:$0xff]
        %v448 = vld [vmem:[%s310 + $0x1a0] sm:$0xff]
        %v449 = vld [vmem:[%s310 + $0x1a8] sm:$0xff]
        %v450 = vld [vmem:[%s310 + $0x1b0] sm:$0xff]
        %v451 = vld [vmem:[%s310 + $0x1b8] sm:$0xff]
        %v452 = vld [vmem:[%s310 + $0x1c0] sm:$0xff]
        %v453 = vld [vmem:[%s310 + $0x1c8] sm:$0xff]
        %v454 = vld [vmem:[%s310 + $0x1d0] sm:$0xff]
        %v455 = vld [vmem:[%s310 + $0x1d8] sm:$0xff]
        %v456 = vld [vmem:[%s310 + $0x1e0] sm:$0xff]
        %v457 = vld [vmem:[%s310 + $0x1e8] sm:$0xff]
        %v458 = vld [vmem:[%s310 + $0x1f0] sm:$0xff]
        %v459 = vld [vmem:[%s310 + $0x1f8] sm:$0xff]
        %v460 = vld [vmem:[%s310 + $0x200] sm:$0xff]
        %v461 = vld [vmem:[%s310 + $0x208] sm:$0xff]
        %v462 = vld [vmem:[%s310 + $0x210] sm:$0xff]
        %v463 = vld [vmem:[%s310 + $0x218] sm:$0xff]
        %v464 = vld [vmem:[%s310 + $0x220] sm:$0xff]
        %v465 = vld [vmem:[%s310 + $0x228] sm:$0xff]
        %v466 = vld [vmem:[%s310 + $0x230] sm:$0xff]
        %v467 = vld [vmem:[%s310 + $0x238] sm:$0xff]
        %v468 = vld [vmem:[%s310 + $0x240] sm:$0xff]
        %v469 = vld [vmem:[%s310 + $0x248] sm:$0xff]
        %v470 = vld [vmem:[%s310 + $0x250] sm:$0xff]
        %v471 = vld [vmem:[%s310 + $0x258] sm:$0xff]
        %v472 = vld [vmem:[%s310 + $0x260] sm:$0xff]
        %v473 = vld [vmem:[%s310 + $0x268] sm:$0xff]
        %v474 = vld [vmem:[%s310 + $0x270] sm:$0xff]
        %v475 = vld [vmem:[%s310 + $0x278] sm:$0xff]
        %v476 = vld [vmem:[%s310 + $0x280] sm:$0xff]
        %v477 = vld [vmem:[%s310 + $0x288] sm:$0xff]
        %v478 = vld [vmem:[%s310 + $0x290] sm:$0xff]
        %v479 = vld [vmem:[%s310 + $0x298] sm:$0xff]
        %v480 = vld [vmem:[%s310 + $0x2a0] sm:$0xff]
        %v481 = vld [vmem:[%s310 + $0x2a8] sm:$0xff]
        %v482 = vld [vmem:[%s310 + $0x2b0] sm:$0xff]
        %v483 = vld [vmem:[%s310 + $0x2b8] sm:$0xff]
        %v484 = vld [vmem:[%s310 + $0x2c0] sm:$0xff]
        %v485 = vld [vmem:[%s310 + $0x2c8] sm:$0xff]
        %v486 = vld [vmem:[%s310 + $0x2d0] sm:$0xff]
        %v487 = vld [vmem:[%s310 + $0x2d8] sm:$0xff]
        %v488 = vld [vmem:[%s310 + $0x2e0] sm:$0xff]
        %v489 = vld [vmem:[%s310 + $0x2e8] sm:$0xff]
        %v490 = vld [vmem:[%s310 + $0x2f0] sm:$0xff]
        %v491 = vld [vmem:[%s310 + $0x2f8] sm:$0xff]
        %v492 = vld [vmem:[%s310 + $0x300] sm:$0xff]
        %v493 = vld [vmem:[%s310 + $0x308] sm:$0xff]
        %v494 = vld [vmem:[%s310 + $0x310] sm:$0xff]
        %v495 = vld [vmem:[%s310 + $0x318] sm:$0xff]
        %v496 = vld [vmem:[%s310 + $0x320] sm:$0xff]
        %v497 = vld [vmem:[%s310 + $0x328] sm:$0xff]
        %v498 = vld [vmem:[%s310 + $0x330] sm:$0xff]
        %v499 = vld [vmem:[%s310 + $0x338] sm:$0xff]
        %v500 = vld [vmem:[%s310 + $0x340] sm:$0xff]
        %v501 = vld [vmem:[%s310 + $0x348] sm:$0xff]
        %v502 = vld [vmem:[%s310 + $0x350] sm:$0xff]
        %v503 = vld [vmem:[%s310 + $0x358] sm:$0xff]
        %v504 = vld [vmem:[%s310 + $0x360] sm:$0xff]
        %v505 = vld [vmem:[%s310 + $0x368] sm:$0xff]
        %v506 = vld [vmem:[%s310 + $0x370] sm:$0xff]
        %v507 = vld [vmem:[%s310 + $0x378] sm:$0xff]
        %v508 = vld [vmem:[%s310 + $0x380] sm:$0xff]
        %v509 = vld [vmem:[%s310 + $0x388] sm:$0xff]
        %v510 = vld [vmem:[%s310 + $0x390] sm:$0xff]
        %v511 = vld [vmem:[%s310 + $0x398] sm:$0xff]
        %v512 = vld [vmem:[%s310 + $0x3a0] sm:$0xff]
        %v513 = vld [vmem:[%s310 + $0x3a8] sm:$0xff]
        %v514 = vld [vmem:[%s310 + $0x3b0] sm:$0xff]
        %v515 = vld [vmem:[%s310 + $0x3b8] sm:$0xff]
        %v516 = vld [vmem:[%s310 + $0x3c0] sm:$0xff]
        %v517 = vld [vmem:[%s310 + $0x3c8] sm:$0xff]
        %v518 = vld [vmem:[%s310 + $0x3d0] sm:$0xff]
        %v519 = vld [vmem:[%s310 + $0x3d8] sm:$0xff]
        %v520 = vld [vmem:[%s310 + $0x3e0] sm:$0xff]
        %v521 = vld [vmem:[%s310 + $0x3e8] sm:$0xff]
        %v522 = vld [vmem:[%s310 + $0x3f0] sm:$0xff]
        %v523 = vld [vmem:[%s310 + $0x3f8] sm:$0xff]
        %v524 = vld [vmem:[%s310 + $0x400] sm:$0xff]
        %v525 = vld [vmem:[%s310 + $0x408] sm:$0xff]
        %v526 = vld [vmem:[%s310 + $0x410] sm:$0xff]
        %v527 = vld [vmem:[%s310 + $0x418] sm:$0xff]
        %v528 = vld [vmem:[%s310 + $0x420] sm:$0xff]
        %v529 = vld [vmem:[%s310 + $0x428] sm:$0xff]
        %v530 = vld [vmem:[%s310 + $0x430] sm:$0xff]
        %v531 = vld [vmem:[%s310 + $0x438] sm:$0xff]
        %v532 = vld [vmem:[%s310 + $0x440] sm:$0xff]
        %v533 = vld [vmem:[%s310 + $0x448] sm:$0xff]
        %v534 = vld [vmem:[%s310 + $0x450] sm:$0xff]
        %v535 = vld [vmem:[%s310 + $0x458] sm:$0xff]
        %v536 = vld [vmem:[%s310 + $0x460] sm:$0xff]
        %v537 = vld [vmem:[%s310 + $0x468] sm:$0xff]
        %v538 = vld [vmem:[%s310 + $0x470] sm:$0xff]
        %v539 = vld [vmem:[%s310 + $0x478] sm:$0xff]
        %v540 = vld [vmem:[%s310 + $0x480] sm:$0xff]
        %v541 = vld [vmem:[%s310 + $0x488] sm:$0xff]
        %v542 = vld [vmem:[%s310 + $0x490] sm:$0xff]
        %v543 = vld [vmem:[%s310 + $0x498] sm:$0xff]
        %v544 = vld [vmem:[%s310 + $0x4a0] sm:$0xff]
        %v545 = vld [vmem:[%s310 + $0x4a8] sm:$0xff]
        %v546 = vld [vmem:[%s310 + $0x4b0] sm:$0xff]
        %v547 = vld [vmem:[%s310 + $0x4b8] sm:$0xff]
        %v548 = vld [vmem:[%s310 + $0x4c0] sm:$0xff]
        %v549 = vld [vmem:[%s310 + $0x4c8] sm:$0xff]
        %v550 = vld [vmem:[%s310 + $0x4d0] sm:$0xff]
        %v551 = vld [vmem:[%s310 + $0x4d8] sm:$0xff]
        %v552 = vld [vmem:[%s310 + $0x4e0] sm:$0xff]
        %v553 = vld [vmem:[%s310 + $0x4e8] sm:$0xff]
        %v554 = vld [vmem:[%s310 + $0x4f0] sm:$0xff]
        %v555 = vld [vmem:[%s310 + $0x4f8] sm:$0xff]
        %v556 = vld [vmem:[%s310 + $0x500] sm:$0xff]
        %v557 = vld [vmem:[%s310 + $0x508] sm:$0xff]
        %v558 = vld [vmem:[%s310 + $0x510] sm:$0xff]
        %v559 = vld [vmem:[%s310 + $0x518] sm:$0xff]
        %v560 = vld [vmem:[%s310 + $0x520] sm:$0xff]
        %v561 = vld [vmem:[%s310 + $0x528] sm:$0xff]
        %v562 = vld [vmem:[%s310 + $0x530] sm:$0xff]
        %v563 = vld [vmem:[%s310 + $0x538] sm:$0xff]
        %v564 = vld [vmem:[%s310 + $0x540] sm:$0xff]
        %v565 = vld [vmem:[%s310 + $0x548] sm:$0xff]
        %v566 = vld [vmem:[%s310 + $0x550] sm:$0xff]
        %v567 = vld [vmem:[%s310 + $0x558] sm:$0xff]
        %v568 = vld [vmem:[%s310 + $0x560] sm:$0xff]
        %v569 = vld [vmem:[%s310 + $0x568] sm:$0xff]
        %v570 = vld [vmem:[%s310 + $0x570] sm:$0xff]
        %v571 = vld [vmem:[%s310 + $0x578] sm:$0xff]
        %v572 = vld [vmem:[%s310 + $0x580] sm:$0xff]
        %v573 = vld [vmem:[%s310 + $0x588] sm:$0xff]
        %v574 = vld [vmem:[%s310 + $0x590] sm:$0xff]
        %v575 = vld [vmem:[%s310 + $0x598] sm:$0xff]
        %v576 = vld [vmem:[%s310 + $0x5a0] sm:$0xff]
        %v577 = vld [vmem:[%s310 + $0x5a8] sm:$0xff]
        %v578 = vld [vmem:[%s310 + $0x5b0] sm:$0xff]
        %v579 = vld [vmem:[%s310 + $0x5b8] sm:$0xff]
        %v580 = vld [vmem:[%s310 + $0x5c0] sm:$0xff]
        %v581 = vld [vmem:[%s310 + $0x5c8] sm:$0xff]
        %v582 = vld [vmem:[%s310 + $0x5d0] sm:$0xff]
        %v583 = vld [vmem:[%s310 + $0x5d8] sm:$0xff]
        %v584 = vld [vmem:[%s310 + $0x5e0] sm:$0xff]
        %v585 = vld [vmem:[%s310 + $0x5e8] sm:$0xff]
        %v586 = vld [vmem:[%s310 + $0x5f0] sm:$0xff]
        %v587 = vld [vmem:[%s310 + $0x5f8] sm:$0xff]
        %v588 = vld [vmem:[%s310 + $0x600] sm:$0xff]
        %v589 = vld [vmem:[%s310 + $0x608] sm:$0xff]
        %v590 = vld [vmem:[%s310 + $0x610] sm:$0xff]
        %v591 = vld [vmem:[%s310 + $0x618] sm:$0xff]
        %v592 = vld [vmem:[%s310 + $0x620] sm:$0xff]
        %v593 = vld [vmem:[%s310 + $0x628] sm:$0xff]
        %v594 = vld [vmem:[%s310 + $0x630] sm:$0xff]
        %v595 = vld [vmem:[%s310 + $0x638] sm:$0xff]
        %v596 = vld [vmem:[%s310 + $0x640] sm:$0xff]
        %v597 = vld [vmem:[%s310 + $0x648] sm:$0xff]
        %v598 = vld [vmem:[%s310 + $0x650] sm:$0xff]
        %v599 = vld [vmem:[%s310 + $0x658] sm:$0xff]
        %v600 = vld [vmem:[%s310 + $0x660] sm:$0xff]
        %v601 = vld [vmem:[%s310 + $0x668] sm:$0xff]
        %v602 = vld [vmem:[%s310 + $0x670] sm:$0xff]
        %v603 = vld [vmem:[%s310 + $0x678] sm:$0xff]
        %v604 = vld [vmem:[%s310 + $0x680] sm:$0xff]
        %v605 = vld [vmem:[%s310 + $0x688] sm:$0xff]
        %v606 = vld [vmem:[%s310 + $0x690] sm:$0xff]
        %v607 = vld [vmem:[%s310 + $0x698] sm:$0xff]
        %v608 = vld [vmem:[%s310 + $0x6a0] sm:$0xff]
        %v609 = vld [vmem:[%s310 + $0x6a8] sm:$0xff]
        %v610 = vld [vmem:[%s310 + $0x6b0] sm:$0xff]
        %v611 = vld [vmem:[%s310 + $0x6b8] sm:$0xff]
        %v612 = vld [vmem:[%s310 + $0x6c0] sm:$0xff]
        %v613 = vld [vmem:[%s310 + $0x6c8] sm:$0xff]
        %v614 = vld [vmem:[%s310 + $0x6d0] sm:$0xff]
        %v615 = vld [vmem:[%s310 + $0x6d8] sm:$0xff]
        %v616 = vld [vmem:[%s310 + $0x6e0] sm:$0xff]
        %v617 = vld [vmem:[%s310 + $0x6e8] sm:$0xff]
        %v618 = vld [vmem:[%s310 + $0x6f0] sm:$0xff]
        %v619 = vld [vmem:[%s310 + $0x6f8] sm:$0xff]
        %v620 = vld [vmem:[%s310 + $0x700] sm:$0xff]
        %v621 = vld [vmem:[%s310 + $0x708] sm:$0xff]
        %v622 = vld [vmem:[%s310 + $0x710] sm:$0xff]
        %v623 = vld [vmem:[%s310 + $0x718] sm:$0xff]
        %v624 = vld [vmem:[%s310 + $0x720] sm:$0xff]
        %v625 = vld [vmem:[%s310 + $0x728] sm:$0xff]
        %v626 = vld [vmem:[%s310 + $0x730] sm:$0xff]
        %v627 = vld [vmem:[%s310 + $0x738] sm:$0xff]
        %v628 = vld [vmem:[%s310 + $0x740] sm:$0xff]
        %v629 = vld [vmem:[%s310 + $0x748] sm:$0xff]
        %v630 = vld [vmem:[%s310 + $0x750] sm:$0xff]
        %v631 = vld [vmem:[%s310 + $0x758] sm:$0xff]
        %v632 = vld [vmem:[%s310 + $0x760] sm:$0xff]
        %v633 = vld [vmem:[%s310 + $0x768] sm:$0xff]
        %v634 = vld [vmem:[%s310 + $0x770] sm:$0xff]
        %v635 = vld [vmem:[%s310 + $0x778] sm:$0xff]
        %v636 = vld [vmem:[%s310 + $0x780] sm:$0xff]
        %v637 = vld [vmem:[%s310 + $0x788] sm:$0xff]
        %v638 = vld [vmem:[%s310 + $0x790] sm:$0xff]
        %v639 = vld [vmem:[%s310 + $0x798] sm:$0xff]
        %v640 = vld [vmem:[%s310 + $0x7a0] sm:$0xff]
        %v641 = vld [vmem:[%s310 + $0x7a8] sm:$0xff]
        %v642 = vld [vmem:[%s310 + $0x7b0] sm:$0xff]
        %v643 = vld [vmem:[%s310 + $0x7b8] sm:$0xff]
        %v644 = vld [vmem:[%s310 + $0x7c0] sm:$0xff]
        %v645 = vld [vmem:[%s310 + $0x7c8] sm:$0xff]
        %v646 = vld [vmem:[%s310 + $0x7d0] sm:$0xff]
        %v647 = vld [vmem:[%s310 + $0x7d8] sm:$0xff]
        %v648 = vld [vmem:[%s310 + $0x7e0] sm:$0xff]
        %v649 = vld [vmem:[%s310 + $0x7e8] sm:$0xff]
        %v650 = vld [vmem:[%s310 + $0x7f0] sm:$0xff]
        %v651 = vld [vmem:[%s310 + $0x7f8] sm:$0xff]
        %v652 = vld [vmem:[%s310 + $0x800] sm:$0xff]
        %v653 = vld [vmem:[%s310 + $0x808] sm:$0xff]
        %v654 = vld [vmem:[%s310 + $0x810] sm:$0xff]
        %v655 = vld [vmem:[%s310 + $0x818] sm:$0xff]
        %v656 = vld [vmem:[%s310 + $0x820] sm:$0xff]
        %v657 = vld [vmem:[%s310 + $0x828] sm:$0xff]
        %v658 = vld [vmem:[%s310 + $0x830] sm:$0xff]
        %v659 = vld [vmem:[%s310 + $0x838] sm:$0xff]
        %v660 = vld [vmem:[%s310 + $0x840] sm:$0xff]
        %v661 = vld [vmem:[%s310 + $0x848] sm:$0xff]
        %v662 = vld [vmem:[%s310 + $0x850] sm:$0xff]
        %v663 = vld [vmem:[%s310 + $0x858] sm:$0xff]
        %v664 = vld [vmem:[%s310 + $0x860] sm:$0xff]
        %v665 = vld [vmem:[%s310 + $0x868] sm:$0xff]
        %v666 = vld [vmem:[%s310 + $0x870] sm:$0xff]
        %v667 = vld [vmem:[%s310 + $0x878] sm:$0xff]
        %v668 = vld [vmem:[%s310 + $0x880] sm:$0xff]
        %v669 = vld [vmem:[%s310 + $0x888] sm:$0xff]
        %v670 = vld [vmem:[%s310 + $0x890] sm:$0xff]
        %v671 = vld [vmem:[%s310 + $0x898] sm:$0xff]
        %v672 = vld [vmem:[%s310 + $0x8a0] sm:$0xff]
        %v673 = vld [vmem:[%s310 + $0x8a8] sm:$0xff]
        %v674 = vld [vmem:[%s310 + $0x8b0] sm:$0xff]
        %v675 = vld [vmem:[%s310 + $0x8b8] sm:$0xff]
        %v676 = vld [vmem:[%s310 + $0x8c0] sm:$0xff]
        %v677 = vld [vmem:[%s310 + $0x8c8] sm:$0xff]
        %v678 = vld [vmem:[%s310 + $0x8d0] sm:$0xff]
        %v679 = vld [vmem:[%s310 + $0x8d8] sm:$0xff]
        %v680 = vld [vmem:[%s310 + $0x8e0] sm:$0xff]
        %v681 = vld [vmem:[%s310 + $0x8e8] sm:$0xff]
        %v682 = vld [vmem:[%s310 + $0x8f0] sm:$0xff]
        %v683 = vld [vmem:[%s310 + $0x8f8] sm:$0xff]
        %v684 = vld [vmem:[%s310 + $0x900] sm:$0xff]
        %v685 = vld [vmem:[%s310 + $0x908] sm:$0xff]
        %v686 = vld [vmem:[%s310 + $0x910] sm:$0xff]
        %v687 = vld [vmem:[%s310 + $0x918] sm:$0xff]
        %v688 = vld [vmem:[%s310 + $0x920] sm:$0xff]
        %v689 = vld [vmem:[%s310 + $0x928] sm:$0xff]
        %v690 = vld [vmem:[%s310 + $0x930] sm:$0xff]
        %v691 = vld [vmem:[%s310 + $0x938] sm:$0xff]
        %v692 = vld [vmem:[%s310 + $0x940] sm:$0xff]
        %v693 = vld [vmem:[%s310 + $0x948] sm:$0xff]
        %v694 = vld [vmem:[%s310 + $0x950] sm:$0xff]
        %v695 = vld [vmem:[%s310 + $0x958] sm:$0xff]
        %v696 = vld [vmem:[%s310 + $0x960] sm:$0xff]
        %v697 = vld [vmem:[%s310 + $0x968] sm:$0xff]
        %v698 = vld [vmem:[%s310 + $0x970] sm:$0xff]
        %v699 = vld [vmem:[%s310 + $0x978] sm:$0xff]
        %v700 = vld [vmem:[%s310 + $0x980] sm:$0xff]
        %v701 = vld [vmem:[%s310 + $0x988] sm:$0xff]
        %v702 = vld [vmem:[%s310 + $0x990] sm:$0xff]
        %v703 = vld [vmem:[%s310 + $0x998] sm:$0xff]
        %v704 = vld [vmem:[%s310 + $0x9a0] sm:$0xff]
        %v705 = vld [vmem:[%s310 + $0x9a8] sm:$0xff]
        %v706 = vld [vmem:[%s310 + $0x9b0] sm:$0xff]
        %v707 = vld [vmem:[%s310 + $0x9b8] sm:$0xff]
        %v708 = vld [vmem:[%s310 + $0x9c0] sm:$0xff]
        %v709 = vld [vmem:[%s310 + $0x9c8] sm:$0xff]
        %v710 = vld [vmem:[%s310 + $0x9d0] sm:$0xff]
        %v711 = vld [vmem:[%s310 + $0x9d8] sm:$0xff]
        %v712 = vld [vmem:[%s310 + $0x9e0] sm:$0xff]
        %v713 = vld [vmem:[%s310 + $0x9e8] sm:$0xff]
        %v714 = vld [vmem:[%s310 + $0x9f0] sm:$0xff]
        %v715 = vld [vmem:[%s310 + $0x9f8] sm:$0xff]
        %v716 = vld [vmem:[%s310 + $0xa00] sm:$0xff]
        %v717 = vld [vmem:[%s310 + $0xa08] sm:$0xff]
        %v718 = vld [vmem:[%s310 + $0xa10] sm:$0xff]
        %v719 = vld [vmem:[%s310 + $0xa18] sm:$0xff]
        %v720 = vld [vmem:[%s310 + $0xa20] sm:$0xff]
        %v721 = vld [vmem:[%s310 + $0xa28] sm:$0xff]
        %v722 = vld [vmem:[%s310 + $0xa30] sm:$0xff]
        %v723 = vld [vmem:[%s310 + $0xa38] sm:$0xff]
        %v724 = vld [vmem:[%s310 + $0xa40] sm:$0xff]
        %v725 = vld [vmem:[%s310 + $0xa48] sm:$0xff]
        %v726 = vld [vmem:[%s310 + $0xa50] sm:$0xff]
        %v727 = vld [vmem:[%s310 + $0xa58] sm:$0xff]
        %v728 = vld [vmem:[%s310 + $0xa60] sm:$0xff]
        %v729 = vld [vmem:[%s310 + $0xa68] sm:$0xff]
        %v730 = vld [vmem:[%s310 + $0xa70] sm:$0xff]
        %v731 = vld [vmem:[%s310 + $0xa78] sm:$0xff]
        %v732 = vld [vmem:[%s310 + $0xa80] sm:$0xff]
        %v733 = vld [vmem:[%s310 + $0xa88] sm:$0xff]
        %v734 = vld [vmem:[%s310 + $0xa90] sm:$0xff]
        %v735 = vld [vmem:[%s310 + $0xa98] sm:$0xff]
        %v736 = vld [vmem:[%s310 + $0xaa0] sm:$0xff]
        %v737 = vld [vmem:[%s310 + $0xaa8] sm:$0xff]
        %v738 = vld [vmem:[%s310 + $0xab0] sm:$0xff]
        %v739 = vld [vmem:[%s310 + $0xab8] sm:$0xff]
        %v740 = vld [vmem:[%s310 + $0xac0] sm:$0xff]
        %v741 = vld [vmem:[%s310 + $0xac8] sm:$0xff]
        %v742 = vld [vmem:[%s310 + $0xad0] sm:$0xff]
        %v743 = vld [vmem:[%s310 + $0xad8] sm:$0xff]
        %v744 = vld [vmem:[%s310 + $0xae0] sm:$0xff]
        %v745 = vld [vmem:[%s310 + $0xae8] sm:$0xff]
        %v746 = vld [vmem:[%s310 + $0xaf0] sm:$0xff]
        %v747 = vld [vmem:[%s310 + $0xaf8] sm:$0xff]
        %v748 = vld [vmem:[%s310 + $0xb00] sm:$0xff]
        %v749 = vld [vmem:[%s310 + $0xb08] sm:$0xff]
        %v750 = vld [vmem:[%s310 + $0xb10] sm:$0xff]
        %v751 = vld [vmem:[%s310 + $0xb18] sm:$0xff]
        %v752 = vld [vmem:[%s310 + $0xb20] sm:$0xff]
        %v753 = vld [vmem:[%s310 + $0xb28] sm:$0xff]
        %v754 = vld [vmem:[%s310 + $0xb30] sm:$0xff]
        %v755 = vld [vmem:[%s310 + $0xb38] sm:$0xff]
        %v756 = vld [vmem:[%s310 + $0xb40] sm:$0xff]
        %v757 = vld [vmem:[%s310 + $0xb48] sm:$0xff]
        %v758 = vld [vmem:[%s310 + $0xb50] sm:$0xff]
        %v759 = vld [vmem:[%s310 + $0xb58] sm:$0xff]
        %v760 = vld [vmem:[%s310 + $0xb60] sm:$0xff]
        %v761 = vld [vmem:[%s310 + $0xb68] sm:$0xff]
        %v762 = vld [vmem:[%s310 + $0xb70] sm:$0xff]
        %v763 = vld [vmem:[%s310 + $0xb78] sm:$0xff]
        %v764 = vld [vmem:[%s310 + $0xb80] sm:$0xff]
        %v765 = vld [vmem:[%s310 + $0xb88] sm:$0xff]
        %v766 = vld [vmem:[%s310 + $0xb90] sm:$0xff]
        %v767 = vld [vmem:[%s310 + $0xb98] sm:$0xff]
        %v768 = vld [vmem:[%s310 + $0xba0] sm:$0xff]
        %v769 = vld [vmem:[%s310 + $0xba8] sm:$0xff]
        %v770 = vld [vmem:[%s310 + $0xbb0] sm:$0xff]
        %v771 = vld [vmem:[%s310 + $0xbb8] sm:$0xff]
        %v772 = vld [vmem:[%s310 + $0xbc0] sm:$0xff]
        %v773 = vld [vmem:[%s310 + $0xbc8] sm:$0xff]
        %v774 = vld [vmem:[%s310 + $0xbd0] sm:$0xff]
        %v775 = vld [vmem:[%s310 + $0xbd8] sm:$0xff]
        %v776 = vld [vmem:[%s310 + $0xbe0] sm:$0xff]
        %v777 = vld [vmem:[%s310 + $0xbe8] sm:$0xff]
        %v778 = vld [vmem:[%s310 + $0xbf0] sm:$0xff]
        %v779 = vld [vmem:[%s310 + $0xbf8] sm:$0xff]
        %v780 = vld [vmem:[%s310 + $0xc00] sm:$0xff]
        %v781 = vld [vmem:[%s310 + $0xc08] sm:$0xff]
        %v782 = vld [vmem:[%s310 + $0xc10] sm:$0xff]
        %v783 = vld [vmem:[%s310 + $0xc18] sm:$0xff]
        %v784 = vld [vmem:[%s310 + $0xc20] sm:$0xff]
        %v785 = vld [vmem:[%s310 + $0xc28] sm:$0xff]
        %v786 = vld [vmem:[%s310 + $0xc30] sm:$0xff]
        %v787 = vld [vmem:[%s310 + $0xc38] sm:$0xff]
        %v788 = vld [vmem:[%s310 + $0xc40] sm:$0xff]
        %v789 = vld [vmem:[%s310 + $0xc48] sm:$0xff]
        %v790 = vld [vmem:[%s310 + $0xc50] sm:$0xff]
        %v791 = vld [vmem:[%s310 + $0xc58] sm:$0xff]
        %v792 = vld [vmem:[%s310 + $0xc60] sm:$0xff]
        %v793 = vld [vmem:[%s310 + $0xc68] sm:$0xff]
        %v794 = vld [vmem:[%s310 + $0xc70] sm:$0xff]
        %v795 = vld [vmem:[%s310 + $0xc78] sm:$0xff]
        %v796 = vld [vmem:[%s310 + $0xc80] sm:$0xff]
        %v797 = vld [vmem:[%s310 + $0xc88] sm:$0xff]
        %v798 = vld [vmem:[%s310 + $0xc90] sm:$0xff]
        %v799 = vld [vmem:[%s310 + $0xc98] sm:$0xff]
        %v800 = vld [vmem:[%s310 + $0xca0] sm:$0xff]
        %v801 = vld [vmem:[%s310 + $0xca8] sm:$0xff]
        %v802 = vld [vmem:[%s310 + $0xcb0] sm:$0xff]
        %v803 = vld [vmem:[%s310 + $0xcb8] sm:$0xff]
        %v804 = vld [vmem:[%s310 + $0xcc0] sm:$0xff]
        %v805 = vld [vmem:[%s310 + $0xcc8] sm:$0xff]
        %v806 = vld [vmem:[%s310 + $0xcd0] sm:$0xff]
        %v807 = vld [vmem:[%s310 + $0xcd8] sm:$0xff]
        %v808 = vld [vmem:[%s310 + $0xce0] sm:$0xff]
        %v809 = vld [vmem:[%s310 + $0xce8] sm:$0xff]
        %v810 = vld [vmem:[%s310 + $0xcf0] sm:$0xff]
        %v811 = vld [vmem:[%s310 + $0xcf8] sm:$0xff]
        %v812 = vld [vmem:[%s310 + $0xd00] sm:$0xff]
        %v813 = vld [vmem:[%s310 + $0xd08] sm:$0xff]
        %v814 = vld [vmem:[%s310 + $0xd10] sm:$0xff]
        %v815 = vld [vmem:[%s310 + $0xd18] sm:$0xff]
        %v816 = vld [vmem:[%s310 + $0xd20] sm:$0xff]
        %v817 = vld [vmem:[%s310 + $0xd28] sm:$0xff]
        %v818 = vld [vmem:[%s310 + $0xd30] sm:$0xff]
        %v819 = vld [vmem:[%s310 + $0xd38] sm:$0xff]
        %v820 = vld [vmem:[%s310 + $0xd40] sm:$0xff]
        %v821 = vld [vmem:[%s310 + $0xd48] sm:$0xff]
        %v822 = vld [vmem:[%s310 + $0xd50] sm:$0xff]
        %v823 = vld [vmem:[%s310 + $0xd58] sm:$0xff]
        %v824 = vld [vmem:[%s310 + $0xd60] sm:$0xff]
        %v825 = vld [vmem:[%s310 + $0xd68] sm:$0xff]
        %v826 = vld [vmem:[%s310 + $0xd70] sm:$0xff]
        %v827 = vld [vmem:[%s310 + $0xd78] sm:$0xff]
        %v828 = vld [vmem:[%s310 + $0xd80] sm:$0xff]
        %v829 = vld [vmem:[%s310 + $0xd88] sm:$0xff]
        %v830 = vld [vmem:[%s310 + $0xd90] sm:$0xff]
        %v831 = vld [vmem:[%s310 + $0xd98] sm:$0xff]
        %v832 = vld [vmem:[%s310 + $0xda0] sm:$0xff]
        %v833 = vld [vmem:[%s310 + $0xda8] sm:$0xff]
        %v834 = vld [vmem:[%s310 + $0xdb0] sm:$0xff]
        %v835 = vld [vmem:[%s310 + $0xdb8] sm:$0xff]
        %v836 = vld [vmem:[%s310 + $0xdc0] sm:$0xff]
        %v837 = vld [vmem:[%s310 + $0xdc8] sm:$0xff]
        %v838 = vld [vmem:[%s310 + $0xdd0] sm:$0xff]
        %v839 = vld [vmem:[%s310 + $0xdd8] sm:$0xff]
        %v840 = vld [vmem:[%s310 + $0xde0] sm:$0xff]
        %v841 = vld [vmem:[%s310 + $0xde8] sm:$0xff]
        %v842 = vld [vmem:[%s310 + $0xdf0] sm:$0xff]
        %v843 = vld [vmem:[%s310 + $0xdf8] sm:$0xff]
        %v844 = vld [vmem:[%s310 + $0xe00] sm:$0xff]
        %v845 = vld [vmem:[%s310 + $0xe08] sm:$0xff]
        %v846 = vld [vmem:[%s310 + $0xe10] sm:$0xff]
        %v847 = vld [vmem:[%s310 + $0xe18] sm:$0xff]
        %v848 = vld [vmem:[%s310 + $0xe20] sm:$0xff]
        %v849 = vld [vmem:[%s310 + $0xe28] sm:$0xff]
        %v850 = vld [vmem:[%s310 + $0xe30] sm:$0xff]
        %v851 = vld [vmem:[%s310 + $0xe38] sm:$0xff]
        %v852 = vld [vmem:[%s310 + $0xe40] sm:$0xff]
        %v853 = vld [vmem:[%s310 + $0xe48] sm:$0xff]
        %v854 = vld [vmem:[%s310 + $0xe50] sm:$0xff]
        %v855 = vld [vmem:[%s310 + $0xe58] sm:$0xff]
        %v856 = vld [vmem:[%s310 + $0xe60] sm:$0xff]
        %v857 = vld [vmem:[%s310 + $0xe68] sm:$0xff]
        %v858 = vld [vmem:[%s310 + $0xe70] sm:$0xff]
        %v859 = vld [vmem:[%s310 + $0xe78] sm:$0xff]
        %v860 = vld [vmem:[%s310 + $0xe80] sm:$0xff]
        %v861 = vld [vmem:[%s310 + $0xe88] sm:$0xff]
        %v862 = vld [vmem:[%s310 + $0xe90] sm:$0xff]
        %v863 = vld [vmem:[%s310 + $0xe98] sm:$0xff]
        %v864 = vld [vmem:[%s310 + $0xea0] sm:$0xff]
        %v865 = vld [vmem:[%s310 + $0xea8] sm:$0xff]
        %v866 = vld [vmem:[%s310 + $0xeb0] sm:$0xff]
        %v867 = vld [vmem:[%s310 + $0xeb8] sm:$0xff]
        %v868 = vld [vmem:[%s310 + $0xec0] sm:$0xff]
        %v869 = vld [vmem:[%s310 + $0xec8] sm:$0xff]
        %v870 = vld [vmem:[%s310 + $0xed0] sm:$0xff]
        %v871 = vld [vmem:[%s310 + $0xed8] sm:$0xff]
        %v872 = vld [vmem:[%s310 + $0xee0] sm:$0xff]
        %v873 = vld [vmem:[%s310 + $0xee8] sm:$0xff]
        %v874 = vld [vmem:[%s310 + $0xef0] sm:$0xff]
        %v875 = vld [vmem:[%s310 + $0xef8] sm:$0xff]
        %v876 = vld [vmem:[%s310 + $0xf00] sm:$0xff]
        %v877 = vld [vmem:[%s310 + $0xf08] sm:$0xff]
        %v878 = vld [vmem:[%s310 + $0xf10] sm:$0xff]
        %v879 = vld [vmem:[%s310 + $0xf18] sm:$0xff]
        %v880 = vld [vmem:[%s310 + $0xf20] sm:$0xff]
        %v881 = vld [vmem:[%s310 + $0xf28] sm:$0xff]
        %v882 = vld [vmem:[%s310 + $0xf30] sm:$0xff]
        %v883 = vld [vmem:[%s310 + $0xf38] sm:$0xff]
        %v884 = vld [vmem:[%s310 + $0xf40] sm:$0xff]
        %v885 = vld [vmem:[%s310 + $0xf48] sm:$0xff]
        %v886 = vld [vmem:[%s310 + $0xf50] sm:$0xff]
        %v887 = vld [vmem:[%s310 + $0xf58] sm:$0xff]
        %v888 = vld [vmem:[%s310 + $0xf60] sm:$0xff]
        %v889 = vld [vmem:[%s310 + $0xf68] sm:$0xff]
        %v890 = vld [vmem:[%s310 + $0xf70] sm:$0xff]
        %v891 = vld [vmem:[%s310 + $0xf78] sm:$0xff]
        %v892 = vld [vmem:[%s310 + $0xf80] sm:$0xff]
        %v893 = vld [vmem:[%s310 + $0xf88] sm:$0xff]
        %v894 = vld [vmem:[%s310 + $0xf90] sm:$0xff]
        %v895 = vld [vmem:[%s310 + $0xf98] sm:$0xff]
        %v896 = vld [vmem:[%s310 + $0xfa0] sm:$0xff]
        %v897 = vld [vmem:[%s310 + $0xfa8] sm:$0xff]
        %v898 = vld [vmem:[%s310 + $0xfb0] sm:$0xff]
        %v899 = vld [vmem:[%s310 + $0xfb8] sm:$0xff]
        %v900 = vld [vmem:[%s310 + $0xfc0] sm:$0xff]
        %v901 = vld [vmem:[%s310 + $0xfc8] sm:$0xff]
        %v902 = vld [vmem:[%s310 + $0xfd0] sm:$0xff]
        %v903 = vld [vmem:[%s310 + $0xfd8] sm:$0xff]
        %v904 = vld [vmem:[%s310 + $0xfe0] sm:$0xff]
        %v905 = vld [vmem:[%s310 + $0xfe8] sm:$0xff]
        %v906 = vld [vmem:[%s310 + $0xff0] sm:$0xff]
        %v907 = vld [vmem:[%s310 + $0xff8] sm:$0xff]
        %v908 = vld [vmem:[%s310 + $0x1000] sm:$0xff]
        %v909 = vld [vmem:[%s310 + $0x1008] sm:$0xff]
        %v910 = vld [vmem:[%s310 + $0x1010] sm:$0xff]
        %v911 = vld [vmem:[%s310 + $0x1018] sm:$0xff]
        %v912 = vld [vmem:[%s310 + $0x1020] sm:$0xff]
        %v913 = vld [vmem:[%s310 + $0x1028] sm:$0xff]
        %v914 = vld [vmem:[%s310 + $0x1030] sm:$0xff]
        %v915 = vld [vmem:[%s310 + $0x1038] sm:$0xff]
        %v916 = vld [vmem:[%s310 + $0x1040] sm:$0xff]
        %v917 = vld [vmem:[%s310 + $0x1048] sm:$0xff]
        %v918 = vld [vmem:[%s310 + $0x1050] sm:$0xff]
        %v919 = vld [vmem:[%s310 + $0x1058] sm:$0xff]
        %v920 = vld [vmem:[%s310 + $0x1060] sm:$0xff]
        %v921 = vld [vmem:[%s310 + $0x1068] sm:$0xff]
        %v922 = vld [vmem:[%s310 + $0x1070] sm:$0xff]
        %v923 = vld [vmem:[%s310 + $0x1078] sm:$0xff]
        %v924 = vld [vmem:[%s310 + $0x1080] sm:$0xff]
        %v925 = vld [vmem:[%s310 + $0x1088] sm:$0xff]
        %v926 = vld [vmem:[%s310 + $0x1090] sm:$0xff]
        %v927 = vld [vmem:[%s310 + $0x1098] sm:$0xff]
        %v928 = vld [vmem:[%s310 + $0x10a0] sm:$0xff]
        %v929 = vld [vmem:[%s310 + $0x10a8] sm:$0xff]
        %v930 = vld [vmem:[%s310 + $0x10b0] sm:$0xff]
        %v931 = vld [vmem:[%s310 + $0x10b8] sm:$0xff]
        %v932 = vld [vmem:[%s310 + $0x10c0] sm:$0xff]
        %v933 = vld [vmem:[%s310 + $0x10c8] sm:$0xff]
        %v934 = vld [vmem:[%s310 + $0x10d0] sm:$0xff]
        %v935 = vld [vmem:[%s310 + $0x10d8] sm:$0xff]
        %v936 = vld [vmem:[%s310 + $0x10e0] sm:$0xff]
        %v937 = vld [vmem:[%s310 + $0x10e8] sm:$0xff]
        %v938 = vld [vmem:[%s310 + $0x10f0] sm:$0xff]
        %v939 = vld [vmem:[%s310 + $0x10f8] sm:$0xff]
        %v940 = vld [vmem:[%s310 + $0x1100] sm:$0xff]
        %v941 = vld [vmem:[%s310 + $0x1108] sm:$0xff]
        %v942 = vld [vmem:[%s310 + $0x1110] sm:$0xff]
        %v943 = vld [vmem:[%s310 + $0x1118] sm:$0xff]
        %v944 = vld [vmem:[%s310 + $0x1120] sm:$0xff]
        %v945 = vld [vmem:[%s310 + $0x1128] sm:$0xff]
        %v946 = vld [vmem:[%s310 + $0x1130] sm:$0xff]
        %v947 = vld [vmem:[%s310 + $0x1138] sm:$0xff]
        %v948 = vld [vmem:[%s310 + $0x1140] sm:$0xff]
        %v949 = vld [vmem:[%s310 + $0x1148] sm:$0xff]
        %v950 = vld [vmem:[%s310 + $0x1150] sm:$0xff]
        %v951 = vld [vmem:[%s310 + $0x1158] sm:$0xff]
        %v952 = vld [vmem:[%s310 + $0x1160] sm:$0xff]
        %v953 = vld [vmem:[%s310 + $0x1168] sm:$0xff]
        %v954 = vld [vmem:[%s310 + $0x1170] sm:$0xff]
        %v955 = vld [vmem:[%s310 + $0x1178] sm:$0xff]
        %v956 = vld [vmem:[%s310 + $0x1180] sm:$0xff]
        %v957 = vld [vmem:[%s310 + $0x1188] sm:$0xff]
        %v958 = vld [vmem:[%s310 + $0x1190] sm:$0xff]
        %v959 = vld [vmem:[%s310 + $0x1198] sm:$0xff]
        %v960 = vld [vmem:[%s310 + $0x11a0] sm:$0xff]
        %v961 = vld [vmem:[%s310 + $0x11a8] sm:$0xff]
        %v962 = vld [vmem:[%s310 + $0x11b0] sm:$0xff]
        %v963 = vld [vmem:[%s310 + $0x11b8] sm:$0xff]
        %v964 = vld [vmem:[%s310 + $0x11c0] sm:$0xff]
        %v965 = vld [vmem:[%s310 + $0x11c8] sm:$0xff]
        %v966 = vld [vmem:[%s310 + $0x11d0] sm:$0xff]
        %v967 = vld [vmem:[%s310 + $0x11d8] sm:$0xff]
        %v968 = vld [vmem:[%s310 + $0x11e0] sm:$0xff]
        %v969 = vld [vmem:[%s310 + $0x11e8] sm:$0xff]
        %v970 = vld [vmem:[%s310 + $0x11f0] sm:$0xff]
        %v971 = vld [vmem:[%s310 + $0x11f8] sm:$0xff]
        %v972 = vld [vmem:[%s310 + $0x1200] sm:$0xff]
        %v973 = vld [vmem:[%s310 + $0x1208] sm:$0xff]
        %v974 = vld [vmem:[%s310 + $0x1210] sm:$0xff]
        %v975 = vld [vmem:[%s310 + $0x1218] sm:$0xff]
        %v976 = vld [vmem:[%s310 + $0x1220] sm:$0xff]
        %v977 = vld [vmem:[%s310 + $0x1228] sm:$0xff]
        %v978 = vld [vmem:[%s310 + $0x1230] sm:$0xff]
        %v979 = vld [vmem:[%s310 + $0x1238] sm:$0xff]
        %v980 = vld [vmem:[%s310 + $0x1240] sm:$0xff]
        %v981 = vld [vmem:[%s310 + $0x1248] sm:$0xff]
        %v982 = vld [vmem:[%s310 + $0x1250] sm:$0xff]
        %v983 = vld [vmem:[%s310 + $0x1258] sm:$0xff]
        %v984 = vld [vmem:[%s310 + $0x1260] sm:$0xff]
        %v985 = vld [vmem:[%s310 + $0x1268] sm:$0xff]
        %v986 = vld [vmem:[%s310 + $0x1270] sm:$0xff]
        %v987 = vld [vmem:[%s310 + $0x1278] sm:$0xff]
        %v988 = vld [vmem:[%s310 + $0x1280] sm:$0xff]
        %v989 = vld [vmem:[%s310 + $0x1288] sm:$0xff]
        %v990 = vld [vmem:[%s310 + $0x1290] sm:$0xff]
        %v991 = vld [vmem:[%s310 + $0x1298] sm:$0xff]
        %v992 = vld [vmem:[%s310 + $0x12a0] sm:$0xff]
        %v993 = vld [vmem:[%s310 + $0x12a8] sm:$0xff]
        %v994 = vld [vmem:[%s310 + $0x12b0] sm:$0xff]
        %v995 = vld [vmem:[%s310 + $0x12b8] sm:$0xff]
        %v996 = vld [vmem:[%s310 + $0x12c0] sm:$0xff]
        %v997 = vld [vmem:[%s310 + $0x12c8] sm:$0xff]
        %v998 = vld [vmem:[%s310 + $0x12d0] sm:$0xff]
        %v999 = vld [vmem:[%s310 + $0x12d8] sm:$0xff]
        %v1000 = vld [vmem:[%s310 + $0x12e0] sm:$0xff]
        %v1001 = vld [vmem:[%s310 + $0x12e8] sm:$0xff]
        %v1002 = vld [vmem:[%s310 + $0x12f0] sm:$0xff]
        %v1003 = vld [vmem:[%s310 + $0x12f8] sm:$0xff]
        %v1004 = vld [vmem:[%s310 + $0x1300] sm:$0xff]
        %v1005 = vld [vmem:[%s310 + $0x1308] sm:$0xff]
        %v1006 = vld [vmem:[%s310 + $0x1310] sm:$0xff]
        %v1007 = vld [vmem:[%s310 + $0x1318] sm:$0xff]
        %v1008 = vld [vmem:[%s310 + $0x1320] sm:$0xff]
        %v1009 = vld [vmem:[%s310 + $0x1328] sm:$0xff]
        %v1010 = vld [vmem:[%s310 + $0x1330] sm:$0xff]
        %v1011 = vld [vmem:[%s310 + $0x1338] sm:$0xff]
        %v1012 = vld [vmem:[%s310 + $0x1340] sm:$0xff]
        %v1013 = vld [vmem:[%s310 + $0x1348] sm:$0xff]
        %v1014 = vld [vmem:[%s310 + $0x1350] sm:$0xff]
        %v1015 = vld [vmem:[%s310 + $0x1358] sm:$0xff]
        %v1016 = vld [vmem:[%s310 + $0x1360] sm:$0xff]
        %v1017 = vld [vmem:[%s310 + $0x1368] sm:$0xff]
        %v1018 = vld [vmem:[%s310 + $0x1370] sm:$0xff]
        %v1019 = vld [vmem:[%s310 + $0x1378] sm:$0xff]
        %v1020 = vld [vmem:[%s310 + $0x1380] sm:$0xff]
        %v1021 = vld [vmem:[%s310 + $0x1388] sm:$0xff]
        %v1022 = vld [vmem:[%s310 + $0x1390] sm:$0xff]
        %v1023 = vld [vmem:[%s310 + $0x1398] sm:$0xff]
        %v1024 = vld [vmem:[%s310 + $0x13a0] sm:$0xff]
        %v1025 = vld [vmem:[%s310 + $0x13a8] sm:$0xff]
        %v1026 = vld [vmem:[%s310 + $0x13b0] sm:$0xff]
        %v1027 = vld [vmem:[%s310 + $0x13b8] sm:$0xff]
        %v1028 = vld [vmem:[%s310 + $0x13c0] sm:$0xff]
        %v1029 = vld [vmem:[%s310 + $0x13c8] sm:$0xff]
        %v1030 = vld [vmem:[%s310 + $0x13d0] sm:$0xff]
        %v1031 = vld [vmem:[%s310 + $0x13d8] sm:$0xff]
        %v1032 = vld [vmem:[%s310 + $0x13e0] sm:$0xff]
        %v1033 = vld [vmem:[%s310 + $0x13e8] sm:$0xff]
        %v1034 = vld [vmem:[%s310 + $0x13f0] sm:$0xff]
        %v1035 = vld [vmem:[%s310 + $0x13f8] sm:$0xff]
        %v1036 = vld [vmem:[%s310 + $0x1400] sm:$0xff]
        %v1037 = vld [vmem:[%s310 + $0x1408] sm:$0xff]
        %v1038 = vld [vmem:[%s310 + $0x1410] sm:$0xff]
        %v1039 = vld [vmem:[%s310 + $0x1418] sm:$0xff]
        %v1040 = vld [vmem:[%s310 + $0x1420] sm:$0xff]
        %v1041 = vld [vmem:[%s310 + $0x1428] sm:$0xff]
        %v1042 = vld [vmem:[%s310 + $0x1430] sm:$0xff]
        %v1043 = vld [vmem:[%s310 + $0x1438] sm:$0xff]
        %v1044 = vld [vmem:[%s310 + $0x1440] sm:$0xff]
        %v1045 = vld [vmem:[%s310 + $0x1448] sm:$0xff]
        %v1046 = vld [vmem:[%s310 + $0x1450] sm:$0xff]
        %v1047 = vld [vmem:[%s310 + $0x1458] sm:$0xff]
        %v1048 = vld [vmem:[%s310 + $0x1460] sm:$0xff]
        %v1049 = vld [vmem:[%s310 + $0x1468] sm:$0xff]
        %v1050 = vld [vmem:[%s310 + $0x1470] sm:$0xff]
        %v1051 = vld [vmem:[%s310 + $0x1478] sm:$0xff]
        %v1052 = vld [vmem:[%s310 + $0x1480] sm:$0xff]
        %v1053 = vld [vmem:[%s310 + $0x1488] sm:$0xff]
        %v1054 = vld [vmem:[%s310 + $0x1490] sm:$0xff]
        %v1055 = vld [vmem:[%s310 + $0x1498] sm:$0xff]
        %v1056 = vld [vmem:[%s310 + $0x14a0] sm:$0xff]
        %v1057 = vld [vmem:[%s310 + $0x14a8] sm:$0xff]
        %v1058 = vld [vmem:[%s310 + $0x14b0] sm:$0xff]
        %v1059 = vld [vmem:[%s310 + $0x14b8] sm:$0xff]
        %v1060 = vld [vmem:[%s310 + $0x14c0] sm:$0xff]
        %v1061 = vld [vmem:[%s310 + $0x14c8] sm:$0xff]
        %v1062 = vld [vmem:[%s310 + $0x14d0] sm:$0xff]
        %v1063 = vld [vmem:[%s310 + $0x14d8] sm:$0xff]
        %v1064 = vld [vmem:[%s310 + $0x14e0] sm:$0xff]
        %v1065 = vld [vmem:[%s310 + $0x14e8] sm:$0xff]
        %v1066 = vld [vmem:[%s310 + $0x14f0] sm:$0xff]
        %v1067 = vld [vmem:[%s310 + $0x14f8] sm:$0xff]
        %v1068 = vld [vmem:[%s310 + $0x1500] sm:$0xff]
        %v1069 = vld [vmem:[%s310 + $0x1508] sm:$0xff]
        %v1070 = vld [vmem:[%s310 + $0x1510] sm:$0xff]
        %v1071 = vld [vmem:[%s310 + $0x1518] sm:$0xff]
        %v1072 = vld [vmem:[%s310 + $0x1520] sm:$0xff]
        %v1073 = vld [vmem:[%s310 + $0x1528] sm:$0xff]
        %v1074 = vld [vmem:[%s310 + $0x1530] sm:$0xff]
        %v1075 = vld [vmem:[%s310 + $0x1538] sm:$0xff]
        %v1076 = vld [vmem:[%s310 + $0x1540] sm:$0xff]
        %v1077 = vld [vmem:[%s310 + $0x1548] sm:$0xff]
        %v1078 = vld [vmem:[%s310 + $0x1550] sm:$0xff]
        %v1079 = vld [vmem:[%s310 + $0x1558] sm:$0xff]
        %v1080 = vld [vmem:[%s310 + $0x1560] sm:$0xff]
        %v1081 = vld [vmem:[%s310 + $0x1568] sm:$0xff]
        %v1082 = vld [vmem:[%s310 + $0x1570] sm:$0xff]
        %v1083 = vld [vmem:[%s310 + $0x1578] sm:$0xff]
        %v1084 = vld [vmem:[%s310 + $0x1580] sm:$0xff]
        %v1085 = vld [vmem:[%s310 + $0x1588] sm:$0xff]
        %v1086 = vld [vmem:[%s310 + $0x1590] sm:$0xff]
        %v1087 = vld [vmem:[%s310 + $0x1598] sm:$0xff]
        %v1088 = vld [vmem:[%s310 + $0x15a0] sm:$0xff]
        %v1089 = vld [vmem:[%s310 + $0x15a8] sm:$0xff]
        %v1090 = vld [vmem:[%s310 + $0x15b0] sm:$0xff]
        %v1091 = vld [vmem:[%s310 + $0x15b8] sm:$0xff]
        %v1092 = vld [vmem:[%s310 + $0x15c0] sm:$0xff]
        %v1093 = vld [vmem:[%s310 + $0x15c8] sm:$0xff]
        %v1094 = vld [vmem:[%s310 + $0x15d0] sm:$0xff]
        %v1095 = vld [vmem:[%s310 + $0x15d8] sm:$0xff]
        %v1096 = vld [vmem:[%s310 + $0x15e0] sm:$0xff]
        %v1097 = vld [vmem:[%s310 + $0x15e8] sm:$0xff]
        %v1098 = vld [vmem:[%s310 + $0x15f0] sm:$0xff]
        %v1099 = vld [vmem:[%s310 + $0x15f8] sm:$0xff]
        %v1100 = vld [vmem:[%s310 + $0x1600] sm:$0xff]
        %v1101 = vld [vmem:[%s310 + $0x1608] sm:$0xff]
        %v1102 = vld [vmem:[%s310 + $0x1610] sm:$0xff]
        %v1103 = vld [vmem:[%s310 + $0x1618] sm:$0xff]
        %v1104 = vld [vmem:[%s310 + $0x1620] sm:$0xff]
        %v1105 = vld [vmem:[%s310 + $0x1628] sm:$0xff]
        %v1106 = vld [vmem:[%s310 + $0x1630] sm:$0xff]
        %v1107 = vld [vmem:[%s310 + $0x1638] sm:$0xff]
        %v1108 = vld [vmem:[%s310 + $0x1640] sm:$0xff]
        %v1109 = vld [vmem:[%s310 + $0x1648] sm:$0xff]
        %v1110 = vld [vmem:[%s310 + $0x1650] sm:$0xff]
        %v1111 = vld [vmem:[%s310 + $0x1658] sm:$0xff]
        %v1112 = vld [vmem:[%s310 + $0x1660] sm:$0xff]
        %v1113 = vld [vmem:[%s310 + $0x1668] sm:$0xff]
        %v1114 = vld [vmem:[%s310 + $0x1670] sm:$0xff]
        %v1115 = vld [vmem:[%s310 + $0x1678] sm:$0xff]
        %v1116 = vld [vmem:[%s310 + $0x1680] sm:$0xff]
        %v1117 = vld [vmem:[%s310 + $0x1688] sm:$0xff]
        %v1118 = vld [vmem:[%s310 + $0x1690] sm:$0xff]
        %v1119 = vld [vmem:[%s310 + $0x1698] sm:$0xff]
        %v1120 = vld [vmem:[%s310 + $0x16a0] sm:$0xff]
        %v1121 = vld [vmem:[%s310 + $0x16a8] sm:$0xff]
        %v1122 = vld [vmem:[%s310 + $0x16b0] sm:$0xff]
        %v1123 = vld [vmem:[%s310 + $0x16b8] sm:$0xff]
        %v1124 = vld [vmem:[%s310 + $0x16c0] sm:$0xff]
        %v1125 = vld [vmem:[%s310 + $0x16c8] sm:$0xff]
        %v1126 = vld [vmem:[%s310 + $0x16d0] sm:$0xff]
        %v1127 = vld [vmem:[%s310 + $0x16d8] sm:$0xff]
        %v1128 = vld [vmem:[%s310 + $0x16e0] sm:$0xff]
        %v1129 = vld [vmem:[%s310 + $0x16e8] sm:$0xff]
        %v1130 = vld [vmem:[%s310 + $0x16f0] sm:$0xff]
        %v1131 = vld [vmem:[%s310 + $0x16f8] sm:$0xff]
        %v1132 = vld [vmem:[%s310 + $0x1700] sm:$0xff]
        %v1133 = vld [vmem:[%s310 + $0x1708] sm:$0xff]
        %v1134 = vld [vmem:[%s310 + $0x1710] sm:$0xff]
        %v1135 = vld [vmem:[%s310 + $0x1718] sm:$0xff]
        %v1136 = vld [vmem:[%s310 + $0x1720] sm:$0xff]
        %v1137 = vld [vmem:[%s310 + $0x1728] sm:$0xff]
        %v1138 = vld [vmem:[%s310 + $0x1730] sm:$0xff]
        %v1139 = vld [vmem:[%s310 + $0x1738] sm:$0xff]
        %v1140 = vld [vmem:[%s310 + $0x1740] sm:$0xff]
        %v1141 = vld [vmem:[%s310 + $0x1748] sm:$0xff]
        %v1142 = vld [vmem:[%s310 + $0x1750] sm:$0xff]
        %v1143 = vld [vmem:[%s310 + $0x1758] sm:$0xff]
        %v1144 = vld [vmem:[%s310 + $0x1760] sm:$0xff]
        %v1145 = vld [vmem:[%s310 + $0x1768] sm:$0xff]
        %v1146 = vld [vmem:[%s310 + $0x1770] sm:$0xff]
        %v1147 = vld [vmem:[%s310 + $0x1778] sm:$0xff]
        %v1148 = vld [vmem:[%s310 + $0x1780] sm:$0xff]
        %v1149 = vld [vmem:[%s310 + $0x1788] sm:$0xff]
        %v1150 = vld [vmem:[%s310 + $0x1790] sm:$0xff]
        %v1151 = vld [vmem:[%s310 + $0x1798] sm:$0xff]
        %v1152 = vld [vmem:[%s310 + $0x17a0] sm:$0xff]
        %v1153 = vld [vmem:[%s310 + $0x17a8] sm:$0xff]
        %v1154 = vld [vmem:[%s310 + $0x17b0] sm:$0xff]
        %v1155 = vld [vmem:[%s310 + $0x17b8] sm:$0xff]
        %v1156 = vld [vmem:[%s310 + $0x17c0] sm:$0xff]
        %v1157 = vld [vmem:[%s310 + $0x17c8] sm:$0xff]
        %v1158 = vld [vmem:[%s310 + $0x17d0] sm:$0xff]
        %v1159 = vld [vmem:[%s310 + $0x17d8] sm:$0xff]
        %v1160 = vld [vmem:[%s310 + $0x17e0] sm:$0xff]
        %v1161 = vld [vmem:[%s310 + $0x17e8] sm:$0xff]
        %v1162 = vld [vmem:[%s310 + $0x17f0] sm:$0xff]
        %v1163 = vld [vmem:[%s310 + $0x17f8] sm:$0xff]
        %v1164 = vld [vmem:[%s310 + $0x1800] sm:$0xff]
        %v1165 = vld [vmem:[%s310 + $0x1808] sm:$0xff]
        %v1166 = vld [vmem:[%s310 + $0x1810] sm:$0xff]
        %v1167 = vld [vmem:[%s310 + $0x1818] sm:$0xff]
        %v1168 = vld [vmem:[%s310 + $0x1820] sm:$0xff]
        %v1169 = vld [vmem:[%s310 + $0x1828] sm:$0xff]
        %v1170 = vld [vmem:[%s310 + $0x1830] sm:$0xff]
        %v1171 = vld [vmem:[%s310 + $0x1838] sm:$0xff]
        %v1172 = vld [vmem:[%s310 + $0x1840] sm:$0xff]
        %v1173 = vld [vmem:[%s310 + $0x1848] sm:$0xff]
        %v1174 = vld [vmem:[%s310 + $0x1850] sm:$0xff]
        %v1175 = vld [vmem:[%s310 + $0x1858] sm:$0xff]
        %v1176 = vld [vmem:[%s310 + $0x1860] sm:$0xff]
        %v1177 = vld [vmem:[%s310 + $0x1868] sm:$0xff]
        %v1178 = vld [vmem:[%s310 + $0x1870] sm:$0xff]
        %v1179 = vld [vmem:[%s310 + $0x1878] sm:$0xff]
        %v1180 = vld [vmem:[%s310 + $0x1880] sm:$0xff]
        %v1181 = vld [vmem:[%s310 + $0x1888] sm:$0xff]
        %v1182 = vld [vmem:[%s310 + $0x1890] sm:$0xff]
        %v1183 = vld [vmem:[%s310 + $0x1898] sm:$0xff]
        %v1184 = vld [vmem:[%s310 + $0x18a0] sm:$0xff]
        %v1185 = vld [vmem:[%s310 + $0x18a8] sm:$0xff]
        %v1186 = vld [vmem:[%s310 + $0x18b0] sm:$0xff]
        %v1187 = vld [vmem:[%s310 + $0x18b8] sm:$0xff]
        %v1188 = vld [vmem:[%s310 + $0x18c0] sm:$0xff]
        %v1189 = vld [vmem:[%s310 + $0x18c8] sm:$0xff]
        %v1190 = vld [vmem:[%s310 + $0x18d0] sm:$0xff]
        %v1191 = vld [vmem:[%s310 + $0x18d8] sm:$0xff]
        %v1192 = vld [vmem:[%s310 + $0x18e0] sm:$0xff]
        %v1193 = vld [vmem:[%s310 + $0x18e8] sm:$0xff]
        %v1194 = vld [vmem:[%s310 + $0x18f0] sm:$0xff]
        %v1195 = vld [vmem:[%s310 + $0x18f8] sm:$0xff]
        %v1196 = vld [vmem:[%s310 + $0x1900] sm:$0xff]
        %v1197 = vld [vmem:[%s310 + $0x1908] sm:$0xff]
        %v1198 = vld [vmem:[%s310 + $0x1910] sm:$0xff]
        %v1199 = vld [vmem:[%s310 + $0x1918] sm:$0xff]
        %v1200 = vld [vmem:[%s310 + $0x1920] sm:$0xff]
        %v1201 = vld [vmem:[%s310 + $0x1928] sm:$0xff]
        %v1202 = vld [vmem:[%s310 + $0x1930] sm:$0xff]
        %v1203 = vld [vmem:[%s310 + $0x1938] sm:$0xff]
        %v1204 = vld [vmem:[%s310 + $0x1940] sm:$0xff]
        %v1205 = vld [vmem:[%s310 + $0x1948] sm:$0xff]
        %v1206 = vld [vmem:[%s310 + $0x1950] sm:$0xff]
        %v1207 = vld [vmem:[%s310 + $0x1958] sm:$0xff]
        %v1208 = vld [vmem:[%s310 + $0x1960] sm:$0xff]
        %v1209 = vld [vmem:[%s310 + $0x1968] sm:$0xff]
        %v1210 = vld [vmem:[%s310 + $0x1970] sm:$0xff]
        %v1211 = vld [vmem:[%s310 + $0x1978] sm:$0xff]
        %v1212 = vld [vmem:[%s310 + $0x1980] sm:$0xff]
        %v1213 = vld [vmem:[%s310 + $0x1988] sm:$0xff]
        %v1214 = vld [vmem:[%s310 + $0x1990] sm:$0xff]
        %v1215 = vld [vmem:[%s310 + $0x1998] sm:$0xff]
        %v1216 = vld [vmem:[%s310 + $0x19a0] sm:$0xff]
        %v1217 = vld [vmem:[%s310 + $0x19a8] sm:$0xff]
        %v1218 = vld [vmem:[%s310 + $0x19b0] sm:$0xff]
        %v1219 = vld [vmem:[%s310 + $0x19b8] sm:$0xff]
        %v1220 = vld [vmem:[%s310 + $0x19c0] sm:$0xff]
        %v1221 = vld [vmem:[%s310 + $0x19c8] sm:$0xff]
        %v1222 = vld [vmem:[%s310 + $0x19d0] sm:$0xff]
        %v1223 = vld [vmem:[%s310 + $0x19d8] sm:$0xff]
        %v1224 = vld [vmem:[%s310 + $0x19e0] sm:$0xff]
        %v1225 = vld [vmem:[%s310 + $0x19e8] sm:$0xff]
        %v1226 = vld [vmem:[%s310 + $0x19f0] sm:$0xff]
        %v1227 = vld [vmem:[%s310 + $0x19f8] sm:$0xff]
        %v1228 = vld [vmem:[%s310 + $0x1a00] sm:$0xff]
        %v1229 = vld [vmem:[%s310 + $0x1a08] sm:$0xff]
        %v1230 = vld [vmem:[%s310 + $0x1a10] sm:$0xff]
        %v1231 = vld [vmem:[%s310 + $0x1a18] sm:$0xff]
        %v1232 = vld [vmem:[%s310 + $0x1a20] sm:$0xff]
        %v1233 = vld [vmem:[%s310 + $0x1a28] sm:$0xff]
        %v1234 = vld [vmem:[%s310 + $0x1a30] sm:$0xff]
        %v1235 = vld [vmem:[%s310 + $0x1a38] sm:$0xff]
        %v1236 = vld [vmem:[%s310 + $0x1a40] sm:$0xff]
        %v1237 = vld [vmem:[%s310 + $0x1a48] sm:$0xff]
        %v1238 = vld [vmem:[%s310 + $0x1a50] sm:$0xff]
        %v1239 = vld [vmem:[%s310 + $0x1a58] sm:$0xff]
        %v1240 = vld [vmem:[%s310 + $0x1a60] sm:$0xff]
        %v1241 = vld [vmem:[%s310 + $0x1a68] sm:$0xff]
        %v1242 = vld [vmem:[%s310 + $0x1a70] sm:$0xff]
        %v1243 = vld [vmem:[%s310 + $0x1a78] sm:$0xff]
        %v1244 = vld [vmem:[%s310 + $0x1a80] sm:$0xff]
        %v1245 = vld [vmem:[%s310 + $0x1a88] sm:$0xff]
        %v1246 = vld [vmem:[%s310 + $0x1a90] sm:$0xff]
        %v1247 = vld [vmem:[%s310 + $0x1a98] sm:$0xff]
        %v1248 = vld [vmem:[%s310 + $0x1aa0] sm:$0xff]
        %v1249 = vld [vmem:[%s310 + $0x1aa8] sm:$0xff]
        %v1250 = vld [vmem:[%s310 + $0x1ab0] sm:$0xff]
        %v1251 = vld [vmem:[%s310 + $0x1ab8] sm:$0xff]
        %v1252 = vld [vmem:[%s310 + $0x1ac0] sm:$0xff]
        %v1253 = vld [vmem:[%s310 + $0x1ac8] sm:$0xff]
        %v1254 = vld [vmem:[%s310 + $0x1ad0] sm:$0xff]
        %v1255 = vld [vmem:[%s310 + $0x1ad8] sm:$0xff]
        %v1256 = vld [vmem:[%s310 + $0x1ae0] sm:$0xff]
        %v1257 = vld [vmem:[%s310 + $0x1ae8] sm:$0xff]
        %v1258 = vld [vmem:[%s310 + $0x1af0] sm:$0xff]
        %v1259 = vld [vmem:[%s310 + $0x1af8] sm:$0xff]
        %v1260 = vld [vmem:[%s310 + $0x1b00] sm:$0xff]
        %v1261 = vld [vmem:[%s310 + $0x1b08] sm:$0xff]
        %v1262 = vld [vmem:[%s310 + $0x1b10] sm:$0xff]
        %v1263 = vld [vmem:[%s310 + $0x1b18] sm:$0xff]
        %v1264 = vld [vmem:[%s310 + $0x1b20] sm:$0xff]
        %v1265 = vld [vmem:[%s310 + $0x1b28] sm:$0xff]
        %v1266 = vld [vmem:[%s310 + $0x1b30] sm:$0xff]
        %v1267 = vld [vmem:[%s310 + $0x1b38] sm:$0xff]
        %v1268 = vld [vmem:[%s310 + $0x1b40] sm:$0xff]
        %v1269 = vld [vmem:[%s310 + $0x1b48] sm:$0xff]
        %v1270 = vld [vmem:[%s310 + $0x1b50] sm:$0xff]
        %v1271 = vld [vmem:[%s310 + $0x1b58] sm:$0xff]
        %v1272 = vld [vmem:[%s310 + $0x1b60] sm:$0xff]
        %v1273 = vld [vmem:[%s310 + $0x1b68] sm:$0xff]
        %v1274 = vld [vmem:[%s310 + $0x1b70] sm:$0xff]
        %v1275 = vld [vmem:[%s310 + $0x1b78] sm:$0xff]
        %v1276 = vld [vmem:[%s310 + $0x1b80] sm:$0xff]
        %v1277 = vld [vmem:[%s310 + $0x1b88] sm:$0xff]
        %v1278 = vld [vmem:[%s310 + $0x1b90] sm:$0xff]
        %v1279 = vld [vmem:[%s310 + $0x1b98] sm:$0xff]
        %v1280 = vld [vmem:[%s310 + $0x1ba0] sm:$0xff]
        %v1281 = vld [vmem:[%s310 + $0x1ba8] sm:$0xff]
        %v1282 = vld [vmem:[%s310 + $0x1bb0] sm:$0xff]
        %v1283 = vld [vmem:[%s310 + $0x1bb8] sm:$0xff]
        %v1284 = vld [vmem:[%s310 + $0x1bc0] sm:$0xff]
        %v1285 = vld [vmem:[%s310 + $0x1bc8] sm:$0xff]
        %v1286 = vld [vmem:[%s310 + $0x1bd0] sm:$0xff]
        %v1287 = vld [vmem:[%s310 + $0x1bd8] sm:$0xff]
        %v1288 = vld [vmem:[%s310 + $0x1be0] sm:$0xff]
        %v1289 = vld [vmem:[%s310 + $0x1be8] sm:$0xff]
        %v1290 = vld [vmem:[%s310 + $0x1bf0] sm:$0xff]
        %v1291 = vld [vmem:[%s310 + $0x1bf8] sm:$0xff]
        %v1292 = vld [vmem:[%s310 + $0x1c00] sm:$0xff]
        %v1293 = vld [vmem:[%s310 + $0x1c08] sm:$0xff]
        %v1294 = vld [vmem:[%s310 + $0x1c10] sm:$0xff]
        %v1295 = vld [vmem:[%s310 + $0x1c18] sm:$0xff]
        %v1296 = vld [vmem:[%s310 + $0x1c20] sm:$0xff]
        %v1297 = vld [vmem:[%s310 + $0x1c28] sm:$0xff]
        %v1298 = vld [vmem:[%s310 + $0x1c30] sm:$0xff]
        %v1299 = vld [vmem:[%s310 + $0x1c38] sm:$0xff]
        %v1300 = vld [vmem:[%s310 + $0x1c40] sm:$0xff]
        %v1301 = vld [vmem:[%s310 + $0x1c48] sm:$0xff]
        %v1302 = vld [vmem:[%s310 + $0x1c50] sm:$0xff]
        %v1303 = vld [vmem:[%s310 + $0x1c58] sm:$0xff]
        %v1304 = vld [vmem:[%s310 + $0x1c60] sm:$0xff]
        %v1305 = vld [vmem:[%s310 + $0x1c68] sm:$0xff]
        %v1306 = vld [vmem:[%s310 + $0x1c70] sm:$0xff]
        %v1307 = vld [vmem:[%s310 + $0x1c78] sm:$0xff]
        %v1308 = vld [vmem:[%s310 + $0x1c80] sm:$0xff]
        %v1309 = vld [vmem:[%s310 + $0x1c88] sm:$0xff]
        %v1310 = vld [vmem:[%s310 + $0x1c90] sm:$0xff]
        %v1311 = vld [vmem:[%s310 + $0x1c98] sm:$0xff]
        %v1312 = vld [vmem:[%s310 + $0x1ca0] sm:$0xff]
        %v1313 = vld [vmem:[%s310 + $0x1ca8] sm:$0xff]
        %v1314 = vld [vmem:[%s310 + $0x1cb0] sm:$0xff]
        %v1315 = vld [vmem:[%s310 + $0x1cb8] sm:$0xff]
        %v1316 = vld [vmem:[%s310 + $0x1cc0] sm:$0xff]
        %v1317 = vld [vmem:[%s310 + $0x1cc8] sm:$0xff]
        %v1318 = vld [vmem:[%s310 + $0x1cd0] sm:$0xff]
        %v1319 = vld [vmem:[%s310 + $0x1cd8] sm:$0xff]
        %v1320 = vld [vmem:[%s310 + $0x1ce0] sm:$0xff]
        %v1321 = vld [vmem:[%s310 + $0x1ce8] sm:$0xff]
        %v1322 = vld [vmem:[%s310 + $0x1cf0] sm:$0xff]
        %v1323 = vld [vmem:[%s310 + $0x1cf8] sm:$0xff]
        %v1324 = vld [vmem:[%s310 + $0x1d00] sm:$0xff]
        %v1325 = vld [vmem:[%s310 + $0x1d08] sm:$0xff]
        %v1326 = vld [vmem:[%s310 + $0x1d10] sm:$0xff]
        %v1327 = vld [vmem:[%s310 + $0x1d18] sm:$0xff]
        %v1328 = vld [vmem:[%s310 + $0x1d20] sm:$0xff]
        %v1329 = vld [vmem:[%s310 + $0x1d28] sm:$0xff]
        %v1330 = vld [vmem:[%s310 + $0x1d30] sm:$0xff]
        %v1331 = vld [vmem:[%s310 + $0x1d38] sm:$0xff]
        %v1332 = vld [vmem:[%s310 + $0x1d40] sm:$0xff]
        %v1333 = vld [vmem:[%s310 + $0x1d48] sm:$0xff]
        %v1334 = vld [vmem:[%s310 + $0x1d50] sm:$0xff]
        %v1335 = vld [vmem:[%s310 + $0x1d58] sm:$0xff]
        %v1336 = vld [vmem:[%s310 + $0x1d60] sm:$0xff]
        %v1337 = vld [vmem:[%s310 + $0x1d68] sm:$0xff]
        %v1338 = vld [vmem:[%s310 + $0x1d70] sm:$0xff]
        %v1339 = vld [vmem:[%s310 + $0x1d78] sm:$0xff]
        %v1340 = vld [vmem:[%s310 + $0x1d80] sm:$0xff]
        %v1341 = vld [vmem:[%s310 + $0x1d88] sm:$0xff]
        %v1342 = vld [vmem:[%s310 + $0x1d90] sm:$0xff]
        %v1343 = vld [vmem:[%s310 + $0x1d98] sm:$0xff]
        %v1344 = vld [vmem:[%s310 + $0x1da0] sm:$0xff]
        %v1345 = vld [vmem:[%s310 + $0x1da8] sm:$0xff]
        %v1346 = vld [vmem:[%s310 + $0x1db0] sm:$0xff]
        %v1347 = vld [vmem:[%s310 + $0x1db8] sm:$0xff]
        %v1348 = vld [vmem:[%s310 + $0x1dc0] sm:$0xff]
        %v1349 = vld [vmem:[%s310 + $0x1dc8] sm:$0xff]
        %v1350 = vld [vmem:[%s310 + $0x1dd0] sm:$0xff]
        %v1351 = vld [vmem:[%s310 + $0x1dd8] sm:$0xff]
        %v1352 = vld [vmem:[%s310 + $0x1de0] sm:$0xff]
        %v1353 = vld [vmem:[%s310 + $0x1de8] sm:$0xff]
        %v1354 = vld [vmem:[%s310 + $0x1df0] sm:$0xff]
        %v1355 = vld [vmem:[%s310 + $0x1df8] sm:$0xff]
        %v1356 = vld [vmem:[%s310 + $0x1e00] sm:$0xff]
        %v1357 = vld [vmem:[%s310 + $0x1e08] sm:$0xff]
        %v1358 = vld [vmem:[%s310 + $0x1e10] sm:$0xff]
        %v1359 = vld [vmem:[%s310 + $0x1e18] sm:$0xff]
        %v1360 = vld [vmem:[%s310 + $0x1e20] sm:$0xff]
        %v1361 = vld [vmem:[%s310 + $0x1e28] sm:$0xff]
        %v1362 = vld [vmem:[%s310 + $0x1e30] sm:$0xff]
        %v1363 = vld [vmem:[%s310 + $0x1e38] sm:$0xff]
        %v1364 = vld [vmem:[%s310 + $0x1e40] sm:$0xff]
        %v1365 = vld [vmem:[%s310 + $0x1e48] sm:$0xff]
        %v1366 = vld [vmem:[%s310 + $0x1e50] sm:$0xff]
        %v1367 = vld [vmem:[%s310 + $0x1e58] sm:$0xff]
        %v1368 = vld [vmem:[%s310 + $0x1e60] sm:$0xff]
        %v1369 = vld [vmem:[%s310 + $0x1e68] sm:$0xff]
        %v1370 = vld [vmem:[%s310 + $0x1e70] sm:$0xff]
        %v1371 = vld [vmem:[%s310 + $0x1e78] sm:$0xff]
        %v1372 = vld [vmem:[%s310 + $0x1e80] sm:$0xff]
        %v1373 = vld [vmem:[%s310 + $0x1e88] sm:$0xff]
        %v1374 = vld [vmem:[%s310 + $0x1e90] sm:$0xff]
        %v1375 = vld [vmem:[%s310 + $0x1e98] sm:$0xff]
        %v1376 = vld [vmem:[%s310 + $0x1ea0] sm:$0xff]
        %v1377 = vld [vmem:[%s310 + $0x1ea8] sm:$0xff]
        %v1378 = vld [vmem:[%s310 + $0x1eb0] sm:$0xff]
        %v1379 = vld [vmem:[%s310 + $0x1eb8] sm:$0xff]
        %v1380 = vld [vmem:[%s310 + $0x1ec0] sm:$0xff]
        %v1381 = vld [vmem:[%s310 + $0x1ec8] sm:$0xff]
        %v1382 = vld [vmem:[%s310 + $0x1ed0] sm:$0xff]
        %v1383 = vld [vmem:[%s310 + $0x1ed8] sm:$0xff]
        %v1384 = vld [vmem:[%s310 + $0x1ee0] sm:$0xff]
        %v1385 = vld [vmem:[%s310 + $0x1ee8] sm:$0xff]
        %v1386 = vld [vmem:[%s310 + $0x1ef0] sm:$0xff]
        %v1387 = vld [vmem:[%s310 + $0x1ef8] sm:$0xff]
        %v1388 = vld [vmem:[%s310 + $0x1f00] sm:$0xff]
        %v1389 = vld [vmem:[%s310 + $0x1f08] sm:$0xff]
        %v1390 = vld [vmem:[%s310 + $0x1f10] sm:$0xff]
        %v1391 = vld [vmem:[%s310 + $0x1f18] sm:$0xff]
        %v1392 = vld [vmem:[%s310 + $0x1f20] sm:$0xff]
        %v1393 = vld [vmem:[%s310 + $0x1f28] sm:$0xff]
        %v1394 = vld [vmem:[%s310 + $0x1f30] sm:$0xff]
        %v1395 = vld [vmem:[%s310 + $0x1f38] sm:$0xff]
        %v1396 = vld [vmem:[%s310 + $0x1f40] sm:$0xff]
        %v1397 = vld [vmem:[%s310 + $0x1f48] sm:$0xff]
        %v1398 = vld [vmem:[%s310 + $0x1f50] sm:$0xff]
        %v1399 = vld [vmem:[%s310 + $0x1f58] sm:$0xff]
        %v1400 = vld [vmem:[%s310 + $0x1f60] sm:$0xff]
        %v1401 = vld [vmem:[%s310 + $0x1f68] sm:$0xff]
        %v1402 = vld [vmem:[%s310 + $0x1f70] sm:$0xff]
        %v1403 = vld [vmem:[%s310 + $0x1f78] sm:$0xff]
        %v1404 = vld [vmem:[%s310 + $0x1f80] sm:$0xff]
        %v1405 = vld [vmem:[%s310 + $0x1f88] sm:$0xff]
        %v1406 = vld [vmem:[%s310 + $0x1f90] sm:$0xff]
        %v1407 = vld [vmem:[%s310 + $0x1f98] sm:$0xff]
        %v1408 = vld [vmem:[%s310 + $0x1fa0] sm:$0xff]
        %v1409 = vld [vmem:[%s310 + $0x1fa8] sm:$0xff]
        %v1410 = vld [vmem:[%s310 + $0x1fb0] sm:$0xff]
        %v1411 = vld [vmem:[%s310 + $0x1fb8] sm:$0xff]
        %v1412 = vld [vmem:[%s310 + $0x1fc0] sm:$0xff]
        %v1413 = vld [vmem:[%s310 + $0x1fc8] sm:$0xff]
        %v1414 = vld [vmem:[%s310 + $0x1fd0] sm:$0xff]
        %v1415 = vld [vmem:[%s310 + $0x1fd8] sm:$0xff]
        %v1416 = vld [vmem:[%s310 + $0x1fe0] sm:$0xff]
        %v1417 = vld [vmem:[%s310 + $0x1fe8] sm:$0xff]
        %v1418 = vld [vmem:[%s310 + $0x1ff0] sm:$0xff]
        %v1419 = vld [vmem:[%s310 + $0x1ff8] sm:$0xff]
        %v1420 = vld [vmem:[%s310 + $0x2000] sm:$0xff]
        %v1421 = vld [vmem:[%s310 + $0x2008] sm:$0xff]
        %v1422 = vld [vmem:[%s310 + $0x2010] sm:$0xff]
        %v1423 = vld [vmem:[%s310 + $0x2018] sm:$0xff]
        %v1424 = vld [vmem:[%s310 + $0x2020] sm:$0xff]
        %v1425 = vld [vmem:[%s310 + $0x2028] sm:$0xff]
        %v1426 = vld [vmem:[%s310 + $0x2030] sm:$0xff]
        %v1427 = vld [vmem:[%s310 + $0x2038] sm:$0xff]
        %v1428 = vld [vmem:[%s310 + $0x2040] sm:$0xff]
        %v1429 = vld [vmem:[%s310 + $0x2048] sm:$0xff]
        %v1430 = vld [vmem:[%s310 + $0x2050] sm:$0xff]
        %v1431 = vld [vmem:[%s310 + $0x2058] sm:$0xff]
        %v1432 = vld [vmem:[%s310 + $0x2060] sm:$0xff]
        %v1433 = vld [vmem:[%s310 + $0x2068] sm:$0xff]
        %v1434 = vld [vmem:[%s310 + $0x2070] sm:$0xff]
        %v1435 = vld [vmem:[%s310 + $0x2078] sm:$0xff]
        %v1436 = vld [vmem:[%s310 + $0x2080] sm:$0xff]
        %v1437 = vld [vmem:[%s310 + $0x2088] sm:$0xff]
        %v1438 = vld [vmem:[%s310 + $0x2090] sm:$0xff]
        %v1439 = vld [vmem:[%s310 + $0x2098] sm:$0xff]
        %v1440 = vld [vmem:[%s310 + $0x20a0] sm:$0xff]
        %v1441 = vld [vmem:[%s310 + $0x20a8] sm:$0xff]
        %v1442 = vld [vmem:[%s310 + $0x20b0] sm:$0xff]
        %v1443 = vld [vmem:[%s310 + $0x20b8] sm:$0xff]
        %v1444 = vld [vmem:[%s310 + $0x20c0] sm:$0xff]
        %v1445 = vld [vmem:[%s310 + $0x20c8] sm:$0xff]
        %v1446 = vld [vmem:[%s310 + $0x20d0] sm:$0xff]
        %v1447 = vld [vmem:[%s310 + $0x20d8] sm:$0xff]
        %v1448 = vld [vmem:[%s310 + $0x20e0] sm:$0xff]
        %v1449 = vld [vmem:[%s310 + $0x20e8] sm:$0xff]
        %v1450 = vld [vmem:[%s310 + $0x20f0] sm:$0xff]
        %v1451 = vld [vmem:[%s310 + $0x20f8] sm:$0xff]
        %v1452 = vld [vmem:[%s310 + $0x2100] sm:$0xff]
        %v1453 = vld [vmem:[%s310 + $0x2108] sm:$0xff]
        %v1454 = vld [vmem:[%s310 + $0x2110] sm:$0xff]
        %v1455 = vld [vmem:[%s310 + $0x2118] sm:$0xff]
        %v1456 = vld [vmem:[%s310 + $0x2120] sm:$0xff]
        %v1457 = vld [vmem:[%s310 + $0x2128] sm:$0xff]
        %v1458 = vld [vmem:[%s310 + $0x2130] sm:$0xff]
        %v1459 = vld [vmem:[%s310 + $0x2138] sm:$0xff]
        %v1460 = vld [vmem:[%s310 + $0x2140] sm:$0xff]
        %v1461 = vld [vmem:[%s310 + $0x2148] sm:$0xff]
        %v1462 = vld [vmem:[%s310 + $0x2150] sm:$0xff]
        %v1463 = vld [vmem:[%s310 + $0x2158] sm:$0xff]
        %v1464 = vld [vmem:[%s310 + $0x2160] sm:$0xff]
        %v1465 = vld [vmem:[%s310 + $0x2168] sm:$0xff]
        %v1466 = vld [vmem:[%s310 + $0x2170] sm:$0xff]
        %v1467 = vld [vmem:[%s310 + $0x2178] sm:$0xff]
        %v1468 = vld [vmem:[%s310 + $0x2180] sm:$0xff]
        %v1469 = vld [vmem:[%s310 + $0x2188] sm:$0xff]
        %v1470 = vld [vmem:[%s310 + $0x2190] sm:$0xff]
        %v1471 = vld [vmem:[%s310 + $0x2198] sm:$0xff]
        %v1472 = vld [vmem:[%s310 + $0x21a0] sm:$0xff]
        %v1473 = vld [vmem:[%s310 + $0x21a8] sm:$0xff]
        %v1474 = vld [vmem:[%s310 + $0x21b0] sm:$0xff]
        %v1475 = vld [vmem:[%s310 + $0x21b8] sm:$0xff]
        %v1476 = vld [vmem:[%s310 + $0x21c0] sm:$0xff]
        %v1477 = vld [vmem:[%s310 + $0x21c8] sm:$0xff]
        %v1478 = vld [vmem:[%s310 + $0x21d0] sm:$0xff]
        %v1479 = vld [vmem:[%s310 + $0x21d8] sm:$0xff]
        %v1480 = vld [vmem:[%s310 + $0x21e0] sm:$0xff]
        %v1481 = vld [vmem:[%s310 + $0x21e8] sm:$0xff]
        %v1482 = vld [vmem:[%s310 + $0x21f0] sm:$0xff]
        %v1483 = vld [vmem:[%s310 + $0x21f8] sm:$0xff]
        %v1484 = vld [vmem:[%s310 + $0x2200] sm:$0xff]
        %v1485 = vld [vmem:[%s310 + $0x2208] sm:$0xff]
        %v1486 = vld [vmem:[%s310 + $0x2210] sm:$0xff]
        %v1487 = vld [vmem:[%s310 + $0x2218] sm:$0xff]
        %v1488 = vld [vmem:[%s310 + $0x2220] sm:$0xff]
        %v1489 = vld [vmem:[%s310 + $0x2228] sm:$0xff]
        %v1490 = vld [vmem:[%s310 + $0x2230] sm:$0xff]
        %v1491 = vld [vmem:[%s310 + $0x2238] sm:$0xff]
        %v1492 = vld [vmem:[%s310 + $0x2240] sm:$0xff]
        %v1493 = vld [vmem:[%s310 + $0x2248] sm:$0xff]
        %v1494 = vld [vmem:[%s310 + $0x2250] sm:$0xff]
        %v1495 = vld [vmem:[%s310 + $0x2258] sm:$0xff]
        %v1496 = vld [vmem:[%s310 + $0x2260] sm:$0xff]
        %v1497 = vld [vmem:[%s310 + $0x2268] sm:$0xff]
        %v1498 = vld [vmem:[%s310 + $0x2270] sm:$0xff]
        %v1499 = vld [vmem:[%s310 + $0x2278] sm:$0xff]
        %v1500 = vld [vmem:[%s310 + $0x2280] sm:$0xff]
        %v1501 = vld [vmem:[%s310 + $0x2288] sm:$0xff]
        %v1502 = vld [vmem:[%s310 + $0x2290] sm:$0xff]
        %v1503 = vld [vmem:[%s310 + $0x2298] sm:$0xff]
        %v1504 = vld [vmem:[%s310 + $0x22a0] sm:$0xff]
        %v1505 = vld [vmem:[%s310 + $0x22a8] sm:$0xff]
        %v1506 = vld [vmem:[%s310 + $0x22b0] sm:$0xff]
        %v1507 = vld [vmem:[%s310 + $0x22b8] sm:$0xff]
        %v1508 = vld [vmem:[%s310 + $0x22c0] sm:$0xff]
        %v1509 = vld [vmem:[%s310 + $0x22c8] sm:$0xff]
        %v1510 = vld [vmem:[%s310 + $0x22d0] sm:$0xff]
        %v1511 = vld [vmem:[%s310 + $0x22d8] sm:$0xff]
        %v1512 = vld [vmem:[%s310 + $0x22e0] sm:$0xff]
        %v1513 = vld [vmem:[%s310 + $0x22e8] sm:$0xff]
        %v1514 = vld [vmem:[%s310 + $0x22f0] sm:$0xff]
        %v1515 = vld [vmem:[%s310 + $0x22f8] sm:$0xff]
        %v1516 = vld [vmem:[%s310 + $0x2300] sm:$0xff]
        %v1517 = vld [vmem:[%s310 + $0x2308] sm:$0xff]
        %v1518 = vld [vmem:[%s310 + $0x2310] sm:$0xff]
        %v1519 = vld [vmem:[%s310 + $0x2318] sm:$0xff]
        %v1520 = vld [vmem:[%s310 + $0x2320] sm:$0xff]
        %v1521 = vld [vmem:[%s310 + $0x2328] sm:$0xff]
        %v1522 = vld [vmem:[%s310 + $0x2330] sm:$0xff]
        %v1523 = vld [vmem:[%s310 + $0x2338] sm:$0xff]
        %v1524 = vld [vmem:[%s310 + $0x2340] sm:$0xff]
        %v1525 = vld [vmem:[%s310 + $0x2348] sm:$0xff]
        %v1526 = vld [vmem:[%s310 + $0x2350] sm:$0xff]
        %v1527 = vld [vmem:[%s310 + $0x2358] sm:$0xff]
        %v1528 = vld [vmem:[%s310 + $0x2360] sm:$0xff]
        %v1529 = vld [vmem:[%s310 + $0x2368] sm:$0xff]
        %v1530 = vld [vmem:[%s310 + $0x2370] sm:$0xff]
        %v1531 = vld [vmem:[%s310 + $0x2378] sm:$0xff]
        %v1532 = vld [vmem:[%s310 + $0x2380] sm:$0xff]
        %v1533 = vld [vmem:[%s310 + $0x2388] sm:$0xff]
        %v1534 = vld [vmem:[%s310 + $0x2390] sm:$0xff]
        %v1535 = vld [vmem:[%s310 + $0x2398] sm:$0xff]
        %v1536 = vld [vmem:[%s310 + $0x23a0] sm:$0xff]
        %v1537 = vld [vmem:[%s310 + $0x23a8] sm:$0xff]
        %v1538 = vld [vmem:[%s310 + $0x23b0] sm:$0xff]
        %v1539 = vld [vmem:[%s310 + $0x23b8] sm:$0xff]
        %v1540 = vld [vmem:[%s310 + $0x23c0] sm:$0xff]
        %v1541 = vld [vmem:[%s310 + $0x23c8] sm:$0xff]
        %v1542 = vld [vmem:[%s310 + $0x23d0] sm:$0xff]
        %v1543 = vld [vmem:[%s310 + $0x23d8] sm:$0xff]
        %v1544 = vld [vmem:[%s310 + $0x23e0] sm:$0xff]
        %v1545 = vld [vmem:[%s310 + $0x23e8] sm:$0xff]
        %v1546 = vld [vmem:[%s310 + $0x23f0] sm:$0xff]
        %v1547 = vld [vmem:[%s310 + $0x23f8] sm:$0xff]
        %v1548 = vld [vmem:[%s310 + $0x2400] sm:$0xff]
        %v1549 = vld [vmem:[%s310 + $0x2408] sm:$0xff]
        %v1550 = vld [vmem:[%s310 + $0x2410] sm:$0xff]
        %v1551 = vld [vmem:[%s310 + $0x2418] sm:$0xff]
        %v1552 = vld [vmem:[%s310 + $0x2420] sm:$0xff]
        %v1553 = vld [vmem:[%s310 + $0x2428] sm:$0xff]
        %v1554 = vld [vmem:[%s310 + $0x2430] sm:$0xff]
        %v1555 = vld [vmem:[%s310 + $0x2438] sm:$0xff]
        %v1556 = vld [vmem:[%s310 + $0x2440] sm:$0xff]
        %v1557 = vld [vmem:[%s310 + $0x2448] sm:$0xff]
        %v1558 = vld [vmem:[%s310 + $0x2450] sm:$0xff]
        %v1559 = vld [vmem:[%s310 + $0x2458] sm:$0xff]
        %v1560 = vld [vmem:[%s310 + $0x2460] sm:$0xff]
        %v1561 = vld [vmem:[%s310 + $0x2468] sm:$0xff]
        %v1562 = vld [vmem:[%s310 + $0x2470] sm:$0xff]
        %v1563 = vld [vmem:[%s310 + $0x2478] sm:$0xff]
        %v1564 = vld [vmem:[%s310 + $0x2480] sm:$0xff]
        %v1565 = vld [vmem:[%s310 + $0x2488] sm:$0xff]
        %v1566 = vld [vmem:[%s310 + $0x2490] sm:$0xff]
        %v1567 = vld [vmem:[%s310 + $0x2498] sm:$0xff]
        %v1568 = vld [vmem:[%s310 + $0x24a0] sm:$0xff]
        %v1569 = vld [vmem:[%s310 + $0x24a8] sm:$0xff]
        %v1570 = vld [vmem:[%s310 + $0x24b0] sm:$0xff]
        %v1571 = vld [vmem:[%s310 + $0x24b8] sm:$0xff]
        %v1572 = vld [vmem:[%s310 + $0x24c0] sm:$0xff]
        %v1573 = vld [vmem:[%s310 + $0x24c8] sm:$0xff]
        %v1574 = vld [vmem:[%s310 + $0x24d0] sm:$0xff]
        %v1575 = vld [vmem:[%s310 + $0x24d8] sm:$0xff]
        %v1576 = vld [vmem:[%s310 + $0x24e0] sm:$0xff]
        %v1577 = vld [vmem:[%s310 + $0x24e8] sm:$0xff]
        %v1578 = vld [vmem:[%s310 + $0x24f0] sm:$0xff]
        %v1579 = vld [vmem:[%s310 + $0x24f8] sm:$0xff]
        %v1580 = vld [vmem:[%s310 + $0x2500] sm:$0xff]
        %v1581 = vld [vmem:[%s310 + $0x2508] sm:$0xff]
        %v1582 = vld [vmem:[%s310 + $0x2510] sm:$0xff]
        %v1583 = vld [vmem:[%s310 + $0x2518] sm:$0xff]
        %v1584 = vld [vmem:[%s310 + $0x2520] sm:$0xff]
        %v1585 = vld [vmem:[%s310 + $0x2528] sm:$0xff]
        %v1586 = vld [vmem:[%s310 + $0x2530] sm:$0xff]
        %v1587 = vld [vmem:[%s310 + $0x2538] sm:$0xff]
        %v1588 = vld [vmem:[%s310 + $0x2540] sm:$0xff]
        %v1589 = vld [vmem:[%s310 + $0x2548] sm:$0xff]
        %v1590 = vld [vmem:[%s310 + $0x2550] sm:$0xff]
        %v1591 = vld [vmem:[%s310 + $0x2558] sm:$0xff]
        %v1592 = vld [vmem:[%s310 + $0x2560] sm:$0xff]
        %v1593 = vld [vmem:[%s310 + $0x2568] sm:$0xff]
        %v1594 = vld [vmem:[%s310 + $0x2570] sm:$0xff]
        %v1595 = vld [vmem:[%s310 + $0x2578] sm:$0xff]
        %v1596 = vld [vmem:[%s310 + $0x2580] sm:$0xff]
        %v1597 = vld [vmem:[%s310 + $0x2588] sm:$0xff]
        %v1598 = vld [vmem:[%s310 + $0x2590] sm:$0xff]
        %v1599 = vld [vmem:[%s310 + $0x2598] sm:$0xff]
        %v1600 = vld [vmem:[%s310 + $0x25a0] sm:$0xff]
        %v1601 = vld [vmem:[%s310 + $0x25a8] sm:$0xff]
        %v1602 = vld [vmem:[%s310 + $0x25b0] sm:$0xff]
        %v1603 = vld [vmem:[%s310 + $0x25b8] sm:$0xff]
        %v1604 = vld [vmem:[%s310 + $0x25c0] sm:$0xff]
        %v1605 = vld [vmem:[%s310 + $0x25c8] sm:$0xff]
        %v1606 = vld [vmem:[%s310 + $0x25d0] sm:$0xff]
        %v1607 = vld [vmem:[%s310 + $0x25d8] sm:$0xff]
        %v1608 = vld [vmem:[%s310 + $0x25e0] sm:$0xff]
        %v1609 = vld [vmem:[%s310 + $0x25e8] sm:$0xff]
        %v1610 = vld [vmem:[%s310 + $0x25f0] sm:$0xff]
        %v1611 = vld [vmem:[%s310 + $0x25f8] sm:$0xff]
        %v1612 = vld [vmem:[%s310 + $0x2600] sm:$0xff]
        %v1613 = vld [vmem:[%s310 + $0x2608] sm:$0xff]
        %v1614 = vld [vmem:[%s310 + $0x2610] sm:$0xff]
        %v1615 = vld [vmem:[%s310 + $0x2618] sm:$0xff]
        %v1616 = vld [vmem:[%s310 + $0x2620] sm:$0xff]
        %v1617 = vld [vmem:[%s310 + $0x2628] sm:$0xff]
        %v1618 = vld [vmem:[%s310 + $0x2630] sm:$0xff]
        %v1619 = vld [vmem:[%s310 + $0x2638] sm:$0xff]
        %v1620 = vld [vmem:[%s310 + $0x2640] sm:$0xff]
        %v1621 = vld [vmem:[%s310 + $0x2648] sm:$0xff]
        %v1622 = vld [vmem:[%s310 + $0x2650] sm:$0xff]
        %v1623 = vld [vmem:[%s310 + $0x2658] sm:$0xff]
        %v1624 = vld [vmem:[%s310 + $0x2660] sm:$0xff]
        %v1625 = vld [vmem:[%s310 + $0x2668] sm:$0xff]
        %v1626 = vld [vmem:[%s310 + $0x2670] sm:$0xff]
        %v1627 = vld [vmem:[%s310 + $0x2678] sm:$0xff]
        %v1628 = vld [vmem:[%s310 + $0x2680] sm:$0xff]
        %v1629 = vld [vmem:[%s310 + $0x2688] sm:$0xff]
        %v1630 = vld [vmem:[%s310 + $0x2690] sm:$0xff]
        %v1631 = vld [vmem:[%s310 + $0x2698] sm:$0xff]
        %v1632 = vld [vmem:[%s310 + $0x26a0] sm:$0xff]
        %v1633 = vld [vmem:[%s310 + $0x26a8] sm:$0xff]
        %v1634 = vld [vmem:[%s310 + $0x26b0] sm:$0xff]
        %v1635 = vld [vmem:[%s310 + $0x26b8] sm:$0xff]
        %v1636 = vld [vmem:[%s310 + $0x26c0] sm:$0xff]
        %v1637 = vld [vmem:[%s310 + $0x26c8] sm:$0xff]
        %v1638 = vld [vmem:[%s310 + $0x26d0] sm:$0xff]
        %v1639 = vld [vmem:[%s310 + $0x26d8] sm:$0xff]
        %v1640 = vld [vmem:[%s310 + $0x26e0] sm:$0xff]
        %v1641 = vld [vmem:[%s310 + $0x26e8] sm:$0xff]
        %v1642 = vld [vmem:[%s310 + $0x26f0] sm:$0xff]
        %v1643 = vld [vmem:[%s310 + $0x26f8] sm:$0xff]
        %v1644 = vld [vmem:[%s310 + $0x2700] sm:$0xff]
        %v1645 = vld [vmem:[%s310 + $0x2708] sm:$0xff]
        %v1646 = vld [vmem:[%s310 + $0x2710] sm:$0xff]
        %v1647 = vld [vmem:[%s310 + $0x2718] sm:$0xff]
        %v1648 = vld [vmem:[%s310 + $0x2720] sm:$0xff]
        %v1649 = vld [vmem:[%s310 + $0x2728] sm:$0xff]
        %v1650 = vld [vmem:[%s310 + $0x2730] sm:$0xff]
        %v1651 = vld [vmem:[%s310 + $0x2738] sm:$0xff]
        %v1652 = vld [vmem:[%s310 + $0x2740] sm:$0xff]
        %v1653 = vld [vmem:[%s310 + $0x2748] sm:$0xff]
        %v1654 = vld [vmem:[%s310 + $0x2750] sm:$0xff]
        %v1655 = vld [vmem:[%s310 + $0x2758] sm:$0xff]
        %v1656 = vld [vmem:[%s310 + $0x2760] sm:$0xff]
        %v1657 = vld [vmem:[%s310 + $0x2768] sm:$0xff]
        %v1658 = vld [vmem:[%s310 + $0x2770] sm:$0xff]
        %v1659 = vld [vmem:[%s310 + $0x2778] sm:$0xff]
        %v1660 = vld [vmem:[%s310 + $0x2780] sm:$0xff]
        %v1661 = vld [vmem:[%s310 + $0x2788] sm:$0xff]
        %v1662 = vld [vmem:[%s310 + $0x2790] sm:$0xff]
        %v1663 = vld [vmem:[%s310 + $0x2798] sm:$0xff]
        %v1664 = vld [vmem:[%s310 + $0x27a0] sm:$0xff]
        %v1665 = vld [vmem:[%s310 + $0x27a8] sm:$0xff]
        %v1666 = vld [vmem:[%s310 + $0x27b0] sm:$0xff]
        %v1667 = vld [vmem:[%s310 + $0x27b8] sm:$0xff]
        %v1668 = vld [vmem:[%s310 + $0x27c0] sm:$0xff]
        %v1669 = vld [vmem:[%s310 + $0x27c8] sm:$0xff]
        %v1670 = vld [vmem:[%s310 + $0x27d0] sm:$0xff]
        %v1671 = vld [vmem:[%s310 + $0x27d8] sm:$0xff]
        %v1672 = vld [vmem:[%s310 + $0x27e0] sm:$0xff]
        %v1673 = vld [vmem:[%s310 + $0x27e8] sm:$0xff]
        %v1674 = vld [vmem:[%s310 + $0x27f0] sm:$0xff]
        %v1675 = vld [vmem:[%s310 + $0x27f8] sm:$0xff]
        %v1676 = vld [vmem:[%s310 + $0x2800] sm:$0xff]
        %v1677 = vld [vmem:[%s310 + $0x2808] sm:$0xff]
        %v1678 = vld [vmem:[%s310 + $0x2810] sm:$0xff]
        %v1679 = vld [vmem:[%s310 + $0x2818] sm:$0xff]
        %v1680 = vld [vmem:[%s310 + $0x2820] sm:$0xff]
        %v1681 = vld [vmem:[%s310 + $0x2828] sm:$0xff]
        %v1682 = vld [vmem:[%s310 + $0x2830] sm:$0xff]
        %v1683 = vld [vmem:[%s310 + $0x2838] sm:$0xff]
        %v1684 = vld [vmem:[%s310 + $0x2840] sm:$0xff]
        %v1685 = vld [vmem:[%s310 + $0x2848] sm:$0xff]
        %v1686 = vld [vmem:[%s310 + $0x2850] sm:$0xff]
        %v1687 = vld [vmem:[%s310 + $0x2858] sm:$0xff]
        %v1688 = vld [vmem:[%s310 + $0x2860] sm:$0xff]
        %v1689 = vld [vmem:[%s310 + $0x2868] sm:$0xff]
        %v1690 = vld [vmem:[%s310 + $0x2870] sm:$0xff]
        %v1691 = vld [vmem:[%s310 + $0x2878] sm:$0xff]
        %v1692 = vld [vmem:[%s310 + $0x2880] sm:$0xff]
        %v1693 = vld [vmem:[%s310 + $0x2888] sm:$0xff]
        %v1694 = vld [vmem:[%s310 + $0x2890] sm:$0xff]
        %v1695 = vld [vmem:[%s310 + $0x2898] sm:$0xff]
        %v1696 = vld [vmem:[%s310 + $0x28a0] sm:$0xff]
        %v1697 = vld [vmem:[%s310 + $0x28a8] sm:$0xff]
        %v1698 = vld [vmem:[%s310 + $0x28b0] sm:$0xff]
        %v1699 = vld [vmem:[%s310 + $0x28b8] sm:$0xff]
        %v1700 = vld [vmem:[%s310 + $0x28c0] sm:$0xff]
        %v1701 = vld [vmem:[%s310 + $0x28c8] sm:$0xff]
        %v1702 = vld [vmem:[%s310 + $0x28d0] sm:$0xff]
        %v1703 = vld [vmem:[%s310 + $0x28d8] sm:$0xff]
        %v1704 = vld [vmem:[%s310 + $0x28e0] sm:$0xff]
        %v1705 = vld [vmem:[%s310 + $0x28e8] sm:$0xff]
        %v1706 = vld [vmem:[%s310 + $0x28f0] sm:$0xff]
        %v1707 = vld [vmem:[%s310 + $0x28f8] sm:$0xff]
        %v1708 = vld [vmem:[%s310 + $0x2900] sm:$0xff]
        %v1709 = vld [vmem:[%s310 + $0x2908] sm:$0xff]
        %v1710 = vld [vmem:[%s310 + $0x2910] sm:$0xff]
        %v1711 = vld [vmem:[%s310 + $0x2918] sm:$0xff]
        %v1712 = vld [vmem:[%s310 + $0x2920] sm:$0xff]
        %v1713 = vld [vmem:[%s310 + $0x2928] sm:$0xff]
        %v1714 = vld [vmem:[%s310 + $0x2930] sm:$0xff]
        %v1715 = vld [vmem:[%s310 + $0x2938] sm:$0xff]
        %v1716 = vld [vmem:[%s310 + $0x2940] sm:$0xff]
        %v1717 = vld [vmem:[%s310 + $0x2948] sm:$0xff]
        %v1718 = vld [vmem:[%s310 + $0x2950] sm:$0xff]
        %v1719 = vld [vmem:[%s310 + $0x2958] sm:$0xff]
        %v1720 = vld [vmem:[%s310 + $0x2960] sm:$0xff]
        %v1721 = vld [vmem:[%s310 + $0x2968] sm:$0xff]
        %v1722 = vld [vmem:[%s310 + $0x2970] sm:$0xff]
        %v1723 = vld [vmem:[%s310 + $0x2978] sm:$0xff]
        %v1724 = vld [vmem:[%s310 + $0x2980] sm:$0xff]
        %v1725 = vld [vmem:[%s310 + $0x2988] sm:$0xff]
        %v1726 = vld [vmem:[%s310 + $0x2990] sm:$0xff]
        %v1727 = vld [vmem:[%s310 + $0x2998] sm:$0xff]
        %v1728 = vld [vmem:[%s310 + $0x29a0] sm:$0xff]
        %v1729 = vld [vmem:[%s310 + $0x29a8] sm:$0xff]
        %v1730 = vld [vmem:[%s310 + $0x29b0] sm:$0xff]
        %v1731 = vld [vmem:[%s310 + $0x29b8] sm:$0xff]
        %v1732 = vld [vmem:[%s310 + $0x29c0] sm:$0xff]
        %v1733 = vld [vmem:[%s310 + $0x29c8] sm:$0xff]
        %v1734 = vld [vmem:[%s310 + $0x29d0] sm:$0xff]
        %v1735 = vld [vmem:[%s310 + $0x29d8] sm:$0xff]
        %v1736 = vld [vmem:[%s310 + $0x29e0] sm:$0xff]
        %v1737 = vld [vmem:[%s310 + $0x29e8] sm:$0xff]
        %v1738 = vld [vmem:[%s310 + $0x29f0] sm:$0xff]
        %v1739 = vld [vmem:[%s310 + $0x29f8] sm:$0xff]
        %v1740 = vld [vmem:[%s310 + $0x2a00] sm:$0xff]
        %v1741 = vld [vmem:[%s310 + $0x2a08] sm:$0xff]
        %v1742 = vld [vmem:[%s310 + $0x2a10] sm:$0xff]
        %v1743 = vld [vmem:[%s310 + $0x2a18] sm:$0xff]
        %v1744 = vld [vmem:[%s310 + $0x2a20] sm:$0xff]
        %v1745 = vld [vmem:[%s310 + $0x2a28] sm:$0xff]
        %v1746 = vld [vmem:[%s310 + $0x2a30] sm:$0xff]
        %v1747 = vld [vmem:[%s310 + $0x2a38] sm:$0xff]
        %v1748 = vld [vmem:[%s310 + $0x2a40] sm:$0xff]
        %v1749 = vld [vmem:[%s310 + $0x2a48] sm:$0xff]
        %v1750 = vld [vmem:[%s310 + $0x2a50] sm:$0xff]
        %v1751 = vld [vmem:[%s310 + $0x2a58] sm:$0xff]
        %v1752 = vld [vmem:[%s310 + $0x2a60] sm:$0xff]
        %v1753 = vld [vmem:[%s310 + $0x2a68] sm:$0xff]
        %v1754 = vld [vmem:[%s310 + $0x2a70] sm:$0xff]
        %v1755 = vld [vmem:[%s310 + $0x2a78] sm:$0xff]
        %v1756 = vld [vmem:[%s310 + $0x2a80] sm:$0xff]
        %v1757 = vld [vmem:[%s310 + $0x2a88] sm:$0xff]
        %v1758 = vld [vmem:[%s310 + $0x2a90] sm:$0xff]
        %v1759 = vld [vmem:[%s310 + $0x2a98] sm:$0xff]
        %v1760 = vld [vmem:[%s310 + $0x2aa0] sm:$0xff]
        %v1761 = vld [vmem:[%s310 + $0x2aa8] sm:$0xff]
        %v1762 = vld [vmem:[%s310 + $0x2ab0] sm:$0xff]
        %v1763 = vld [vmem:[%s310 + $0x2ab8] sm:$0xff]
        %v1764 = vld [vmem:[%s310 + $0x2ac0] sm:$0xff]
        %v1765 = vld [vmem:[%s310 + $0x2ac8] sm:$0xff]
        %v1766 = vld [vmem:[%s310 + $0x2ad0] sm:$0xff]
        %v1767 = vld [vmem:[%s310 + $0x2ad8] sm:$0xff]
        %v1768 = vld [vmem:[%s310 + $0x2ae0] sm:$0xff]
        %v1769 = vld [vmem:[%s310 + $0x2ae8] sm:$0xff]
        %v1770 = vld [vmem:[%s310 + $0x2af0] sm:$0xff]
        %v1771 = vld [vmem:[%s310 + $0x2af8] sm:$0xff]
        %v1772 = vld [vmem:[%s310 + $0x2b00] sm:$0xff]
        %v1773 = vld [vmem:[%s310 + $0x2b08] sm:$0xff]
        %v1774 = vld [vmem:[%s310 + $0x2b10] sm:$0xff]
        %v1775 = vld [vmem:[%s310 + $0x2b18] sm:$0xff]
        %v1776 = vld [vmem:[%s310 + $0x2b20] sm:$0xff]
        %v1777 = vld [vmem:[%s310 + $0x2b28] sm:$0xff]
        %v1778 = vld [vmem:[%s310 + $0x2b30] sm:$0xff]
        %v1779 = vld [vmem:[%s310 + $0x2b38] sm:$0xff]
        %v1780 = vld [vmem:[%s310 + $0x2b40] sm:$0xff]
        %v1781 = vld [vmem:[%s310 + $0x2b48] sm:$0xff]
        %v1782 = vld [vmem:[%s310 + $0x2b50] sm:$0xff]
        %v1783 = vld [vmem:[%s310 + $0x2b58] sm:$0xff]
        %v1784 = vld [vmem:[%s310 + $0x2b60] sm:$0xff]
        %v1785 = vld [vmem:[%s310 + $0x2b68] sm:$0xff]
        %v1786 = vld [vmem:[%s310 + $0x2b70] sm:$0xff]
        %v1787 = vld [vmem:[%s310 + $0x2b78] sm:$0xff]
        %v1788 = vld [vmem:[%s310 + $0x2b80] sm:$0xff]
        %v1789 = vld [vmem:[%s310 + $0x2b88] sm:$0xff]
        %v1790 = vld [vmem:[%s310 + $0x2b90] sm:$0xff]
        %v1791 = vld [vmem:[%s310 + $0x2b98] sm:$0xff]
        %v1792 = vld [vmem:[%s310 + $0x2ba0] sm:$0xff]
        %v1793 = vld [vmem:[%s310 + $0x2ba8] sm:$0xff]
        %v1794 = vld [vmem:[%s310 + $0x2bb0] sm:$0xff]
        %v1795 = vld [vmem:[%s310 + $0x2bb8] sm:$0xff]
        %v1796 = vld [vmem:[%s310 + $0x2bc0] sm:$0xff]
        %v1797 = vld [vmem:[%s310 + $0x2bc8] sm:$0xff]
        %v1798 = vld [vmem:[%s310 + $0x2bd0] sm:$0xff]
        %v1799 = vld [vmem:[%s310 + $0x2bd8] sm:$0xff]
        %v1800 = vld [vmem:[%s310 + $0x2be0] sm:$0xff]
        %v1801 = vld [vmem:[%s310 + $0x2be8] sm:$0xff]
        %v1802 = vld [vmem:[%s310 + $0x2bf0] sm:$0xff]
        %v1803 = vld [vmem:[%s310 + $0x2bf8] sm:$0xff]
        %v1804 = vld [vmem:[%s310 + $0x2c00] sm:$0xff]
        %v1805 = vld [vmem:[%s310 + $0x2c08] sm:$0xff]
        %v1806 = vld [vmem:[%s310 + $0x2c10] sm:$0xff]
        %v1807 = vld [vmem:[%s310 + $0x2c18] sm:$0xff]
        %v1808 = vld [vmem:[%s310 + $0x2c20] sm:$0xff]
        %v1809 = vld [vmem:[%s310 + $0x2c28] sm:$0xff]
        %v1810 = vld [vmem:[%s310 + $0x2c30] sm:$0xff]
        %v1811 = vld [vmem:[%s310 + $0x2c38] sm:$0xff]
        %v1812 = vld [vmem:[%s310 + $0x2c40] sm:$0xff]
        %v1813 = vld [vmem:[%s310 + $0x2c48] sm:$0xff]
        %v1814 = vld [vmem:[%s310 + $0x2c50] sm:$0xff]
        %v1815 = vld [vmem:[%s310 + $0x2c58] sm:$0xff]
        %v1816 = vld [vmem:[%s310 + $0x2c60] sm:$0xff]
        %v1817 = vld [vmem:[%s310 + $0x2c68] sm:$0xff]
        %v1818 = vld [vmem:[%s310 + $0x2c70] sm:$0xff]
        %v1819 = vld [vmem:[%s310 + $0x2c78] sm:$0xff]
        %v1820 = vld [vmem:[%s310 + $0x2c80] sm:$0xff]
        %v1821 = vld [vmem:[%s310 + $0x2c88] sm:$0xff]
        %v1822 = vld [vmem:[%s310 + $0x2c90] sm:$0xff]
        %v1823 = vld [vmem:[%s310 + $0x2c98] sm:$0xff]
        %v1824 = vld [vmem:[%s310 + $0x2ca0] sm:$0xff]
        %v1825 = vld [vmem:[%s310 + $0x2ca8] sm:$0xff]
        %v1826 = vld [vmem:[%s310 + $0x2cb0] sm:$0xff]
        %v1827 = vld [vmem:[%s310 + $0x2cb8] sm:$0xff]
        %v1828 = vld [vmem:[%s310 + $0x2cc0] sm:$0xff]
        %v1829 = vld [vmem:[%s310 + $0x2cc8] sm:$0xff]
        %v1830 = vld [vmem:[%s310 + $0x2cd0] sm:$0xff]
        %v1831 = vld [vmem:[%s310 + $0x2cd8] sm:$0xff]
        %v1832 = vld [vmem:[%s310 + $0x2ce0] sm:$0xff]
        %v1833 = vld [vmem:[%s310 + $0x2ce8] sm:$0xff]
        %v1834 = vld [vmem:[%s310 + $0x2cf0] sm:$0xff]
        %v1835 = vld [vmem:[%s310 + $0x2cf8] sm:$0xff]
        %v1836 = vld [vmem:[%s310 + $0x2d00] sm:$0xff]
        %v1837 = vld [vmem:[%s310 + $0x2d08] sm:$0xff]
        %v1838 = vld [vmem:[%s310 + $0x2d10] sm:$0xff]
        %v1839 = vld [vmem:[%s310 + $0x2d18] sm:$0xff]
        %v1840 = vld [vmem:[%s310 + $0x2d20] sm:$0xff]
        %v1841 = vld [vmem:[%s310 + $0x2d28] sm:$0xff]
        %v1842 = vld [vmem:[%s310 + $0x2d30] sm:$0xff]
        %v1843 = vld [vmem:[%s310 + $0x2d38] sm:$0xff]
        %v1844 = vld [vmem:[%s310 + $0x2d40] sm:$0xff]
        %v1845 = vld [vmem:[%s310 + $0x2d48] sm:$0xff]
        %v1846 = vld [vmem:[%s310 + $0x2d50] sm:$0xff]
        %v1847 = vld [vmem:[%s310 + $0x2d58] sm:$0xff]
        %v1848 = vld [vmem:[%s310 + $0x2d60] sm:$0xff]
        %v1849 = vld [vmem:[%s310 + $0x2d68] sm:$0xff]
        %v1850 = vld [vmem:[%s310 + $0x2d70] sm:$0xff]
        %v1851 = vld [vmem:[%s310 + $0x2d78] sm:$0xff]
        %v1852 = vld [vmem:[%s310 + $0x2d80] sm:$0xff]
        %v1853 = vld [vmem:[%s310 + $0x2d88] sm:$0xff]
        %v1854 = vld [vmem:[%s310 + $0x2d90] sm:$0xff]
        %v1855 = vld [vmem:[%s310 + $0x2d98] sm:$0xff]
        %v1856 = vld [vmem:[%s310 + $0x2da0] sm:$0xff]
        %v1857 = vld [vmem:[%s310 + $0x2da8] sm:$0xff]
        %v1858 = vld [vmem:[%s310 + $0x2db0] sm:$0xff]
        %v1859 = vld [vmem:[%s310 + $0x2db8] sm:$0xff]
        %v1860 = vld [vmem:[%s310 + $0x2dc0] sm:$0xff]
        %v1861 = vld [vmem:[%s310 + $0x2dc8] sm:$0xff]
        %v1862 = vld [vmem:[%s310 + $0x2dd0] sm:$0xff]
        %v1863 = vld [vmem:[%s310 + $0x2dd8] sm:$0xff]
        %v1864 = vld [vmem:[%s310 + $0x2de0] sm:$0xff]
        %v1865 = vld [vmem:[%s310 + $0x2de8] sm:$0xff]
        %v1866 = vld [vmem:[%s310 + $0x2df0] sm:$0xff]
        %v1867 = vld [vmem:[%s310 + $0x2df8] sm:$0xff]
        %v1868 = vld [vmem:[%s310 + $0x2e00] sm:$0xff]
        %v1869 = vld [vmem:[%s310 + $0x2e08] sm:$0xff]
        %v1870 = vld [vmem:[%s310 + $0x2e10] sm:$0xff]
        %v1871 = vld [vmem:[%s310 + $0x2e18] sm:$0xff]
        %v1872 = vld [vmem:[%s310 + $0x2e20] sm:$0xff]
        %v1873 = vld [vmem:[%s310 + $0x2e28] sm:$0xff]
        %v1874 = vld [vmem:[%s310 + $0x2e30] sm:$0xff]
        %v1875 = vld [vmem:[%s310 + $0x2e38] sm:$0xff]
        %v1876 = vld [vmem:[%s310 + $0x2e40] sm:$0xff]
        %v1877 = vld [vmem:[%s310 + $0x2e48] sm:$0xff]
        %v1878 = vld [vmem:[%s310 + $0x2e50] sm:$0xff]
        %v1879 = vld [vmem:[%s310 + $0x2e58] sm:$0xff]
        %v1880 = vld [vmem:[%s310 + $0x2e60] sm:$0xff]
        %v1881 = vld [vmem:[%s310 + $0x2e68] sm:$0xff]
        %v1882 = vld [vmem:[%s310 + $0x2e70] sm:$0xff]
        %v1883 = vld [vmem:[%s310 + $0x2e78] sm:$0xff]
        %v1884 = vld [vmem:[%s310 + $0x2e80] sm:$0xff]
        %v1885 = vld [vmem:[%s310 + $0x2e88] sm:$0xff]
        %v1886 = vld [vmem:[%s310 + $0x2e90] sm:$0xff]
        %v1887 = vld [vmem:[%s310 + $0x2e98] sm:$0xff]
        %v1888 = vld [vmem:[%s310 + $0x2ea0] sm:$0xff]
        %v1889 = vld [vmem:[%s310 + $0x2ea8] sm:$0xff]
        %v1890 = vld [vmem:[%s310 + $0x2eb0] sm:$0xff]
        %v1891 = vld [vmem:[%s310 + $0x2eb8] sm:$0xff]
        %v1892 = vld [vmem:[%s310 + $0x2ec0] sm:$0xff]
        %v1893 = vld [vmem:[%s310 + $0x2ec8] sm:$0xff]
        %v1894 = vld [vmem:[%s310 + $0x2ed0] sm:$0xff]
        %v1895 = vld [vmem:[%s310 + $0x2ed8] sm:$0xff]
        %v1896 = vld [vmem:[%s310 + $0x2ee0] sm:$0xff]
        %v1897 = vld [vmem:[%s310 + $0x2ee8] sm:$0xff]
        %v1898 = vld [vmem:[%s310 + $0x2ef0] sm:$0xff]
        %v1899 = vld [vmem:[%s310 + $0x2ef8] sm:$0xff]
        %v1900 = vld [vmem:[%s310 + $0x2f00] sm:$0xff]
        %v1901 = vld [vmem:[%s310 + $0x2f08] sm:$0xff]
        %v1902 = vld [vmem:[%s310 + $0x2f10] sm:$0xff]
        %v1903 = vld [vmem:[%s310 + $0x2f18] sm:$0xff]
        %v1904 = vld [vmem:[%s310 + $0x2f20] sm:$0xff]
        %v1905 = vld [vmem:[%s310 + $0x2f28] sm:$0xff]
        %v1906 = vld [vmem:[%s310 + $0x2f30] sm:$0xff]
        %v1907 = vld [vmem:[%s310 + $0x2f38] sm:$0xff]
        %v1908 = vld [vmem:[%s310 + $0x2f40] sm:$0xff]
        %v1909 = vld [vmem:[%s310 + $0x2f48] sm:$0xff]
        %v1910 = vld [vmem:[%s310 + $0x2f50] sm:$0xff]
        %v1911 = vld [vmem:[%s310 + $0x2f58] sm:$0xff]
        %v1912 = vld [vmem:[%s310 + $0x2f60] sm:$0xff]
        %v1913 = vld [vmem:[%s310 + $0x2f68] sm:$0xff]
        %v1914 = vld [vmem:[%s310 + $0x2f70] sm:$0xff]
        %v1915 = vld [vmem:[%s310 + $0x2f78] sm:$0xff]
        %v1916 = vld [vmem:[%s310 + $0x2f80] sm:$0xff]
        %v1917 = vld [vmem:[%s310 + $0x2f88] sm:$0xff]
        %v1918 = vld [vmem:[%s310 + $0x2f90] sm:$0xff]
        %v1919 = vld [vmem:[%s310 + $0x2f98] sm:$0xff]
        %v1920 = vld [vmem:[%s310 + $0x2fa0] sm:$0xff]
        %v1921 = vld [vmem:[%s310 + $0x2fa8] sm:$0xff]
        %v1922 = vld [vmem:[%s310 + $0x2fb0] sm:$0xff]
        %v1923 = vld [vmem:[%s310 + $0x2fb8] sm:$0xff]
        %v1924 = vld [vmem:[%s310 + $0x2fc0] sm:$0xff]
        %v1925 = vld [vmem:[%s310 + $0x2fc8] sm:$0xff]
        %v1926 = vld [vmem:[%s310 + $0x2fd0] sm:$0xff]
        %v1927 = vld [vmem:[%s310 + $0x2fd8] sm:$0xff]
        %v1928 = vld [vmem:[%s310 + $0x2fe0] sm:$0xff]
        %v1929 = vld [vmem:[%s310 + $0x2fe8] sm:$0xff]
        %v1930 = vld [vmem:[%s310 + $0x2ff0] sm:$0xff]
        %v1931 = vld [vmem:[%s310 + $0x2ff8] sm:$0xff]
        %v1944 = vunpack.c.l.b16 %v384
        %v1945 = vunpack.c.h.b16 %v384
        %v1946 = vunpack.c.l.b16 %v385
        %v1947 = vunpack.c.h.b16 %v385
        %v1948 = vunpack.c.l.b16 %v386
        %v1949 = vunpack.c.h.b16 %v386
        %v1950 = vunpack.c.l.b16 %v387
        %v1951 = vunpack.c.h.b16 %v387
        %v1952 = vunpack.c.l.b16 %v388
        %v1953 = vunpack.c.h.b16 %v388
        %v1954 = vunpack.c.l.b16 %v389
        %v1955 = vunpack.c.h.b16 %v389
        %v1956 = vunpack.c.l.b16 %v390
        %v1957 = vunpack.c.h.b16 %v390
        %v1958 = vunpack.c.l.b16 %v391
        %v1959 = vunpack.c.h.b16 %v391
        %v1960 = vunpack.c.l.b16 %v392
        %v1961 = vunpack.c.h.b16 %v392
        %v1962 = vunpack.c.l.b16 %v393
        %v1963 = vunpack.c.h.b16 %v393
        %v1964 = vunpack.c.l.b16 %v394
        %v1965 = vunpack.c.h.b16 %v394
        %v1966 = vunpack.c.l.b16 %v395
        %v1967 = vunpack.c.h.b16 %v395
        %v1968 = vpack.c.b16 %v1944, %v1944
        %v1969 = vpack.c.b16 %v1945, %v1945
        %v1970 = vpack.c.b16 %v1946, %v1946
        %v1971 = vpack.c.b16 %v1947, %v1947
        %v1972 = vpack.c.b16 %v1948, %v1948
        %v1973 = vpack.c.b16 %v1949, %v1949
        %v1974 = vpack.c.b16 %v1950, %v1950
        %v1975 = vpack.c.b16 %v1951, %v1951
        %v1976 = vpack.c.b16 %v1952, %v1952
        %v1977 = vpack.c.b16 %v1953, %v1953
        %v1978 = vpack.c.b16 %v1954, %v1954
        %v1979 = vpack.c.b16 %v1955, %v1955
        %v1980 = vpack.c.b16 %v1956, %v1956
        %v1981 = vpack.c.b16 %v1957, %v1957
        %v1982 = vpack.c.b16 %v1958, %v1958
        %v1983 = vpack.c.b16 %v1959, %v1959
        %v1984 = vpack.c.b16 %v1960, %v1960
        %v1985 = vpack.c.b16 %v1961, %v1961
        %v1986 = vpack.c.b16 %v1962, %v1962
        %v1987 = vpack.c.b16 %v1963, %v1963
        %v1988 = vpack.c.b16 %v1964, %v1964
        %v1989 = vpack.c.b16 %v1965, %v1965
        %v1990 = vpack.c.b16 %v1966, %v1966
        %v1991 = vpack.c.b16 %v1967, %v1967
        %v3552 = vunpack.c.l.b16 %v396
        %v3553 = vunpack.c.h.b16 %v396
        %v3554 = vunpack.c.l.b16 %v397
        %v3555 = vunpack.c.h.b16 %v397
        %v3556 = vunpack.c.l.b16 %v398
        %v3557 = vunpack.c.h.b16 %v398
        %v3558 = vunpack.c.l.b16 %v399
        %v3559 = vunpack.c.h.b16 %v399
        %v3560 = vunpack.c.l.b16 %v400
        %v3561 = vunpack.c.h.b16 %v400
        %v3562 = vunpack.c.l.b16 %v401
        %v3563 = vunpack.c.h.b16 %v401
        %v3564 = vunpack.c.l.b16 %v402
        %v3565 = vunpack.c.h.b16 %v402
        %v3566 = vunpack.c.l.b16 %v403
        %v3567 = vunpack.c.h.b16 %v403
        %v3568 = vunpack.c.l.b16 %v404
        %v3569 = vunpack.c.h.b16 %v404
        %v3570 = vunpack.c.l.b16 %v405
        %v3571 = vunpack.c.h.b16 %v405
        %v3572 = vunpack.c.l.b16 %v406
        %v3573 = vunpack.c.h.b16 %v406
        %v3574 = vunpack.c.l.b16 %v407
        %v3575 = vunpack.c.h.b16 %v407
        %v3576 = vunpack.c.l.b16 %v408
        %v3577 = vunpack.c.h.b16 %v408
        %v3578 = vunpack.c.l.b16 %v409
        %v3579 = vunpack.c.h.b16 %v409
        %v3580 = vunpack.c.l.b16 %v410
        %v3581 = vunpack.c.h.b16 %v410
        %v3582 = vunpack.c.l.b16 %v411
        %v3583 = vunpack.c.h.b16 %v411
        %v3584 = vunpack.c.l.b16 %v412
        %v3585 = vunpack.c.h.b16 %v412
        %v3586 = vunpack.c.l.b16 %v413
        %v3587 = vunpack.c.h.b16 %v413
        %v3588 = vunpack.c.l.b16 %v414
        %v3589 = vunpack.c.h.b16 %v414
        %v3590 = vunpack.c.l.b16 %v415
        %v3591 = vunpack.c.h.b16 %v415
        %v3592 = vunpack.c.l.b16 %v416
        %v3593 = vunpack.c.h.b16 %v416
        %v3594 = vunpack.c.l.b16 %v417
        %v3595 = vunpack.c.h.b16 %v417
        %v3596 = vunpack.c.l.b16 %v418
        %v3597 = vunpack.c.h.b16 %v418
        %v3598 = vunpack.c.l.b16 %v419
        %v3599 = vunpack.c.h.b16 %v419
        %v3600 = vunpack.c.l.b16 %v420
        %v3601 = vunpack.c.h.b16 %v420
        %v3602 = vunpack.c.l.b16 %v421
        %v3603 = vunpack.c.h.b16 %v421
        %v3604 = vunpack.c.l.b16 %v422
        %v3605 = vunpack.c.h.b16 %v422
        %v3606 = vunpack.c.l.b16 %v423
        %v3607 = vunpack.c.h.b16 %v423
        %v3608 = vunpack.c.l.b16 %v424
        %v3609 = vunpack.c.h.b16 %v424
        %v3610 = vunpack.c.l.b16 %v425
        %v3611 = vunpack.c.h.b16 %v425
        %v3612 = vunpack.c.l.b16 %v426
        %v3613 = vunpack.c.h.b16 %v426
        %v3614 = vunpack.c.l.b16 %v427
        %v3615 = vunpack.c.h.b16 %v427
        %v3616 = vunpack.c.l.b16 %v428
        %v3617 = vunpack.c.h.b16 %v428
        %v3618 = vunpack.c.l.b16 %v429
        %v3619 = vunpack.c.h.b16 %v429
        %v3620 = vunpack.c.l.b16 %v430
        %v3621 = vunpack.c.h.b16 %v430
        %v3622 = vunpack.c.l.b16 %v431
        %v3623 = vunpack.c.h.b16 %v431
        %v3624 = vunpack.c.l.b16 %v432
        %v3625 = vunpack.c.h.b16 %v432
        %v3626 = vunpack.c.l.b16 %v433
        %v3627 = vunpack.c.h.b16 %v433
        %v3628 = vunpack.c.l.b16 %v434
        %v3629 = vunpack.c.h.b16 %v434
        %v3630 = vunpack.c.l.b16 %v435
        %v3631 = vunpack.c.h.b16 %v435
        %v3632 = vunpack.c.l.b16 %v436
        %v3633 = vunpack.c.h.b16 %v436
        %v3634 = vunpack.c.l.b16 %v437
        %v3635 = vunpack.c.h.b16 %v437
        %v3636 = vunpack.c.l.b16 %v438
        %v3637 = vunpack.c.h.b16 %v438
        %v3638 = vunpack.c.l.b16 %v439
        %v3639 = vunpack.c.h.b16 %v439
        %v3640 = vunpack.c.l.b16 %v440
        %v3641 = vunpack.c.h.b16 %v440
        %v3642 = vunpack.c.l.b16 %v441
        %v3643 = vunpack.c.h.b16 %v441
        %v3644 = vunpack.c.l.b16 %v442
        %v3645 = vunpack.c.h.b16 %v442
        %v3646 = vunpack.c.l.b16 %v443
        %v3647 = vunpack.c.h.b16 %v443
        %v3648 = vunpack.c.l.b16 %v444
        %v3649 = vunpack.c.h.b16 %v444
        %v3650 = vunpack.c.l.b16 %v445
        %v3651 = vunpack.c.h.b16 %v445
        %v3652 = vunpack.c.l.b16 %v446
        %v3653 = vunpack.c.h.b16 %v446
        %v3654 = vunpack.c.l.b16 %v447
        %v3655 = vunpack.c.h.b16 %v447
        %v3656 = vunpack.c.l.b16 %v448
        %v3657 = vunpack.c.h.b16 %v448
        %v3658 = vunpack.c.l.b16 %v449
        %v3659 = vunpack.c.h.b16 %v449
        %v3660 = vunpack.c.l.b16 %v450
        %v3661 = vunpack.c.h.b16 %v450
        %v3662 = vunpack.c.l.b16 %v451
        %v3663 = vunpack.c.h.b16 %v451
        %v3664 = vunpack.c.l.b16 %v452
        %v3665 = vunpack.c.h.b16 %v452
        %v3666 = vunpack.c.l.b16 %v453
        %v3667 = vunpack.c.h.b16 %v453
        %v3668 = vunpack.c.l.b16 %v454
        %v3669 = vunpack.c.h.b16 %v454
        %v3670 = vunpack.c.l.b16 %v455
        %v3671 = vunpack.c.h.b16 %v455
        %v3672 = vunpack.c.l.b16 %v456
        %v3673 = vunpack.c.h.b16 %v456
        %v3674 = vunpack.c.l.b16 %v457
        %v3675 = vunpack.c.h.b16 %v457
        %v3676 = vunpack.c.l.b16 %v458
        %v3677 = vunpack.c.h.b16 %v458
        %v3678 = vunpack.c.l.b16 %v459
        %v3679 = vunpack.c.h.b16 %v459
        %v3680 = vunpack.c.l.b16 %v460
        %v3681 = vunpack.c.h.b16 %v460
        %v3682 = vunpack.c.l.b16 %v461
        %v3683 = vunpack.c.h.b16 %v461
        %v3684 = vunpack.c.l.b16 %v462
        %v3685 = vunpack.c.h.b16 %v462
        %v3686 = vunpack.c.l.b16 %v463
        %v3687 = vunpack.c.h.b16 %v463
        %v3688 = vunpack.c.l.b16 %v464
        %v3689 = vunpack.c.h.b16 %v464
        %v3690 = vunpack.c.l.b16 %v465
        %v3691 = vunpack.c.h.b16 %v465
        %v3692 = vunpack.c.l.b16 %v466
        %v3693 = vunpack.c.h.b16 %v466
        %v3694 = vunpack.c.l.b16 %v467
        %v3695 = vunpack.c.h.b16 %v467
        %v3696 = vunpack.c.l.b16 %v468
        %v3697 = vunpack.c.h.b16 %v468
        %v3698 = vunpack.c.l.b16 %v469
        %v3699 = vunpack.c.h.b16 %v469
        %v3700 = vunpack.c.l.b16 %v470
        %v3701 = vunpack.c.h.b16 %v470
        %v3702 = vunpack.c.l.b16 %v471
        %v3703 = vunpack.c.h.b16 %v471
        %v3704 = vunpack.c.l.b16 %v472
        %v3705 = vunpack.c.h.b16 %v472
        %v3706 = vunpack.c.l.b16 %v473
        %v3707 = vunpack.c.h.b16 %v473
        %v3708 = vunpack.c.l.b16 %v474
        %v3709 = vunpack.c.h.b16 %v474
        %v3710 = vunpack.c.l.b16 %v475
        %v3711 = vunpack.c.h.b16 %v475
        %v3712 = vunpack.c.l.b16 %v476
        %v3713 = vunpack.c.h.b16 %v476
        %v3714 = vunpack.c.l.b16 %v477
        %v3715 = vunpack.c.h.b16 %v477
        %v3716 = vunpack.c.l.b16 %v478
        %v3717 = vunpack.c.h.b16 %v478
        %v3718 = vunpack.c.l.b16 %v479
        %v3719 = vunpack.c.h.b16 %v479
        %v3720 = vunpack.c.l.b16 %v480
        %v3721 = vunpack.c.h.b16 %v480
        %v3722 = vunpack.c.l.b16 %v481
        %v3723 = vunpack.c.h.b16 %v481
        %v3724 = vunpack.c.l.b16 %v482
        %v3725 = vunpack.c.h.b16 %v482
        %v3726 = vunpack.c.l.b16 %v483
        %v3727 = vunpack.c.h.b16 %v483
        %v3728 = vunpack.c.l.b16 %v484
        %v3729 = vunpack.c.h.b16 %v484
        %v3730 = vunpack.c.l.b16 %v485
        %v3731 = vunpack.c.h.b16 %v485
        %v3732 = vunpack.c.l.b16 %v486
        %v3733 = vunpack.c.h.b16 %v486
        %v3734 = vunpack.c.l.b16 %v487
        %v3735 = vunpack.c.h.b16 %v487
        %v3736 = vunpack.c.l.b16 %v488
        %v3737 = vunpack.c.h.b16 %v488
        %v3738 = vunpack.c.l.b16 %v489
        %v3739 = vunpack.c.h.b16 %v489
        %v3740 = vunpack.c.l.b16 %v490
        %v3741 = vunpack.c.h.b16 %v490
        %v3742 = vunpack.c.l.b16 %v491
        %v3743 = vunpack.c.h.b16 %v491
        %v3744 = vunpack.c.l.b16 %v492
        %v3745 = vunpack.c.h.b16 %v492
        %v3746 = vunpack.c.l.b16 %v493
        %v3747 = vunpack.c.h.b16 %v493
        %v3748 = vunpack.c.l.b16 %v494
        %v3749 = vunpack.c.h.b16 %v494
        %v3750 = vunpack.c.l.b16 %v495
        %v3751 = vunpack.c.h.b16 %v495
        %v3752 = vunpack.c.l.b16 %v496
        %v3753 = vunpack.c.h.b16 %v496
        %v3754 = vunpack.c.l.b16 %v497
        %v3755 = vunpack.c.h.b16 %v497
        %v3756 = vunpack.c.l.b16 %v498
        %v3757 = vunpack.c.h.b16 %v498
        %v3758 = vunpack.c.l.b16 %v499
        %v3759 = vunpack.c.h.b16 %v499
        %v3760 = vunpack.c.l.b16 %v500
        %v3761 = vunpack.c.h.b16 %v500
        %v3762 = vunpack.c.l.b16 %v501
        %v3763 = vunpack.c.h.b16 %v501
        %v3764 = vunpack.c.l.b16 %v502
        %v3765 = vunpack.c.h.b16 %v502
        %v3766 = vunpack.c.l.b16 %v503
        %v3767 = vunpack.c.h.b16 %v503
        %v3768 = vunpack.c.l.b16 %v504
        %v3769 = vunpack.c.h.b16 %v504
        %v3770 = vunpack.c.l.b16 %v505
        %v3771 = vunpack.c.h.b16 %v505
        %v3772 = vunpack.c.l.b16 %v506
        %v3773 = vunpack.c.h.b16 %v506
        %v3774 = vunpack.c.l.b16 %v507
        %v3775 = vunpack.c.h.b16 %v507
        %v3776 = vunpack.c.l.b16 %v508
        %v3777 = vunpack.c.h.b16 %v508
        %v3778 = vunpack.c.l.b16 %v509
        %v3779 = vunpack.c.h.b16 %v509
        %v3780 = vunpack.c.l.b16 %v510
        %v3781 = vunpack.c.h.b16 %v510
        %v3782 = vunpack.c.l.b16 %v511
        %v3783 = vunpack.c.h.b16 %v511
        %v3784 = vunpack.c.l.b16 %v512
        %v3785 = vunpack.c.h.b16 %v512
        %v3786 = vunpack.c.l.b16 %v513
        %v3787 = vunpack.c.h.b16 %v513
        %v3788 = vunpack.c.l.b16 %v514
        %v3789 = vunpack.c.h.b16 %v514
        %v3790 = vunpack.c.l.b16 %v515
        %v3791 = vunpack.c.h.b16 %v515
        %v3792 = vunpack.c.l.b16 %v516
        %v3793 = vunpack.c.h.b16 %v516
        %v3794 = vunpack.c.l.b16 %v517
        %v3795 = vunpack.c.h.b16 %v517
        %v3796 = vunpack.c.l.b16 %v518
        %v3797 = vunpack.c.h.b16 %v518
        %v3798 = vunpack.c.l.b16 %v519
        %v3799 = vunpack.c.h.b16 %v519
        %v3800 = vunpack.c.l.b16 %v520
        %v3801 = vunpack.c.h.b16 %v520
        %v3802 = vunpack.c.l.b16 %v521
        %v3803 = vunpack.c.h.b16 %v521
        %v3804 = vunpack.c.l.b16 %v522
        %v3805 = vunpack.c.h.b16 %v522
        %v3806 = vunpack.c.l.b16 %v523
        %v3807 = vunpack.c.h.b16 %v523
        %v3808 = vunpack.c.l.b16 %v524
        %v3809 = vunpack.c.h.b16 %v524
        %v3810 = vunpack.c.l.b16 %v525
        %v3811 = vunpack.c.h.b16 %v525
        %v3812 = vunpack.c.l.b16 %v526
        %v3813 = vunpack.c.h.b16 %v526
        %v3814 = vunpack.c.l.b16 %v527
        %v3815 = vunpack.c.h.b16 %v527
        %v3816 = vunpack.c.l.b16 %v528
        %v3817 = vunpack.c.h.b16 %v528
        %v3818 = vunpack.c.l.b16 %v529
        %v3819 = vunpack.c.h.b16 %v529
        %v3820 = vunpack.c.l.b16 %v530
        %v3821 = vunpack.c.h.b16 %v530
        %v3822 = vunpack.c.l.b16 %v531
        %v3823 = vunpack.c.h.b16 %v531
        %v3824 = vunpack.c.l.b16 %v532
        %v3825 = vunpack.c.h.b16 %v532
        %v3826 = vunpack.c.l.b16 %v533
        %v3827 = vunpack.c.h.b16 %v533
        %v3828 = vunpack.c.l.b16 %v534
        %v3829 = vunpack.c.h.b16 %v534
        %v3830 = vunpack.c.l.b16 %v535
        %v3831 = vunpack.c.h.b16 %v535
        %v3832 = vunpack.c.l.b16 %v536
        %v3833 = vunpack.c.h.b16 %v536
        %v3834 = vunpack.c.l.b16 %v537
        %v3835 = vunpack.c.h.b16 %v537
        %v3836 = vunpack.c.l.b16 %v538
        %v3837 = vunpack.c.h.b16 %v538
        %v3838 = vunpack.c.l.b16 %v539
        %v3839 = vunpack.c.h.b16 %v539
        %v3840 = vunpack.c.l.b16 %v540
        %v3841 = vunpack.c.h.b16 %v540
        %v3842 = vunpack.c.l.b16 %v541
        %v3843 = vunpack.c.h.b16 %v541
        %v3844 = vunpack.c.l.b16 %v542
        %v3845 = vunpack.c.h.b16 %v542
        %v3846 = vunpack.c.l.b16 %v543
        %v3847 = vunpack.c.h.b16 %v543
        %v3848 = vunpack.c.l.b16 %v544
        %v3849 = vunpack.c.h.b16 %v544
        %v3850 = vunpack.c.l.b16 %v545
        %v3851 = vunpack.c.h.b16 %v545
        %v3852 = vunpack.c.l.b16 %v546
        %v3853 = vunpack.c.h.b16 %v546
        %v3854 = vunpack.c.l.b16 %v547
        %v3855 = vunpack.c.h.b16 %v547
        %v3856 = vunpack.c.l.b16 %v548
        %v3857 = vunpack.c.h.b16 %v548
        %v3858 = vunpack.c.l.b16 %v549
        %v3859 = vunpack.c.h.b16 %v549
        %v3860 = vunpack.c.l.b16 %v550
        %v3861 = vunpack.c.h.b16 %v550
        %v3862 = vunpack.c.l.b16 %v551
        %v3863 = vunpack.c.h.b16 %v551
        %v3864 = vunpack.c.l.b16 %v552
        %v3865 = vunpack.c.h.b16 %v552
        %v3866 = vunpack.c.l.b16 %v553
        %v3867 = vunpack.c.h.b16 %v553
        %v3868 = vunpack.c.l.b16 %v554
        %v3869 = vunpack.c.h.b16 %v554
        %v3870 = vunpack.c.l.b16 %v555
        %v3871 = vunpack.c.h.b16 %v555
        %v3872 = vunpack.c.l.b16 %v556
        %v3873 = vunpack.c.h.b16 %v556
        %v3874 = vunpack.c.l.b16 %v557
        %v3875 = vunpack.c.h.b16 %v557
        %v3876 = vunpack.c.l.b16 %v558
        %v3877 = vunpack.c.h.b16 %v558
        %v3878 = vunpack.c.l.b16 %v559
        %v3879 = vunpack.c.h.b16 %v559
        %v3880 = vunpack.c.l.b16 %v560
        %v3881 = vunpack.c.h.b16 %v560
        %v3882 = vunpack.c.l.b16 %v561
        %v3883 = vunpack.c.h.b16 %v561
        %v3884 = vunpack.c.l.b16 %v562
        %v3885 = vunpack.c.h.b16 %v562
        %v3886 = vunpack.c.l.b16 %v563
        %v3887 = vunpack.c.h.b16 %v563
        %v3888 = vunpack.c.l.b16 %v564
        %v3889 = vunpack.c.h.b16 %v564
        %v3890 = vunpack.c.l.b16 %v565
        %v3891 = vunpack.c.h.b16 %v565
        %v3892 = vunpack.c.l.b16 %v566
        %v3893 = vunpack.c.h.b16 %v566
        %v3894 = vunpack.c.l.b16 %v567
        %v3895 = vunpack.c.h.b16 %v567
        %v3896 = vunpack.c.l.b16 %v568
        %v3897 = vunpack.c.h.b16 %v568
        %v3898 = vunpack.c.l.b16 %v569
        %v3899 = vunpack.c.h.b16 %v569
        %v3900 = vunpack.c.l.b16 %v570
        %v3901 = vunpack.c.h.b16 %v570
        %v3902 = vunpack.c.l.b16 %v571
        %v3903 = vunpack.c.h.b16 %v571
        %v3904 = vunpack.c.l.b16 %v572
        %v3905 = vunpack.c.h.b16 %v572
        %v3906 = vunpack.c.l.b16 %v573
        %v3907 = vunpack.c.h.b16 %v573
        %v3908 = vunpack.c.l.b16 %v574
        %v3909 = vunpack.c.h.b16 %v574
        %v3910 = vunpack.c.l.b16 %v575
        %v3911 = vunpack.c.h.b16 %v575
        %v3912 = vunpack.c.l.b16 %v576
        %v3913 = vunpack.c.h.b16 %v576
        %v3914 = vunpack.c.l.b16 %v577
        %v3915 = vunpack.c.h.b16 %v577
        %v3916 = vunpack.c.l.b16 %v578
        %v3917 = vunpack.c.h.b16 %v578
        %v3918 = vunpack.c.l.b16 %v579
        %v3919 = vunpack.c.h.b16 %v579
        %v3920 = vunpack.c.l.b16 %v580
        %v3921 = vunpack.c.h.b16 %v580
        %v3922 = vunpack.c.l.b16 %v581
        %v3923 = vunpack.c.h.b16 %v581
        %v3924 = vunpack.c.l.b16 %v582
        %v3925 = vunpack.c.h.b16 %v582
        %v3926 = vunpack.c.l.b16 %v583
        %v3927 = vunpack.c.h.b16 %v583
        %v3928 = vunpack.c.l.b16 %v584
        %v3929 = vunpack.c.h.b16 %v584
        %v3930 = vunpack.c.l.b16 %v585
        %v3931 = vunpack.c.h.b16 %v585
        %v3932 = vunpack.c.l.b16 %v586
        %v3933 = vunpack.c.h.b16 %v586
        %v3934 = vunpack.c.l.b16 %v587
        %v3935 = vunpack.c.h.b16 %v587
        %v3936 = vunpack.c.l.b16 %v588
        %v3937 = vunpack.c.h.b16 %v588
        %v3938 = vunpack.c.l.b16 %v589
        %v3939 = vunpack.c.h.b16 %v589
        %v3940 = vunpack.c.l.b16 %v590
        %v3941 = vunpack.c.h.b16 %v590
        %v3942 = vunpack.c.l.b16 %v591
        %v3943 = vunpack.c.h.b16 %v591
        %v3944 = vunpack.c.l.b16 %v592
        %v3945 = vunpack.c.h.b16 %v592
        %v3946 = vunpack.c.l.b16 %v593
        %v3947 = vunpack.c.h.b16 %v593
        %v3948 = vunpack.c.l.b16 %v594
        %v3949 = vunpack.c.h.b16 %v594
        %v3950 = vunpack.c.l.b16 %v595
        %v3951 = vunpack.c.h.b16 %v595
        %v3952 = vunpack.c.l.b16 %v596
        %v3953 = vunpack.c.h.b16 %v596
        %v3954 = vunpack.c.l.b16 %v597
        %v3955 = vunpack.c.h.b16 %v597
        %v3956 = vunpack.c.l.b16 %v598
        %v3957 = vunpack.c.h.b16 %v598
        %v3958 = vunpack.c.l.b16 %v599
        %v3959 = vunpack.c.h.b16 %v599
        %v3960 = vunpack.c.l.b16 %v600
        %v3961 = vunpack.c.h.b16 %v600
        %v3962 = vunpack.c.l.b16 %v601
        %v3963 = vunpack.c.h.b16 %v601
        %v3964 = vunpack.c.l.b16 %v602
        %v3965 = vunpack.c.h.b16 %v602
        %v3966 = vunpack.c.l.b16 %v603
        %v3967 = vunpack.c.h.b16 %v603
        %v3968 = vunpack.c.l.b16 %v604
        %v3969 = vunpack.c.h.b16 %v604
        %v3970 = vunpack.c.l.b16 %v605
        %v3971 = vunpack.c.h.b16 %v605
        %v3972 = vunpack.c.l.b16 %v606
        %v3973 = vunpack.c.h.b16 %v606
        %v3974 = vunpack.c.l.b16 %v607
        %v3975 = vunpack.c.h.b16 %v607
        %v3976 = vunpack.c.l.b16 %v608
        %v3977 = vunpack.c.h.b16 %v608
        %v3978 = vunpack.c.l.b16 %v609
        %v3979 = vunpack.c.h.b16 %v609
        %v3980 = vunpack.c.l.b16 %v610
        %v3981 = vunpack.c.h.b16 %v610
        %v3982 = vunpack.c.l.b16 %v611
        %v3983 = vunpack.c.h.b16 %v611
        %v3984 = vunpack.c.l.b16 %v612
        %v3985 = vunpack.c.h.b16 %v612
        %v3986 = vunpack.c.l.b16 %v613
        %v3987 = vunpack.c.h.b16 %v613
        %v3988 = vunpack.c.l.b16 %v614
        %v3989 = vunpack.c.h.b16 %v614
        %v3990 = vunpack.c.l.b16 %v615
        %v3991 = vunpack.c.h.b16 %v615
        %v3992 = vunpack.c.l.b16 %v616
        %v3993 = vunpack.c.h.b16 %v616
        %v3994 = vunpack.c.l.b16 %v617
        %v3995 = vunpack.c.h.b16 %v617
        %v3996 = vunpack.c.l.b16 %v618
        %v3997 = vunpack.c.h.b16 %v618
        %v3998 = vunpack.c.l.b16 %v619
        %v3999 = vunpack.c.h.b16 %v619
        %v4000 = vunpack.c.l.b16 %v620
        %v4001 = vunpack.c.h.b16 %v620
        %v4002 = vunpack.c.l.b16 %v621
        %v4003 = vunpack.c.h.b16 %v621
        %v4004 = vunpack.c.l.b16 %v622
        %v4005 = vunpack.c.h.b16 %v622
        %v4006 = vunpack.c.l.b16 %v623
        %v4007 = vunpack.c.h.b16 %v623
        %v4008 = vunpack.c.l.b16 %v624
        %v4009 = vunpack.c.h.b16 %v624
        %v4010 = vunpack.c.l.b16 %v625
        %v4011 = vunpack.c.h.b16 %v625
        %v4012 = vunpack.c.l.b16 %v626
        %v4013 = vunpack.c.h.b16 %v626
        %v4014 = vunpack.c.l.b16 %v627
        %v4015 = vunpack.c.h.b16 %v627
        %v4016 = vunpack.c.l.b16 %v628
        %v4017 = vunpack.c.h.b16 %v628
        %v4018 = vunpack.c.l.b16 %v629
        %v4019 = vunpack.c.h.b16 %v629
        %v4020 = vunpack.c.l.b16 %v630
        %v4021 = vunpack.c.h.b16 %v630
        %v4022 = vunpack.c.l.b16 %v631
        %v4023 = vunpack.c.h.b16 %v631
        %v4024 = vunpack.c.l.b16 %v632
        %v4025 = vunpack.c.h.b16 %v632
        %v4026 = vunpack.c.l.b16 %v633
        %v4027 = vunpack.c.h.b16 %v633
        %v4028 = vunpack.c.l.b16 %v634
        %v4029 = vunpack.c.h.b16 %v634
        %v4030 = vunpack.c.l.b16 %v635
        %v4031 = vunpack.c.h.b16 %v635
        %v4032 = vunpack.c.l.b16 %v636
        %v4033 = vunpack.c.h.b16 %v636
        %v4034 = vunpack.c.l.b16 %v637
        %v4035 = vunpack.c.h.b16 %v637
        %v4036 = vunpack.c.l.b16 %v638
        %v4037 = vunpack.c.h.b16 %v638
        %v4038 = vunpack.c.l.b16 %v639
        %v4039 = vunpack.c.h.b16 %v639
        %v4040 = vunpack.c.l.b16 %v640
        %v4041 = vunpack.c.h.b16 %v640
        %v4042 = vunpack.c.l.b16 %v641
        %v4043 = vunpack.c.h.b16 %v641
        %v4044 = vunpack.c.l.b16 %v642
        %v4045 = vunpack.c.h.b16 %v642
        %v4046 = vunpack.c.l.b16 %v643
        %v4047 = vunpack.c.h.b16 %v643
        %v4048 = vunpack.c.l.b16 %v644
        %v4049 = vunpack.c.h.b16 %v644
        %v4050 = vunpack.c.l.b16 %v645
        %v4051 = vunpack.c.h.b16 %v645
        %v4052 = vunpack.c.l.b16 %v646
        %v4053 = vunpack.c.h.b16 %v646
        %v4054 = vunpack.c.l.b16 %v647
        %v4055 = vunpack.c.h.b16 %v647
        %v4056 = vunpack.c.l.b16 %v648
        %v4057 = vunpack.c.h.b16 %v648
        %v4058 = vunpack.c.l.b16 %v649
        %v4059 = vunpack.c.h.b16 %v649
        %v4060 = vunpack.c.l.b16 %v650
        %v4061 = vunpack.c.h.b16 %v650
        %v4062 = vunpack.c.l.b16 %v651
        %v4063 = vunpack.c.h.b16 %v651
        %v4064 = vunpack.c.l.b16 %v652
        %v4065 = vunpack.c.h.b16 %v652
        %v4066 = vunpack.c.l.b16 %v653
        %v4067 = vunpack.c.h.b16 %v653
        %v4068 = vunpack.c.l.b16 %v654
        %v4069 = vunpack.c.h.b16 %v654
        %v4070 = vunpack.c.l.b16 %v655
        %v4071 = vunpack.c.h.b16 %v655
        %v4072 = vunpack.c.l.b16 %v656
        %v4073 = vunpack.c.h.b16 %v656
        %v4074 = vunpack.c.l.b16 %v657
        %v4075 = vunpack.c.h.b16 %v657
        %v4076 = vunpack.c.l.b16 %v658
        %v4077 = vunpack.c.h.b16 %v658
        %v4078 = vunpack.c.l.b16 %v659
        %v4079 = vunpack.c.h.b16 %v659
        %v4080 = vunpack.c.l.b16 %v660
        %v4081 = vunpack.c.h.b16 %v660
        %v4082 = vunpack.c.l.b16 %v661
        %v4083 = vunpack.c.h.b16 %v661
        %v4084 = vunpack.c.l.b16 %v662
        %v4085 = vunpack.c.h.b16 %v662
        %v4086 = vunpack.c.l.b16 %v663
        %v4087 = vunpack.c.h.b16 %v663
        %v4088 = vunpack.c.l.b16 %v664
        %v4089 = vunpack.c.h.b16 %v664
        %v4090 = vunpack.c.l.b16 %v665
        %v4091 = vunpack.c.h.b16 %v665
        %v4092 = vunpack.c.l.b16 %v666
        %v4093 = vunpack.c.h.b16 %v666
        %v4094 = vunpack.c.l.b16 %v667
        %v4095 = vunpack.c.h.b16 %v667
        %v4096 = vunpack.c.l.b16 %v668
        %v4097 = vunpack.c.h.b16 %v668
        %v4098 = vunpack.c.l.b16 %v669
        %v4099 = vunpack.c.h.b16 %v669
        %v4100 = vunpack.c.l.b16 %v670
        %v4101 = vunpack.c.h.b16 %v670
        %v4102 = vunpack.c.l.b16 %v671
        %v4103 = vunpack.c.h.b16 %v671
        %v4104 = vunpack.c.l.b16 %v672
        %v4105 = vunpack.c.h.b16 %v672
        %v4106 = vunpack.c.l.b16 %v673
        %v4107 = vunpack.c.h.b16 %v673
        %v4108 = vunpack.c.l.b16 %v674
        %v4109 = vunpack.c.h.b16 %v674
        %v4110 = vunpack.c.l.b16 %v675
        %v4111 = vunpack.c.h.b16 %v675
        %v4112 = vunpack.c.l.b16 %v676
        %v4113 = vunpack.c.h.b16 %v676
        %v4114 = vunpack.c.l.b16 %v677
        %v4115 = vunpack.c.h.b16 %v677
        %v4116 = vunpack.c.l.b16 %v678
        %v4117 = vunpack.c.h.b16 %v678
        %v4118 = vunpack.c.l.b16 %v679
        %v4119 = vunpack.c.h.b16 %v679
        %v4120 = vunpack.c.l.b16 %v680
        %v4121 = vunpack.c.h.b16 %v680
        %v4122 = vunpack.c.l.b16 %v681
        %v4123 = vunpack.c.h.b16 %v681
        %v4124 = vunpack.c.l.b16 %v682
        %v4125 = vunpack.c.h.b16 %v682
        %v4126 = vunpack.c.l.b16 %v683
        %v4127 = vunpack.c.h.b16 %v683
        %v4128 = vunpack.c.l.b16 %v684
        %v4129 = vunpack.c.h.b16 %v684
        %v4130 = vunpack.c.l.b16 %v685
        %v4131 = vunpack.c.h.b16 %v685
        %v4132 = vunpack.c.l.b16 %v686
        %v4133 = vunpack.c.h.b16 %v686
        %v4134 = vunpack.c.l.b16 %v687
        %v4135 = vunpack.c.h.b16 %v687
        %v4136 = vunpack.c.l.b16 %v688
        %v4137 = vunpack.c.h.b16 %v688
        %v4138 = vunpack.c.l.b16 %v689
        %v4139 = vunpack.c.h.b16 %v689
        %v4140 = vunpack.c.l.b16 %v690
        %v4141 = vunpack.c.h.b16 %v690
        %v4142 = vunpack.c.l.b16 %v691
        %v4143 = vunpack.c.h.b16 %v691
        %v4144 = vunpack.c.l.b16 %v692
        %v4145 = vunpack.c.h.b16 %v692
        %v4146 = vunpack.c.l.b16 %v693
        %v4147 = vunpack.c.h.b16 %v693
        %v4148 = vunpack.c.l.b16 %v694
        %v4149 = vunpack.c.h.b16 %v694
        %v4150 = vunpack.c.l.b16 %v695
        %v4151 = vunpack.c.h.b16 %v695
        %v4152 = vunpack.c.l.b16 %v696
        %v4153 = vunpack.c.h.b16 %v696
        %v4154 = vunpack.c.l.b16 %v697
        %v4155 = vunpack.c.h.b16 %v697
        %v4156 = vunpack.c.l.b16 %v698
        %v4157 = vunpack.c.h.b16 %v698
        %v4158 = vunpack.c.l.b16 %v699
        %v4159 = vunpack.c.h.b16 %v699
        %v4160 = vunpack.c.l.b16 %v700
        %v4161 = vunpack.c.h.b16 %v700
        %v4162 = vunpack.c.l.b16 %v701
        %v4163 = vunpack.c.h.b16 %v701
        %v4164 = vunpack.c.l.b16 %v702
        %v4165 = vunpack.c.h.b16 %v702
        %v4166 = vunpack.c.l.b16 %v703
        %v4167 = vunpack.c.h.b16 %v703
        %v4168 = vunpack.c.l.b16 %v704
        %v4169 = vunpack.c.h.b16 %v704
        %v4170 = vunpack.c.l.b16 %v705
        %v4171 = vunpack.c.h.b16 %v705
        %v4172 = vunpack.c.l.b16 %v706
        %v4173 = vunpack.c.h.b16 %v706
        %v4174 = vunpack.c.l.b16 %v707
        %v4175 = vunpack.c.h.b16 %v707
        %v4176 = vunpack.c.l.b16 %v708
        %v4177 = vunpack.c.h.b16 %v708
        %v4178 = vunpack.c.l.b16 %v709
        %v4179 = vunpack.c.h.b16 %v709
        %v4180 = vunpack.c.l.b16 %v710
        %v4181 = vunpack.c.h.b16 %v710
        %v4182 = vunpack.c.l.b16 %v711
        %v4183 = vunpack.c.h.b16 %v711
        %v4184 = vunpack.c.l.b16 %v712
        %v4185 = vunpack.c.h.b16 %v712
        %v4186 = vunpack.c.l.b16 %v713
        %v4187 = vunpack.c.h.b16 %v713
        %v4188 = vunpack.c.l.b16 %v714
        %v4189 = vunpack.c.h.b16 %v714
        %v4190 = vunpack.c.l.b16 %v715
        %v4191 = vunpack.c.h.b16 %v715
        %v4192 = vunpack.c.l.b16 %v716
        %v4193 = vunpack.c.h.b16 %v716
        %v4194 = vunpack.c.l.b16 %v717
        %v4195 = vunpack.c.h.b16 %v717
        %v4196 = vunpack.c.l.b16 %v718
        %v4197 = vunpack.c.h.b16 %v718
        %v4198 = vunpack.c.l.b16 %v719
        %v4199 = vunpack.c.h.b16 %v719
        %v4200 = vunpack.c.l.b16 %v720
        %v4201 = vunpack.c.h.b16 %v720
        %v4202 = vunpack.c.l.b16 %v721
        %v4203 = vunpack.c.h.b16 %v721
        %v4204 = vunpack.c.l.b16 %v722
        %v4205 = vunpack.c.h.b16 %v722
        %v4206 = vunpack.c.l.b16 %v723
        %v4207 = vunpack.c.h.b16 %v723
        %v4208 = vunpack.c.l.b16 %v724
        %v4209 = vunpack.c.h.b16 %v724
        %v4210 = vunpack.c.l.b16 %v725
        %v4211 = vunpack.c.h.b16 %v725
        %v4212 = vunpack.c.l.b16 %v726
        %v4213 = vunpack.c.h.b16 %v726
        %v4214 = vunpack.c.l.b16 %v727
        %v4215 = vunpack.c.h.b16 %v727
        %v4216 = vunpack.c.l.b16 %v728
        %v4217 = vunpack.c.h.b16 %v728
        %v4218 = vunpack.c.l.b16 %v729
        %v4219 = vunpack.c.h.b16 %v729
        %v4220 = vunpack.c.l.b16 %v730
        %v4221 = vunpack.c.h.b16 %v730
        %v4222 = vunpack.c.l.b16 %v731
        %v4223 = vunpack.c.h.b16 %v731
        %v4224 = vunpack.c.l.b16 %v732
        %v4225 = vunpack.c.h.b16 %v732
        %v4226 = vunpack.c.l.b16 %v733
        %v4227 = vunpack.c.h.b16 %v733
        %v4228 = vunpack.c.l.b16 %v734
        %v4229 = vunpack.c.h.b16 %v734
        %v4230 = vunpack.c.l.b16 %v735
        %v4231 = vunpack.c.h.b16 %v735
        %v4232 = vunpack.c.l.b16 %v736
        %v4233 = vunpack.c.h.b16 %v736
        %v4234 = vunpack.c.l.b16 %v737
        %v4235 = vunpack.c.h.b16 %v737
        %v4236 = vunpack.c.l.b16 %v738
        %v4237 = vunpack.c.h.b16 %v738
        %v4238 = vunpack.c.l.b16 %v739
        %v4239 = vunpack.c.h.b16 %v739
        %v4240 = vunpack.c.l.b16 %v740
        %v4241 = vunpack.c.h.b16 %v740
        %v4242 = vunpack.c.l.b16 %v741
        %v4243 = vunpack.c.h.b16 %v741
        %v4244 = vunpack.c.l.b16 %v742
        %v4245 = vunpack.c.h.b16 %v742
        %v4246 = vunpack.c.l.b16 %v743
        %v4247 = vunpack.c.h.b16 %v743
        %v4248 = vunpack.c.l.b16 %v744
        %v4249 = vunpack.c.h.b16 %v744
        %v4250 = vunpack.c.l.b16 %v745
        %v4251 = vunpack.c.h.b16 %v745
        %v4252 = vunpack.c.l.b16 %v746
        %v4253 = vunpack.c.h.b16 %v746
        %v4254 = vunpack.c.l.b16 %v747
        %v4255 = vunpack.c.h.b16 %v747
        %v4256 = vunpack.c.l.b16 %v748
        %v4257 = vunpack.c.h.b16 %v748
        %v4258 = vunpack.c.l.b16 %v749
        %v4259 = vunpack.c.h.b16 %v749
        %v4260 = vunpack.c.l.b16 %v750
        %v4261 = vunpack.c.h.b16 %v750
        %v4262 = vunpack.c.l.b16 %v751
        %v4263 = vunpack.c.h.b16 %v751
        %v4264 = vunpack.c.l.b16 %v752
        %v4265 = vunpack.c.h.b16 %v752
        %v4266 = vunpack.c.l.b16 %v753
        %v4267 = vunpack.c.h.b16 %v753
        %v4268 = vunpack.c.l.b16 %v754
        %v4269 = vunpack.c.h.b16 %v754
        %v4270 = vunpack.c.l.b16 %v755
        %v4271 = vunpack.c.h.b16 %v755
        %v4272 = vunpack.c.l.b16 %v756
        %v4273 = vunpack.c.h.b16 %v756
        %v4274 = vunpack.c.l.b16 %v757
        %v4275 = vunpack.c.h.b16 %v757
        %v4276 = vunpack.c.l.b16 %v758
        %v4277 = vunpack.c.h.b16 %v758
        %v4278 = vunpack.c.l.b16 %v759
        %v4279 = vunpack.c.h.b16 %v759
        %v4280 = vunpack.c.l.b16 %v760
        %v4281 = vunpack.c.h.b16 %v760
        %v4282 = vunpack.c.l.b16 %v761
        %v4283 = vunpack.c.h.b16 %v761
        %v4284 = vunpack.c.l.b16 %v762
        %v4285 = vunpack.c.h.b16 %v762
        %v4286 = vunpack.c.l.b16 %v763
        %v4287 = vunpack.c.h.b16 %v763
        %v4288 = vunpack.c.l.b16 %v764
        %v4289 = vunpack.c.h.b16 %v764
        %v4290 = vunpack.c.l.b16 %v765
        %v4291 = vunpack.c.h.b16 %v765
        %v4292 = vunpack.c.l.b16 %v766
        %v4293 = vunpack.c.h.b16 %v766
        %v4294 = vunpack.c.l.b16 %v767
        %v4295 = vunpack.c.h.b16 %v767
        %v4296 = vunpack.c.l.b16 %v768
        %v4297 = vunpack.c.h.b16 %v768
        %v4298 = vunpack.c.l.b16 %v769
        %v4299 = vunpack.c.h.b16 %v769
        %v4300 = vunpack.c.l.b16 %v770
        %v4301 = vunpack.c.h.b16 %v770
        %v4302 = vunpack.c.l.b16 %v771
        %v4303 = vunpack.c.h.b16 %v771
        %v4304 = vunpack.c.l.b16 %v772
        %v4305 = vunpack.c.h.b16 %v772
        %v4306 = vunpack.c.l.b16 %v773
        %v4307 = vunpack.c.h.b16 %v773
        %v4308 = vunpack.c.l.b16 %v774
        %v4309 = vunpack.c.h.b16 %v774
        %v4310 = vunpack.c.l.b16 %v775
        %v4311 = vunpack.c.h.b16 %v775
        %v4312 = vunpack.c.l.b16 %v776
        %v4313 = vunpack.c.h.b16 %v776
        %v4314 = vunpack.c.l.b16 %v777
        %v4315 = vunpack.c.h.b16 %v777
        %v4316 = vunpack.c.l.b16 %v778
        %v4317 = vunpack.c.h.b16 %v778
        %v4318 = vunpack.c.l.b16 %v779
        %v4319 = vunpack.c.h.b16 %v779
        %v4320 = vunpack.c.l.b16 %v780
        %v4321 = vunpack.c.h.b16 %v780
        %v4322 = vunpack.c.l.b16 %v781
        %v4323 = vunpack.c.h.b16 %v781
        %v4324 = vunpack.c.l.b16 %v782
        %v4325 = vunpack.c.h.b16 %v782
        %v4326 = vunpack.c.l.b16 %v783
        %v4327 = vunpack.c.h.b16 %v783
        %v4328 = vunpack.c.l.b16 %v784
        %v4329 = vunpack.c.h.b16 %v784
        %v4330 = vunpack.c.l.b16 %v785
        %v4331 = vunpack.c.h.b16 %v785
        %v4332 = vunpack.c.l.b16 %v786
        %v4333 = vunpack.c.h.b16 %v786
        %v4334 = vunpack.c.l.b16 %v787
        %v4335 = vunpack.c.h.b16 %v787
        %v4336 = vunpack.c.l.b16 %v788
        %v4337 = vunpack.c.h.b16 %v788
        %v4338 = vunpack.c.l.b16 %v789
        %v4339 = vunpack.c.h.b16 %v789
        %v4340 = vunpack.c.l.b16 %v790
        %v4341 = vunpack.c.h.b16 %v790
        %v4342 = vunpack.c.l.b16 %v791
        %v4343 = vunpack.c.h.b16 %v791
        %v4344 = vunpack.c.l.b16 %v792
        %v4345 = vunpack.c.h.b16 %v792
        %v4346 = vunpack.c.l.b16 %v793
        %v4347 = vunpack.c.h.b16 %v793
        %v4348 = vunpack.c.l.b16 %v794
        %v4349 = vunpack.c.h.b16 %v794
        %v4350 = vunpack.c.l.b16 %v795
        %v4351 = vunpack.c.h.b16 %v795
        %v4352 = vunpack.c.l.b16 %v796
        %v4353 = vunpack.c.h.b16 %v796
        %v4354 = vunpack.c.l.b16 %v797
        %v4355 = vunpack.c.h.b16 %v797
        %v4356 = vunpack.c.l.b16 %v798
        %v4357 = vunpack.c.h.b16 %v798
        %v4358 = vunpack.c.l.b16 %v799
        %v4359 = vunpack.c.h.b16 %v799
        %v4360 = vunpack.c.l.b16 %v800
        %v4361 = vunpack.c.h.b16 %v800
        %v4362 = vunpack.c.l.b16 %v801
        %v4363 = vunpack.c.h.b16 %v801
        %v4364 = vunpack.c.l.b16 %v802
        %v4365 = vunpack.c.h.b16 %v802
        %v4366 = vunpack.c.l.b16 %v803
        %v4367 = vunpack.c.h.b16 %v803
        %v4368 = vunpack.c.l.b16 %v804
        %v4369 = vunpack.c.h.b16 %v804
        %v4370 = vunpack.c.l.b16 %v805
        %v4371 = vunpack.c.h.b16 %v805
        %v4372 = vunpack.c.l.b16 %v806
        %v4373 = vunpack.c.h.b16 %v806
        %v4374 = vunpack.c.l.b16 %v807
        %v4375 = vunpack.c.h.b16 %v807
        %v4376 = vunpack.c.l.b16 %v808
        %v4377 = vunpack.c.h.b16 %v808
        %v4378 = vunpack.c.l.b16 %v809
        %v4379 = vunpack.c.h.b16 %v809
        %v4380 = vunpack.c.l.b16 %v810
        %v4381 = vunpack.c.h.b16 %v810
        %v4382 = vunpack.c.l.b16 %v811
        %v4383 = vunpack.c.h.b16 %v811
        %v4384 = vunpack.c.l.b16 %v812
        %v4385 = vunpack.c.h.b16 %v812
        %v4386 = vunpack.c.l.b16 %v813
        %v4387 = vunpack.c.h.b16 %v813
        %v4388 = vunpack.c.l.b16 %v814
        %v4389 = vunpack.c.h.b16 %v814
        %v4390 = vunpack.c.l.b16 %v815
        %v4391 = vunpack.c.h.b16 %v815
        %v4392 = vunpack.c.l.b16 %v816
        %v4393 = vunpack.c.h.b16 %v816
        %v4394 = vunpack.c.l.b16 %v817
        %v4395 = vunpack.c.h.b16 %v817
        %v4396 = vunpack.c.l.b16 %v818
        %v4397 = vunpack.c.h.b16 %v818
        %v4398 = vunpack.c.l.b16 %v819
        %v4399 = vunpack.c.h.b16 %v819
        %v4400 = vunpack.c.l.b16 %v820
        %v4401 = vunpack.c.h.b16 %v820
        %v4402 = vunpack.c.l.b16 %v821
        %v4403 = vunpack.c.h.b16 %v821
        %v4404 = vunpack.c.l.b16 %v822
        %v4405 = vunpack.c.h.b16 %v822
        %v4406 = vunpack.c.l.b16 %v823
        %v4407 = vunpack.c.h.b16 %v823
        %v4408 = vunpack.c.l.b16 %v824
        %v4409 = vunpack.c.h.b16 %v824
        %v4410 = vunpack.c.l.b16 %v825
        %v4411 = vunpack.c.h.b16 %v825
        %v4412 = vunpack.c.l.b16 %v826
        %v4413 = vunpack.c.h.b16 %v826
        %v4414 = vunpack.c.l.b16 %v827
        %v4415 = vunpack.c.h.b16 %v827
        %v4416 = vunpack.c.l.b16 %v828
        %v4417 = vunpack.c.h.b16 %v828
        %v4418 = vunpack.c.l.b16 %v829
        %v4419 = vunpack.c.h.b16 %v829
        %v4420 = vunpack.c.l.b16 %v830
        %v4421 = vunpack.c.h.b16 %v830
        %v4422 = vunpack.c.l.b16 %v831
        %v4423 = vunpack.c.h.b16 %v831
        %v4424 = vunpack.c.l.b16 %v832
        %v4425 = vunpack.c.h.b16 %v832
        %v4426 = vunpack.c.l.b16 %v833
        %v4427 = vunpack.c.h.b16 %v833
        %v4428 = vunpack.c.l.b16 %v834
        %v4429 = vunpack.c.h.b16 %v834
        %v4430 = vunpack.c.l.b16 %v835
        %v4431 = vunpack.c.h.b16 %v835
        %v4432 = vunpack.c.l.b16 %v836
        %v4433 = vunpack.c.h.b16 %v836
        %v4434 = vunpack.c.l.b16 %v837
        %v4435 = vunpack.c.h.b16 %v837
        %v4436 = vunpack.c.l.b16 %v838
        %v4437 = vunpack.c.h.b16 %v838
        %v4438 = vunpack.c.l.b16 %v839
        %v4439 = vunpack.c.h.b16 %v839
        %v4440 = vunpack.c.l.b16 %v840
        %v4441 = vunpack.c.h.b16 %v840
        %v4442 = vunpack.c.l.b16 %v841
        %v4443 = vunpack.c.h.b16 %v841
        %v4444 = vunpack.c.l.b16 %v842
        %v4445 = vunpack.c.h.b16 %v842
        %v4446 = vunpack.c.l.b16 %v843
        %v4447 = vunpack.c.h.b16 %v843
        %v4448 = vunpack.c.l.b16 %v844
        %v4449 = vunpack.c.h.b16 %v844
        %v4450 = vunpack.c.l.b16 %v845
        %v4451 = vunpack.c.h.b16 %v845
        %v4452 = vunpack.c.l.b16 %v846
        %v4453 = vunpack.c.h.b16 %v846
        %v4454 = vunpack.c.l.b16 %v847
        %v4455 = vunpack.c.h.b16 %v847
        %v4456 = vunpack.c.l.b16 %v848
        %v4457 = vunpack.c.h.b16 %v848
        %v4458 = vunpack.c.l.b16 %v849
        %v4459 = vunpack.c.h.b16 %v849
        %v4460 = vunpack.c.l.b16 %v850
        %v4461 = vunpack.c.h.b16 %v850
        %v4462 = vunpack.c.l.b16 %v851
        %v4463 = vunpack.c.h.b16 %v851
        %v4464 = vunpack.c.l.b16 %v852
        %v4465 = vunpack.c.h.b16 %v852
        %v4466 = vunpack.c.l.b16 %v853
        %v4467 = vunpack.c.h.b16 %v853
        %v4468 = vunpack.c.l.b16 %v854
        %v4469 = vunpack.c.h.b16 %v854
        %v4470 = vunpack.c.l.b16 %v855
        %v4471 = vunpack.c.h.b16 %v855
        %v4472 = vunpack.c.l.b16 %v856
        %v4473 = vunpack.c.h.b16 %v856
        %v4474 = vunpack.c.l.b16 %v857
        %v4475 = vunpack.c.h.b16 %v857
        %v4476 = vunpack.c.l.b16 %v858
        %v4477 = vunpack.c.h.b16 %v858
        %v4478 = vunpack.c.l.b16 %v859
        %v4479 = vunpack.c.h.b16 %v859
        %v4480 = vunpack.c.l.b16 %v860
        %v4481 = vunpack.c.h.b16 %v860
        %v4482 = vunpack.c.l.b16 %v861
        %v4483 = vunpack.c.h.b16 %v861
        %v4484 = vunpack.c.l.b16 %v862
        %v4485 = vunpack.c.h.b16 %v862
        %v4486 = vunpack.c.l.b16 %v863
        %v4487 = vunpack.c.h.b16 %v863
        %v4488 = vunpack.c.l.b16 %v864
        %v4489 = vunpack.c.h.b16 %v864
        %v4490 = vunpack.c.l.b16 %v865
        %v4491 = vunpack.c.h.b16 %v865
        %v4492 = vunpack.c.l.b16 %v866
        %v4493 = vunpack.c.h.b16 %v866
        %v4494 = vunpack.c.l.b16 %v867
        %v4495 = vunpack.c.h.b16 %v867
        %v4496 = vunpack.c.l.b16 %v868
        %v4497 = vunpack.c.h.b16 %v868
        %v4498 = vunpack.c.l.b16 %v869
        %v4499 = vunpack.c.h.b16 %v869
        %v4500 = vunpack.c.l.b16 %v870
        %v4501 = vunpack.c.h.b16 %v870
        %v4502 = vunpack.c.l.b16 %v871
        %v4503 = vunpack.c.h.b16 %v871
        %v4504 = vunpack.c.l.b16 %v872
        %v4505 = vunpack.c.h.b16 %v872
        %v4506 = vunpack.c.l.b16 %v873
        %v4507 = vunpack.c.h.b16 %v873
        %v4508 = vunpack.c.l.b16 %v874
        %v4509 = vunpack.c.h.b16 %v874
        %v4510 = vunpack.c.l.b16 %v875
        %v4511 = vunpack.c.h.b16 %v875
        %v4512 = vunpack.c.l.b16 %v876
        %v4513 = vunpack.c.h.b16 %v876
        %v4514 = vunpack.c.l.b16 %v877
        %v4515 = vunpack.c.h.b16 %v877
        %v4516 = vunpack.c.l.b16 %v878
        %v4517 = vunpack.c.h.b16 %v878
        %v4518 = vunpack.c.l.b16 %v879
        %v4519 = vunpack.c.h.b16 %v879
        %v4520 = vunpack.c.l.b16 %v880
        %v4521 = vunpack.c.h.b16 %v880
        %v4522 = vunpack.c.l.b16 %v881
        %v4523 = vunpack.c.h.b16 %v881
        %v4524 = vunpack.c.l.b16 %v882
        %v4525 = vunpack.c.h.b16 %v882
        %v4526 = vunpack.c.l.b16 %v883
        %v4527 = vunpack.c.h.b16 %v883
        %v4528 = vunpack.c.l.b16 %v884
        %v4529 = vunpack.c.h.b16 %v884
        %v4530 = vunpack.c.l.b16 %v885
        %v4531 = vunpack.c.h.b16 %v885
        %v4532 = vunpack.c.l.b16 %v886
        %v4533 = vunpack.c.h.b16 %v886
        %v4534 = vunpack.c.l.b16 %v887
        %v4535 = vunpack.c.h.b16 %v887
        %v4536 = vunpack.c.l.b16 %v888
        %v4537 = vunpack.c.h.b16 %v888
        %v4538 = vunpack.c.l.b16 %v889
        %v4539 = vunpack.c.h.b16 %v889
        %v4540 = vunpack.c.l.b16 %v890
        %v4541 = vunpack.c.h.b16 %v890
        %v4542 = vunpack.c.l.b16 %v891
        %v4543 = vunpack.c.h.b16 %v891
        %v4544 = vunpack.c.l.b16 %v892
        %v4545 = vunpack.c.h.b16 %v892
        %v4546 = vunpack.c.l.b16 %v893
        %v4547 = vunpack.c.h.b16 %v893
        %v4548 = vunpack.c.l.b16 %v894
        %v4549 = vunpack.c.h.b16 %v894
        %v4550 = vunpack.c.l.b16 %v895
        %v4551 = vunpack.c.h.b16 %v895
        %v4552 = vunpack.c.l.b16 %v896
        %v4553 = vunpack.c.h.b16 %v896
        %v4554 = vunpack.c.l.b16 %v897
        %v4555 = vunpack.c.h.b16 %v897
        %v4556 = vunpack.c.l.b16 %v898
        %v4557 = vunpack.c.h.b16 %v898
        %v4558 = vunpack.c.l.b16 %v899
        %v4559 = vunpack.c.h.b16 %v899
        %v4560 = vunpack.c.l.b16 %v900
        %v4561 = vunpack.c.h.b16 %v900
        %v4562 = vunpack.c.l.b16 %v901
        %v4563 = vunpack.c.h.b16 %v901
        %v4564 = vunpack.c.l.b16 %v902
        %v4565 = vunpack.c.h.b16 %v902
        %v4566 = vunpack.c.l.b16 %v903
        %v4567 = vunpack.c.h.b16 %v903
        %v4568 = vunpack.c.l.b16 %v904
        %v4569 = vunpack.c.h.b16 %v904
        %v4570 = vunpack.c.l.b16 %v905
        %v4571 = vunpack.c.h.b16 %v905
        %v4572 = vunpack.c.l.b16 %v906
        %v4573 = vunpack.c.h.b16 %v906
        %v4574 = vunpack.c.l.b16 %v907
        %v4575 = vunpack.c.h.b16 %v907
        %v4576 = vunpack.c.l.b16 %v908
        %v4577 = vunpack.c.h.b16 %v908
        %v4578 = vunpack.c.l.b16 %v909
        %v4579 = vunpack.c.h.b16 %v909
        %v4580 = vunpack.c.l.b16 %v910
        %v4581 = vunpack.c.h.b16 %v910
        %v4582 = vunpack.c.l.b16 %v911
        %v4583 = vunpack.c.h.b16 %v911
        %v4584 = vunpack.c.l.b16 %v912
        %v4585 = vunpack.c.h.b16 %v912
        %v4586 = vunpack.c.l.b16 %v913
        %v4587 = vunpack.c.h.b16 %v913
        %v4588 = vunpack.c.l.b16 %v914
        %v4589 = vunpack.c.h.b16 %v914
        %v4590 = vunpack.c.l.b16 %v915
        %v4591 = vunpack.c.h.b16 %v915
        %v4592 = vunpack.c.l.b16 %v916
        %v4593 = vunpack.c.h.b16 %v916
        %v4594 = vunpack.c.l.b16 %v917
        %v4595 = vunpack.c.h.b16 %v917
        %v4596 = vunpack.c.l.b16 %v918
        %v4597 = vunpack.c.h.b16 %v918
        %v4598 = vunpack.c.l.b16 %v919
        %v4599 = vunpack.c.h.b16 %v919
        %v4600 = vunpack.c.l.b16 %v920
        %v4601 = vunpack.c.h.b16 %v920
        %v4602 = vunpack.c.l.b16 %v921
        %v4603 = vunpack.c.h.b16 %v921
        %v4604 = vunpack.c.l.b16 %v922
        %v4605 = vunpack.c.h.b16 %v922
        %v4606 = vunpack.c.l.b16 %v923
        %v4607 = vunpack.c.h.b16 %v923
        %v4608 = vunpack.c.l.b16 %v924
        %v4609 = vunpack.c.h.b16 %v924
        %v4610 = vunpack.c.l.b16 %v925
        %v4611 = vunpack.c.h.b16 %v925
        %v4612 = vunpack.c.l.b16 %v926
        %v4613 = vunpack.c.h.b16 %v926
        %v4614 = vunpack.c.l.b16 %v927
        %v4615 = vunpack.c.h.b16 %v927
        %v4616 = vunpack.c.l.b16 %v928
        %v4617 = vunpack.c.h.b16 %v928
        %v4618 = vunpack.c.l.b16 %v929
        %v4619 = vunpack.c.h.b16 %v929
        %v4620 = vunpack.c.l.b16 %v930
        %v4621 = vunpack.c.h.b16 %v930
        %v4622 = vunpack.c.l.b16 %v931
        %v4623 = vunpack.c.h.b16 %v931
        %v4624 = vunpack.c.l.b16 %v932
        %v4625 = vunpack.c.h.b16 %v932
        %v4626 = vunpack.c.l.b16 %v933
        %v4627 = vunpack.c.h.b16 %v933
        %v4628 = vunpack.c.l.b16 %v934
        %v4629 = vunpack.c.h.b16 %v934
        %v4630 = vunpack.c.l.b16 %v935
        %v4631 = vunpack.c.h.b16 %v935
        %v4632 = vunpack.c.l.b16 %v936
        %v4633 = vunpack.c.h.b16 %v936
        %v4634 = vunpack.c.l.b16 %v937
        %v4635 = vunpack.c.h.b16 %v937
        %v4636 = vunpack.c.l.b16 %v938
        %v4637 = vunpack.c.h.b16 %v938
        %v4638 = vunpack.c.l.b16 %v939
        %v4639 = vunpack.c.h.b16 %v939
        %v4640 = vunpack.c.l.b16 %v940
        %v4641 = vunpack.c.h.b16 %v940
        %v4642 = vunpack.c.l.b16 %v941
        %v4643 = vunpack.c.h.b16 %v941
        %v4644 = vunpack.c.l.b16 %v942
        %v4645 = vunpack.c.h.b16 %v942
        %v4646 = vunpack.c.l.b16 %v943
        %v4647 = vunpack.c.h.b16 %v943
        %v4648 = vunpack.c.l.b16 %v944
        %v4649 = vunpack.c.h.b16 %v944
        %v4650 = vunpack.c.l.b16 %v945
        %v4651 = vunpack.c.h.b16 %v945
        %v4652 = vunpack.c.l.b16 %v946
        %v4653 = vunpack.c.h.b16 %v946
        %v4654 = vunpack.c.l.b16 %v947
        %v4655 = vunpack.c.h.b16 %v947
        %v4656 = vunpack.c.l.b16 %v948
        %v4657 = vunpack.c.h.b16 %v948
        %v4658 = vunpack.c.l.b16 %v949
        %v4659 = vunpack.c.h.b16 %v949
        %v4660 = vunpack.c.l.b16 %v950
        %v4661 = vunpack.c.h.b16 %v950
        %v4662 = vunpack.c.l.b16 %v951
        %v4663 = vunpack.c.h.b16 %v951
        %v4664 = vunpack.c.l.b16 %v952
        %v4665 = vunpack.c.h.b16 %v952
        %v4666 = vunpack.c.l.b16 %v953
        %v4667 = vunpack.c.h.b16 %v953
        %v4668 = vunpack.c.l.b16 %v954
        %v4669 = vunpack.c.h.b16 %v954
        %v4670 = vunpack.c.l.b16 %v955
        %v4671 = vunpack.c.h.b16 %v955
        %v4672 = vunpack.c.l.b16 %v956
        %v4673 = vunpack.c.h.b16 %v956
        %v4674 = vunpack.c.l.b16 %v957
        %v4675 = vunpack.c.h.b16 %v957
        %v4676 = vunpack.c.l.b16 %v958
        %v4677 = vunpack.c.h.b16 %v958
        %v4678 = vunpack.c.l.b16 %v959
        %v4679 = vunpack.c.h.b16 %v959
        %v4680 = vunpack.c.l.b16 %v960
        %v4681 = vunpack.c.h.b16 %v960
        %v4682 = vunpack.c.l.b16 %v961
        %v4683 = vunpack.c.h.b16 %v961
        %v4684 = vunpack.c.l.b16 %v962
        %v4685 = vunpack.c.h.b16 %v962
        %v4686 = vunpack.c.l.b16 %v963
        %v4687 = vunpack.c.h.b16 %v963
        %v4688 = vunpack.c.l.b16 %v964
        %v4689 = vunpack.c.h.b16 %v964
        %v4690 = vunpack.c.l.b16 %v965
        %v4691 = vunpack.c.h.b16 %v965
        %v4692 = vunpack.c.l.b16 %v966
        %v4693 = vunpack.c.h.b16 %v966
        %v4694 = vunpack.c.l.b16 %v967
        %v4695 = vunpack.c.h.b16 %v967
        %v4696 = vunpack.c.l.b16 %v968
        %v4697 = vunpack.c.h.b16 %v968
        %v4698 = vunpack.c.l.b16 %v969
        %v4699 = vunpack.c.h.b16 %v969
        %v4700 = vunpack.c.l.b16 %v970
        %v4701 = vunpack.c.h.b16 %v970
        %v4702 = vunpack.c.l.b16 %v971
        %v4703 = vunpack.c.h.b16 %v971
        %v4704 = vunpack.c.l.b16 %v972
        %v4705 = vunpack.c.h.b16 %v972
        %v4706 = vunpack.c.l.b16 %v973
        %v4707 = vunpack.c.h.b16 %v973
        %v4708 = vunpack.c.l.b16 %v974
        %v4709 = vunpack.c.h.b16 %v974
        %v4710 = vunpack.c.l.b16 %v975
        %v4711 = vunpack.c.h.b16 %v975
        %v4712 = vunpack.c.l.b16 %v976
        %v4713 = vunpack.c.h.b16 %v976
        %v4714 = vunpack.c.l.b16 %v977
        %v4715 = vunpack.c.h.b16 %v977
        %v4716 = vunpack.c.l.b16 %v978
        %v4717 = vunpack.c.h.b16 %v978
        %v4718 = vunpack.c.l.b16 %v979
        %v4719 = vunpack.c.h.b16 %v979
        %v4720 = vunpack.c.l.b16 %v980
        %v4721 = vunpack.c.h.b16 %v980
        %v4722 = vunpack.c.l.b16 %v981
        %v4723 = vunpack.c.h.b16 %v981
        %v4724 = vunpack.c.l.b16 %v982
        %v4725 = vunpack.c.h.b16 %v982
        %v4726 = vunpack.c.l.b16 %v983
        %v4727 = vunpack.c.h.b16 %v983
        %v4728 = vunpack.c.l.b16 %v984
        %v4729 = vunpack.c.h.b16 %v984
        %v4730 = vunpack.c.l.b16 %v985
        %v4731 = vunpack.c.h.b16 %v985
        %v4732 = vunpack.c.l.b16 %v986
        %v4733 = vunpack.c.h.b16 %v986
        %v4734 = vunpack.c.l.b16 %v987
        %v4735 = vunpack.c.h.b16 %v987
        %v4736 = vunpack.c.l.b16 %v988
        %v4737 = vunpack.c.h.b16 %v988
        %v4738 = vunpack.c.l.b16 %v989
        %v4739 = vunpack.c.h.b16 %v989
        %v4740 = vunpack.c.l.b16 %v990
        %v4741 = vunpack.c.h.b16 %v990
        %v4742 = vunpack.c.l.b16 %v991
        %v4743 = vunpack.c.h.b16 %v991
        %v4744 = vunpack.c.l.b16 %v992
        %v4745 = vunpack.c.h.b16 %v992
        %v4746 = vunpack.c.l.b16 %v993
        %v4747 = vunpack.c.h.b16 %v993
        %v4748 = vunpack.c.l.b16 %v994
        %v4749 = vunpack.c.h.b16 %v994
        %v4750 = vunpack.c.l.b16 %v995
        %v4751 = vunpack.c.h.b16 %v995
        %v4752 = vunpack.c.l.b16 %v996
        %v4753 = vunpack.c.h.b16 %v996
        %v4754 = vunpack.c.l.b16 %v997
        %v4755 = vunpack.c.h.b16 %v997
        %v4756 = vunpack.c.l.b16 %v998
        %v4757 = vunpack.c.h.b16 %v998
        %v4758 = vunpack.c.l.b16 %v999
        %v4759 = vunpack.c.h.b16 %v999
        %v4760 = vunpack.c.l.b16 %v1000
        %v4761 = vunpack.c.h.b16 %v1000
        %v4762 = vunpack.c.l.b16 %v1001
        %v4763 = vunpack.c.h.b16 %v1001
        %v4764 = vunpack.c.l.b16 %v1002
        %v4765 = vunpack.c.h.b16 %v1002
        %v4766 = vunpack.c.l.b16 %v1003
        %v4767 = vunpack.c.h.b16 %v1003
        %v4768 = vunpack.c.l.b16 %v1004
        %v4769 = vunpack.c.h.b16 %v1004
        %v4770 = vunpack.c.l.b16 %v1005
        %v4771 = vunpack.c.h.b16 %v1005
        %v4772 = vunpack.c.l.b16 %v1006
        %v4773 = vunpack.c.h.b16 %v1006
        %v4774 = vunpack.c.l.b16 %v1007
        %v4775 = vunpack.c.h.b16 %v1007
        %v4776 = vunpack.c.l.b16 %v1008
        %v4777 = vunpack.c.h.b16 %v1008
        %v4778 = vunpack.c.l.b16 %v1009
        %v4779 = vunpack.c.h.b16 %v1009
        %v4780 = vunpack.c.l.b16 %v1010
        %v4781 = vunpack.c.h.b16 %v1010
        %v4782 = vunpack.c.l.b16 %v1011
        %v4783 = vunpack.c.h.b16 %v1011
        %v4784 = vunpack.c.l.b16 %v1012
        %v4785 = vunpack.c.h.b16 %v1012
        %v4786 = vunpack.c.l.b16 %v1013
        %v4787 = vunpack.c.h.b16 %v1013
        %v4788 = vunpack.c.l.b16 %v1014
        %v4789 = vunpack.c.h.b16 %v1014
        %v4790 = vunpack.c.l.b16 %v1015
        %v4791 = vunpack.c.h.b16 %v1015
        %v4792 = vunpack.c.l.b16 %v1016
        %v4793 = vunpack.c.h.b16 %v1016
        %v4794 = vunpack.c.l.b16 %v1017
        %v4795 = vunpack.c.h.b16 %v1017
        %v4796 = vunpack.c.l.b16 %v1018
        %v4797 = vunpack.c.h.b16 %v1018
        %v4798 = vunpack.c.l.b16 %v1019
        %v4799 = vunpack.c.h.b16 %v1019
        %v4800 = vunpack.c.l.b16 %v1020
        %v4801 = vunpack.c.h.b16 %v1020
        %v4802 = vunpack.c.l.b16 %v1021
        %v4803 = vunpack.c.h.b16 %v1021
        %v4804 = vunpack.c.l.b16 %v1022
        %v4805 = vunpack.c.h.b16 %v1022
        %v4806 = vunpack.c.l.b16 %v1023
        %v4807 = vunpack.c.h.b16 %v1023
        %v4808 = vunpack.c.l.b16 %v1024
        %v4809 = vunpack.c.h.b16 %v1024
        %v4810 = vunpack.c.l.b16 %v1025
        %v4811 = vunpack.c.h.b16 %v1025
        %v4812 = vunpack.c.l.b16 %v1026
        %v4813 = vunpack.c.h.b16 %v1026
        %v4814 = vunpack.c.l.b16 %v1027
        %v4815 = vunpack.c.h.b16 %v1027
        %v4816 = vunpack.c.l.b16 %v1028
        %v4817 = vunpack.c.h.b16 %v1028
        %v4818 = vunpack.c.l.b16 %v1029
        %v4819 = vunpack.c.h.b16 %v1029
        %v4820 = vunpack.c.l.b16 %v1030
        %v4821 = vunpack.c.h.b16 %v1030
        %v4822 = vunpack.c.l.b16 %v1031
        %v4823 = vunpack.c.h.b16 %v1031
        %v4824 = vunpack.c.l.b16 %v1032
        %v4825 = vunpack.c.h.b16 %v1032
        %v4826 = vunpack.c.l.b16 %v1033
        %v4827 = vunpack.c.h.b16 %v1033
        %v4828 = vunpack.c.l.b16 %v1034
        %v4829 = vunpack.c.h.b16 %v1034
        %v4830 = vunpack.c.l.b16 %v1035
        %v4831 = vunpack.c.h.b16 %v1035
        %v4832 = vunpack.c.l.b16 %v1036
        %v4833 = vunpack.c.h.b16 %v1036
        %v4834 = vunpack.c.l.b16 %v1037
        %v4835 = vunpack.c.h.b16 %v1037
        %v4836 = vunpack.c.l.b16 %v1038
        %v4837 = vunpack.c.h.b16 %v1038
        %v4838 = vunpack.c.l.b16 %v1039
        %v4839 = vunpack.c.h.b16 %v1039
        %v4840 = vunpack.c.l.b16 %v1040
        %v4841 = vunpack.c.h.b16 %v1040
        %v4842 = vunpack.c.l.b16 %v1041
        %v4843 = vunpack.c.h.b16 %v1041
        %v4844 = vunpack.c.l.b16 %v1042
        %v4845 = vunpack.c.h.b16 %v1042
        %v4846 = vunpack.c.l.b16 %v1043
        %v4847 = vunpack.c.h.b16 %v1043
        %v4848 = vunpack.c.l.b16 %v1044
        %v4849 = vunpack.c.h.b16 %v1044
        %v4850 = vunpack.c.l.b16 %v1045
        %v4851 = vunpack.c.h.b16 %v1045
        %v4852 = vunpack.c.l.b16 %v1046
        %v4853 = vunpack.c.h.b16 %v1046
        %v4854 = vunpack.c.l.b16 %v1047
        %v4855 = vunpack.c.h.b16 %v1047
        %v4856 = vunpack.c.l.b16 %v1048
        %v4857 = vunpack.c.h.b16 %v1048
        %v4858 = vunpack.c.l.b16 %v1049
        %v4859 = vunpack.c.h.b16 %v1049
        %v4860 = vunpack.c.l.b16 %v1050
        %v4861 = vunpack.c.h.b16 %v1050
        %v4862 = vunpack.c.l.b16 %v1051
        %v4863 = vunpack.c.h.b16 %v1051
        %v4864 = vunpack.c.l.b16 %v1052
        %v4865 = vunpack.c.h.b16 %v1052
        %v4866 = vunpack.c.l.b16 %v1053
        %v4867 = vunpack.c.h.b16 %v1053
        %v4868 = vunpack.c.l.b16 %v1054
        %v4869 = vunpack.c.h.b16 %v1054
        %v4870 = vunpack.c.l.b16 %v1055
        %v4871 = vunpack.c.h.b16 %v1055
        %v4872 = vunpack.c.l.b16 %v1056
        %v4873 = vunpack.c.h.b16 %v1056
        %v4874 = vunpack.c.l.b16 %v1057
        %v4875 = vunpack.c.h.b16 %v1057
        %v4876 = vunpack.c.l.b16 %v1058
        %v4877 = vunpack.c.h.b16 %v1058
        %v4878 = vunpack.c.l.b16 %v1059
        %v4879 = vunpack.c.h.b16 %v1059
        %v4880 = vunpack.c.l.b16 %v1060
        %v4881 = vunpack.c.h.b16 %v1060
        %v4882 = vunpack.c.l.b16 %v1061
        %v4883 = vunpack.c.h.b16 %v1061
        %v4884 = vunpack.c.l.b16 %v1062
        %v4885 = vunpack.c.h.b16 %v1062
        %v4886 = vunpack.c.l.b16 %v1063
        %v4887 = vunpack.c.h.b16 %v1063
        %v4888 = vunpack.c.l.b16 %v1064
        %v4889 = vunpack.c.h.b16 %v1064
        %v4890 = vunpack.c.l.b16 %v1065
        %v4891 = vunpack.c.h.b16 %v1065
        %v4892 = vunpack.c.l.b16 %v1066
        %v4893 = vunpack.c.h.b16 %v1066
        %v4894 = vunpack.c.l.b16 %v1067
        %v4895 = vunpack.c.h.b16 %v1067
        %v4896 = vunpack.c.l.b16 %v1068
        %v4897 = vunpack.c.h.b16 %v1068
        %v4898 = vunpack.c.l.b16 %v1069
        %v4899 = vunpack.c.h.b16 %v1069
        %v4900 = vunpack.c.l.b16 %v1070
        %v4901 = vunpack.c.h.b16 %v1070
        %v4902 = vunpack.c.l.b16 %v1071
        %v4903 = vunpack.c.h.b16 %v1071
        %v4904 = vunpack.c.l.b16 %v1072
        %v4905 = vunpack.c.h.b16 %v1072
        %v4906 = vunpack.c.l.b16 %v1073
        %v4907 = vunpack.c.h.b16 %v1073
        %v4908 = vunpack.c.l.b16 %v1074
        %v4909 = vunpack.c.h.b16 %v1074
        %v4910 = vunpack.c.l.b16 %v1075
        %v4911 = vunpack.c.h.b16 %v1075
        %v4912 = vunpack.c.l.b16 %v1076
        %v4913 = vunpack.c.h.b16 %v1076
        %v4914 = vunpack.c.l.b16 %v1077
        %v4915 = vunpack.c.h.b16 %v1077
        %v4916 = vunpack.c.l.b16 %v1078
        %v4917 = vunpack.c.h.b16 %v1078
        %v4918 = vunpack.c.l.b16 %v1079
        %v4919 = vunpack.c.h.b16 %v1079
        %v4920 = vunpack.c.l.b16 %v1080
        %v4921 = vunpack.c.h.b16 %v1080
        %v4922 = vunpack.c.l.b16 %v1081
        %v4923 = vunpack.c.h.b16 %v1081
        %v4924 = vunpack.c.l.b16 %v1082
        %v4925 = vunpack.c.h.b16 %v1082
        %v4926 = vunpack.c.l.b16 %v1083
        %v4927 = vunpack.c.h.b16 %v1083
        %v4928 = vunpack.c.l.b16 %v1084
        %v4929 = vunpack.c.h.b16 %v1084
        %v4930 = vunpack.c.l.b16 %v1085
        %v4931 = vunpack.c.h.b16 %v1085
        %v4932 = vunpack.c.l.b16 %v1086
        %v4933 = vunpack.c.h.b16 %v1086
        %v4934 = vunpack.c.l.b16 %v1087
        %v4935 = vunpack.c.h.b16 %v1087
        %v4936 = vunpack.c.l.b16 %v1088
        %v4937 = vunpack.c.h.b16 %v1088
        %v4938 = vunpack.c.l.b16 %v1089
        %v4939 = vunpack.c.h.b16 %v1089
        %v4940 = vunpack.c.l.b16 %v1090
        %v4941 = vunpack.c.h.b16 %v1090
        %v4942 = vunpack.c.l.b16 %v1091
        %v4943 = vunpack.c.h.b16 %v1091
        %v4944 = vunpack.c.l.b16 %v1092
        %v4945 = vunpack.c.h.b16 %v1092
        %v4946 = vunpack.c.l.b16 %v1093
        %v4947 = vunpack.c.h.b16 %v1093
        %v4948 = vunpack.c.l.b16 %v1094
        %v4949 = vunpack.c.h.b16 %v1094
        %v4950 = vunpack.c.l.b16 %v1095
        %v4951 = vunpack.c.h.b16 %v1095
        %v4952 = vunpack.c.l.b16 %v1096
        %v4953 = vunpack.c.h.b16 %v1096
        %v4954 = vunpack.c.l.b16 %v1097
        %v4955 = vunpack.c.h.b16 %v1097
        %v4956 = vunpack.c.l.b16 %v1098
        %v4957 = vunpack.c.h.b16 %v1098
        %v4958 = vunpack.c.l.b16 %v1099
        %v4959 = vunpack.c.h.b16 %v1099
        %v4960 = vunpack.c.l.b16 %v1100
        %v4961 = vunpack.c.h.b16 %v1100
        %v4962 = vunpack.c.l.b16 %v1101
        %v4963 = vunpack.c.h.b16 %v1101
        %v4964 = vunpack.c.l.b16 %v1102
        %v4965 = vunpack.c.h.b16 %v1102
        %v4966 = vunpack.c.l.b16 %v1103
        %v4967 = vunpack.c.h.b16 %v1103
        %v4968 = vunpack.c.l.b16 %v1104
        %v4969 = vunpack.c.h.b16 %v1104
        %v4970 = vunpack.c.l.b16 %v1105
        %v4971 = vunpack.c.h.b16 %v1105
        %v4972 = vunpack.c.l.b16 %v1106
        %v4973 = vunpack.c.h.b16 %v1106
        %v4974 = vunpack.c.l.b16 %v1107
        %v4975 = vunpack.c.h.b16 %v1107
        %v4976 = vunpack.c.l.b16 %v1108
        %v4977 = vunpack.c.h.b16 %v1108
        %v4978 = vunpack.c.l.b16 %v1109
        %v4979 = vunpack.c.h.b16 %v1109
        %v4980 = vunpack.c.l.b16 %v1110
        %v4981 = vunpack.c.h.b16 %v1110
        %v4982 = vunpack.c.l.b16 %v1111
        %v4983 = vunpack.c.h.b16 %v1111
        %v4984 = vunpack.c.l.b16 %v1112
        %v4985 = vunpack.c.h.b16 %v1112
        %v4986 = vunpack.c.l.b16 %v1113
        %v4987 = vunpack.c.h.b16 %v1113
        %v4988 = vunpack.c.l.b16 %v1114
        %v4989 = vunpack.c.h.b16 %v1114
        %v4990 = vunpack.c.l.b16 %v1115
        %v4991 = vunpack.c.h.b16 %v1115
        %v4992 = vunpack.c.l.b16 %v1116
        %v4993 = vunpack.c.h.b16 %v1116
        %v4994 = vunpack.c.l.b16 %v1117
        %v4995 = vunpack.c.h.b16 %v1117
        %v4996 = vunpack.c.l.b16 %v1118
        %v4997 = vunpack.c.h.b16 %v1118
        %v4998 = vunpack.c.l.b16 %v1119
        %v4999 = vunpack.c.h.b16 %v1119
        %v5000 = vunpack.c.l.b16 %v1120
        %v5001 = vunpack.c.h.b16 %v1120
        %v5002 = vunpack.c.l.b16 %v1121
        %v5003 = vunpack.c.h.b16 %v1121
        %v5004 = vunpack.c.l.b16 %v1122
        %v5005 = vunpack.c.h.b16 %v1122
        %v5006 = vunpack.c.l.b16 %v1123
        %v5007 = vunpack.c.h.b16 %v1123
        %v5008 = vunpack.c.l.b16 %v1124
        %v5009 = vunpack.c.h.b16 %v1124
        %v5010 = vunpack.c.l.b16 %v1125
        %v5011 = vunpack.c.h.b16 %v1125
        %v5012 = vunpack.c.l.b16 %v1126
        %v5013 = vunpack.c.h.b16 %v1126
        %v5014 = vunpack.c.l.b16 %v1127
        %v5015 = vunpack.c.h.b16 %v1127
        %v5016 = vunpack.c.l.b16 %v1128
        %v5017 = vunpack.c.h.b16 %v1128
        %v5018 = vunpack.c.l.b16 %v1129
        %v5019 = vunpack.c.h.b16 %v1129
        %v5020 = vunpack.c.l.b16 %v1130
        %v5021 = vunpack.c.h.b16 %v1130
        %v5022 = vunpack.c.l.b16 %v1131
        %v5023 = vunpack.c.h.b16 %v1131
        %v5024 = vunpack.c.l.b16 %v1132
        %v5025 = vunpack.c.h.b16 %v1132
        %v5026 = vunpack.c.l.b16 %v1133
        %v5027 = vunpack.c.h.b16 %v1133
        %v5028 = vunpack.c.l.b16 %v1134
        %v5029 = vunpack.c.h.b16 %v1134
        %v5030 = vunpack.c.l.b16 %v1135
        %v5031 = vunpack.c.h.b16 %v1135
        %v5032 = vunpack.c.l.b16 %v1136
        %v5033 = vunpack.c.h.b16 %v1136
        %v5034 = vunpack.c.l.b16 %v1137
        %v5035 = vunpack.c.h.b16 %v1137
        %v5036 = vunpack.c.l.b16 %v1138
        %v5037 = vunpack.c.h.b16 %v1138
        %v5038 = vunpack.c.l.b16 %v1139
        %v5039 = vunpack.c.h.b16 %v1139
        %v5040 = vunpack.c.l.b16 %v1140
        %v5041 = vunpack.c.h.b16 %v1140
        %v5042 = vunpack.c.l.b16 %v1141
        %v5043 = vunpack.c.h.b16 %v1141
        %v5044 = vunpack.c.l.b16 %v1142
        %v5045 = vunpack.c.h.b16 %v1142
        %v5046 = vunpack.c.l.b16 %v1143
        %v5047 = vunpack.c.h.b16 %v1143
        %v5048 = vunpack.c.l.b16 %v1144
        %v5049 = vunpack.c.h.b16 %v1144
        %v5050 = vunpack.c.l.b16 %v1145
        %v5051 = vunpack.c.h.b16 %v1145
        %v5052 = vunpack.c.l.b16 %v1146
        %v5053 = vunpack.c.h.b16 %v1146
        %v5054 = vunpack.c.l.b16 %v1147
        %v5055 = vunpack.c.h.b16 %v1147
        %v5056 = vunpack.c.l.b16 %v1148
        %v5057 = vunpack.c.h.b16 %v1148
        %v5058 = vunpack.c.l.b16 %v1149
        %v5059 = vunpack.c.h.b16 %v1149
        %v5060 = vunpack.c.l.b16 %v1150
        %v5061 = vunpack.c.h.b16 %v1150
        %v5062 = vunpack.c.l.b16 %v1151
        %v5063 = vunpack.c.h.b16 %v1151
        %v5064 = vunpack.c.l.b16 %v1152
        %v5065 = vunpack.c.h.b16 %v1152
        %v5066 = vunpack.c.l.b16 %v1153
        %v5067 = vunpack.c.h.b16 %v1153
        %v5068 = vunpack.c.l.b16 %v1154
        %v5069 = vunpack.c.h.b16 %v1154
        %v5070 = vunpack.c.l.b16 %v1155
        %v5071 = vunpack.c.h.b16 %v1155
        %v5072 = vunpack.c.l.b16 %v1156
        %v5073 = vunpack.c.h.b16 %v1156
        %v5074 = vunpack.c.l.b16 %v1157
        %v5075 = vunpack.c.h.b16 %v1157
        %v5076 = vunpack.c.l.b16 %v1158
        %v5077 = vunpack.c.h.b16 %v1158
        %v5078 = vunpack.c.l.b16 %v1159
        %v5079 = vunpack.c.h.b16 %v1159
        %v5080 = vunpack.c.l.b16 %v1160
        %v5081 = vunpack.c.h.b16 %v1160
        %v5082 = vunpack.c.l.b16 %v1161
        %v5083 = vunpack.c.h.b16 %v1161
        %v5084 = vunpack.c.l.b16 %v1162
        %v5085 = vunpack.c.h.b16 %v1162
        %v5086 = vunpack.c.l.b16 %v1163
        %v5087 = vunpack.c.h.b16 %v1163
        %v5088 = vunpack.c.l.b16 %v1164
        %v5089 = vunpack.c.h.b16 %v1164
        %v5090 = vunpack.c.l.b16 %v1165
        %v5091 = vunpack.c.h.b16 %v1165
        %v5092 = vunpack.c.l.b16 %v1166
        %v5093 = vunpack.c.h.b16 %v1166
        %v5094 = vunpack.c.l.b16 %v1167
        %v5095 = vunpack.c.h.b16 %v1167
        %v5096 = vunpack.c.l.b16 %v1168
        %v5097 = vunpack.c.h.b16 %v1168
        %v5098 = vunpack.c.l.b16 %v1169
        %v5099 = vunpack.c.h.b16 %v1169
        %v5100 = vunpack.c.l.b16 %v1170
        %v5101 = vunpack.c.h.b16 %v1170
        %v5102 = vunpack.c.l.b16 %v1171
        %v5103 = vunpack.c.h.b16 %v1171
        %v5104 = vunpack.c.l.b16 %v1172
        %v5105 = vunpack.c.h.b16 %v1172
        %v5106 = vunpack.c.l.b16 %v1173
        %v5107 = vunpack.c.h.b16 %v1173
        %v5108 = vunpack.c.l.b16 %v1174
        %v5109 = vunpack.c.h.b16 %v1174
        %v5110 = vunpack.c.l.b16 %v1175
        %v5111 = vunpack.c.h.b16 %v1175
        %v5112 = vunpack.c.l.b16 %v1176
        %v5113 = vunpack.c.h.b16 %v1176
        %v5114 = vunpack.c.l.b16 %v1177
        %v5115 = vunpack.c.h.b16 %v1177
        %v5116 = vunpack.c.l.b16 %v1178
        %v5117 = vunpack.c.h.b16 %v1178
        %v5118 = vunpack.c.l.b16 %v1179
        %v5119 = vunpack.c.h.b16 %v1179
        %v5120 = vunpack.c.l.b16 %v1180
        %v5121 = vunpack.c.h.b16 %v1180
        %v5122 = vunpack.c.l.b16 %v1181
        %v5123 = vunpack.c.h.b16 %v1181
        %v5124 = vunpack.c.l.b16 %v1182
        %v5125 = vunpack.c.h.b16 %v1182
        %v5126 = vunpack.c.l.b16 %v1183
        %v5127 = vunpack.c.h.b16 %v1183
        %v5128 = vunpack.c.l.b16 %v1184
        %v5129 = vunpack.c.h.b16 %v1184
        %v5130 = vunpack.c.l.b16 %v1185
        %v5131 = vunpack.c.h.b16 %v1185
        %v5132 = vunpack.c.l.b16 %v1186
        %v5133 = vunpack.c.h.b16 %v1186
        %v5134 = vunpack.c.l.b16 %v1187
        %v5135 = vunpack.c.h.b16 %v1187
        %v5136 = vunpack.c.l.b16 %v1188
        %v5137 = vunpack.c.h.b16 %v1188
        %v5138 = vunpack.c.l.b16 %v1189
        %v5139 = vunpack.c.h.b16 %v1189
        %v5140 = vunpack.c.l.b16 %v1190
        %v5141 = vunpack.c.h.b16 %v1190
        %v5142 = vunpack.c.l.b16 %v1191
        %v5143 = vunpack.c.h.b16 %v1191
        %v5144 = vunpack.c.l.b16 %v1192
        %v5145 = vunpack.c.h.b16 %v1192
        %v5146 = vunpack.c.l.b16 %v1193
        %v5147 = vunpack.c.h.b16 %v1193
        %v5148 = vunpack.c.l.b16 %v1194
        %v5149 = vunpack.c.h.b16 %v1194
        %v5150 = vunpack.c.l.b16 %v1195
        %v5151 = vunpack.c.h.b16 %v1195
        %v5152 = vunpack.c.l.b16 %v1196
        %v5153 = vunpack.c.h.b16 %v1196
        %v5154 = vunpack.c.l.b16 %v1197
        %v5155 = vunpack.c.h.b16 %v1197
        %v5156 = vunpack.c.l.b16 %v1198
        %v5157 = vunpack.c.h.b16 %v1198
        %v5158 = vunpack.c.l.b16 %v1199
        %v5159 = vunpack.c.h.b16 %v1199
        %v5160 = vunpack.c.l.b16 %v1200
        %v5161 = vunpack.c.h.b16 %v1200
        %v5162 = vunpack.c.l.b16 %v1201
        %v5163 = vunpack.c.h.b16 %v1201
        %v5164 = vunpack.c.l.b16 %v1202
        %v5165 = vunpack.c.h.b16 %v1202
        %v5166 = vunpack.c.l.b16 %v1203
        %v5167 = vunpack.c.h.b16 %v1203
        %v5168 = vunpack.c.l.b16 %v1204
        %v5169 = vunpack.c.h.b16 %v1204
        %v5170 = vunpack.c.l.b16 %v1205
        %v5171 = vunpack.c.h.b16 %v1205
        %v5172 = vunpack.c.l.b16 %v1206
        %v5173 = vunpack.c.h.b16 %v1206
        %v5174 = vunpack.c.l.b16 %v1207
        %v5175 = vunpack.c.h.b16 %v1207
        %v5176 = vunpack.c.l.b16 %v1208
        %v5177 = vunpack.c.h.b16 %v1208
        %v5178 = vunpack.c.l.b16 %v1209
        %v5179 = vunpack.c.h.b16 %v1209
        %v5180 = vunpack.c.l.b16 %v1210
        %v5181 = vunpack.c.h.b16 %v1210
        %v5182 = vunpack.c.l.b16 %v1211
        %v5183 = vunpack.c.h.b16 %v1211
        %v5184 = vunpack.c.l.b16 %v1212
        %v5185 = vunpack.c.h.b16 %v1212
        %v5186 = vunpack.c.l.b16 %v1213
        %v5187 = vunpack.c.h.b16 %v1213
        %v5188 = vunpack.c.l.b16 %v1214
        %v5189 = vunpack.c.h.b16 %v1214
        %v5190 = vunpack.c.l.b16 %v1215
        %v5191 = vunpack.c.h.b16 %v1215
        %v5192 = vunpack.c.l.b16 %v1216
        %v5193 = vunpack.c.h.b16 %v1216
        %v5194 = vunpack.c.l.b16 %v1217
        %v5195 = vunpack.c.h.b16 %v1217
        %v5196 = vunpack.c.l.b16 %v1218
        %v5197 = vunpack.c.h.b16 %v1218
        %v5198 = vunpack.c.l.b16 %v1219
        %v5199 = vunpack.c.h.b16 %v1219
        %v5200 = vunpack.c.l.b16 %v1220
        %v5201 = vunpack.c.h.b16 %v1220
        %v5202 = vunpack.c.l.b16 %v1221
        %v5203 = vunpack.c.h.b16 %v1221
        %v5204 = vunpack.c.l.b16 %v1222
        %v5205 = vunpack.c.h.b16 %v1222
        %v5206 = vunpack.c.l.b16 %v1223
        %v5207 = vunpack.c.h.b16 %v1223
        %v5208 = vunpack.c.l.b16 %v1224
        %v5209 = vunpack.c.h.b16 %v1224
        %v5210 = vunpack.c.l.b16 %v1225
        %v5211 = vunpack.c.h.b16 %v1225
        %v5212 = vunpack.c.l.b16 %v1226
        %v5213 = vunpack.c.h.b16 %v1226
        %v5214 = vunpack.c.l.b16 %v1227
        %v5215 = vunpack.c.h.b16 %v1227
        %v5216 = vunpack.c.l.b16 %v1228
        %v5217 = vunpack.c.h.b16 %v1228
        %v5218 = vunpack.c.l.b16 %v1229
        %v5219 = vunpack.c.h.b16 %v1229
        %v5220 = vunpack.c.l.b16 %v1230
        %v5221 = vunpack.c.h.b16 %v1230
        %v5222 = vunpack.c.l.b16 %v1231
        %v5223 = vunpack.c.h.b16 %v1231
        %v5224 = vunpack.c.l.b16 %v1232
        %v5225 = vunpack.c.h.b16 %v1232
        %v5226 = vunpack.c.l.b16 %v1233
        %v5227 = vunpack.c.h.b16 %v1233
        %v5228 = vunpack.c.l.b16 %v1234
        %v5229 = vunpack.c.h.b16 %v1234
        %v5230 = vunpack.c.l.b16 %v1235
        %v5231 = vunpack.c.h.b16 %v1235
        %v5232 = vunpack.c.l.b16 %v1236
        %v5233 = vunpack.c.h.b16 %v1236
        %v5234 = vunpack.c.l.b16 %v1237
        %v5235 = vunpack.c.h.b16 %v1237
        %v5236 = vunpack.c.l.b16 %v1238
        %v5237 = vunpack.c.h.b16 %v1238
        %v5238 = vunpack.c.l.b16 %v1239
        %v5239 = vunpack.c.h.b16 %v1239
        %v5240 = vunpack.c.l.b16 %v1240
        %v5241 = vunpack.c.h.b16 %v1240
        %v5242 = vunpack.c.l.b16 %v1241
        %v5243 = vunpack.c.h.b16 %v1241
        %v5244 = vunpack.c.l.b16 %v1242
        %v5245 = vunpack.c.h.b16 %v1242
        %v5246 = vunpack.c.l.b16 %v1243
        %v5247 = vunpack.c.h.b16 %v1243
        %v5248 = vunpack.c.l.b16 %v1244
        %v5249 = vunpack.c.h.b16 %v1244
        %v5250 = vunpack.c.l.b16 %v1245
        %v5251 = vunpack.c.h.b16 %v1245
        %v5252 = vunpack.c.l.b16 %v1246
        %v5253 = vunpack.c.h.b16 %v1246
        %v5254 = vunpack.c.l.b16 %v1247
        %v5255 = vunpack.c.h.b16 %v1247
        %v5256 = vunpack.c.l.b16 %v1248
        %v5257 = vunpack.c.h.b16 %v1248
        %v5258 = vunpack.c.l.b16 %v1249
        %v5259 = vunpack.c.h.b16 %v1249
        %v5260 = vunpack.c.l.b16 %v1250
        %v5261 = vunpack.c.h.b16 %v1250
        %v5262 = vunpack.c.l.b16 %v1251
        %v5263 = vunpack.c.h.b16 %v1251
        %v5264 = vunpack.c.l.b16 %v1252
        %v5265 = vunpack.c.h.b16 %v1252
        %v5266 = vunpack.c.l.b16 %v1253
        %v5267 = vunpack.c.h.b16 %v1253
        %v5268 = vunpack.c.l.b16 %v1254
        %v5269 = vunpack.c.h.b16 %v1254
        %v5270 = vunpack.c.l.b16 %v1255
        %v5271 = vunpack.c.h.b16 %v1255
        %v5272 = vunpack.c.l.b16 %v1256
        %v5273 = vunpack.c.h.b16 %v1256
        %v5274 = vunpack.c.l.b16 %v1257
        %v5275 = vunpack.c.h.b16 %v1257
        %v5276 = vunpack.c.l.b16 %v1258
        %v5277 = vunpack.c.h.b16 %v1258
        %v5278 = vunpack.c.l.b16 %v1259
        %v5279 = vunpack.c.h.b16 %v1259
        %v5280 = vunpack.c.l.b16 %v1260
        %v5281 = vunpack.c.h.b16 %v1260
        %v5282 = vunpack.c.l.b16 %v1261
        %v5283 = vunpack.c.h.b16 %v1261
        %v5284 = vunpack.c.l.b16 %v1262
        %v5285 = vunpack.c.h.b16 %v1262
        %v5286 = vunpack.c.l.b16 %v1263
        %v5287 = vunpack.c.h.b16 %v1263
        %v5288 = vunpack.c.l.b16 %v1264
        %v5289 = vunpack.c.h.b16 %v1264
        %v5290 = vunpack.c.l.b16 %v1265
        %v5291 = vunpack.c.h.b16 %v1265
        %v5292 = vunpack.c.l.b16 %v1266
        %v5293 = vunpack.c.h.b16 %v1266
        %v5294 = vunpack.c.l.b16 %v1267
        %v5295 = vunpack.c.h.b16 %v1267
        %v5296 = vunpack.c.l.b16 %v1268
        %v5297 = vunpack.c.h.b16 %v1268
        %v5298 = vunpack.c.l.b16 %v1269
        %v5299 = vunpack.c.h.b16 %v1269
        %v5300 = vunpack.c.l.b16 %v1270
        %v5301 = vunpack.c.h.b16 %v1270
        %v5302 = vunpack.c.l.b16 %v1271
        %v5303 = vunpack.c.h.b16 %v1271
        %v5304 = vunpack.c.l.b16 %v1272
        %v5305 = vunpack.c.h.b16 %v1272
        %v5306 = vunpack.c.l.b16 %v1273
        %v5307 = vunpack.c.h.b16 %v1273
        %v5308 = vunpack.c.l.b16 %v1274
        %v5309 = vunpack.c.h.b16 %v1274
        %v5310 = vunpack.c.l.b16 %v1275
        %v5311 = vunpack.c.h.b16 %v1275
        %v5312 = vunpack.c.l.b16 %v1276
        %v5313 = vunpack.c.h.b16 %v1276
        %v5314 = vunpack.c.l.b16 %v1277
        %v5315 = vunpack.c.h.b16 %v1277
        %v5316 = vunpack.c.l.b16 %v1278
        %v5317 = vunpack.c.h.b16 %v1278
        %v5318 = vunpack.c.l.b16 %v1279
        %v5319 = vunpack.c.h.b16 %v1279
        %v5320 = vunpack.c.l.b16 %v1280
        %v5321 = vunpack.c.h.b16 %v1280
        %v5322 = vunpack.c.l.b16 %v1281
        %v5323 = vunpack.c.h.b16 %v1281
        %v5324 = vunpack.c.l.b16 %v1282
        %v5325 = vunpack.c.h.b16 %v1282
        %v5326 = vunpack.c.l.b16 %v1283
        %v5327 = vunpack.c.h.b16 %v1283
        %v5328 = vunpack.c.l.b16 %v1284
        %v5329 = vunpack.c.h.b16 %v1284
        %v5330 = vunpack.c.l.b16 %v1285
        %v5331 = vunpack.c.h.b16 %v1285
        %v5332 = vunpack.c.l.b16 %v1286
        %v5333 = vunpack.c.h.b16 %v1286
        %v5334 = vunpack.c.l.b16 %v1287
        %v5335 = vunpack.c.h.b16 %v1287
        %v5336 = vunpack.c.l.b16 %v1288
        %v5337 = vunpack.c.h.b16 %v1288
        %v5338 = vunpack.c.l.b16 %v1289
        %v5339 = vunpack.c.h.b16 %v1289
        %v5340 = vunpack.c.l.b16 %v1290
        %v5341 = vunpack.c.h.b16 %v1290
        %v5342 = vunpack.c.l.b16 %v1291
        %v5343 = vunpack.c.h.b16 %v1291
        %v5344 = vunpack.c.l.b16 %v1292
        %v5345 = vunpack.c.h.b16 %v1292
        %v5346 = vunpack.c.l.b16 %v1293
        %v5347 = vunpack.c.h.b16 %v1293
        %v5348 = vunpack.c.l.b16 %v1294
        %v5349 = vunpack.c.h.b16 %v1294
        %v5350 = vunpack.c.l.b16 %v1295
        %v5351 = vunpack.c.h.b16 %v1295
        %v5352 = vunpack.c.l.b16 %v1296
        %v5353 = vunpack.c.h.b16 %v1296
        %v5354 = vunpack.c.l.b16 %v1297
        %v5355 = vunpack.c.h.b16 %v1297
        %v5356 = vunpack.c.l.b16 %v1298
        %v5357 = vunpack.c.h.b16 %v1298
        %v5358 = vunpack.c.l.b16 %v1299
        %v5359 = vunpack.c.h.b16 %v1299
        %v5360 = vunpack.c.l.b16 %v1300
        %v5361 = vunpack.c.h.b16 %v1300
        %v5362 = vunpack.c.l.b16 %v1301
        %v5363 = vunpack.c.h.b16 %v1301
        %v5364 = vunpack.c.l.b16 %v1302
        %v5365 = vunpack.c.h.b16 %v1302
        %v5366 = vunpack.c.l.b16 %v1303
        %v5367 = vunpack.c.h.b16 %v1303
        %v5368 = vunpack.c.l.b16 %v1304
        %v5369 = vunpack.c.h.b16 %v1304
        %v5370 = vunpack.c.l.b16 %v1305
        %v5371 = vunpack.c.h.b16 %v1305
        %v5372 = vunpack.c.l.b16 %v1306
        %v5373 = vunpack.c.h.b16 %v1306
        %v5374 = vunpack.c.l.b16 %v1307
        %v5375 = vunpack.c.h.b16 %v1307
        %v5376 = vunpack.c.l.b16 %v1308
        %v5377 = vunpack.c.h.b16 %v1308
        %v5378 = vunpack.c.l.b16 %v1309
        %v5379 = vunpack.c.h.b16 %v1309
        %v5380 = vunpack.c.l.b16 %v1310
        %v5381 = vunpack.c.h.b16 %v1310
        %v5382 = vunpack.c.l.b16 %v1311
        %v5383 = vunpack.c.h.b16 %v1311
        %v5384 = vunpack.c.l.b16 %v1312
        %v5385 = vunpack.c.h.b16 %v1312
        %v5386 = vunpack.c.l.b16 %v1313
        %v5387 = vunpack.c.h.b16 %v1313
        %v5388 = vunpack.c.l.b16 %v1314
        %v5389 = vunpack.c.h.b16 %v1314
        %v5390 = vunpack.c.l.b16 %v1315
        %v5391 = vunpack.c.h.b16 %v1315
        %v5392 = vunpack.c.l.b16 %v1316
        %v5393 = vunpack.c.h.b16 %v1316
        %v5394 = vunpack.c.l.b16 %v1317
        %v5395 = vunpack.c.h.b16 %v1317
        %v5396 = vunpack.c.l.b16 %v1318
        %v5397 = vunpack.c.h.b16 %v1318
        %v5398 = vunpack.c.l.b16 %v1319
        %v5399 = vunpack.c.h.b16 %v1319
        %v5400 = vunpack.c.l.b16 %v1320
        %v5401 = vunpack.c.h.b16 %v1320
        %v5402 = vunpack.c.l.b16 %v1321
        %v5403 = vunpack.c.h.b16 %v1321
        %v5404 = vunpack.c.l.b16 %v1322
        %v5405 = vunpack.c.h.b16 %v1322
        %v5406 = vunpack.c.l.b16 %v1323
        %v5407 = vunpack.c.h.b16 %v1323
        %v5408 = vunpack.c.l.b16 %v1324
        %v5409 = vunpack.c.h.b16 %v1324
        %v5410 = vunpack.c.l.b16 %v1325
        %v5411 = vunpack.c.h.b16 %v1325
        %v5412 = vunpack.c.l.b16 %v1326
        %v5413 = vunpack.c.h.b16 %v1326
        %v5414 = vunpack.c.l.b16 %v1327
        %v5415 = vunpack.c.h.b16 %v1327
        %v5416 = vunpack.c.l.b16 %v1328
        %v5417 = vunpack.c.h.b16 %v1328
        %v5418 = vunpack.c.l.b16 %v1329
        %v5419 = vunpack.c.h.b16 %v1329
        %v5420 = vunpack.c.l.b16 %v1330
        %v5421 = vunpack.c.h.b16 %v1330
        %v5422 = vunpack.c.l.b16 %v1331
        %v5423 = vunpack.c.h.b16 %v1331
        %v5424 = vunpack.c.l.b16 %v1332
        %v5425 = vunpack.c.h.b16 %v1332
        %v5426 = vunpack.c.l.b16 %v1333
        %v5427 = vunpack.c.h.b16 %v1333
        %v5428 = vunpack.c.l.b16 %v1334
        %v5429 = vunpack.c.h.b16 %v1334
        %v5430 = vunpack.c.l.b16 %v1335
        %v5431 = vunpack.c.h.b16 %v1335
        %v5432 = vunpack.c.l.b16 %v1336
        %v5433 = vunpack.c.h.b16 %v1336
        %v5434 = vunpack.c.l.b16 %v1337
        %v5435 = vunpack.c.h.b16 %v1337
        %v5436 = vunpack.c.l.b16 %v1338
        %v5437 = vunpack.c.h.b16 %v1338
        %v5438 = vunpack.c.l.b16 %v1339
        %v5439 = vunpack.c.h.b16 %v1339
        %v5440 = vunpack.c.l.b16 %v1340
        %v5441 = vunpack.c.h.b16 %v1340
        %v5442 = vunpack.c.l.b16 %v1341
        %v5443 = vunpack.c.h.b16 %v1341
        %v5444 = vunpack.c.l.b16 %v1342
        %v5445 = vunpack.c.h.b16 %v1342
        %v5446 = vunpack.c.l.b16 %v1343
        %v5447 = vunpack.c.h.b16 %v1343
        %v5448 = vunpack.c.l.b16 %v1344
        %v5449 = vunpack.c.h.b16 %v1344
        %v5450 = vunpack.c.l.b16 %v1345
        %v5451 = vunpack.c.h.b16 %v1345
        %v5452 = vunpack.c.l.b16 %v1346
        %v5453 = vunpack.c.h.b16 %v1346
        %v5454 = vunpack.c.l.b16 %v1347
        %v5455 = vunpack.c.h.b16 %v1347
        %v5456 = vunpack.c.l.b16 %v1348
        %v5457 = vunpack.c.h.b16 %v1348
        %v5458 = vunpack.c.l.b16 %v1349
        %v5459 = vunpack.c.h.b16 %v1349
        %v5460 = vunpack.c.l.b16 %v1350
        %v5461 = vunpack.c.h.b16 %v1350
        %v5462 = vunpack.c.l.b16 %v1351
        %v5463 = vunpack.c.h.b16 %v1351
        %v5464 = vunpack.c.l.b16 %v1352
        %v5465 = vunpack.c.h.b16 %v1352
        %v5466 = vunpack.c.l.b16 %v1353
        %v5467 = vunpack.c.h.b16 %v1353
        %v5468 = vunpack.c.l.b16 %v1354
        %v5469 = vunpack.c.h.b16 %v1354
        %v5470 = vunpack.c.l.b16 %v1355
        %v5471 = vunpack.c.h.b16 %v1355
        %v5472 = vunpack.c.l.b16 %v1356
        %v5473 = vunpack.c.h.b16 %v1356
        %v5474 = vunpack.c.l.b16 %v1357
        %v5475 = vunpack.c.h.b16 %v1357
        %v5476 = vunpack.c.l.b16 %v1358
        %v5477 = vunpack.c.h.b16 %v1358
        %v5478 = vunpack.c.l.b16 %v1359
        %v5479 = vunpack.c.h.b16 %v1359
        %v5480 = vunpack.c.l.b16 %v1360
        %v5481 = vunpack.c.h.b16 %v1360
        %v5482 = vunpack.c.l.b16 %v1361
        %v5483 = vunpack.c.h.b16 %v1361
        %v5484 = vunpack.c.l.b16 %v1362
        %v5485 = vunpack.c.h.b16 %v1362
        %v5486 = vunpack.c.l.b16 %v1363
        %v5487 = vunpack.c.h.b16 %v1363
        %v5488 = vunpack.c.l.b16 %v1364
        %v5489 = vunpack.c.h.b16 %v1364
        %v5490 = vunpack.c.l.b16 %v1365
        %v5491 = vunpack.c.h.b16 %v1365
        %v5492 = vunpack.c.l.b16 %v1366
        %v5493 = vunpack.c.h.b16 %v1366
        %v5494 = vunpack.c.l.b16 %v1367
        %v5495 = vunpack.c.h.b16 %v1367
        %v5496 = vunpack.c.l.b16 %v1368
        %v5497 = vunpack.c.h.b16 %v1368
        %v5498 = vunpack.c.l.b16 %v1369
        %v5499 = vunpack.c.h.b16 %v1369
        %v5500 = vunpack.c.l.b16 %v1370
        %v5501 = vunpack.c.h.b16 %v1370
        %v5502 = vunpack.c.l.b16 %v1371
        %v5503 = vunpack.c.h.b16 %v1371
        %v5504 = vunpack.c.l.b16 %v1372
        %v5505 = vunpack.c.h.b16 %v1372
        %v5506 = vunpack.c.l.b16 %v1373
        %v5507 = vunpack.c.h.b16 %v1373
        %v5508 = vunpack.c.l.b16 %v1374
        %v5509 = vunpack.c.h.b16 %v1374
        %v5510 = vunpack.c.l.b16 %v1375
        %v5511 = vunpack.c.h.b16 %v1375
        %v5512 = vunpack.c.l.b16 %v1376
        %v5513 = vunpack.c.h.b16 %v1376
        %v5514 = vunpack.c.l.b16 %v1377
        %v5515 = vunpack.c.h.b16 %v1377
        %v5516 = vunpack.c.l.b16 %v1378
        %v5517 = vunpack.c.h.b16 %v1378
        %v5518 = vunpack.c.l.b16 %v1379
        %v5519 = vunpack.c.h.b16 %v1379
        %v5520 = vunpack.c.l.b16 %v1380
        %v5521 = vunpack.c.h.b16 %v1380
        %v5522 = vunpack.c.l.b16 %v1381
        %v5523 = vunpack.c.h.b16 %v1381
        %v5524 = vunpack.c.l.b16 %v1382
        %v5525 = vunpack.c.h.b16 %v1382
        %v5526 = vunpack.c.l.b16 %v1383
        %v5527 = vunpack.c.h.b16 %v1383
        %v5528 = vunpack.c.l.b16 %v1384
        %v5529 = vunpack.c.h.b16 %v1384
        %v5530 = vunpack.c.l.b16 %v1385
        %v5531 = vunpack.c.h.b16 %v1385
        %v5532 = vunpack.c.l.b16 %v1386
        %v5533 = vunpack.c.h.b16 %v1386
        %v5534 = vunpack.c.l.b16 %v1387
        %v5535 = vunpack.c.h.b16 %v1387
        %v5536 = vunpack.c.l.b16 %v1388
        %v5537 = vunpack.c.h.b16 %v1388
        %v5538 = vunpack.c.l.b16 %v1389
        %v5539 = vunpack.c.h.b16 %v1389
        %v5540 = vunpack.c.l.b16 %v1390
        %v5541 = vunpack.c.h.b16 %v1390
        %v5542 = vunpack.c.l.b16 %v1391
        %v5543 = vunpack.c.h.b16 %v1391
        %v5544 = vunpack.c.l.b16 %v1392
        %v5545 = vunpack.c.h.b16 %v1392
        %v5546 = vunpack.c.l.b16 %v1393
        %v5547 = vunpack.c.h.b16 %v1393
        %v5548 = vunpack.c.l.b16 %v1394
        %v5549 = vunpack.c.h.b16 %v1394
        %v5550 = vunpack.c.l.b16 %v1395
        %v5551 = vunpack.c.h.b16 %v1395
        %v5552 = vunpack.c.l.b16 %v1396
        %v5553 = vunpack.c.h.b16 %v1396
        %v5554 = vunpack.c.l.b16 %v1397
        %v5555 = vunpack.c.h.b16 %v1397
        %v5556 = vunpack.c.l.b16 %v1398
        %v5557 = vunpack.c.h.b16 %v1398
        %v5558 = vunpack.c.l.b16 %v1399
        %v5559 = vunpack.c.h.b16 %v1399
        %v5560 = vunpack.c.l.b16 %v1400
        %v5561 = vunpack.c.h.b16 %v1400
        %v5562 = vunpack.c.l.b16 %v1401
        %v5563 = vunpack.c.h.b16 %v1401
        %v5564 = vunpack.c.l.b16 %v1402
        %v5565 = vunpack.c.h.b16 %v1402
        %v5566 = vunpack.c.l.b16 %v1403
        %v5567 = vunpack.c.h.b16 %v1403
        %v5568 = vunpack.c.l.b16 %v1404
        %v5569 = vunpack.c.h.b16 %v1404
        %v5570 = vunpack.c.l.b16 %v1405
        %v5571 = vunpack.c.h.b16 %v1405
        %v5572 = vunpack.c.l.b16 %v1406
        %v5573 = vunpack.c.h.b16 %v1406
        %v5574 = vunpack.c.l.b16 %v1407
        %v5575 = vunpack.c.h.b16 %v1407
        %v5576 = vunpack.c.l.b16 %v1408
        %v5577 = vunpack.c.h.b16 %v1408
        %v5578 = vunpack.c.l.b16 %v1409
        %v5579 = vunpack.c.h.b16 %v1409
        %v5580 = vunpack.c.l.b16 %v1410
        %v5581 = vunpack.c.h.b16 %v1410
        %v5582 = vunpack.c.l.b16 %v1411
        %v5583 = vunpack.c.h.b16 %v1411
        %v5584 = vunpack.c.l.b16 %v1412
        %v5585 = vunpack.c.h.b16 %v1412
        %v5586 = vunpack.c.l.b16 %v1413
        %v5587 = vunpack.c.h.b16 %v1413
        %v5588 = vunpack.c.l.b16 %v1414
        %v5589 = vunpack.c.h.b16 %v1414
        %v5590 = vunpack.c.l.b16 %v1415
        %v5591 = vunpack.c.h.b16 %v1415
        %v5592 = vunpack.c.l.b16 %v1416
        %v5593 = vunpack.c.h.b16 %v1416
        %v5594 = vunpack.c.l.b16 %v1417
        %v5595 = vunpack.c.h.b16 %v1417
        %v5596 = vunpack.c.l.b16 %v1418
        %v5597 = vunpack.c.h.b16 %v1418
        %v5598 = vunpack.c.l.b16 %v1419
        %v5599 = vunpack.c.h.b16 %v1419
        %v5600 = vunpack.c.l.b16 %v1420
        %v5601 = vunpack.c.h.b16 %v1420
        %v5602 = vunpack.c.l.b16 %v1421
        %v5603 = vunpack.c.h.b16 %v1421
        %v5604 = vunpack.c.l.b16 %v1422
        %v5605 = vunpack.c.h.b16 %v1422
        %v5606 = vunpack.c.l.b16 %v1423
        %v5607 = vunpack.c.h.b16 %v1423
        %v5608 = vunpack.c.l.b16 %v1424
        %v5609 = vunpack.c.h.b16 %v1424
        %v5610 = vunpack.c.l.b16 %v1425
        %v5611 = vunpack.c.h.b16 %v1425
        %v5612 = vunpack.c.l.b16 %v1426
        %v5613 = vunpack.c.h.b16 %v1426
        %v5614 = vunpack.c.l.b16 %v1427
        %v5615 = vunpack.c.h.b16 %v1427
        %v5616 = vunpack.c.l.b16 %v1428
        %v5617 = vunpack.c.h.b16 %v1428
        %v5618 = vunpack.c.l.b16 %v1429
        %v5619 = vunpack.c.h.b16 %v1429
        %v5620 = vunpack.c.l.b16 %v1430
        %v5621 = vunpack.c.h.b16 %v1430
        %v5622 = vunpack.c.l.b16 %v1431
        %v5623 = vunpack.c.h.b16 %v1431
        %v5624 = vunpack.c.l.b16 %v1432
        %v5625 = vunpack.c.h.b16 %v1432
        %v5626 = vunpack.c.l.b16 %v1433
        %v5627 = vunpack.c.h.b16 %v1433
        %v5628 = vunpack.c.l.b16 %v1434
        %v5629 = vunpack.c.h.b16 %v1434
        %v5630 = vunpack.c.l.b16 %v1435
        %v5631 = vunpack.c.h.b16 %v1435
        %v5632 = vunpack.c.l.b16 %v1436
        %v5633 = vunpack.c.h.b16 %v1436
        %v5634 = vunpack.c.l.b16 %v1437
        %v5635 = vunpack.c.h.b16 %v1437
        %v5636 = vunpack.c.l.b16 %v1438
        %v5637 = vunpack.c.h.b16 %v1438
        %v5638 = vunpack.c.l.b16 %v1439
        %v5639 = vunpack.c.h.b16 %v1439
        %v5640 = vunpack.c.l.b16 %v1440
        %v5641 = vunpack.c.h.b16 %v1440
        %v5642 = vunpack.c.l.b16 %v1441
        %v5643 = vunpack.c.h.b16 %v1441
        %v5644 = vunpack.c.l.b16 %v1442
        %v5645 = vunpack.c.h.b16 %v1442
        %v5646 = vunpack.c.l.b16 %v1443
        %v5647 = vunpack.c.h.b16 %v1443
        %v5648 = vunpack.c.l.b16 %v1444
        %v5649 = vunpack.c.h.b16 %v1444
        %v5650 = vunpack.c.l.b16 %v1445
        %v5651 = vunpack.c.h.b16 %v1445
        %v5652 = vunpack.c.l.b16 %v1446
        %v5653 = vunpack.c.h.b16 %v1446
        %v5654 = vunpack.c.l.b16 %v1447
        %v5655 = vunpack.c.h.b16 %v1447
        %v5656 = vunpack.c.l.b16 %v1448
        %v5657 = vunpack.c.h.b16 %v1448
        %v5658 = vunpack.c.l.b16 %v1449
        %v5659 = vunpack.c.h.b16 %v1449
        %v5660 = vunpack.c.l.b16 %v1450
        %v5661 = vunpack.c.h.b16 %v1450
        %v5662 = vunpack.c.l.b16 %v1451
        %v5663 = vunpack.c.h.b16 %v1451
        %v5664 = vunpack.c.l.b16 %v1452
        %v5665 = vunpack.c.h.b16 %v1452
        %v5666 = vunpack.c.l.b16 %v1453
        %v5667 = vunpack.c.h.b16 %v1453
        %v5668 = vunpack.c.l.b16 %v1454
        %v5669 = vunpack.c.h.b16 %v1454
        %v5670 = vunpack.c.l.b16 %v1455
        %v5671 = vunpack.c.h.b16 %v1455
        %v5672 = vunpack.c.l.b16 %v1456
        %v5673 = vunpack.c.h.b16 %v1456
        %v5674 = vunpack.c.l.b16 %v1457
        %v5675 = vunpack.c.h.b16 %v1457
        %v5676 = vunpack.c.l.b16 %v1458
        %v5677 = vunpack.c.h.b16 %v1458
        %v5678 = vunpack.c.l.b16 %v1459
        %v5679 = vunpack.c.h.b16 %v1459
        %v5680 = vunpack.c.l.b16 %v1460
        %v5681 = vunpack.c.h.b16 %v1460
        %v5682 = vunpack.c.l.b16 %v1461
        %v5683 = vunpack.c.h.b16 %v1461
        %v5684 = vunpack.c.l.b16 %v1462
        %v5685 = vunpack.c.h.b16 %v1462
        %v5686 = vunpack.c.l.b16 %v1463
        %v5687 = vunpack.c.h.b16 %v1463
        %v5688 = vunpack.c.l.b16 %v1464
        %v5689 = vunpack.c.h.b16 %v1464
        %v5690 = vunpack.c.l.b16 %v1465
        %v5691 = vunpack.c.h.b16 %v1465
        %v5692 = vunpack.c.l.b16 %v1466
        %v5693 = vunpack.c.h.b16 %v1466
        %v5694 = vunpack.c.l.b16 %v1467
        %v5695 = vunpack.c.h.b16 %v1467
        %v5696 = vunpack.c.l.b16 %v1468
        %v5697 = vunpack.c.h.b16 %v1468
        %v5698 = vunpack.c.l.b16 %v1469
        %v5699 = vunpack.c.h.b16 %v1469
        %v5700 = vunpack.c.l.b16 %v1470
        %v5701 = vunpack.c.h.b16 %v1470
        %v5702 = vunpack.c.l.b16 %v1471
        %v5703 = vunpack.c.h.b16 %v1471
        %v5704 = vunpack.c.l.b16 %v1472
        %v5705 = vunpack.c.h.b16 %v1472
        %v5706 = vunpack.c.l.b16 %v1473
        %v5707 = vunpack.c.h.b16 %v1473
        %v5708 = vunpack.c.l.b16 %v1474
        %v5709 = vunpack.c.h.b16 %v1474
        %v5710 = vunpack.c.l.b16 %v1475
        %v5711 = vunpack.c.h.b16 %v1475
        %v5712 = vunpack.c.l.b16 %v1476
        %v5713 = vunpack.c.h.b16 %v1476
        %v5714 = vunpack.c.l.b16 %v1477
        %v5715 = vunpack.c.h.b16 %v1477
        %v5716 = vunpack.c.l.b16 %v1478
        %v5717 = vunpack.c.h.b16 %v1478
        %v5718 = vunpack.c.l.b16 %v1479
        %v5719 = vunpack.c.h.b16 %v1479
        %v5720 = vunpack.c.l.b16 %v1480
        %v5721 = vunpack.c.h.b16 %v1480
        %v5722 = vunpack.c.l.b16 %v1481
        %v5723 = vunpack.c.h.b16 %v1481
        %v5724 = vunpack.c.l.b16 %v1482
        %v5725 = vunpack.c.h.b16 %v1482
        %v5726 = vunpack.c.l.b16 %v1483
        %v5727 = vunpack.c.h.b16 %v1483
        %v5728 = vunpack.c.l.b16 %v1484
        %v5729 = vunpack.c.h.b16 %v1484
        %v5730 = vunpack.c.l.b16 %v1485
        %v5731 = vunpack.c.h.b16 %v1485
        %v5732 = vunpack.c.l.b16 %v1486
        %v5733 = vunpack.c.h.b16 %v1486
        %v5734 = vunpack.c.l.b16 %v1487
        %v5735 = vunpack.c.h.b16 %v1487
        %v5736 = vunpack.c.l.b16 %v1488
        %v5737 = vunpack.c.h.b16 %v1488
        %v5738 = vunpack.c.l.b16 %v1489
        %v5739 = vunpack.c.h.b16 %v1489
        %v5740 = vunpack.c.l.b16 %v1490
        %v5741 = vunpack.c.h.b16 %v1490
        %v5742 = vunpack.c.l.b16 %v1491
        %v5743 = vunpack.c.h.b16 %v1491
        %v5744 = vunpack.c.l.b16 %v1492
        %v5745 = vunpack.c.h.b16 %v1492
        %v5746 = vunpack.c.l.b16 %v1493
        %v5747 = vunpack.c.h.b16 %v1493
        %v5748 = vunpack.c.l.b16 %v1494
        %v5749 = vunpack.c.h.b16 %v1494
        %v5750 = vunpack.c.l.b16 %v1495
        %v5751 = vunpack.c.h.b16 %v1495
        %v5752 = vunpack.c.l.b16 %v1496
        %v5753 = vunpack.c.h.b16 %v1496
        %v5754 = vunpack.c.l.b16 %v1497
        %v5755 = vunpack.c.h.b16 %v1497
        %v5756 = vunpack.c.l.b16 %v1498
        %v5757 = vunpack.c.h.b16 %v1498
        %v5758 = vunpack.c.l.b16 %v1499
        %v5759 = vunpack.c.h.b16 %v1499
        %v5760 = vunpack.c.l.b16 %v1500
        %v5761 = vunpack.c.h.b16 %v1500
        %v5762 = vunpack.c.l.b16 %v1501
        %v5763 = vunpack.c.h.b16 %v1501
        %v5764 = vunpack.c.l.b16 %v1502
        %v5765 = vunpack.c.h.b16 %v1502
        %v5766 = vunpack.c.l.b16 %v1503
        %v5767 = vunpack.c.h.b16 %v1503
        %v5768 = vunpack.c.l.b16 %v1504
        %v5769 = vunpack.c.h.b16 %v1504
        %v5770 = vunpack.c.l.b16 %v1505
        %v5771 = vunpack.c.h.b16 %v1505
        %v5772 = vunpack.c.l.b16 %v1506
        %v5773 = vunpack.c.h.b16 %v1506
        %v5774 = vunpack.c.l.b16 %v1507
        %v5775 = vunpack.c.h.b16 %v1507
        %v5776 = vunpack.c.l.b16 %v1508
        %v5777 = vunpack.c.h.b16 %v1508
        %v5778 = vunpack.c.l.b16 %v1509
        %v5779 = vunpack.c.h.b16 %v1509
        %v5780 = vunpack.c.l.b16 %v1510
        %v5781 = vunpack.c.h.b16 %v1510
        %v5782 = vunpack.c.l.b16 %v1511
        %v5783 = vunpack.c.h.b16 %v1511
        %v5784 = vunpack.c.l.b16 %v1512
        %v5785 = vunpack.c.h.b16 %v1512
        %v5786 = vunpack.c.l.b16 %v1513
        %v5787 = vunpack.c.h.b16 %v1513
        %v5788 = vunpack.c.l.b16 %v1514
        %v5789 = vunpack.c.h.b16 %v1514
        %v5790 = vunpack.c.l.b16 %v1515
        %v5791 = vunpack.c.h.b16 %v1515
        %v5792 = vunpack.c.l.b16 %v1516
        %v5793 = vunpack.c.h.b16 %v1516
        %v5794 = vunpack.c.l.b16 %v1517
        %v5795 = vunpack.c.h.b16 %v1517
        %v5796 = vunpack.c.l.b16 %v1518
        %v5797 = vunpack.c.h.b16 %v1518
        %v5798 = vunpack.c.l.b16 %v1519
        %v5799 = vunpack.c.h.b16 %v1519
        %v5800 = vunpack.c.l.b16 %v1520
        %v5801 = vunpack.c.h.b16 %v1520
        %v5802 = vunpack.c.l.b16 %v1521
        %v5803 = vunpack.c.h.b16 %v1521
        %v5804 = vunpack.c.l.b16 %v1522
        %v5805 = vunpack.c.h.b16 %v1522
        %v5806 = vunpack.c.l.b16 %v1523
        %v5807 = vunpack.c.h.b16 %v1523
        %v5808 = vunpack.c.l.b16 %v1524
        %v5809 = vunpack.c.h.b16 %v1524
        %v5810 = vunpack.c.l.b16 %v1525
        %v5811 = vunpack.c.h.b16 %v1525
        %v5812 = vunpack.c.l.b16 %v1526
        %v5813 = vunpack.c.h.b16 %v1526
        %v5814 = vunpack.c.l.b16 %v1527
        %v5815 = vunpack.c.h.b16 %v1527
        %v5816 = vunpack.c.l.b16 %v1528
        %v5817 = vunpack.c.h.b16 %v1528
        %v5818 = vunpack.c.l.b16 %v1529
        %v5819 = vunpack.c.h.b16 %v1529
        %v5820 = vunpack.c.l.b16 %v1530
        %v5821 = vunpack.c.h.b16 %v1530
        %v5822 = vunpack.c.l.b16 %v1531
        %v5823 = vunpack.c.h.b16 %v1531
        %v5824 = vunpack.c.l.b16 %v1532
        %v5825 = vunpack.c.h.b16 %v1532
        %v5826 = vunpack.c.l.b16 %v1533
        %v5827 = vunpack.c.h.b16 %v1533
        %v5828 = vunpack.c.l.b16 %v1534
        %v5829 = vunpack.c.h.b16 %v1534
        %v5830 = vunpack.c.l.b16 %v1535
        %v5831 = vunpack.c.h.b16 %v1535
        %v5832 = vunpack.c.l.b16 %v1536
        %v5833 = vunpack.c.h.b16 %v1536
        %v5834 = vunpack.c.l.b16 %v1537
        %v5835 = vunpack.c.h.b16 %v1537
        %v5836 = vunpack.c.l.b16 %v1538
        %v5837 = vunpack.c.h.b16 %v1538
        %v5838 = vunpack.c.l.b16 %v1539
        %v5839 = vunpack.c.h.b16 %v1539
        %v5840 = vunpack.c.l.b16 %v1540
        %v5841 = vunpack.c.h.b16 %v1540
        %v5842 = vunpack.c.l.b16 %v1541
        %v5843 = vunpack.c.h.b16 %v1541
        %v5844 = vunpack.c.l.b16 %v1542
        %v5845 = vunpack.c.h.b16 %v1542
        %v5846 = vunpack.c.l.b16 %v1543
        %v5847 = vunpack.c.h.b16 %v1543
        %v5848 = vunpack.c.l.b16 %v1544
        %v5849 = vunpack.c.h.b16 %v1544
        %v5850 = vunpack.c.l.b16 %v1545
        %v5851 = vunpack.c.h.b16 %v1545
        %v5852 = vunpack.c.l.b16 %v1546
        %v5853 = vunpack.c.h.b16 %v1546
        %v5854 = vunpack.c.l.b16 %v1547
        %v5855 = vunpack.c.h.b16 %v1547
        %v5856 = vunpack.c.l.b16 %v1548
        %v5857 = vunpack.c.h.b16 %v1548
        %v5858 = vunpack.c.l.b16 %v1549
        %v5859 = vunpack.c.h.b16 %v1549
        %v5860 = vunpack.c.l.b16 %v1550
        %v5861 = vunpack.c.h.b16 %v1550
        %v5862 = vunpack.c.l.b16 %v1551
        %v5863 = vunpack.c.h.b16 %v1551
        %v5864 = vunpack.c.l.b16 %v1552
        %v5865 = vunpack.c.h.b16 %v1552
        %v5866 = vunpack.c.l.b16 %v1553
        %v5867 = vunpack.c.h.b16 %v1553
        %v5868 = vunpack.c.l.b16 %v1554
        %v5869 = vunpack.c.h.b16 %v1554
        %v5870 = vunpack.c.l.b16 %v1555
        %v5871 = vunpack.c.h.b16 %v1555
        %v5872 = vunpack.c.l.b16 %v1556
        %v5873 = vunpack.c.h.b16 %v1556
        %v5874 = vunpack.c.l.b16 %v1557
        %v5875 = vunpack.c.h.b16 %v1557
        %v5876 = vunpack.c.l.b16 %v1558
        %v5877 = vunpack.c.h.b16 %v1558
        %v5878 = vunpack.c.l.b16 %v1559
        %v5879 = vunpack.c.h.b16 %v1559
        %v5880 = vunpack.c.l.b16 %v1560
        %v5881 = vunpack.c.h.b16 %v1560
        %v5882 = vunpack.c.l.b16 %v1561
        %v5883 = vunpack.c.h.b16 %v1561
        %v5884 = vunpack.c.l.b16 %v1562
        %v5885 = vunpack.c.h.b16 %v1562
        %v5886 = vunpack.c.l.b16 %v1563
        %v5887 = vunpack.c.h.b16 %v1563
        %v5888 = vunpack.c.l.b16 %v1564
        %v5889 = vunpack.c.h.b16 %v1564
        %v5890 = vunpack.c.l.b16 %v1565
        %v5891 = vunpack.c.h.b16 %v1565
        %v5892 = vunpack.c.l.b16 %v1566
        %v5893 = vunpack.c.h.b16 %v1566
        %v5894 = vunpack.c.l.b16 %v1567
        %v5895 = vunpack.c.h.b16 %v1567
        %v5896 = vunpack.c.l.b16 %v1568
        %v5897 = vunpack.c.h.b16 %v1568
        %v5898 = vunpack.c.l.b16 %v1569
        %v5899 = vunpack.c.h.b16 %v1569
        %v5900 = vunpack.c.l.b16 %v1570
        %v5901 = vunpack.c.h.b16 %v1570
        %v5902 = vunpack.c.l.b16 %v1571
        %v5903 = vunpack.c.h.b16 %v1571
        %v5904 = vunpack.c.l.b16 %v1572
        %v5905 = vunpack.c.h.b16 %v1572
        %v5906 = vunpack.c.l.b16 %v1573
        %v5907 = vunpack.c.h.b16 %v1573
        %v5908 = vunpack.c.l.b16 %v1574
        %v5909 = vunpack.c.h.b16 %v1574
        %v5910 = vunpack.c.l.b16 %v1575
        %v5911 = vunpack.c.h.b16 %v1575
        %v5912 = vunpack.c.l.b16 %v1576
        %v5913 = vunpack.c.h.b16 %v1576
        %v5914 = vunpack.c.l.b16 %v1577
        %v5915 = vunpack.c.h.b16 %v1577
        %v5916 = vunpack.c.l.b16 %v1578
        %v5917 = vunpack.c.h.b16 %v1578
        %v5918 = vunpack.c.l.b16 %v1579
        %v5919 = vunpack.c.h.b16 %v1579
        %v5920 = vunpack.c.l.b16 %v1580
        %v5921 = vunpack.c.h.b16 %v1580
        %v5922 = vunpack.c.l.b16 %v1581
        %v5923 = vunpack.c.h.b16 %v1581
        %v5924 = vunpack.c.l.b16 %v1582
        %v5925 = vunpack.c.h.b16 %v1582
        %v5926 = vunpack.c.l.b16 %v1583
        %v5927 = vunpack.c.h.b16 %v1583
        %v5928 = vunpack.c.l.b16 %v1584
        %v5929 = vunpack.c.h.b16 %v1584
        %v5930 = vunpack.c.l.b16 %v1585
        %v5931 = vunpack.c.h.b16 %v1585
        %v5932 = vunpack.c.l.b16 %v1586
        %v5933 = vunpack.c.h.b16 %v1586
        %v5934 = vunpack.c.l.b16 %v1587
        %v5935 = vunpack.c.h.b16 %v1587
        %v5936 = vunpack.c.l.b16 %v1588
        %v5937 = vunpack.c.h.b16 %v1588
        %v5938 = vunpack.c.l.b16 %v1589
        %v5939 = vunpack.c.h.b16 %v1589
        %v5940 = vunpack.c.l.b16 %v1590
        %v5941 = vunpack.c.h.b16 %v1590
        %v5942 = vunpack.c.l.b16 %v1591
        %v5943 = vunpack.c.h.b16 %v1591
        %v5944 = vunpack.c.l.b16 %v1592
        %v5945 = vunpack.c.h.b16 %v1592
        %v5946 = vunpack.c.l.b16 %v1593
        %v5947 = vunpack.c.h.b16 %v1593
        %v5948 = vunpack.c.l.b16 %v1594
        %v5949 = vunpack.c.h.b16 %v1594
        %v5950 = vunpack.c.l.b16 %v1595
        %v5951 = vunpack.c.h.b16 %v1595
        %v5952 = vunpack.c.l.b16 %v1596
        %v5953 = vunpack.c.h.b16 %v1596
        %v5954 = vunpack.c.l.b16 %v1597
        %v5955 = vunpack.c.h.b16 %v1597
        %v5956 = vunpack.c.l.b16 %v1598
        %v5957 = vunpack.c.h.b16 %v1598
        %v5958 = vunpack.c.l.b16 %v1599
        %v5959 = vunpack.c.h.b16 %v1599
        %v5960 = vunpack.c.l.b16 %v1600
        %v5961 = vunpack.c.h.b16 %v1600
        %v5962 = vunpack.c.l.b16 %v1601
        %v5963 = vunpack.c.h.b16 %v1601
        %v5964 = vunpack.c.l.b16 %v1602
        %v5965 = vunpack.c.h.b16 %v1602
        %v5966 = vunpack.c.l.b16 %v1603
        %v5967 = vunpack.c.h.b16 %v1603
        %v5968 = vunpack.c.l.b16 %v1604
        %v5969 = vunpack.c.h.b16 %v1604
        %v5970 = vunpack.c.l.b16 %v1605
        %v5971 = vunpack.c.h.b16 %v1605
        %v5972 = vunpack.c.l.b16 %v1606
        %v5973 = vunpack.c.h.b16 %v1606
        %v5974 = vunpack.c.l.b16 %v1607
        %v5975 = vunpack.c.h.b16 %v1607
        %v5976 = vunpack.c.l.b16 %v1608
        %v5977 = vunpack.c.h.b16 %v1608
        %v5978 = vunpack.c.l.b16 %v1609
        %v5979 = vunpack.c.h.b16 %v1609
        %v5980 = vunpack.c.l.b16 %v1610
        %v5981 = vunpack.c.h.b16 %v1610
        %v5982 = vunpack.c.l.b16 %v1611
        %v5983 = vunpack.c.h.b16 %v1611
        %v5984 = vunpack.c.l.b16 %v1612
        %v5985 = vunpack.c.h.b16 %v1612
        %v5986 = vunpack.c.l.b16 %v1613
        %v5987 = vunpack.c.h.b16 %v1613
        %v5988 = vunpack.c.l.b16 %v1614
        %v5989 = vunpack.c.h.b16 %v1614
        %v5990 = vunpack.c.l.b16 %v1615
        %v5991 = vunpack.c.h.b16 %v1615
        %v5992 = vunpack.c.l.b16 %v1616
        %v5993 = vunpack.c.h.b16 %v1616
        %v5994 = vunpack.c.l.b16 %v1617
        %v5995 = vunpack.c.h.b16 %v1617
        %v5996 = vunpack.c.l.b16 %v1618
        %v5997 = vunpack.c.h.b16 %v1618
        %v5998 = vunpack.c.l.b16 %v1619
        %v5999 = vunpack.c.h.b16 %v1619
        %v6000 = vunpack.c.l.b16 %v1620
        %v6001 = vunpack.c.h.b16 %v1620
        %v6002 = vunpack.c.l.b16 %v1621
        %v6003 = vunpack.c.h.b16 %v1621
        %v6004 = vunpack.c.l.b16 %v1622
        %v6005 = vunpack.c.h.b16 %v1622
        %v6006 = vunpack.c.l.b16 %v1623
        %v6007 = vunpack.c.h.b16 %v1623
        %v6008 = vunpack.c.l.b16 %v1624
        %v6009 = vunpack.c.h.b16 %v1624
        %v6010 = vunpack.c.l.b16 %v1625
        %v6011 = vunpack.c.h.b16 %v1625
        %v6012 = vunpack.c.l.b16 %v1626
        %v6013 = vunpack.c.h.b16 %v1626
        %v6014 = vunpack.c.l.b16 %v1627
        %v6015 = vunpack.c.h.b16 %v1627
        %v6016 = vunpack.c.l.b16 %v1628
        %v6017 = vunpack.c.h.b16 %v1628
        %v6018 = vunpack.c.l.b16 %v1629
        %v6019 = vunpack.c.h.b16 %v1629
        %v6020 = vunpack.c.l.b16 %v1630
        %v6021 = vunpack.c.h.b16 %v1630
        %v6022 = vunpack.c.l.b16 %v1631
        %v6023 = vunpack.c.h.b16 %v1631
        %v6024 = vunpack.c.l.b16 %v1632
        %v6025 = vunpack.c.h.b16 %v1632
        %v6026 = vunpack.c.l.b16 %v1633
        %v6027 = vunpack.c.h.b16 %v1633
        %v6028 = vunpack.c.l.b16 %v1634
        %v6029 = vunpack.c.h.b16 %v1634
        %v6030 = vunpack.c.l.b16 %v1635
        %v6031 = vunpack.c.h.b16 %v1635
        %v6032 = vunpack.c.l.b16 %v1636
        %v6033 = vunpack.c.h.b16 %v1636
        %v6034 = vunpack.c.l.b16 %v1637
        %v6035 = vunpack.c.h.b16 %v1637
        %v6036 = vunpack.c.l.b16 %v1638
        %v6037 = vunpack.c.h.b16 %v1638
        %v6038 = vunpack.c.l.b16 %v1639
        %v6039 = vunpack.c.h.b16 %v1639
        %v6040 = vunpack.c.l.b16 %v1640
        %v6041 = vunpack.c.h.b16 %v1640
        %v6042 = vunpack.c.l.b16 %v1641
        %v6043 = vunpack.c.h.b16 %v1641
        %v6044 = vunpack.c.l.b16 %v1642
        %v6045 = vunpack.c.h.b16 %v1642
        %v6046 = vunpack.c.l.b16 %v1643
        %v6047 = vunpack.c.h.b16 %v1643
        %v6048 = vunpack.c.l.b16 %v1644
        %v6049 = vunpack.c.h.b16 %v1644
        %v6050 = vunpack.c.l.b16 %v1645
        %v6051 = vunpack.c.h.b16 %v1645
        %v6052 = vunpack.c.l.b16 %v1646
        %v6053 = vunpack.c.h.b16 %v1646
        %v6054 = vunpack.c.l.b16 %v1647
        %v6055 = vunpack.c.h.b16 %v1647
        %v6056 = vunpack.c.l.b16 %v1648
        %v6057 = vunpack.c.h.b16 %v1648
        %v6058 = vunpack.c.l.b16 %v1649
        %v6059 = vunpack.c.h.b16 %v1649
        %v6060 = vunpack.c.l.b16 %v1650
        %v6061 = vunpack.c.h.b16 %v1650
        %v6062 = vunpack.c.l.b16 %v1651
        %v6063 = vunpack.c.h.b16 %v1651
        %v6064 = vunpack.c.l.b16 %v1652
        %v6065 = vunpack.c.h.b16 %v1652
        %v6066 = vunpack.c.l.b16 %v1653
        %v6067 = vunpack.c.h.b16 %v1653
        %v6068 = vunpack.c.l.b16 %v1654
        %v6069 = vunpack.c.h.b16 %v1654
        %v6070 = vunpack.c.l.b16 %v1655
        %v6071 = vunpack.c.h.b16 %v1655
        %v6072 = vunpack.c.l.b16 %v1656
        %v6073 = vunpack.c.h.b16 %v1656
        %v6074 = vunpack.c.l.b16 %v1657
        %v6075 = vunpack.c.h.b16 %v1657
        %v6076 = vunpack.c.l.b16 %v1658
        %v6077 = vunpack.c.h.b16 %v1658
        %v6078 = vunpack.c.l.b16 %v1659
        %v6079 = vunpack.c.h.b16 %v1659
        %v6080 = vunpack.c.l.b16 %v1660
        %v6081 = vunpack.c.h.b16 %v1660
        %v6082 = vunpack.c.l.b16 %v1661
        %v6083 = vunpack.c.h.b16 %v1661
        %v6084 = vunpack.c.l.b16 %v1662
        %v6085 = vunpack.c.h.b16 %v1662
        %v6086 = vunpack.c.l.b16 %v1663
        %v6087 = vunpack.c.h.b16 %v1663
        %v6088 = vunpack.c.l.b16 %v1664
        %v6089 = vunpack.c.h.b16 %v1664
        %v6090 = vunpack.c.l.b16 %v1665
        %v6091 = vunpack.c.h.b16 %v1665
        %v6092 = vunpack.c.l.b16 %v1666
        %v6093 = vunpack.c.h.b16 %v1666
        %v6094 = vunpack.c.l.b16 %v1667
        %v6095 = vunpack.c.h.b16 %v1667
        %v6096 = vunpack.c.l.b16 %v1668
        %v6097 = vunpack.c.h.b16 %v1668
        %v6098 = vunpack.c.l.b16 %v1669
        %v6099 = vunpack.c.h.b16 %v1669
        %v6100 = vunpack.c.l.b16 %v1670
        %v6101 = vunpack.c.h.b16 %v1670
        %v6102 = vunpack.c.l.b16 %v1671
        %v6103 = vunpack.c.h.b16 %v1671
        %v6104 = vunpack.c.l.b16 %v1672
        %v6105 = vunpack.c.h.b16 %v1672
        %v6106 = vunpack.c.l.b16 %v1673
        %v6107 = vunpack.c.h.b16 %v1673
        %v6108 = vunpack.c.l.b16 %v1674
        %v6109 = vunpack.c.h.b16 %v1674
        %v6110 = vunpack.c.l.b16 %v1675
        %v6111 = vunpack.c.h.b16 %v1675
        %v6112 = vunpack.c.l.b16 %v1676
        %v6113 = vunpack.c.h.b16 %v1676
        %v6114 = vunpack.c.l.b16 %v1677
        %v6115 = vunpack.c.h.b16 %v1677
        %v6116 = vunpack.c.l.b16 %v1678
        %v6117 = vunpack.c.h.b16 %v1678
        %v6118 = vunpack.c.l.b16 %v1679
        %v6119 = vunpack.c.h.b16 %v1679
        %v6120 = vunpack.c.l.b16 %v1680
        %v6121 = vunpack.c.h.b16 %v1680
        %v6122 = vunpack.c.l.b16 %v1681
        %v6123 = vunpack.c.h.b16 %v1681
        %v6124 = vunpack.c.l.b16 %v1682
        %v6125 = vunpack.c.h.b16 %v1682
        %v6126 = vunpack.c.l.b16 %v1683
        %v6127 = vunpack.c.h.b16 %v1683
        %v6128 = vunpack.c.l.b16 %v1684
        %v6129 = vunpack.c.h.b16 %v1684
        %v6130 = vunpack.c.l.b16 %v1685
        %v6131 = vunpack.c.h.b16 %v1685
        %v6132 = vunpack.c.l.b16 %v1686
        %v6133 = vunpack.c.h.b16 %v1686
        %v6134 = vunpack.c.l.b16 %v1687
        %v6135 = vunpack.c.h.b16 %v1687
        %v6136 = vunpack.c.l.b16 %v1688
        %v6137 = vunpack.c.h.b16 %v1688
        %v6138 = vunpack.c.l.b16 %v1689
        %v6139 = vunpack.c.h.b16 %v1689
        %v6140 = vunpack.c.l.b16 %v1690
        %v6141 = vunpack.c.h.b16 %v1690
        %v6142 = vunpack.c.l.b16 %v1691
        %v6143 = vunpack.c.h.b16 %v1691
        %v6144 = vunpack.c.l.b16 %v1692
        %v6145 = vunpack.c.h.b16 %v1692
        %v6146 = vunpack.c.l.b16 %v1693
        %v6147 = vunpack.c.h.b16 %v1693
        %v6148 = vunpack.c.l.b16 %v1694
        %v6149 = vunpack.c.h.b16 %v1694
        %v6150 = vunpack.c.l.b16 %v1695
        %v6151 = vunpack.c.h.b16 %v1695
        %v6152 = vunpack.c.l.b16 %v1696
        %v6153 = vunpack.c.h.b16 %v1696
        %v6154 = vunpack.c.l.b16 %v1697
        %v6155 = vunpack.c.h.b16 %v1697
        %v6156 = vunpack.c.l.b16 %v1698
        %v6157 = vunpack.c.h.b16 %v1698
        %v6158 = vunpack.c.l.b16 %v1699
        %v6159 = vunpack.c.h.b16 %v1699
        %v6160 = vunpack.c.l.b16 %v1700
        %v6161 = vunpack.c.h.b16 %v1700
        %v6162 = vunpack.c.l.b16 %v1701
        %v6163 = vunpack.c.h.b16 %v1701
        %v6164 = vunpack.c.l.b16 %v1702
        %v6165 = vunpack.c.h.b16 %v1702
        %v6166 = vunpack.c.l.b16 %v1703
        %v6167 = vunpack.c.h.b16 %v1703
        %v6168 = vunpack.c.l.b16 %v1704
        %v6169 = vunpack.c.h.b16 %v1704
        %v6170 = vunpack.c.l.b16 %v1705
        %v6171 = vunpack.c.h.b16 %v1705
        %v6172 = vunpack.c.l.b16 %v1706
        %v6173 = vunpack.c.h.b16 %v1706
        %v6174 = vunpack.c.l.b16 %v1707
        %v6175 = vunpack.c.h.b16 %v1707
        %v6176 = vunpack.c.l.b16 %v1708
        %v6177 = vunpack.c.h.b16 %v1708
        %v6178 = vunpack.c.l.b16 %v1709
        %v6179 = vunpack.c.h.b16 %v1709
        %v6180 = vunpack.c.l.b16 %v1710
        %v6181 = vunpack.c.h.b16 %v1710
        %v6182 = vunpack.c.l.b16 %v1711
        %v6183 = vunpack.c.h.b16 %v1711
        %v6184 = vunpack.c.l.b16 %v1712
        %v6185 = vunpack.c.h.b16 %v1712
        %v6186 = vunpack.c.l.b16 %v1713
        %v6187 = vunpack.c.h.b16 %v1713
        %v6188 = vunpack.c.l.b16 %v1714
        %v6189 = vunpack.c.h.b16 %v1714
        %v6190 = vunpack.c.l.b16 %v1715
        %v6191 = vunpack.c.h.b16 %v1715
        %v6192 = vunpack.c.l.b16 %v1716
        %v6193 = vunpack.c.h.b16 %v1716
        %v6194 = vunpack.c.l.b16 %v1717
        %v6195 = vunpack.c.h.b16 %v1717
        %v6196 = vunpack.c.l.b16 %v1718
        %v6197 = vunpack.c.h.b16 %v1718
        %v6198 = vunpack.c.l.b16 %v1719
        %v6199 = vunpack.c.h.b16 %v1719
        %v6200 = vunpack.c.l.b16 %v1720
        %v6201 = vunpack.c.h.b16 %v1720
        %v6202 = vunpack.c.l.b16 %v1721
        %v6203 = vunpack.c.h.b16 %v1721
        %v6204 = vunpack.c.l.b16 %v1722
        %v6205 = vunpack.c.h.b16 %v1722
        %v6206 = vunpack.c.l.b16 %v1723
        %v6207 = vunpack.c.h.b16 %v1723
        %v6208 = vunpack.c.l.b16 %v1724
        %v6209 = vunpack.c.h.b16 %v1724
        %v6210 = vunpack.c.l.b16 %v1725
        %v6211 = vunpack.c.h.b16 %v1725
        %v6212 = vunpack.c.l.b16 %v1726
        %v6213 = vunpack.c.h.b16 %v1726
        %v6214 = vunpack.c.l.b16 %v1727
        %v6215 = vunpack.c.h.b16 %v1727
        %v6216 = vunpack.c.l.b16 %v1728
        %v6217 = vunpack.c.h.b16 %v1728
        %v6218 = vunpack.c.l.b16 %v1729
        %v6219 = vunpack.c.h.b16 %v1729
        %v6220 = vunpack.c.l.b16 %v1730
        %v6221 = vunpack.c.h.b16 %v1730
        %v6222 = vunpack.c.l.b16 %v1731
        %v6223 = vunpack.c.h.b16 %v1731
        %v6224 = vunpack.c.l.b16 %v1732
        %v6225 = vunpack.c.h.b16 %v1732
        %v6226 = vunpack.c.l.b16 %v1733
        %v6227 = vunpack.c.h.b16 %v1733
        %v6228 = vunpack.c.l.b16 %v1734
        %v6229 = vunpack.c.h.b16 %v1734
        %v6230 = vunpack.c.l.b16 %v1735
        %v6231 = vunpack.c.h.b16 %v1735
        %v6232 = vunpack.c.l.b16 %v1736
        %v6233 = vunpack.c.h.b16 %v1736
        %v6234 = vunpack.c.l.b16 %v1737
        %v6235 = vunpack.c.h.b16 %v1737
        %v6236 = vunpack.c.l.b16 %v1738
        %v6237 = vunpack.c.h.b16 %v1738
        %v6238 = vunpack.c.l.b16 %v1739
        %v6239 = vunpack.c.h.b16 %v1739
        %v6240 = vunpack.c.l.b16 %v1740
        %v6241 = vunpack.c.h.b16 %v1740
        %v6242 = vunpack.c.l.b16 %v1741
        %v6243 = vunpack.c.h.b16 %v1741
        %v6244 = vunpack.c.l.b16 %v1742
        %v6245 = vunpack.c.h.b16 %v1742
        %v6246 = vunpack.c.l.b16 %v1743
        %v6247 = vunpack.c.h.b16 %v1743
        %v6248 = vunpack.c.l.b16 %v1744
        %v6249 = vunpack.c.h.b16 %v1744
        %v6250 = vunpack.c.l.b16 %v1745
        %v6251 = vunpack.c.h.b16 %v1745
        %v6252 = vunpack.c.l.b16 %v1746
        %v6253 = vunpack.c.h.b16 %v1746
        %v6254 = vunpack.c.l.b16 %v1747
        %v6255 = vunpack.c.h.b16 %v1747
        %v6256 = vunpack.c.l.b16 %v1748
        %v6257 = vunpack.c.h.b16 %v1748
        %v6258 = vunpack.c.l.b16 %v1749
        %v6259 = vunpack.c.h.b16 %v1749
        %v6260 = vunpack.c.l.b16 %v1750
        %v6261 = vunpack.c.h.b16 %v1750
        %v6262 = vunpack.c.l.b16 %v1751
        %v6263 = vunpack.c.h.b16 %v1751
        %v6264 = vunpack.c.l.b16 %v1752
        %v6265 = vunpack.c.h.b16 %v1752
        %v6266 = vunpack.c.l.b16 %v1753
        %v6267 = vunpack.c.h.b16 %v1753
        %v6268 = vunpack.c.l.b16 %v1754
        %v6269 = vunpack.c.h.b16 %v1754
        %v6270 = vunpack.c.l.b16 %v1755
        %v6271 = vunpack.c.h.b16 %v1755
        %v6272 = vunpack.c.l.b16 %v1756
        %v6273 = vunpack.c.h.b16 %v1756
        %v6274 = vunpack.c.l.b16 %v1757
        %v6275 = vunpack.c.h.b16 %v1757
        %v6276 = vunpack.c.l.b16 %v1758
        %v6277 = vunpack.c.h.b16 %v1758
        %v6278 = vunpack.c.l.b16 %v1759
        %v6279 = vunpack.c.h.b16 %v1759
        %v6280 = vunpack.c.l.b16 %v1760
        %v6281 = vunpack.c.h.b16 %v1760
        %v6282 = vunpack.c.l.b16 %v1761
        %v6283 = vunpack.c.h.b16 %v1761
        %v6284 = vunpack.c.l.b16 %v1762
        %v6285 = vunpack.c.h.b16 %v1762
        %v6286 = vunpack.c.l.b16 %v1763
        %v6287 = vunpack.c.h.b16 %v1763
        %v6288 = vunpack.c.l.b16 %v1764
        %v6289 = vunpack.c.h.b16 %v1764
        %v6290 = vunpack.c.l.b16 %v1765
        %v6291 = vunpack.c.h.b16 %v1765
        %v6292 = vunpack.c.l.b16 %v1766
        %v6293 = vunpack.c.h.b16 %v1766
        %v6294 = vunpack.c.l.b16 %v1767
        %v6295 = vunpack.c.h.b16 %v1767
        %v6296 = vunpack.c.l.b16 %v1768
        %v6297 = vunpack.c.h.b16 %v1768
        %v6298 = vunpack.c.l.b16 %v1769
        %v6299 = vunpack.c.h.b16 %v1769
        %v6300 = vunpack.c.l.b16 %v1770
        %v6301 = vunpack.c.h.b16 %v1770
        %v6302 = vunpack.c.l.b16 %v1771
        %v6303 = vunpack.c.h.b16 %v1771
        %v6304 = vunpack.c.l.b16 %v1772
        %v6305 = vunpack.c.h.b16 %v1772
        %v6306 = vunpack.c.l.b16 %v1773
        %v6307 = vunpack.c.h.b16 %v1773
        %v6308 = vunpack.c.l.b16 %v1774
        %v6309 = vunpack.c.h.b16 %v1774
        %v6310 = vunpack.c.l.b16 %v1775
        %v6311 = vunpack.c.h.b16 %v1775
        %v6312 = vunpack.c.l.b16 %v1776
        %v6313 = vunpack.c.h.b16 %v1776
        %v6314 = vunpack.c.l.b16 %v1777
        %v6315 = vunpack.c.h.b16 %v1777
        %v6316 = vunpack.c.l.b16 %v1778
        %v6317 = vunpack.c.h.b16 %v1778
        %v6318 = vunpack.c.l.b16 %v1779
        %v6319 = vunpack.c.h.b16 %v1779
        %v6320 = vunpack.c.l.b16 %v1780
        %v6321 = vunpack.c.h.b16 %v1780
        %v6322 = vunpack.c.l.b16 %v1781
        %v6323 = vunpack.c.h.b16 %v1781
        %v6324 = vunpack.c.l.b16 %v1782
        %v6325 = vunpack.c.h.b16 %v1782
        %v6326 = vunpack.c.l.b16 %v1783
        %v6327 = vunpack.c.h.b16 %v1783
        %v6328 = vunpack.c.l.b16 %v1784
        %v6329 = vunpack.c.h.b16 %v1784
        %v6330 = vunpack.c.l.b16 %v1785
        %v6331 = vunpack.c.h.b16 %v1785
        %v6332 = vunpack.c.l.b16 %v1786
        %v6333 = vunpack.c.h.b16 %v1786
        %v6334 = vunpack.c.l.b16 %v1787
        %v6335 = vunpack.c.h.b16 %v1787
        %v6336 = vunpack.c.l.b16 %v1788
        %v6337 = vunpack.c.h.b16 %v1788
        %v6338 = vunpack.c.l.b16 %v1789
        %v6339 = vunpack.c.h.b16 %v1789
        %v6340 = vunpack.c.l.b16 %v1790
        %v6341 = vunpack.c.h.b16 %v1790
        %v6342 = vunpack.c.l.b16 %v1791
        %v6343 = vunpack.c.h.b16 %v1791
        %v6344 = vunpack.c.l.b16 %v1792
        %v6345 = vunpack.c.h.b16 %v1792
        %v6346 = vunpack.c.l.b16 %v1793
        %v6347 = vunpack.c.h.b16 %v1793
        %v6348 = vunpack.c.l.b16 %v1794
        %v6349 = vunpack.c.h.b16 %v1794
        %v6350 = vunpack.c.l.b16 %v1795
        %v6351 = vunpack.c.h.b16 %v1795
        %v6352 = vunpack.c.l.b16 %v1796
        %v6353 = vunpack.c.h.b16 %v1796
        %v6354 = vunpack.c.l.b16 %v1797
        %v6355 = vunpack.c.h.b16 %v1797
        %v6356 = vunpack.c.l.b16 %v1798
        %v6357 = vunpack.c.h.b16 %v1798
        %v6358 = vunpack.c.l.b16 %v1799
        %v6359 = vunpack.c.h.b16 %v1799
        %v6360 = vunpack.c.l.b16 %v1800
        %v6361 = vunpack.c.h.b16 %v1800
        %v6362 = vunpack.c.l.b16 %v1801
        %v6363 = vunpack.c.h.b16 %v1801
        %v6364 = vunpack.c.l.b16 %v1802
        %v6365 = vunpack.c.h.b16 %v1802
        %v6366 = vunpack.c.l.b16 %v1803
        %v6367 = vunpack.c.h.b16 %v1803
        %v6368 = vunpack.c.l.b16 %v1804
        %v6369 = vunpack.c.h.b16 %v1804
        %v6370 = vunpack.c.l.b16 %v1805
        %v6371 = vunpack.c.h.b16 %v1805
        %v6372 = vunpack.c.l.b16 %v1806
        %v6373 = vunpack.c.h.b16 %v1806
        %v6374 = vunpack.c.l.b16 %v1807
        %v6375 = vunpack.c.h.b16 %v1807
        %v6376 = vunpack.c.l.b16 %v1808
        %v6377 = vunpack.c.h.b16 %v1808
        %v6378 = vunpack.c.l.b16 %v1809
        %v6379 = vunpack.c.h.b16 %v1809
        %v6380 = vunpack.c.l.b16 %v1810
        %v6381 = vunpack.c.h.b16 %v1810
        %v6382 = vunpack.c.l.b16 %v1811
        %v6383 = vunpack.c.h.b16 %v1811
        %v6384 = vunpack.c.l.b16 %v1812
        %v6385 = vunpack.c.h.b16 %v1812
        %v6386 = vunpack.c.l.b16 %v1813
        %v6387 = vunpack.c.h.b16 %v1813
        %v6388 = vunpack.c.l.b16 %v1814
        %v6389 = vunpack.c.h.b16 %v1814
        %v6390 = vunpack.c.l.b16 %v1815
        %v6391 = vunpack.c.h.b16 %v1815
        %v6392 = vunpack.c.l.b16 %v1816
        %v6393 = vunpack.c.h.b16 %v1816
        %v6394 = vunpack.c.l.b16 %v1817
        %v6395 = vunpack.c.h.b16 %v1817
        %v6396 = vunpack.c.l.b16 %v1818
        %v6397 = vunpack.c.h.b16 %v1818
        %v6398 = vunpack.c.l.b16 %v1819
        %v6399 = vunpack.c.h.b16 %v1819
        %v6400 = vunpack.c.l.b16 %v1820
        %v6401 = vunpack.c.h.b16 %v1820
        %v6402 = vunpack.c.l.b16 %v1821
        %v6403 = vunpack.c.h.b16 %v1821
        %v6404 = vunpack.c.l.b16 %v1822
        %v6405 = vunpack.c.h.b16 %v1822
        %v6406 = vunpack.c.l.b16 %v1823
        %v6407 = vunpack.c.h.b16 %v1823
        %v6408 = vunpack.c.l.b16 %v1824
        %v6409 = vunpack.c.h.b16 %v1824
        %v6410 = vunpack.c.l.b16 %v1825
        %v6411 = vunpack.c.h.b16 %v1825
        %v6412 = vunpack.c.l.b16 %v1826
        %v6413 = vunpack.c.h.b16 %v1826
        %v6414 = vunpack.c.l.b16 %v1827
        %v6415 = vunpack.c.h.b16 %v1827
        %v6416 = vunpack.c.l.b16 %v1828
        %v6417 = vunpack.c.h.b16 %v1828
        %v6418 = vunpack.c.l.b16 %v1829
        %v6419 = vunpack.c.h.b16 %v1829
        %v6420 = vunpack.c.l.b16 %v1830
        %v6421 = vunpack.c.h.b16 %v1830
        %v6422 = vunpack.c.l.b16 %v1831
        %v6423 = vunpack.c.h.b16 %v1831
        %v6424 = vunpack.c.l.b16 %v1832
        %v6425 = vunpack.c.h.b16 %v1832
        %v6426 = vunpack.c.l.b16 %v1833
        %v6427 = vunpack.c.h.b16 %v1833
        %v6428 = vunpack.c.l.b16 %v1834
        %v6429 = vunpack.c.h.b16 %v1834
        %v6430 = vunpack.c.l.b16 %v1835
        %v6431 = vunpack.c.h.b16 %v1835
        %v6432 = vunpack.c.l.b16 %v1836
        %v6433 = vunpack.c.h.b16 %v1836
        %v6434 = vunpack.c.l.b16 %v1837
        %v6435 = vunpack.c.h.b16 %v1837
        %v6436 = vunpack.c.l.b16 %v1838
        %v6437 = vunpack.c.h.b16 %v1838
        %v6438 = vunpack.c.l.b16 %v1839
        %v6439 = vunpack.c.h.b16 %v1839
        %v6440 = vunpack.c.l.b16 %v1840
        %v6441 = vunpack.c.h.b16 %v1840
        %v6442 = vunpack.c.l.b16 %v1841
        %v6443 = vunpack.c.h.b16 %v1841
        %v6444 = vunpack.c.l.b16 %v1842
        %v6445 = vunpack.c.h.b16 %v1842
        %v6446 = vunpack.c.l.b16 %v1843
        %v6447 = vunpack.c.h.b16 %v1843
        %v6448 = vunpack.c.l.b16 %v1844
        %v6449 = vunpack.c.h.b16 %v1844
        %v6450 = vunpack.c.l.b16 %v1845
        %v6451 = vunpack.c.h.b16 %v1845
        %v6452 = vunpack.c.l.b16 %v1846
        %v6453 = vunpack.c.h.b16 %v1846
        %v6454 = vunpack.c.l.b16 %v1847
        %v6455 = vunpack.c.h.b16 %v1847
        %v6456 = vunpack.c.l.b16 %v1848
        %v6457 = vunpack.c.h.b16 %v1848
        %v6458 = vunpack.c.l.b16 %v1849
        %v6459 = vunpack.c.h.b16 %v1849
        %v6460 = vunpack.c.l.b16 %v1850
        %v6461 = vunpack.c.h.b16 %v1850
        %v6462 = vunpack.c.l.b16 %v1851
        %v6463 = vunpack.c.h.b16 %v1851
        %v6464 = vunpack.c.l.b16 %v1852
        %v6465 = vunpack.c.h.b16 %v1852
        %v6466 = vunpack.c.l.b16 %v1853
        %v6467 = vunpack.c.h.b16 %v1853
        %v6468 = vunpack.c.l.b16 %v1854
        %v6469 = vunpack.c.h.b16 %v1854
        %v6470 = vunpack.c.l.b16 %v1855
        %v6471 = vunpack.c.h.b16 %v1855
        %v6472 = vunpack.c.l.b16 %v1856
        %v6473 = vunpack.c.h.b16 %v1856
        %v6474 = vunpack.c.l.b16 %v1857
        %v6475 = vunpack.c.h.b16 %v1857
        %v6476 = vunpack.c.l.b16 %v1858
        %v6477 = vunpack.c.h.b16 %v1858
        %v6478 = vunpack.c.l.b16 %v1859
        %v6479 = vunpack.c.h.b16 %v1859
        %v6480 = vunpack.c.l.b16 %v1860
        %v6481 = vunpack.c.h.b16 %v1860
        %v6482 = vunpack.c.l.b16 %v1861
        %v6483 = vunpack.c.h.b16 %v1861
        %v6484 = vunpack.c.l.b16 %v1862
        %v6485 = vunpack.c.h.b16 %v1862
        %v6486 = vunpack.c.l.b16 %v1863
        %v6487 = vunpack.c.h.b16 %v1863
        %v6488 = vunpack.c.l.b16 %v1864
        %v6489 = vunpack.c.h.b16 %v1864
        %v6490 = vunpack.c.l.b16 %v1865
        %v6491 = vunpack.c.h.b16 %v1865
        %v6492 = vunpack.c.l.b16 %v1866
        %v6493 = vunpack.c.h.b16 %v1866
        %v6494 = vunpack.c.l.b16 %v1867
        %v6495 = vunpack.c.h.b16 %v1867
        %v6496 = vunpack.c.l.b16 %v1868
        %v6497 = vunpack.c.h.b16 %v1868
        %v6498 = vunpack.c.l.b16 %v1869
        %v6499 = vunpack.c.h.b16 %v1869
        %v6500 = vunpack.c.l.b16 %v1870
        %v6501 = vunpack.c.h.b16 %v1870
        %v6502 = vunpack.c.l.b16 %v1871
        %v6503 = vunpack.c.h.b16 %v1871
        %v6504 = vunpack.c.l.b16 %v1872
        %v6505 = vunpack.c.h.b16 %v1872
        %v6506 = vunpack.c.l.b16 %v1873
        %v6507 = vunpack.c.h.b16 %v1873
        %v6508 = vunpack.c.l.b16 %v1874
        %v6509 = vunpack.c.h.b16 %v1874
        %v6510 = vunpack.c.l.b16 %v1875
        %v6511 = vunpack.c.h.b16 %v1875
        %v6512 = vunpack.c.l.b16 %v1876
        %v6513 = vunpack.c.h.b16 %v1876
        %v6514 = vunpack.c.l.b16 %v1877
        %v6515 = vunpack.c.h.b16 %v1877
        %v6516 = vunpack.c.l.b16 %v1878
        %v6517 = vunpack.c.h.b16 %v1878
        %v6518 = vunpack.c.l.b16 %v1879
        %v6519 = vunpack.c.h.b16 %v1879
        %v6520 = vunpack.c.l.b16 %v1880
        %v6521 = vunpack.c.h.b16 %v1880
        %v6522 = vunpack.c.l.b16 %v1881
        %v6523 = vunpack.c.h.b16 %v1881
        %v6524 = vunpack.c.l.b16 %v1882
        %v6525 = vunpack.c.h.b16 %v1882
        %v6526 = vunpack.c.l.b16 %v1883
        %v6527 = vunpack.c.h.b16 %v1883
        %v6528 = vunpack.c.l.b16 %v1884
        %v6529 = vunpack.c.h.b16 %v1884
        %v6530 = vunpack.c.l.b16 %v1885
        %v6531 = vunpack.c.h.b16 %v1885
        %v6532 = vunpack.c.l.b16 %v1886
        %v6533 = vunpack.c.h.b16 %v1886
        %v6534 = vunpack.c.l.b16 %v1887
        %v6535 = vunpack.c.h.b16 %v1887
        %v6536 = vunpack.c.l.b16 %v1888
        %v6537 = vunpack.c.h.b16 %v1888
        %v6538 = vunpack.c.l.b16 %v1889
        %v6539 = vunpack.c.h.b16 %v1889
        %v6540 = vunpack.c.l.b16 %v1890
        %v6541 = vunpack.c.h.b16 %v1890
        %v6542 = vunpack.c.l.b16 %v1891
        %v6543 = vunpack.c.h.b16 %v1891
        %v6544 = vunpack.c.l.b16 %v1892
        %v6545 = vunpack.c.h.b16 %v1892
        %v6546 = vunpack.c.l.b16 %v1893
        %v6547 = vunpack.c.h.b16 %v1893
        %v6548 = vunpack.c.l.b16 %v1894
        %v6549 = vunpack.c.h.b16 %v1894
        %v6550 = vunpack.c.l.b16 %v1895
        %v6551 = vunpack.c.h.b16 %v1895
        %v6552 = vunpack.c.l.b16 %v1896
        %v6553 = vunpack.c.h.b16 %v1896
        %v6554 = vunpack.c.l.b16 %v1897
        %v6555 = vunpack.c.h.b16 %v1897
        %v6556 = vunpack.c.l.b16 %v1898
        %v6557 = vunpack.c.h.b16 %v1898
        %v6558 = vunpack.c.l.b16 %v1899
        %v6559 = vunpack.c.h.b16 %v1899
        %v6560 = vunpack.c.l.b16 %v1900
        %v6561 = vunpack.c.h.b16 %v1900
        %v6562 = vunpack.c.l.b16 %v1901
        %v6563 = vunpack.c.h.b16 %v1901
        %v6564 = vunpack.c.l.b16 %v1902
        %v6565 = vunpack.c.h.b16 %v1902
        %v6566 = vunpack.c.l.b16 %v1903
        %v6567 = vunpack.c.h.b16 %v1903
        %v6568 = vunpack.c.l.b16 %v1904
        %v6569 = vunpack.c.h.b16 %v1904
        %v6570 = vunpack.c.l.b16 %v1905
        %v6571 = vunpack.c.h.b16 %v1905
        %v6572 = vunpack.c.l.b16 %v1906
        %v6573 = vunpack.c.h.b16 %v1906
        %v6574 = vunpack.c.l.b16 %v1907
        %v6575 = vunpack.c.h.b16 %v1907
        %v6576 = vunpack.c.l.b16 %v1908
        %v6577 = vunpack.c.h.b16 %v1908
        %v6578 = vunpack.c.l.b16 %v1909
        %v6579 = vunpack.c.h.b16 %v1909
        %v6580 = vunpack.c.l.b16 %v1910
        %v6581 = vunpack.c.h.b16 %v1910
        %v6582 = vunpack.c.l.b16 %v1911
        %v6583 = vunpack.c.h.b16 %v1911
        %v6584 = vunpack.c.l.b16 %v1912
        %v6585 = vunpack.c.h.b16 %v1912
        %v6586 = vunpack.c.l.b16 %v1913
        %v6587 = vunpack.c.h.b16 %v1913
        %v6588 = vunpack.c.l.b16 %v1914
        %v6589 = vunpack.c.h.b16 %v1914
        %v6590 = vunpack.c.l.b16 %v1915
        %v6591 = vunpack.c.h.b16 %v1915
        %v6592 = vunpack.c.l.b16 %v1916
        %v6593 = vunpack.c.h.b16 %v1916
        %v6594 = vunpack.c.l.b16 %v1917
        %v6595 = vunpack.c.h.b16 %v1917
        %v6596 = vunpack.c.l.b16 %v1918
        %v6597 = vunpack.c.h.b16 %v1918
        %v6598 = vunpack.c.l.b16 %v1919
        %v6599 = vunpack.c.h.b16 %v1919
        %v6600 = vunpack.c.l.b16 %v1920
        %v6601 = vunpack.c.h.b16 %v1920
        %v6602 = vunpack.c.l.b16 %v1921
        %v6603 = vunpack.c.h.b16 %v1921
        %v6604 = vunpack.c.l.b16 %v1922
        %v6605 = vunpack.c.h.b16 %v1922
        %v6606 = vunpack.c.l.b16 %v1923
        %v6607 = vunpack.c.h.b16 %v1923
        %v6608 = vunpack.c.l.b16 %v1924
        %v6609 = vunpack.c.h.b16 %v1924
        %v6610 = vunpack.c.l.b16 %v1925
        %v6611 = vunpack.c.h.b16 %v1925
        %v6612 = vunpack.c.l.b16 %v1926
        %v6613 = vunpack.c.h.b16 %v1926
        %v6614 = vunpack.c.l.b16 %v1927
        %v6615 = vunpack.c.h.b16 %v1927
        %v6616 = vunpack.c.l.b16 %v1928
        %v6617 = vunpack.c.h.b16 %v1928
        %v6618 = vunpack.c.l.b16 %v1929
        %v6619 = vunpack.c.h.b16 %v1929
        %v6620 = vunpack.c.l.b16 %v1930
        %v6621 = vunpack.c.h.b16 %v1930
        %v6622 = vunpack.c.l.b16 %v1931
        %v6623 = vunpack.c.h.b16 %v1931
        %v6624 = vpack.c.b16 %v3560, %v3552
        %v6625 = vpack.c.b16 %v3561, %v3553
        %v6626 = vpack.c.b16 %v3562, %v3554
        %v6627 = vpack.c.b16 %v3563, %v3555
        %v6628 = vpack.c.b16 %v3564, %v3556
        %v6629 = vpack.c.b16 %v3565, %v3557
        %v6630 = vpack.c.b16 %v3566, %v3558
        %v6631 = vpack.c.b16 %v3567, %v3559
        %v6632 = vpack.c.b16 %v3576, %v3568
        %v6633 = vpack.c.b16 %v3577, %v3569
        %v6634 = vpack.c.b16 %v3578, %v3570
        %v6635 = vpack.c.b16 %v3579, %v3571
        %v6636 = vpack.c.b16 %v3580, %v3572
        %v6637 = vpack.c.b16 %v3581, %v3573
        %v6638 = vpack.c.b16 %v3582, %v3574
        %v6639 = vpack.c.b16 %v3583, %v3575
        %v6640 = vpack.c.b16 %v3592, %v3584
        %v6641 = vpack.c.b16 %v3593, %v3585
        %v6642 = vpack.c.b16 %v3594, %v3586
        %v6643 = vpack.c.b16 %v3595, %v3587
        %v6644 = vpack.c.b16 %v3596, %v3588
        %v6645 = vpack.c.b16 %v3597, %v3589
        %v6646 = vpack.c.b16 %v3598, %v3590
        %v6647 = vpack.c.b16 %v3599, %v3591
        %v6648 = vpack.c.b16 %v3608, %v3600
        %v6649 = vpack.c.b16 %v3609, %v3601
        %v6650 = vpack.c.b16 %v3610, %v3602
        %v6651 = vpack.c.b16 %v3611, %v3603
        %v6652 = vpack.c.b16 %v3612, %v3604
        %v6653 = vpack.c.b16 %v3613, %v3605
        %v6654 = vpack.c.b16 %v3614, %v3606
        %v6655 = vpack.c.b16 %v3615, %v3607
        %v6656 = vpack.c.b16 %v3624, %v3616
        %v6657 = vpack.c.b16 %v3625, %v3617
        %v6658 = vpack.c.b16 %v3626, %v3618
        %v6659 = vpack.c.b16 %v3627, %v3619
        %v6660 = vpack.c.b16 %v3628, %v3620
        %v6661 = vpack.c.b16 %v3629, %v3621
        %v6662 = vpack.c.b16 %v3630, %v3622
        %v6663 = vpack.c.b16 %v3631, %v3623
        %v6664 = vpack.c.b16 %v3640, %v3632
        %v6665 = vpack.c.b16 %v3641, %v3633
        %v6666 = vpack.c.b16 %v3642, %v3634
        %v6667 = vpack.c.b16 %v3643, %v3635
        %v6668 = vpack.c.b16 %v3644, %v3636
        %v6669 = vpack.c.b16 %v3645, %v3637
        %v6670 = vpack.c.b16 %v3646, %v3638
        %v6671 = vpack.c.b16 %v3647, %v3639
        %v6672 = vpack.c.b16 %v3656, %v3648
        %v6673 = vpack.c.b16 %v3657, %v3649
        %v6674 = vpack.c.b16 %v3658, %v3650
        %v6675 = vpack.c.b16 %v3659, %v3651
        %v6676 = vpack.c.b16 %v3660, %v3652
        %v6677 = vpack.c.b16 %v3661, %v3653
        %v6678 = vpack.c.b16 %v3662, %v3654
        %v6679 = vpack.c.b16 %v3663, %v3655
        %v6680 = vpack.c.b16 %v3672, %v3664
        %v6681 = vpack.c.b16 %v3673, %v3665
        %v6682 = vpack.c.b16 %v3674, %v3666
        %v6683 = vpack.c.b16 %v3675, %v3667
        %v6684 = vpack.c.b16 %v3676, %v3668
        %v6685 = vpack.c.b16 %v3677, %v3669
        %v6686 = vpack.c.b16 %v3678, %v3670
        %v6687 = vpack.c.b16 %v3679, %v3671
        %v6688 = vpack.c.b16 %v3688, %v3680
        %v6689 = vpack.c.b16 %v3689, %v3681
        %v6690 = vpack.c.b16 %v3690, %v3682
        %v6691 = vpack.c.b16 %v3691, %v3683
        %v6692 = vpack.c.b16 %v3692, %v3684
        %v6693 = vpack.c.b16 %v3693, %v3685
        %v6694 = vpack.c.b16 %v3694, %v3686
        %v6695 = vpack.c.b16 %v3695, %v3687
        %v6696 = vpack.c.b16 %v3704, %v3696
        %v6697 = vpack.c.b16 %v3705, %v3697
        %v6698 = vpack.c.b16 %v3706, %v3698
        %v6699 = vpack.c.b16 %v3707, %v3699
        %v6700 = vpack.c.b16 %v3708, %v3700
        %v6701 = vpack.c.b16 %v3709, %v3701
        %v6702 = vpack.c.b16 %v3710, %v3702
        %v6703 = vpack.c.b16 %v3711, %v3703
        %v6704 = vpack.c.b16 %v3720, %v3712
        %v6705 = vpack.c.b16 %v3721, %v3713
        %v6706 = vpack.c.b16 %v3722, %v3714
        %v6707 = vpack.c.b16 %v3723, %v3715
        %v6708 = vpack.c.b16 %v3724, %v3716
        %v6709 = vpack.c.b16 %v3725, %v3717
        %v6710 = vpack.c.b16 %v3726, %v3718
        %v6711 = vpack.c.b16 %v3727, %v3719
        %v6712 = vpack.c.b16 %v3736, %v3728
        %v6713 = vpack.c.b16 %v3737, %v3729
        %v6714 = vpack.c.b16 %v3738, %v3730
        %v6715 = vpack.c.b16 %v3739, %v3731
        %v6716 = vpack.c.b16 %v3740, %v3732
        %v6717 = vpack.c.b16 %v3741, %v3733
        %v6718 = vpack.c.b16 %v3742, %v3734
        %v6719 = vpack.c.b16 %v3743, %v3735
        %v6720 = vpack.c.b16 %v3752, %v3744
        %v6721 = vpack.c.b16 %v3753, %v3745
        %v6722 = vpack.c.b16 %v3754, %v3746
        %v6723 = vpack.c.b16 %v3755, %v3747
        %v6724 = vpack.c.b16 %v3756, %v3748
        %v6725 = vpack.c.b16 %v3757, %v3749
        %v6726 = vpack.c.b16 %v3758, %v3750
        %v6727 = vpack.c.b16 %v3759, %v3751
        %v6728 = vpack.c.b16 %v3768, %v3760
        %v6729 = vpack.c.b16 %v3769, %v3761
        %v6730 = vpack.c.b16 %v3770, %v3762
        %v6731 = vpack.c.b16 %v3771, %v3763
        %v6732 = vpack.c.b16 %v3772, %v3764
        %v6733 = vpack.c.b16 %v3773, %v3765
        %v6734 = vpack.c.b16 %v3774, %v3766
        %v6735 = vpack.c.b16 %v3775, %v3767
        %v6736 = vpack.c.b16 %v3784, %v3776
        %v6737 = vpack.c.b16 %v3785, %v3777
        %v6738 = vpack.c.b16 %v3786, %v3778
        %v6739 = vpack.c.b16 %v3787, %v3779
        %v6740 = vpack.c.b16 %v3788, %v3780
        %v6741 = vpack.c.b16 %v3789, %v3781
        %v6742 = vpack.c.b16 %v3790, %v3782
        %v6743 = vpack.c.b16 %v3791, %v3783
        %v6744 = vpack.c.b16 %v3800, %v3792
        %v6745 = vpack.c.b16 %v3801, %v3793
        %v6746 = vpack.c.b16 %v3802, %v3794
        %v6747 = vpack.c.b16 %v3803, %v3795
        %v6748 = vpack.c.b16 %v3804, %v3796
        %v6749 = vpack.c.b16 %v3805, %v3797
        %v6750 = vpack.c.b16 %v3806, %v3798
        %v6751 = vpack.c.b16 %v3807, %v3799
        %v6752 = vpack.c.b16 %v3816, %v3808
        %v6753 = vpack.c.b16 %v3817, %v3809
        %v6754 = vpack.c.b16 %v3818, %v3810
        %v6755 = vpack.c.b16 %v3819, %v3811
        %v6756 = vpack.c.b16 %v3820, %v3812
        %v6757 = vpack.c.b16 %v3821, %v3813
        %v6758 = vpack.c.b16 %v3822, %v3814
        %v6759 = vpack.c.b16 %v3823, %v3815
        %v6760 = vpack.c.b16 %v3832, %v3824
        %v6761 = vpack.c.b16 %v3833, %v3825
        %v6762 = vpack.c.b16 %v3834, %v3826
        %v6763 = vpack.c.b16 %v3835, %v3827
        %v6764 = vpack.c.b16 %v3836, %v3828
        %v6765 = vpack.c.b16 %v3837, %v3829
        %v6766 = vpack.c.b16 %v3838, %v3830
        %v6767 = vpack.c.b16 %v3839, %v3831
        %v6768 = vpack.c.b16 %v3848, %v3840
        %v6769 = vpack.c.b16 %v3849, %v3841
        %v6770 = vpack.c.b16 %v3850, %v3842
        %v6771 = vpack.c.b16 %v3851, %v3843
        %v6772 = vpack.c.b16 %v3852, %v3844
        %v6773 = vpack.c.b16 %v3853, %v3845
        %v6774 = vpack.c.b16 %v3854, %v3846
        %v6775 = vpack.c.b16 %v3855, %v3847
        %v6776 = vpack.c.b16 %v3864, %v3856
        %v6777 = vpack.c.b16 %v3865, %v3857
        %v6778 = vpack.c.b16 %v3866, %v3858
        %v6779 = vpack.c.b16 %v3867, %v3859
        %v6780 = vpack.c.b16 %v3868, %v3860
        %v6781 = vpack.c.b16 %v3869, %v3861
        %v6782 = vpack.c.b16 %v3870, %v3862
        %v6783 = vpack.c.b16 %v3871, %v3863
        %v6784 = vpack.c.b16 %v3880, %v3872
        %v6785 = vpack.c.b16 %v3881, %v3873
        %v6786 = vpack.c.b16 %v3882, %v3874
        %v6787 = vpack.c.b16 %v3883, %v3875
        %v6788 = vpack.c.b16 %v3884, %v3876
        %v6789 = vpack.c.b16 %v3885, %v3877
        %v6790 = vpack.c.b16 %v3886, %v3878
        %v6791 = vpack.c.b16 %v3887, %v3879
        %v6792 = vpack.c.b16 %v3896, %v3888
        %v6793 = vpack.c.b16 %v3897, %v3889
        %v6794 = vpack.c.b16 %v3898, %v3890
        %v6795 = vpack.c.b16 %v3899, %v3891
        %v6796 = vpack.c.b16 %v3900, %v3892
        %v6797 = vpack.c.b16 %v3901, %v3893
        %v6798 = vpack.c.b16 %v3902, %v3894
        %v6799 = vpack.c.b16 %v3903, %v3895
        %v6800 = vpack.c.b16 %v3912, %v3904
        %v6801 = vpack.c.b16 %v3913, %v3905
        %v6802 = vpack.c.b16 %v3914, %v3906
        %v6803 = vpack.c.b16 %v3915, %v3907
        %v6804 = vpack.c.b16 %v3916, %v3908
        %v6805 = vpack.c.b16 %v3917, %v3909
        %v6806 = vpack.c.b16 %v3918, %v3910
        %v6807 = vpack.c.b16 %v3919, %v3911
        %v6808 = vpack.c.b16 %v3928, %v3920
        %v6809 = vpack.c.b16 %v3929, %v3921
        %v6810 = vpack.c.b16 %v3930, %v3922
        %v6811 = vpack.c.b16 %v3931, %v3923
        %v6812 = vpack.c.b16 %v3932, %v3924
        %v6813 = vpack.c.b16 %v3933, %v3925
        %v6814 = vpack.c.b16 %v3934, %v3926
        %v6815 = vpack.c.b16 %v3935, %v3927
        %v6816 = vpack.c.b16 %v3944, %v3936
        %v6817 = vpack.c.b16 %v3945, %v3937
        %v6818 = vpack.c.b16 %v3946, %v3938
        %v6819 = vpack.c.b16 %v3947, %v3939
        %v6820 = vpack.c.b16 %v3948, %v3940
        %v6821 = vpack.c.b16 %v3949, %v3941
        %v6822 = vpack.c.b16 %v3950, %v3942
        %v6823 = vpack.c.b16 %v3951, %v3943
        %v6824 = vpack.c.b16 %v3960, %v3952
        %v6825 = vpack.c.b16 %v3961, %v3953
        %v6826 = vpack.c.b16 %v3962, %v3954
        %v6827 = vpack.c.b16 %v3963, %v3955
        %v6828 = vpack.c.b16 %v3964, %v3956
        %v6829 = vpack.c.b16 %v3965, %v3957
        %v6830 = vpack.c.b16 %v3966, %v3958
        %v6831 = vpack.c.b16 %v3967, %v3959
        %v6832 = vpack.c.b16 %v3976, %v3968
        %v6833 = vpack.c.b16 %v3977, %v3969
        %v6834 = vpack.c.b16 %v3978, %v3970
        %v6835 = vpack.c.b16 %v3979, %v3971
        %v6836 = vpack.c.b16 %v3980, %v3972
        %v6837 = vpack.c.b16 %v3981, %v3973
        %v6838 = vpack.c.b16 %v3982, %v3974
        %v6839 = vpack.c.b16 %v3983, %v3975
        %v6840 = vpack.c.b16 %v3992, %v3984
        %v6841 = vpack.c.b16 %v3993, %v3985
        %v6842 = vpack.c.b16 %v3994, %v3986
        %v6843 = vpack.c.b16 %v3995, %v3987
        %v6844 = vpack.c.b16 %v3996, %v3988
        %v6845 = vpack.c.b16 %v3997, %v3989
        %v6846 = vpack.c.b16 %v3998, %v3990
        %v6847 = vpack.c.b16 %v3999, %v3991
        %v6848 = vpack.c.b16 %v4008, %v4000
        %v6849 = vpack.c.b16 %v4009, %v4001
        %v6850 = vpack.c.b16 %v4010, %v4002
        %v6851 = vpack.c.b16 %v4011, %v4003
        %v6852 = vpack.c.b16 %v4012, %v4004
        %v6853 = vpack.c.b16 %v4013, %v4005
        %v6854 = vpack.c.b16 %v4014, %v4006
        %v6855 = vpack.c.b16 %v4015, %v4007
        %v6856 = vpack.c.b16 %v4024, %v4016
        %v6857 = vpack.c.b16 %v4025, %v4017
        %v6858 = vpack.c.b16 %v4026, %v4018
        %v6859 = vpack.c.b16 %v4027, %v4019
        %v6860 = vpack.c.b16 %v4028, %v4020
        %v6861 = vpack.c.b16 %v4029, %v4021
        %v6862 = vpack.c.b16 %v4030, %v4022
        %v6863 = vpack.c.b16 %v4031, %v4023
        %v6864 = vpack.c.b16 %v4040, %v4032
        %v6865 = vpack.c.b16 %v4041, %v4033
        %v6866 = vpack.c.b16 %v4042, %v4034
        %v6867 = vpack.c.b16 %v4043, %v4035
        %v6868 = vpack.c.b16 %v4044, %v4036
        %v6869 = vpack.c.b16 %v4045, %v4037
        %v6870 = vpack.c.b16 %v4046, %v4038
        %v6871 = vpack.c.b16 %v4047, %v4039
        %v6872 = vpack.c.b16 %v4056, %v4048
        %v6873 = vpack.c.b16 %v4057, %v4049
        %v6874 = vpack.c.b16 %v4058, %v4050
        %v6875 = vpack.c.b16 %v4059, %v4051
        %v6876 = vpack.c.b16 %v4060, %v4052
        %v6877 = vpack.c.b16 %v4061, %v4053
        %v6878 = vpack.c.b16 %v4062, %v4054
        %v6879 = vpack.c.b16 %v4063, %v4055
        %v6880 = vpack.c.b16 %v4072, %v4064
        %v6881 = vpack.c.b16 %v4073, %v4065
        %v6882 = vpack.c.b16 %v4074, %v4066
        %v6883 = vpack.c.b16 %v4075, %v4067
        %v6884 = vpack.c.b16 %v4076, %v4068
        %v6885 = vpack.c.b16 %v4077, %v4069
        %v6886 = vpack.c.b16 %v4078, %v4070
        %v6887 = vpack.c.b16 %v4079, %v4071
        %v6888 = vpack.c.b16 %v4088, %v4080
        %v6889 = vpack.c.b16 %v4089, %v4081
        %v6890 = vpack.c.b16 %v4090, %v4082
        %v6891 = vpack.c.b16 %v4091, %v4083
        %v6892 = vpack.c.b16 %v4092, %v4084
        %v6893 = vpack.c.b16 %v4093, %v4085
        %v6894 = vpack.c.b16 %v4094, %v4086
        %v6895 = vpack.c.b16 %v4095, %v4087
        %v6896 = vpack.c.b16 %v4104, %v4096
        %v6897 = vpack.c.b16 %v4105, %v4097
        %v6898 = vpack.c.b16 %v4106, %v4098
        %v6899 = vpack.c.b16 %v4107, %v4099
        %v6900 = vpack.c.b16 %v4108, %v4100
        %v6901 = vpack.c.b16 %v4109, %v4101
        %v6902 = vpack.c.b16 %v4110, %v4102
        %v6903 = vpack.c.b16 %v4111, %v4103
        %v6904 = vpack.c.b16 %v4120, %v4112
        %v6905 = vpack.c.b16 %v4121, %v4113
        %v6906 = vpack.c.b16 %v4122, %v4114
        %v6907 = vpack.c.b16 %v4123, %v4115
        %v6908 = vpack.c.b16 %v4124, %v4116
        %v6909 = vpack.c.b16 %v4125, %v4117
        %v6910 = vpack.c.b16 %v4126, %v4118
        %v6911 = vpack.c.b16 %v4127, %v4119
        %v6912 = vpack.c.b16 %v4136, %v4128
        %v6913 = vpack.c.b16 %v4137, %v4129
        %v6914 = vpack.c.b16 %v4138, %v4130
        %v6915 = vpack.c.b16 %v4139, %v4131
        %v6916 = vpack.c.b16 %v4140, %v4132
        %v6917 = vpack.c.b16 %v4141, %v4133
        %v6918 = vpack.c.b16 %v4142, %v4134
        %v6919 = vpack.c.b16 %v4143, %v4135
        %v6920 = vpack.c.b16 %v4152, %v4144
        %v6921 = vpack.c.b16 %v4153, %v4145
        %v6922 = vpack.c.b16 %v4154, %v4146
        %v6923 = vpack.c.b16 %v4155, %v4147
        %v6924 = vpack.c.b16 %v4156, %v4148
        %v6925 = vpack.c.b16 %v4157, %v4149
        %v6926 = vpack.c.b16 %v4158, %v4150
        %v6927 = vpack.c.b16 %v4159, %v4151
        %v6928 = vpack.c.b16 %v4168, %v4160
        %v6929 = vpack.c.b16 %v4169, %v4161
        %v6930 = vpack.c.b16 %v4170, %v4162
        %v6931 = vpack.c.b16 %v4171, %v4163
        %v6932 = vpack.c.b16 %v4172, %v4164
        %v6933 = vpack.c.b16 %v4173, %v4165
        %v6934 = vpack.c.b16 %v4174, %v4166
        %v6935 = vpack.c.b16 %v4175, %v4167
        %v6936 = vpack.c.b16 %v4184, %v4176
        %v6937 = vpack.c.b16 %v4185, %v4177
        %v6938 = vpack.c.b16 %v4186, %v4178
        %v6939 = vpack.c.b16 %v4187, %v4179
        %v6940 = vpack.c.b16 %v4188, %v4180
        %v6941 = vpack.c.b16 %v4189, %v4181
        %v6942 = vpack.c.b16 %v4190, %v4182
        %v6943 = vpack.c.b16 %v4191, %v4183
        %v6944 = vpack.c.b16 %v4200, %v4192
        %v6945 = vpack.c.b16 %v4201, %v4193
        %v6946 = vpack.c.b16 %v4202, %v4194
        %v6947 = vpack.c.b16 %v4203, %v4195
        %v6948 = vpack.c.b16 %v4204, %v4196
        %v6949 = vpack.c.b16 %v4205, %v4197
        %v6950 = vpack.c.b16 %v4206, %v4198
        %v6951 = vpack.c.b16 %v4207, %v4199
        %v6952 = vpack.c.b16 %v4216, %v4208
        %v6953 = vpack.c.b16 %v4217, %v4209
        %v6954 = vpack.c.b16 %v4218, %v4210
        %v6955 = vpack.c.b16 %v4219, %v4211
        %v6956 = vpack.c.b16 %v4220, %v4212
        %v6957 = vpack.c.b16 %v4221, %v4213
        %v6958 = vpack.c.b16 %v4222, %v4214
        %v6959 = vpack.c.b16 %v4223, %v4215
        %v6960 = vpack.c.b16 %v4232, %v4224
        %v6961 = vpack.c.b16 %v4233, %v4225
        %v6962 = vpack.c.b16 %v4234, %v4226
        %v6963 = vpack.c.b16 %v4235, %v4227
        %v6964 = vpack.c.b16 %v4236, %v4228
        %v6965 = vpack.c.b16 %v4237, %v4229
        %v6966 = vpack.c.b16 %v4238, %v4230
        %v6967 = vpack.c.b16 %v4239, %v4231
        %v6968 = vpack.c.b16 %v4248, %v4240
        %v6969 = vpack.c.b16 %v4249, %v4241
        %v6970 = vpack.c.b16 %v4250, %v4242
        %v6971 = vpack.c.b16 %v4251, %v4243
        %v6972 = vpack.c.b16 %v4252, %v4244
        %v6973 = vpack.c.b16 %v4253, %v4245
        %v6974 = vpack.c.b16 %v4254, %v4246
        %v6975 = vpack.c.b16 %v4255, %v4247
        %v6976 = vpack.c.b16 %v4264, %v4256
        %v6977 = vpack.c.b16 %v4265, %v4257
        %v6978 = vpack.c.b16 %v4266, %v4258
        %v6979 = vpack.c.b16 %v4267, %v4259
        %v6980 = vpack.c.b16 %v4268, %v4260
        %v6981 = vpack.c.b16 %v4269, %v4261
        %v6982 = vpack.c.b16 %v4270, %v4262
        %v6983 = vpack.c.b16 %v4271, %v4263
        %v6984 = vpack.c.b16 %v4280, %v4272
        %v6985 = vpack.c.b16 %v4281, %v4273
        %v6986 = vpack.c.b16 %v4282, %v4274
        %v6987 = vpack.c.b16 %v4283, %v4275
        %v6988 = vpack.c.b16 %v4284, %v4276
        %v6989 = vpack.c.b16 %v4285, %v4277
        %v6990 = vpack.c.b16 %v4286, %v4278
        %v6991 = vpack.c.b16 %v4287, %v4279
        %v6992 = vpack.c.b16 %v4296, %v4288
        %v6993 = vpack.c.b16 %v4297, %v4289
        %v6994 = vpack.c.b16 %v4298, %v4290
        %v6995 = vpack.c.b16 %v4299, %v4291
        %v6996 = vpack.c.b16 %v4300, %v4292
        %v6997 = vpack.c.b16 %v4301, %v4293
        %v6998 = vpack.c.b16 %v4302, %v4294
        %v6999 = vpack.c.b16 %v4303, %v4295
        %v7000 = vpack.c.b16 %v4312, %v4304
        %v7001 = vpack.c.b16 %v4313, %v4305
        %v7002 = vpack.c.b16 %v4314, %v4306
        %v7003 = vpack.c.b16 %v4315, %v4307
        %v7004 = vpack.c.b16 %v4316, %v4308
        %v7005 = vpack.c.b16 %v4317, %v4309
        %v7006 = vpack.c.b16 %v4318, %v4310
        %v7007 = vpack.c.b16 %v4319, %v4311
        %v7008 = vpack.c.b16 %v4328, %v4320
        %v7009 = vpack.c.b16 %v4329, %v4321
        %v7010 = vpack.c.b16 %v4330, %v4322
        %v7011 = vpack.c.b16 %v4331, %v4323
        %v7012 = vpack.c.b16 %v4332, %v4324
        %v7013 = vpack.c.b16 %v4333, %v4325
        %v7014 = vpack.c.b16 %v4334, %v4326
        %v7015 = vpack.c.b16 %v4335, %v4327
        %v7016 = vpack.c.b16 %v4344, %v4336
        %v7017 = vpack.c.b16 %v4345, %v4337
        %v7018 = vpack.c.b16 %v4346, %v4338
        %v7019 = vpack.c.b16 %v4347, %v4339
        %v7020 = vpack.c.b16 %v4348, %v4340
        %v7021 = vpack.c.b16 %v4349, %v4341
        %v7022 = vpack.c.b16 %v4350, %v4342
        %v7023 = vpack.c.b16 %v4351, %v4343
        %v7024 = vpack.c.b16 %v4360, %v4352
        %v7025 = vpack.c.b16 %v4361, %v4353
        %v7026 = vpack.c.b16 %v4362, %v4354
        %v7027 = vpack.c.b16 %v4363, %v4355
        %v7028 = vpack.c.b16 %v4364, %v4356
        %v7029 = vpack.c.b16 %v4365, %v4357
        %v7030 = vpack.c.b16 %v4366, %v4358
        %v7031 = vpack.c.b16 %v4367, %v4359
        %v7032 = vpack.c.b16 %v4376, %v4368
        %v7033 = vpack.c.b16 %v4377, %v4369
        %v7034 = vpack.c.b16 %v4378, %v4370
        %v7035 = vpack.c.b16 %v4379, %v4371
        %v7036 = vpack.c.b16 %v4380, %v4372
        %v7037 = vpack.c.b16 %v4381, %v4373
        %v7038 = vpack.c.b16 %v4382, %v4374
        %v7039 = vpack.c.b16 %v4383, %v4375
        %v7040 = vpack.c.b16 %v4392, %v4384
        %v7041 = vpack.c.b16 %v4393, %v4385
        %v7042 = vpack.c.b16 %v4394, %v4386
        %v7043 = vpack.c.b16 %v4395, %v4387
        %v7044 = vpack.c.b16 %v4396, %v4388
        %v7045 = vpack.c.b16 %v4397, %v4389
        %v7046 = vpack.c.b16 %v4398, %v4390
        %v7047 = vpack.c.b16 %v4399, %v4391
        %v7048 = vpack.c.b16 %v4408, %v4400
        %v7049 = vpack.c.b16 %v4409, %v4401
        %v7050 = vpack.c.b16 %v4410, %v4402
        %v7051 = vpack.c.b16 %v4411, %v4403
        %v7052 = vpack.c.b16 %v4412, %v4404
        %v7053 = vpack.c.b16 %v4413, %v4405
        %v7054 = vpack.c.b16 %v4414, %v4406
        %v7055 = vpack.c.b16 %v4415, %v4407
        %v7056 = vpack.c.b16 %v4424, %v4416
        %v7057 = vpack.c.b16 %v4425, %v4417
        %v7058 = vpack.c.b16 %v4426, %v4418
        %v7059 = vpack.c.b16 %v4427, %v4419
        %v7060 = vpack.c.b16 %v4428, %v4420
        %v7061 = vpack.c.b16 %v4429, %v4421
        %v7062 = vpack.c.b16 %v4430, %v4422
        %v7063 = vpack.c.b16 %v4431, %v4423
        %v7064 = vpack.c.b16 %v4440, %v4432
        %v7065 = vpack.c.b16 %v4441, %v4433
        %v7066 = vpack.c.b16 %v4442, %v4434
        %v7067 = vpack.c.b16 %v4443, %v4435
        %v7068 = vpack.c.b16 %v4444, %v4436
        %v7069 = vpack.c.b16 %v4445, %v4437
        %v7070 = vpack.c.b16 %v4446, %v4438
        %v7071 = vpack.c.b16 %v4447, %v4439
        %v7072 = vpack.c.b16 %v4456, %v4448
        %v7073 = vpack.c.b16 %v4457, %v4449
        %v7074 = vpack.c.b16 %v4458, %v4450
        %v7075 = vpack.c.b16 %v4459, %v4451
        %v7076 = vpack.c.b16 %v4460, %v4452
        %v7077 = vpack.c.b16 %v4461, %v4453
        %v7078 = vpack.c.b16 %v4462, %v4454
        %v7079 = vpack.c.b16 %v4463, %v4455
        %v7080 = vpack.c.b16 %v4472, %v4464
        %v7081 = vpack.c.b16 %v4473, %v4465
        %v7082 = vpack.c.b16 %v4474, %v4466
        %v7083 = vpack.c.b16 %v4475, %v4467
        %v7084 = vpack.c.b16 %v4476, %v4468
        %v7085 = vpack.c.b16 %v4477, %v4469
        %v7086 = vpack.c.b16 %v4478, %v4470
        %v7087 = vpack.c.b16 %v4479, %v4471
        %v7088 = vpack.c.b16 %v4488, %v4480
        %v7089 = vpack.c.b16 %v4489, %v4481
        %v7090 = vpack.c.b16 %v4490, %v4482
        %v7091 = vpack.c.b16 %v4491, %v4483
        %v7092 = vpack.c.b16 %v4492, %v4484
        %v7093 = vpack.c.b16 %v4493, %v4485
        %v7094 = vpack.c.b16 %v4494, %v4486
        %v7095 = vpack.c.b16 %v4495, %v4487
        %v7096 = vpack.c.b16 %v4504, %v4496
        %v7097 = vpack.c.b16 %v4505, %v4497
        %v7098 = vpack.c.b16 %v4506, %v4498
        %v7099 = vpack.c.b16 %v4507, %v4499
        %v7100 = vpack.c.b16 %v4508, %v4500
        %v7101 = vpack.c.b16 %v4509, %v4501
        %v7102 = vpack.c.b16 %v4510, %v4502
        %v7103 = vpack.c.b16 %v4511, %v4503
        %v7104 = vpack.c.b16 %v4520, %v4512
        %v7105 = vpack.c.b16 %v4521, %v4513
        %v7106 = vpack.c.b16 %v4522, %v4514
        %v7107 = vpack.c.b16 %v4523, %v4515
        %v7108 = vpack.c.b16 %v4524, %v4516
        %v7109 = vpack.c.b16 %v4525, %v4517
        %v7110 = vpack.c.b16 %v4526, %v4518
        %v7111 = vpack.c.b16 %v4527, %v4519
        %v7112 = vpack.c.b16 %v4536, %v4528
        %v7113 = vpack.c.b16 %v4537, %v4529
        %v7114 = vpack.c.b16 %v4538, %v4530
        %v7115 = vpack.c.b16 %v4539, %v4531
        %v7116 = vpack.c.b16 %v4540, %v4532
        %v7117 = vpack.c.b16 %v4541, %v4533
        %v7118 = vpack.c.b16 %v4542, %v4534
        %v7119 = vpack.c.b16 %v4543, %v4535
        %v7120 = vpack.c.b16 %v4552, %v4544
        %v7121 = vpack.c.b16 %v4553, %v4545
        %v7122 = vpack.c.b16 %v4554, %v4546
        %v7123 = vpack.c.b16 %v4555, %v4547
        %v7124 = vpack.c.b16 %v4556, %v4548
        %v7125 = vpack.c.b16 %v4557, %v4549
        %v7126 = vpack.c.b16 %v4558, %v4550
        %v7127 = vpack.c.b16 %v4559, %v4551
        %v7128 = vpack.c.b16 %v4568, %v4560
        %v7129 = vpack.c.b16 %v4569, %v4561
        %v7130 = vpack.c.b16 %v4570, %v4562
        %v7131 = vpack.c.b16 %v4571, %v4563
        %v7132 = vpack.c.b16 %v4572, %v4564
        %v7133 = vpack.c.b16 %v4573, %v4565
        %v7134 = vpack.c.b16 %v4574, %v4566
        %v7135 = vpack.c.b16 %v4575, %v4567
        %v7136 = vpack.c.b16 %v4584, %v4576
        %v7137 = vpack.c.b16 %v4585, %v4577
        %v7138 = vpack.c.b16 %v4586, %v4578
        %v7139 = vpack.c.b16 %v4587, %v4579
        %v7140 = vpack.c.b16 %v4588, %v4580
        %v7141 = vpack.c.b16 %v4589, %v4581
        %v7142 = vpack.c.b16 %v4590, %v4582
        %v7143 = vpack.c.b16 %v4591, %v4583
        %v7144 = vpack.c.b16 %v4600, %v4592
        %v7145 = vpack.c.b16 %v4601, %v4593
        %v7146 = vpack.c.b16 %v4602, %v4594
        %v7147 = vpack.c.b16 %v4603, %v4595
        %v7148 = vpack.c.b16 %v4604, %v4596
        %v7149 = vpack.c.b16 %v4605, %v4597
        %v7150 = vpack.c.b16 %v4606, %v4598
        %v7151 = vpack.c.b16 %v4607, %v4599
        %v7152 = vpack.c.b16 %v4616, %v4608
        %v7153 = vpack.c.b16 %v4617, %v4609
        %v7154 = vpack.c.b16 %v4618, %v4610
        %v7155 = vpack.c.b16 %v4619, %v4611
        %v7156 = vpack.c.b16 %v4620, %v4612
        %v7157 = vpack.c.b16 %v4621, %v4613
        %v7158 = vpack.c.b16 %v4622, %v4614
        %v7159 = vpack.c.b16 %v4623, %v4615
        %v7160 = vpack.c.b16 %v4632, %v4624
        %v7161 = vpack.c.b16 %v4633, %v4625
        %v7162 = vpack.c.b16 %v4634, %v4626
        %v7163 = vpack.c.b16 %v4635, %v4627
        %v7164 = vpack.c.b16 %v4636, %v4628
        %v7165 = vpack.c.b16 %v4637, %v4629
        %v7166 = vpack.c.b16 %v4638, %v4630
        %v7167 = vpack.c.b16 %v4639, %v4631
        %v7168 = vpack.c.b16 %v4648, %v4640
        %v7169 = vpack.c.b16 %v4649, %v4641
        %v7170 = vpack.c.b16 %v4650, %v4642
        %v7171 = vpack.c.b16 %v4651, %v4643
        %v7172 = vpack.c.b16 %v4652, %v4644
        %v7173 = vpack.c.b16 %v4653, %v4645
        %v7174 = vpack.c.b16 %v4654, %v4646
        %v7175 = vpack.c.b16 %v4655, %v4647
        %v7176 = vpack.c.b16 %v4664, %v4656
        %v7177 = vpack.c.b16 %v4665, %v4657
        %v7178 = vpack.c.b16 %v4666, %v4658
        %v7179 = vpack.c.b16 %v4667, %v4659
        %v7180 = vpack.c.b16 %v4668, %v4660
        %v7181 = vpack.c.b16 %v4669, %v4661
        %v7182 = vpack.c.b16 %v4670, %v4662
        %v7183 = vpack.c.b16 %v4671, %v4663
        %v7184 = vpack.c.b16 %v4680, %v4672
        %v7185 = vpack.c.b16 %v4681, %v4673
        %v7186 = vpack.c.b16 %v4682, %v4674
        %v7187 = vpack.c.b16 %v4683, %v4675
        %v7188 = vpack.c.b16 %v4684, %v4676
        %v7189 = vpack.c.b16 %v4685, %v4677
        %v7190 = vpack.c.b16 %v4686, %v4678
        %v7191 = vpack.c.b16 %v4687, %v4679
        %v7192 = vpack.c.b16 %v4696, %v4688
        %v7193 = vpack.c.b16 %v4697, %v4689
        %v7194 = vpack.c.b16 %v4698, %v4690
        %v7195 = vpack.c.b16 %v4699, %v4691
        %v7196 = vpack.c.b16 %v4700, %v4692
        %v7197 = vpack.c.b16 %v4701, %v4693
        %v7198 = vpack.c.b16 %v4702, %v4694
        %v7199 = vpack.c.b16 %v4703, %v4695
        %v7200 = vpack.c.b16 %v4712, %v4704
        %v7201 = vpack.c.b16 %v4713, %v4705
        %v7202 = vpack.c.b16 %v4714, %v4706
        %v7203 = vpack.c.b16 %v4715, %v4707
        %v7204 = vpack.c.b16 %v4716, %v4708
        %v7205 = vpack.c.b16 %v4717, %v4709
        %v7206 = vpack.c.b16 %v4718, %v4710
        %v7207 = vpack.c.b16 %v4719, %v4711
        %v7208 = vpack.c.b16 %v4728, %v4720
        %v7209 = vpack.c.b16 %v4729, %v4721
        %v7210 = vpack.c.b16 %v4730, %v4722
        %v7211 = vpack.c.b16 %v4731, %v4723
        %v7212 = vpack.c.b16 %v4732, %v4724
        %v7213 = vpack.c.b16 %v4733, %v4725
        %v7214 = vpack.c.b16 %v4734, %v4726
        %v7215 = vpack.c.b16 %v4735, %v4727
        %v7216 = vpack.c.b16 %v4744, %v4736
        %v7217 = vpack.c.b16 %v4745, %v4737
        %v7218 = vpack.c.b16 %v4746, %v4738
        %v7219 = vpack.c.b16 %v4747, %v4739
        %v7220 = vpack.c.b16 %v4748, %v4740
        %v7221 = vpack.c.b16 %v4749, %v4741
        %v7222 = vpack.c.b16 %v4750, %v4742
        %v7223 = vpack.c.b16 %v4751, %v4743
        %v7224 = vpack.c.b16 %v4760, %v4752
        %v7225 = vpack.c.b16 %v4761, %v4753
        %v7226 = vpack.c.b16 %v4762, %v4754
        %v7227 = vpack.c.b16 %v4763, %v4755
        %v7228 = vpack.c.b16 %v4764, %v4756
        %v7229 = vpack.c.b16 %v4765, %v4757
        %v7230 = vpack.c.b16 %v4766, %v4758
        %v7231 = vpack.c.b16 %v4767, %v4759
        %v7232 = vpack.c.b16 %v4776, %v4768
        %v7233 = vpack.c.b16 %v4777, %v4769
        %v7234 = vpack.c.b16 %v4778, %v4770
        %v7235 = vpack.c.b16 %v4779, %v4771
        %v7236 = vpack.c.b16 %v4780, %v4772
        %v7237 = vpack.c.b16 %v4781, %v4773
        %v7238 = vpack.c.b16 %v4782, %v4774
        %v7239 = vpack.c.b16 %v4783, %v4775
        %v7240 = vpack.c.b16 %v4792, %v4784
        %v7241 = vpack.c.b16 %v4793, %v4785
        %v7242 = vpack.c.b16 %v4794, %v4786
        %v7243 = vpack.c.b16 %v4795, %v4787
        %v7244 = vpack.c.b16 %v4796, %v4788
        %v7245 = vpack.c.b16 %v4797, %v4789
        %v7246 = vpack.c.b16 %v4798, %v4790
        %v7247 = vpack.c.b16 %v4799, %v4791
        %v7248 = vpack.c.b16 %v4808, %v4800
        %v7249 = vpack.c.b16 %v4809, %v4801
        %v7250 = vpack.c.b16 %v4810, %v4802
        %v7251 = vpack.c.b16 %v4811, %v4803
        %v7252 = vpack.c.b16 %v4812, %v4804
        %v7253 = vpack.c.b16 %v4813, %v4805
        %v7254 = vpack.c.b16 %v4814, %v4806
        %v7255 = vpack.c.b16 %v4815, %v4807
        %v7256 = vpack.c.b16 %v4824, %v4816
        %v7257 = vpack.c.b16 %v4825, %v4817
        %v7258 = vpack.c.b16 %v4826, %v4818
        %v7259 = vpack.c.b16 %v4827, %v4819
        %v7260 = vpack.c.b16 %v4828, %v4820
        %v7261 = vpack.c.b16 %v4829, %v4821
        %v7262 = vpack.c.b16 %v4830, %v4822
        %v7263 = vpack.c.b16 %v4831, %v4823
        %v7264 = vpack.c.b16 %v4840, %v4832
        %v7265 = vpack.c.b16 %v4841, %v4833
        %v7266 = vpack.c.b16 %v4842, %v4834
        %v7267 = vpack.c.b16 %v4843, %v4835
        %v7268 = vpack.c.b16 %v4844, %v4836
        %v7269 = vpack.c.b16 %v4845, %v4837
        %v7270 = vpack.c.b16 %v4846, %v4838
        %v7271 = vpack.c.b16 %v4847, %v4839
        %v7272 = vpack.c.b16 %v4856, %v4848
        %v7273 = vpack.c.b16 %v4857, %v4849
        %v7274 = vpack.c.b16 %v4858, %v4850
        %v7275 = vpack.c.b16 %v4859, %v4851
        %v7276 = vpack.c.b16 %v4860, %v4852
        %v7277 = vpack.c.b16 %v4861, %v4853
        %v7278 = vpack.c.b16 %v4862, %v4854
        %v7279 = vpack.c.b16 %v4863, %v4855
        %v7280 = vpack.c.b16 %v4872, %v4864
        %v7281 = vpack.c.b16 %v4873, %v4865
        %v7282 = vpack.c.b16 %v4874, %v4866
        %v7283 = vpack.c.b16 %v4875, %v4867
        %v7284 = vpack.c.b16 %v4876, %v4868
        %v7285 = vpack.c.b16 %v4877, %v4869
        %v7286 = vpack.c.b16 %v4878, %v4870
        %v7287 = vpack.c.b16 %v4879, %v4871
        %v7288 = vpack.c.b16 %v4888, %v4880
        %v7289 = vpack.c.b16 %v4889, %v4881
        %v7290 = vpack.c.b16 %v4890, %v4882
        %v7291 = vpack.c.b16 %v4891, %v4883
        %v7292 = vpack.c.b16 %v4892, %v4884
        %v7293 = vpack.c.b16 %v4893, %v4885
        %v7294 = vpack.c.b16 %v4894, %v4886
        %v7295 = vpack.c.b16 %v4895, %v4887
        %v7296 = vpack.c.b16 %v4904, %v4896
        %v7297 = vpack.c.b16 %v4905, %v4897
        %v7298 = vpack.c.b16 %v4906, %v4898
        %v7299 = vpack.c.b16 %v4907, %v4899
        %v7300 = vpack.c.b16 %v4908, %v4900
        %v7301 = vpack.c.b16 %v4909, %v4901
        %v7302 = vpack.c.b16 %v4910, %v4902
        %v7303 = vpack.c.b16 %v4911, %v4903
        %v7304 = vpack.c.b16 %v4920, %v4912
        %v7305 = vpack.c.b16 %v4921, %v4913
        %v7306 = vpack.c.b16 %v4922, %v4914
        %v7307 = vpack.c.b16 %v4923, %v4915
        %v7308 = vpack.c.b16 %v4924, %v4916
        %v7309 = vpack.c.b16 %v4925, %v4917
        %v7310 = vpack.c.b16 %v4926, %v4918
        %v7311 = vpack.c.b16 %v4927, %v4919
        %v7312 = vpack.c.b16 %v4936, %v4928
        %v7313 = vpack.c.b16 %v4937, %v4929
        %v7314 = vpack.c.b16 %v4938, %v4930
        %v7315 = vpack.c.b16 %v4939, %v4931
        %v7316 = vpack.c.b16 %v4940, %v4932
        %v7317 = vpack.c.b16 %v4941, %v4933
        %v7318 = vpack.c.b16 %v4942, %v4934
        %v7319 = vpack.c.b16 %v4943, %v4935
        %v7320 = vpack.c.b16 %v4952, %v4944
        %v7321 = vpack.c.b16 %v4953, %v4945
        %v7322 = vpack.c.b16 %v4954, %v4946
        %v7323 = vpack.c.b16 %v4955, %v4947
        %v7324 = vpack.c.b16 %v4956, %v4948
        %v7325 = vpack.c.b16 %v4957, %v4949
        %v7326 = vpack.c.b16 %v4958, %v4950
        %v7327 = vpack.c.b16 %v4959, %v4951
        %v7328 = vpack.c.b16 %v4968, %v4960
        %v7329 = vpack.c.b16 %v4969, %v4961
        %v7330 = vpack.c.b16 %v4970, %v4962
        %v7331 = vpack.c.b16 %v4971, %v4963
        %v7332 = vpack.c.b16 %v4972, %v4964
        %v7333 = vpack.c.b16 %v4973, %v4965
        %v7334 = vpack.c.b16 %v4974, %v4966
        %v7335 = vpack.c.b16 %v4975, %v4967
        %v7336 = vpack.c.b16 %v4984, %v4976
        %v7337 = vpack.c.b16 %v4985, %v4977
        %v7338 = vpack.c.b16 %v4986, %v4978
        %v7339 = vpack.c.b16 %v4987, %v4979
        %v7340 = vpack.c.b16 %v4988, %v4980
        %v7341 = vpack.c.b16 %v4989, %v4981
        %v7342 = vpack.c.b16 %v4990, %v4982
        %v7343 = vpack.c.b16 %v4991, %v4983
        %v7344 = vpack.c.b16 %v5000, %v4992
        %v7345 = vpack.c.b16 %v5001, %v4993
        %v7346 = vpack.c.b16 %v5002, %v4994
        %v7347 = vpack.c.b16 %v5003, %v4995
        %v7348 = vpack.c.b16 %v5004, %v4996
        %v7349 = vpack.c.b16 %v5005, %v4997
        %v7350 = vpack.c.b16 %v5006, %v4998
        %v7351 = vpack.c.b16 %v5007, %v4999
        %v7352 = vpack.c.b16 %v5016, %v5008
        %v7353 = vpack.c.b16 %v5017, %v5009
        %v7354 = vpack.c.b16 %v5018, %v5010
        %v7355 = vpack.c.b16 %v5019, %v5011
        %v7356 = vpack.c.b16 %v5020, %v5012
        %v7357 = vpack.c.b16 %v5021, %v5013
        %v7358 = vpack.c.b16 %v5022, %v5014
        %v7359 = vpack.c.b16 %v5023, %v5015
        %v7360 = vpack.c.b16 %v5032, %v5024
        %v7361 = vpack.c.b16 %v5033, %v5025
        %v7362 = vpack.c.b16 %v5034, %v5026
        %v7363 = vpack.c.b16 %v5035, %v5027
        %v7364 = vpack.c.b16 %v5036, %v5028
        %v7365 = vpack.c.b16 %v5037, %v5029
        %v7366 = vpack.c.b16 %v5038, %v5030
        %v7367 = vpack.c.b16 %v5039, %v5031
        %v7368 = vpack.c.b16 %v5048, %v5040
        %v7369 = vpack.c.b16 %v5049, %v5041
        %v7370 = vpack.c.b16 %v5050, %v5042
        %v7371 = vpack.c.b16 %v5051, %v5043
        %v7372 = vpack.c.b16 %v5052, %v5044
        %v7373 = vpack.c.b16 %v5053, %v5045
        %v7374 = vpack.c.b16 %v5054, %v5046
        %v7375 = vpack.c.b16 %v5055, %v5047
        %v7376 = vpack.c.b16 %v5064, %v5056
        %v7377 = vpack.c.b16 %v5065, %v5057
        %v7378 = vpack.c.b16 %v5066, %v5058
        %v7379 = vpack.c.b16 %v5067, %v5059
        %v7380 = vpack.c.b16 %v5068, %v5060
        %v7381 = vpack.c.b16 %v5069, %v5061
        %v7382 = vpack.c.b16 %v5070, %v5062
        %v7383 = vpack.c.b16 %v5071, %v5063
        %v7384 = vpack.c.b16 %v5080, %v5072
        %v7385 = vpack.c.b16 %v5081, %v5073
        %v7386 = vpack.c.b16 %v5082, %v5074
        %v7387 = vpack.c.b16 %v5083, %v5075
        %v7388 = vpack.c.b16 %v5084, %v5076
        %v7389 = vpack.c.b16 %v5085, %v5077
        %v7390 = vpack.c.b16 %v5086, %v5078
        %v7391 = vpack.c.b16 %v5087, %v5079
        %v7392 = vpack.c.b16 %v5096, %v5088
        %v7393 = vpack.c.b16 %v5097, %v5089
        %v7394 = vpack.c.b16 %v5098, %v5090
        %v7395 = vpack.c.b16 %v5099, %v5091
        %v7396 = vpack.c.b16 %v5100, %v5092
        %v7397 = vpack.c.b16 %v5101, %v5093
        %v7398 = vpack.c.b16 %v5102, %v5094
        %v7399 = vpack.c.b16 %v5103, %v5095
        %v7400 = vpack.c.b16 %v5112, %v5104
        %v7401 = vpack.c.b16 %v5113, %v5105
        %v7402 = vpack.c.b16 %v5114, %v5106
        %v7403 = vpack.c.b16 %v5115, %v5107
        %v7404 = vpack.c.b16 %v5116, %v5108
        %v7405 = vpack.c.b16 %v5117, %v5109
        %v7406 = vpack.c.b16 %v5118, %v5110
        %v7407 = vpack.c.b16 %v5119, %v5111
        %v7408 = vpack.c.b16 %v5128, %v5120
        %v7409 = vpack.c.b16 %v5129, %v5121
        %v7410 = vpack.c.b16 %v5130, %v5122
        %v7411 = vpack.c.b16 %v5131, %v5123
        %v7412 = vpack.c.b16 %v5132, %v5124
        %v7413 = vpack.c.b16 %v5133, %v5125
        %v7414 = vpack.c.b16 %v5134, %v5126
        %v7415 = vpack.c.b16 %v5135, %v5127
        %v7416 = vpack.c.b16 %v5144, %v5136
        %v7417 = vpack.c.b16 %v5145, %v5137
        %v7418 = vpack.c.b16 %v5146, %v5138
        %v7419 = vpack.c.b16 %v5147, %v5139
        %v7420 = vpack.c.b16 %v5148, %v5140
        %v7421 = vpack.c.b16 %v5149, %v5141
        %v7422 = vpack.c.b16 %v5150, %v5142
        %v7423 = vpack.c.b16 %v5151, %v5143
        %v7424 = vpack.c.b16 %v5160, %v5152
        %v7425 = vpack.c.b16 %v5161, %v5153
        %v7426 = vpack.c.b16 %v5162, %v5154
        %v7427 = vpack.c.b16 %v5163, %v5155
        %v7428 = vpack.c.b16 %v5164, %v5156
        %v7429 = vpack.c.b16 %v5165, %v5157
        %v7430 = vpack.c.b16 %v5166, %v5158
        %v7431 = vpack.c.b16 %v5167, %v5159
        %v7432 = vpack.c.b16 %v5176, %v5168
        %v7433 = vpack.c.b16 %v5177, %v5169
        %v7434 = vpack.c.b16 %v5178, %v5170
        %v7435 = vpack.c.b16 %v5179, %v5171
        %v7436 = vpack.c.b16 %v5180, %v5172
        %v7437 = vpack.c.b16 %v5181, %v5173
        %v7438 = vpack.c.b16 %v5182, %v5174
        %v7439 = vpack.c.b16 %v5183, %v5175
        %v7440 = vpack.c.b16 %v5192, %v5184
        %v7441 = vpack.c.b16 %v5193, %v5185
        %v7442 = vpack.c.b16 %v5194, %v5186
        %v7443 = vpack.c.b16 %v5195, %v5187
        %v7444 = vpack.c.b16 %v5196, %v5188
        %v7445 = vpack.c.b16 %v5197, %v5189
        %v7446 = vpack.c.b16 %v5198, %v5190
        %v7447 = vpack.c.b16 %v5199, %v5191
        %v7448 = vpack.c.b16 %v5208, %v5200
        %v7449 = vpack.c.b16 %v5209, %v5201
        %v7450 = vpack.c.b16 %v5210, %v5202
        %v7451 = vpack.c.b16 %v5211, %v5203
        %v7452 = vpack.c.b16 %v5212, %v5204
        %v7453 = vpack.c.b16 %v5213, %v5205
        %v7454 = vpack.c.b16 %v5214, %v5206
        %v7455 = vpack.c.b16 %v5215, %v5207
        %v7456 = vpack.c.b16 %v5224, %v5216
        %v7457 = vpack.c.b16 %v5225, %v5217
        %v7458 = vpack.c.b16 %v5226, %v5218
        %v7459 = vpack.c.b16 %v5227, %v5219
        %v7460 = vpack.c.b16 %v5228, %v5220
        %v7461 = vpack.c.b16 %v5229, %v5221
        %v7462 = vpack.c.b16 %v5230, %v5222
        %v7463 = vpack.c.b16 %v5231, %v5223
        %v7464 = vpack.c.b16 %v5240, %v5232
        %v7465 = vpack.c.b16 %v5241, %v5233
        %v7466 = vpack.c.b16 %v5242, %v5234
        %v7467 = vpack.c.b16 %v5243, %v5235
        %v7468 = vpack.c.b16 %v5244, %v5236
        %v7469 = vpack.c.b16 %v5245, %v5237
        %v7470 = vpack.c.b16 %v5246, %v5238
        %v7471 = vpack.c.b16 %v5247, %v5239
        %v7472 = vpack.c.b16 %v5256, %v5248
        %v7473 = vpack.c.b16 %v5257, %v5249
        %v7474 = vpack.c.b16 %v5258, %v5250
        %v7475 = vpack.c.b16 %v5259, %v5251
        %v7476 = vpack.c.b16 %v5260, %v5252
        %v7477 = vpack.c.b16 %v5261, %v5253
        %v7478 = vpack.c.b16 %v5262, %v5254
        %v7479 = vpack.c.b16 %v5263, %v5255
        %v7480 = vpack.c.b16 %v5272, %v5264
        %v7481 = vpack.c.b16 %v5273, %v5265
        %v7482 = vpack.c.b16 %v5274, %v5266
        %v7483 = vpack.c.b16 %v5275, %v5267
        %v7484 = vpack.c.b16 %v5276, %v5268
        %v7485 = vpack.c.b16 %v5277, %v5269
        %v7486 = vpack.c.b16 %v5278, %v5270
        %v7487 = vpack.c.b16 %v5279, %v5271
        %v7488 = vpack.c.b16 %v5288, %v5280
        %v7489 = vpack.c.b16 %v5289, %v5281
        %v7490 = vpack.c.b16 %v5290, %v5282
        %v7491 = vpack.c.b16 %v5291, %v5283
        %v7492 = vpack.c.b16 %v5292, %v5284
        %v7493 = vpack.c.b16 %v5293, %v5285
        %v7494 = vpack.c.b16 %v5294, %v5286
        %v7495 = vpack.c.b16 %v5295, %v5287
        %v7496 = vpack.c.b16 %v5304, %v5296
        %v7497 = vpack.c.b16 %v5305, %v5297
        %v7498 = vpack.c.b16 %v5306, %v5298
        %v7499 = vpack.c.b16 %v5307, %v5299
        %v7500 = vpack.c.b16 %v5308, %v5300
        %v7501 = vpack.c.b16 %v5309, %v5301
        %v7502 = vpack.c.b16 %v5310, %v5302
        %v7503 = vpack.c.b16 %v5311, %v5303
        %v7504 = vpack.c.b16 %v5320, %v5312
        %v7505 = vpack.c.b16 %v5321, %v5313
        %v7506 = vpack.c.b16 %v5322, %v5314
        %v7507 = vpack.c.b16 %v5323, %v5315
        %v7508 = vpack.c.b16 %v5324, %v5316
        %v7509 = vpack.c.b16 %v5325, %v5317
        %v7510 = vpack.c.b16 %v5326, %v5318
        %v7511 = vpack.c.b16 %v5327, %v5319
        %v7512 = vpack.c.b16 %v5336, %v5328
        %v7513 = vpack.c.b16 %v5337, %v5329
        %v7514 = vpack.c.b16 %v5338, %v5330
        %v7515 = vpack.c.b16 %v5339, %v5331
        %v7516 = vpack.c.b16 %v5340, %v5332
        %v7517 = vpack.c.b16 %v5341, %v5333
        %v7518 = vpack.c.b16 %v5342, %v5334
        %v7519 = vpack.c.b16 %v5343, %v5335
        %v7520 = vpack.c.b16 %v5352, %v5344
        %v7521 = vpack.c.b16 %v5353, %v5345
        %v7522 = vpack.c.b16 %v5354, %v5346
        %v7523 = vpack.c.b16 %v5355, %v5347
        %v7524 = vpack.c.b16 %v5356, %v5348
        %v7525 = vpack.c.b16 %v5357, %v5349
        %v7526 = vpack.c.b16 %v5358, %v5350
        %v7527 = vpack.c.b16 %v5359, %v5351
        %v7528 = vpack.c.b16 %v5368, %v5360
        %v7529 = vpack.c.b16 %v5369, %v5361
        %v7530 = vpack.c.b16 %v5370, %v5362
        %v7531 = vpack.c.b16 %v5371, %v5363
        %v7532 = vpack.c.b16 %v5372, %v5364
        %v7533 = vpack.c.b16 %v5373, %v5365
        %v7534 = vpack.c.b16 %v5374, %v5366
        %v7535 = vpack.c.b16 %v5375, %v5367
        %v7536 = vpack.c.b16 %v5384, %v5376
        %v7537 = vpack.c.b16 %v5385, %v5377
        %v7538 = vpack.c.b16 %v5386, %v5378
        %v7539 = vpack.c.b16 %v5387, %v5379
        %v7540 = vpack.c.b16 %v5388, %v5380
        %v7541 = vpack.c.b16 %v5389, %v5381
        %v7542 = vpack.c.b16 %v5390, %v5382
        %v7543 = vpack.c.b16 %v5391, %v5383
        %v7544 = vpack.c.b16 %v5400, %v5392
        %v7545 = vpack.c.b16 %v5401, %v5393
        %v7546 = vpack.c.b16 %v5402, %v5394
        %v7547 = vpack.c.b16 %v5403, %v5395
        %v7548 = vpack.c.b16 %v5404, %v5396
        %v7549 = vpack.c.b16 %v5405, %v5397
        %v7550 = vpack.c.b16 %v5406, %v5398
        %v7551 = vpack.c.b16 %v5407, %v5399
        %v7552 = vpack.c.b16 %v5416, %v5408
        %v7553 = vpack.c.b16 %v5417, %v5409
        %v7554 = vpack.c.b16 %v5418, %v5410
        %v7555 = vpack.c.b16 %v5419, %v5411
        %v7556 = vpack.c.b16 %v5420, %v5412
        %v7557 = vpack.c.b16 %v5421, %v5413
        %v7558 = vpack.c.b16 %v5422, %v5414
        %v7559 = vpack.c.b16 %v5423, %v5415
        %v7560 = vpack.c.b16 %v5432, %v5424
        %v7561 = vpack.c.b16 %v5433, %v5425
        %v7562 = vpack.c.b16 %v5434, %v5426
        %v7563 = vpack.c.b16 %v5435, %v5427
        %v7564 = vpack.c.b16 %v5436, %v5428
        %v7565 = vpack.c.b16 %v5437, %v5429
        %v7566 = vpack.c.b16 %v5438, %v5430
        %v7567 = vpack.c.b16 %v5439, %v5431
        %v7568 = vpack.c.b16 %v5448, %v5440
        %v7569 = vpack.c.b16 %v5449, %v5441
        %v7570 = vpack.c.b16 %v5450, %v5442
        %v7571 = vpack.c.b16 %v5451, %v5443
        %v7572 = vpack.c.b16 %v5452, %v5444
        %v7573 = vpack.c.b16 %v5453, %v5445
        %v7574 = vpack.c.b16 %v5454, %v5446
        %v7575 = vpack.c.b16 %v5455, %v5447
        %v7576 = vpack.c.b16 %v5464, %v5456
        %v7577 = vpack.c.b16 %v5465, %v5457
        %v7578 = vpack.c.b16 %v5466, %v5458
        %v7579 = vpack.c.b16 %v5467, %v5459
        %v7580 = vpack.c.b16 %v5468, %v5460
        %v7581 = vpack.c.b16 %v5469, %v5461
        %v7582 = vpack.c.b16 %v5470, %v5462
        %v7583 = vpack.c.b16 %v5471, %v5463
        %v7584 = vpack.c.b16 %v5480, %v5472
        %v7585 = vpack.c.b16 %v5481, %v5473
        %v7586 = vpack.c.b16 %v5482, %v5474
        %v7587 = vpack.c.b16 %v5483, %v5475
        %v7588 = vpack.c.b16 %v5484, %v5476
        %v7589 = vpack.c.b16 %v5485, %v5477
        %v7590 = vpack.c.b16 %v5486, %v5478
        %v7591 = vpack.c.b16 %v5487, %v5479
        %v7592 = vpack.c.b16 %v5496, %v5488
        %v7593 = vpack.c.b16 %v5497, %v5489
        %v7594 = vpack.c.b16 %v5498, %v5490
        %v7595 = vpack.c.b16 %v5499, %v5491
        %v7596 = vpack.c.b16 %v5500, %v5492
        %v7597 = vpack.c.b16 %v5501, %v5493
        %v7598 = vpack.c.b16 %v5502, %v5494
        %v7599 = vpack.c.b16 %v5503, %v5495
        %v7600 = vpack.c.b16 %v5512, %v5504
        %v7601 = vpack.c.b16 %v5513, %v5505
        %v7602 = vpack.c.b16 %v5514, %v5506
        %v7603 = vpack.c.b16 %v5515, %v5507
        %v7604 = vpack.c.b16 %v5516, %v5508
        %v7605 = vpack.c.b16 %v5517, %v5509
        %v7606 = vpack.c.b16 %v5518, %v5510
        %v7607 = vpack.c.b16 %v5519, %v5511
        %v7608 = vpack.c.b16 %v5528, %v5520
        %v7609 = vpack.c.b16 %v5529, %v5521
        %v7610 = vpack.c.b16 %v5530, %v5522
        %v7611 = vpack.c.b16 %v5531, %v5523
        %v7612 = vpack.c.b16 %v5532, %v5524
        %v7613 = vpack.c.b16 %v5533, %v5525
        %v7614 = vpack.c.b16 %v5534, %v5526
        %v7615 = vpack.c.b16 %v5535, %v5527
        %v7616 = vpack.c.b16 %v5544, %v5536
        %v7617 = vpack.c.b16 %v5545, %v5537
        %v7618 = vpack.c.b16 %v5546, %v5538
        %v7619 = vpack.c.b16 %v5547, %v5539
        %v7620 = vpack.c.b16 %v5548, %v5540
        %v7621 = vpack.c.b16 %v5549, %v5541
        %v7622 = vpack.c.b16 %v5550, %v5542
        %v7623 = vpack.c.b16 %v5551, %v5543
        %v7624 = vpack.c.b16 %v5560, %v5552
        %v7625 = vpack.c.b16 %v5561, %v5553
        %v7626 = vpack.c.b16 %v5562, %v5554
        %v7627 = vpack.c.b16 %v5563, %v5555
        %v7628 = vpack.c.b16 %v5564, %v5556
        %v7629 = vpack.c.b16 %v5565, %v5557
        %v7630 = vpack.c.b16 %v5566, %v5558
        %v7631 = vpack.c.b16 %v5567, %v5559
        %v7632 = vpack.c.b16 %v5576, %v5568
        %v7633 = vpack.c.b16 %v5577, %v5569
        %v7634 = vpack.c.b16 %v5578, %v5570
        %v7635 = vpack.c.b16 %v5579, %v5571
        %v7636 = vpack.c.b16 %v5580, %v5572
        %v7637 = vpack.c.b16 %v5581, %v5573
        %v7638 = vpack.c.b16 %v5582, %v5574
        %v7639 = vpack.c.b16 %v5583, %v5575
        %v7640 = vpack.c.b16 %v5592, %v5584
        %v7641 = vpack.c.b16 %v5593, %v5585
        %v7642 = vpack.c.b16 %v5594, %v5586
        %v7643 = vpack.c.b16 %v5595, %v5587
        %v7644 = vpack.c.b16 %v5596, %v5588
        %v7645 = vpack.c.b16 %v5597, %v5589
        %v7646 = vpack.c.b16 %v5598, %v5590
        %v7647 = vpack.c.b16 %v5599, %v5591
        %v7648 = vpack.c.b16 %v5608, %v5600
        %v7649 = vpack.c.b16 %v5609, %v5601
        %v7650 = vpack.c.b16 %v5610, %v5602
        %v7651 = vpack.c.b16 %v5611, %v5603
        %v7652 = vpack.c.b16 %v5612, %v5604
        %v7653 = vpack.c.b16 %v5613, %v5605
        %v7654 = vpack.c.b16 %v5614, %v5606
        %v7655 = vpack.c.b16 %v5615, %v5607
        %v7656 = vpack.c.b16 %v5624, %v5616
        %v7657 = vpack.c.b16 %v5625, %v5617
        %v7658 = vpack.c.b16 %v5626, %v5618
        %v7659 = vpack.c.b16 %v5627, %v5619
        %v7660 = vpack.c.b16 %v5628, %v5620
        %v7661 = vpack.c.b16 %v5629, %v5621
        %v7662 = vpack.c.b16 %v5630, %v5622
        %v7663 = vpack.c.b16 %v5631, %v5623
        %v7664 = vpack.c.b16 %v5640, %v5632
        %v7665 = vpack.c.b16 %v5641, %v5633
        %v7666 = vpack.c.b16 %v5642, %v5634
        %v7667 = vpack.c.b16 %v5643, %v5635
        %v7668 = vpack.c.b16 %v5644, %v5636
        %v7669 = vpack.c.b16 %v5645, %v5637
        %v7670 = vpack.c.b16 %v5646, %v5638
        %v7671 = vpack.c.b16 %v5647, %v5639
        %v7672 = vpack.c.b16 %v5656, %v5648
        %v7673 = vpack.c.b16 %v5657, %v5649
        %v7674 = vpack.c.b16 %v5658, %v5650
        %v7675 = vpack.c.b16 %v5659, %v5651
        %v7676 = vpack.c.b16 %v5660, %v5652
        %v7677 = vpack.c.b16 %v5661, %v5653
        %v7678 = vpack.c.b16 %v5662, %v5654
        %v7679 = vpack.c.b16 %v5663, %v5655
        %v7680 = vpack.c.b16 %v5672, %v5664
        %v7681 = vpack.c.b16 %v5673, %v5665
        %v7682 = vpack.c.b16 %v5674, %v5666
        %v7683 = vpack.c.b16 %v5675, %v5667
        %v7684 = vpack.c.b16 %v5676, %v5668
        %v7685 = vpack.c.b16 %v5677, %v5669
        %v7686 = vpack.c.b16 %v5678, %v5670
        %v7687 = vpack.c.b16 %v5679, %v5671
        %v7688 = vpack.c.b16 %v5688, %v5680
        %v7689 = vpack.c.b16 %v5689, %v5681
        %v7690 = vpack.c.b16 %v5690, %v5682
        %v7691 = vpack.c.b16 %v5691, %v5683
        %v7692 = vpack.c.b16 %v5692, %v5684
        %v7693 = vpack.c.b16 %v5693, %v5685
        %v7694 = vpack.c.b16 %v5694, %v5686
        %v7695 = vpack.c.b16 %v5695, %v5687
        %v7696 = vpack.c.b16 %v5704, %v5696
        %v7697 = vpack.c.b16 %v5705, %v5697
        %v7698 = vpack.c.b16 %v5706, %v5698
        %v7699 = vpack.c.b16 %v5707, %v5699
        %v7700 = vpack.c.b16 %v5708, %v5700
        %v7701 = vpack.c.b16 %v5709, %v5701
        %v7702 = vpack.c.b16 %v5710, %v5702
        %v7703 = vpack.c.b16 %v5711, %v5703
        %v7704 = vpack.c.b16 %v5720, %v5712
        %v7705 = vpack.c.b16 %v5721, %v5713
        %v7706 = vpack.c.b16 %v5722, %v5714
        %v7707 = vpack.c.b16 %v5723, %v5715
        %v7708 = vpack.c.b16 %v5724, %v5716
        %v7709 = vpack.c.b16 %v5725, %v5717
        %v7710 = vpack.c.b16 %v5726, %v5718
        %v7711 = vpack.c.b16 %v5727, %v5719
        %v7712 = vpack.c.b16 %v5736, %v5728
        %v7713 = vpack.c.b16 %v5737, %v5729
        %v7714 = vpack.c.b16 %v5738, %v5730
        %v7715 = vpack.c.b16 %v5739, %v5731
        %v7716 = vpack.c.b16 %v5740, %v5732
        %v7717 = vpack.c.b16 %v5741, %v5733
        %v7718 = vpack.c.b16 %v5742, %v5734
        %v7719 = vpack.c.b16 %v5743, %v5735
        %v7720 = vpack.c.b16 %v5752, %v5744
        %v7721 = vpack.c.b16 %v5753, %v5745
        %v7722 = vpack.c.b16 %v5754, %v5746
        %v7723 = vpack.c.b16 %v5755, %v5747
        %v7724 = vpack.c.b16 %v5756, %v5748
        %v7725 = vpack.c.b16 %v5757, %v5749
        %v7726 = vpack.c.b16 %v5758, %v5750
        %v7727 = vpack.c.b16 %v5759, %v5751
        %v7728 = vpack.c.b16 %v5768, %v5760
        %v7729 = vpack.c.b16 %v5769, %v5761
        %v7730 = vpack.c.b16 %v5770, %v5762
        %v7731 = vpack.c.b16 %v5771, %v5763
        %v7732 = vpack.c.b16 %v5772, %v5764
        %v7733 = vpack.c.b16 %v5773, %v5765
        %v7734 = vpack.c.b16 %v5774, %v5766
        %v7735 = vpack.c.b16 %v5775, %v5767
        %v7736 = vpack.c.b16 %v5784, %v5776
        %v7737 = vpack.c.b16 %v5785, %v5777
        %v7738 = vpack.c.b16 %v5786, %v5778
        %v7739 = vpack.c.b16 %v5787, %v5779
        %v7740 = vpack.c.b16 %v5788, %v5780
        %v7741 = vpack.c.b16 %v5789, %v5781
        %v7742 = vpack.c.b16 %v5790, %v5782
        %v7743 = vpack.c.b16 %v5791, %v5783
        %v7744 = vpack.c.b16 %v5800, %v5792
        %v7745 = vpack.c.b16 %v5801, %v5793
        %v7746 = vpack.c.b16 %v5802, %v5794
        %v7747 = vpack.c.b16 %v5803, %v5795
        %v7748 = vpack.c.b16 %v5804, %v5796
        %v7749 = vpack.c.b16 %v5805, %v5797
        %v7750 = vpack.c.b16 %v5806, %v5798
        %v7751 = vpack.c.b16 %v5807, %v5799
        %v7752 = vpack.c.b16 %v5816, %v5808
        %v7753 = vpack.c.b16 %v5817, %v5809
        %v7754 = vpack.c.b16 %v5818, %v5810
        %v7755 = vpack.c.b16 %v5819, %v5811
        %v7756 = vpack.c.b16 %v5820, %v5812
        %v7757 = vpack.c.b16 %v5821, %v5813
        %v7758 = vpack.c.b16 %v5822, %v5814
        %v7759 = vpack.c.b16 %v5823, %v5815
        %v7760 = vpack.c.b16 %v5832, %v5824
        %v7761 = vpack.c.b16 %v5833, %v5825
        %v7762 = vpack.c.b16 %v5834, %v5826
        %v7763 = vpack.c.b16 %v5835, %v5827
        %v7764 = vpack.c.b16 %v5836, %v5828
        %v7765 = vpack.c.b16 %v5837, %v5829
        %v7766 = vpack.c.b16 %v5838, %v5830
        %v7767 = vpack.c.b16 %v5839, %v5831
        %v7768 = vpack.c.b16 %v5848, %v5840
        %v7769 = vpack.c.b16 %v5849, %v5841
        %v7770 = vpack.c.b16 %v5850, %v5842
        %v7771 = vpack.c.b16 %v5851, %v5843
        %v7772 = vpack.c.b16 %v5852, %v5844
        %v7773 = vpack.c.b16 %v5853, %v5845
        %v7774 = vpack.c.b16 %v5854, %v5846
        %v7775 = vpack.c.b16 %v5855, %v5847
        %v7776 = vpack.c.b16 %v5864, %v5856
        %v7777 = vpack.c.b16 %v5865, %v5857
        %v7778 = vpack.c.b16 %v5866, %v5858
        %v7779 = vpack.c.b16 %v5867, %v5859
        %v7780 = vpack.c.b16 %v5868, %v5860
        %v7781 = vpack.c.b16 %v5869, %v5861
        %v7782 = vpack.c.b16 %v5870, %v5862
        %v7783 = vpack.c.b16 %v5871, %v5863
        %v7784 = vpack.c.b16 %v5880, %v5872
        %v7785 = vpack.c.b16 %v5881, %v5873
        %v7786 = vpack.c.b16 %v5882, %v5874
        %v7787 = vpack.c.b16 %v5883, %v5875
        %v7788 = vpack.c.b16 %v5884, %v5876
        %v7789 = vpack.c.b16 %v5885, %v5877
        %v7790 = vpack.c.b16 %v5886, %v5878
        %v7791 = vpack.c.b16 %v5887, %v5879
        %v7792 = vpack.c.b16 %v5896, %v5888
        %v7793 = vpack.c.b16 %v5897, %v5889
        %v7794 = vpack.c.b16 %v5898, %v5890
        %v7795 = vpack.c.b16 %v5899, %v5891
        %v7796 = vpack.c.b16 %v5900, %v5892
        %v7797 = vpack.c.b16 %v5901, %v5893
        %v7798 = vpack.c.b16 %v5902, %v5894
        %v7799 = vpack.c.b16 %v5903, %v5895
        %v7800 = vpack.c.b16 %v5912, %v5904
        %v7801 = vpack.c.b16 %v5913, %v5905
        %v7802 = vpack.c.b16 %v5914, %v5906
        %v7803 = vpack.c.b16 %v5915, %v5907
        %v7804 = vpack.c.b16 %v5916, %v5908
        %v7805 = vpack.c.b16 %v5917, %v5909
        %v7806 = vpack.c.b16 %v5918, %v5910
        %v7807 = vpack.c.b16 %v5919, %v5911
        %v7808 = vpack.c.b16 %v5928, %v5920
        %v7809 = vpack.c.b16 %v5929, %v5921
        %v7810 = vpack.c.b16 %v5930, %v5922
        %v7811 = vpack.c.b16 %v5931, %v5923
        %v7812 = vpack.c.b16 %v5932, %v5924
        %v7813 = vpack.c.b16 %v5933, %v5925
        %v7814 = vpack.c.b16 %v5934, %v5926
        %v7815 = vpack.c.b16 %v5935, %v5927
        %v7816 = vpack.c.b16 %v5944, %v5936
        %v7817 = vpack.c.b16 %v5945, %v5937
        %v7818 = vpack.c.b16 %v5946, %v5938
        %v7819 = vpack.c.b16 %v5947, %v5939
        %v7820 = vpack.c.b16 %v5948, %v5940
        %v7821 = vpack.c.b16 %v5949, %v5941
        %v7822 = vpack.c.b16 %v5950, %v5942
        %v7823 = vpack.c.b16 %v5951, %v5943
        %v7824 = vpack.c.b16 %v5960, %v5952
        %v7825 = vpack.c.b16 %v5961, %v5953
        %v7826 = vpack.c.b16 %v5962, %v5954
        %v7827 = vpack.c.b16 %v5963, %v5955
        %v7828 = vpack.c.b16 %v5964, %v5956
        %v7829 = vpack.c.b16 %v5965, %v5957
        %v7830 = vpack.c.b16 %v5966, %v5958
        %v7831 = vpack.c.b16 %v5967, %v5959
        %v7832 = vpack.c.b16 %v5976, %v5968
        %v7833 = vpack.c.b16 %v5977, %v5969
        %v7834 = vpack.c.b16 %v5978, %v5970
        %v7835 = vpack.c.b16 %v5979, %v5971
        %v7836 = vpack.c.b16 %v5980, %v5972
        %v7837 = vpack.c.b16 %v5981, %v5973
        %v7838 = vpack.c.b16 %v5982, %v5974
        %v7839 = vpack.c.b16 %v5983, %v5975
        %v7840 = vpack.c.b16 %v5992, %v5984
        %v7841 = vpack.c.b16 %v5993, %v5985
        %v7842 = vpack.c.b16 %v5994, %v5986
        %v7843 = vpack.c.b16 %v5995, %v5987
        %v7844 = vpack.c.b16 %v5996, %v5988
        %v7845 = vpack.c.b16 %v5997, %v5989
        %v7846 = vpack.c.b16 %v5998, %v5990
        %v7847 = vpack.c.b16 %v5999, %v5991
        %v7848 = vpack.c.b16 %v6008, %v6000
        %v7849 = vpack.c.b16 %v6009, %v6001
        %v7850 = vpack.c.b16 %v6010, %v6002
        %v7851 = vpack.c.b16 %v6011, %v6003
        %v7852 = vpack.c.b16 %v6012, %v6004
        %v7853 = vpack.c.b16 %v6013, %v6005
        %v7854 = vpack.c.b16 %v6014, %v6006
        %v7855 = vpack.c.b16 %v6015, %v6007
        %v7856 = vpack.c.b16 %v6024, %v6016
        %v7857 = vpack.c.b16 %v6025, %v6017
        %v7858 = vpack.c.b16 %v6026, %v6018
        %v7859 = vpack.c.b16 %v6027, %v6019
        %v7860 = vpack.c.b16 %v6028, %v6020
        %v7861 = vpack.c.b16 %v6029, %v6021
        %v7862 = vpack.c.b16 %v6030, %v6022
        %v7863 = vpack.c.b16 %v6031, %v6023
        %v7864 = vpack.c.b16 %v6040, %v6032
        %v7865 = vpack.c.b16 %v6041, %v6033
        %v7866 = vpack.c.b16 %v6042, %v6034
        %v7867 = vpack.c.b16 %v6043, %v6035
        %v7868 = vpack.c.b16 %v6044, %v6036
        %v7869 = vpack.c.b16 %v6045, %v6037
        %v7870 = vpack.c.b16 %v6046, %v6038
        %v7871 = vpack.c.b16 %v6047, %v6039
        %v7872 = vpack.c.b16 %v6056, %v6048
        %v7873 = vpack.c.b16 %v6057, %v6049
        %v7874 = vpack.c.b16 %v6058, %v6050
        %v7875 = vpack.c.b16 %v6059, %v6051
        %v7876 = vpack.c.b16 %v6060, %v6052
        %v7877 = vpack.c.b16 %v6061, %v6053
        %v7878 = vpack.c.b16 %v6062, %v6054
        %v7879 = vpack.c.b16 %v6063, %v6055
        %v7880 = vpack.c.b16 %v6072, %v6064
        %v7881 = vpack.c.b16 %v6073, %v6065
        %v7882 = vpack.c.b16 %v6074, %v6066
        %v7883 = vpack.c.b16 %v6075, %v6067
        %v7884 = vpack.c.b16 %v6076, %v6068
        %v7885 = vpack.c.b16 %v6077, %v6069
        %v7886 = vpack.c.b16 %v6078, %v6070
        %v7887 = vpack.c.b16 %v6079, %v6071
        %v7888 = vpack.c.b16 %v6088, %v6080
        %v7889 = vpack.c.b16 %v6089, %v6081
        %v7890 = vpack.c.b16 %v6090, %v6082
        %v7891 = vpack.c.b16 %v6091, %v6083
        %v7892 = vpack.c.b16 %v6092, %v6084
        %v7893 = vpack.c.b16 %v6093, %v6085
        %v7894 = vpack.c.b16 %v6094, %v6086
        %v7895 = vpack.c.b16 %v6095, %v6087
        %v7896 = vpack.c.b16 %v6104, %v6096
        %v7897 = vpack.c.b16 %v6105, %v6097
        %v7898 = vpack.c.b16 %v6106, %v6098
        %v7899 = vpack.c.b16 %v6107, %v6099
        %v7900 = vpack.c.b16 %v6108, %v6100
        %v7901 = vpack.c.b16 %v6109, %v6101
        %v7902 = vpack.c.b16 %v6110, %v6102
        %v7903 = vpack.c.b16 %v6111, %v6103
        %v7904 = vpack.c.b16 %v6120, %v6112
        %v7905 = vpack.c.b16 %v6121, %v6113
        %v7906 = vpack.c.b16 %v6122, %v6114
        %v7907 = vpack.c.b16 %v6123, %v6115
        %v7908 = vpack.c.b16 %v6124, %v6116
        %v7909 = vpack.c.b16 %v6125, %v6117
        %v7910 = vpack.c.b16 %v6126, %v6118
        %v7911 = vpack.c.b16 %v6127, %v6119
        %v7912 = vpack.c.b16 %v6136, %v6128
        %v7913 = vpack.c.b16 %v6137, %v6129
        %v7914 = vpack.c.b16 %v6138, %v6130
        %v7915 = vpack.c.b16 %v6139, %v6131
        %v7916 = vpack.c.b16 %v6140, %v6132
        %v7917 = vpack.c.b16 %v6141, %v6133
        %v7918 = vpack.c.b16 %v6142, %v6134
        %v7919 = vpack.c.b16 %v6143, %v6135
        %v7920 = vpack.c.b16 %v6152, %v6144
        %v7921 = vpack.c.b16 %v6153, %v6145
        %v7922 = vpack.c.b16 %v6154, %v6146
        %v7923 = vpack.c.b16 %v6155, %v6147
        %v7924 = vpack.c.b16 %v6156, %v6148
        %v7925 = vpack.c.b16 %v6157, %v6149
        %v7926 = vpack.c.b16 %v6158, %v6150
        %v7927 = vpack.c.b16 %v6159, %v6151
        %v7928 = vpack.c.b16 %v6168, %v6160
        %v7929 = vpack.c.b16 %v6169, %v6161
        %v7930 = vpack.c.b16 %v6170, %v6162
        %v7931 = vpack.c.b16 %v6171, %v6163
        %v7932 = vpack.c.b16 %v6172, %v6164
        %v7933 = vpack.c.b16 %v6173, %v6165
        %v7934 = vpack.c.b16 %v6174, %v6166
        %v7935 = vpack.c.b16 %v6175, %v6167
        %v7936 = vpack.c.b16 %v6184, %v6176
        %v7937 = vpack.c.b16 %v6185, %v6177
        %v7938 = vpack.c.b16 %v6186, %v6178
        %v7939 = vpack.c.b16 %v6187, %v6179
        %v7940 = vpack.c.b16 %v6188, %v6180
        %v7941 = vpack.c.b16 %v6189, %v6181
        %v7942 = vpack.c.b16 %v6190, %v6182
        %v7943 = vpack.c.b16 %v6191, %v6183
        %v7944 = vpack.c.b16 %v6200, %v6192
        %v7945 = vpack.c.b16 %v6201, %v6193
        %v7946 = vpack.c.b16 %v6202, %v6194
        %v7947 = vpack.c.b16 %v6203, %v6195
        %v7948 = vpack.c.b16 %v6204, %v6196
        %v7949 = vpack.c.b16 %v6205, %v6197
        %v7950 = vpack.c.b16 %v6206, %v6198
        %v7951 = vpack.c.b16 %v6207, %v6199
        %v7952 = vpack.c.b16 %v6216, %v6208
        %v7953 = vpack.c.b16 %v6217, %v6209
        %v7954 = vpack.c.b16 %v6218, %v6210
        %v7955 = vpack.c.b16 %v6219, %v6211
        %v7956 = vpack.c.b16 %v6220, %v6212
        %v7957 = vpack.c.b16 %v6221, %v6213
        %v7958 = vpack.c.b16 %v6222, %v6214
        %v7959 = vpack.c.b16 %v6223, %v6215
        %v7960 = vpack.c.b16 %v6232, %v6224
        %v7961 = vpack.c.b16 %v6233, %v6225
        %v7962 = vpack.c.b16 %v6234, %v6226
        %v7963 = vpack.c.b16 %v6235, %v6227
        %v7964 = vpack.c.b16 %v6236, %v6228
        %v7965 = vpack.c.b16 %v6237, %v6229
        %v7966 = vpack.c.b16 %v6238, %v6230
        %v7967 = vpack.c.b16 %v6239, %v6231
        %v7968 = vpack.c.b16 %v6248, %v6240
        %v7969 = vpack.c.b16 %v6249, %v6241
        %v7970 = vpack.c.b16 %v6250, %v6242
        %v7971 = vpack.c.b16 %v6251, %v6243
        %v7972 = vpack.c.b16 %v6252, %v6244
        %v7973 = vpack.c.b16 %v6253, %v6245
        %v7974 = vpack.c.b16 %v6254, %v6246
        %v7975 = vpack.c.b16 %v6255, %v6247
        %v7976 = vpack.c.b16 %v6264, %v6256
        %v7977 = vpack.c.b16 %v6265, %v6257
        %v7978 = vpack.c.b16 %v6266, %v6258
        %v7979 = vpack.c.b16 %v6267, %v6259
        %v7980 = vpack.c.b16 %v6268, %v6260
        %v7981 = vpack.c.b16 %v6269, %v6261
        %v7982 = vpack.c.b16 %v6270, %v6262
        %v7983 = vpack.c.b16 %v6271, %v6263
        %v7984 = vpack.c.b16 %v6280, %v6272
        %v7985 = vpack.c.b16 %v6281, %v6273
        %v7986 = vpack.c.b16 %v6282, %v6274
        %v7987 = vpack.c.b16 %v6283, %v6275
        %v7988 = vpack.c.b16 %v6284, %v6276
        %v7989 = vpack.c.b16 %v6285, %v6277
        %v7990 = vpack.c.b16 %v6286, %v6278
        %v7991 = vpack.c.b16 %v6287, %v6279
        %v7992 = vpack.c.b16 %v6296, %v6288
        %v7993 = vpack.c.b16 %v6297, %v6289
        %v7994 = vpack.c.b16 %v6298, %v6290
        %v7995 = vpack.c.b16 %v6299, %v6291
        %v7996 = vpack.c.b16 %v6300, %v6292
        %v7997 = vpack.c.b16 %v6301, %v6293
        %v7998 = vpack.c.b16 %v6302, %v6294
        %v7999 = vpack.c.b16 %v6303, %v6295
        %v8000 = vpack.c.b16 %v6312, %v6304
        %v8001 = vpack.c.b16 %v6313, %v6305
        %v8002 = vpack.c.b16 %v6314, %v6306
        %v8003 = vpack.c.b16 %v6315, %v6307
        %v8004 = vpack.c.b16 %v6316, %v6308
        %v8005 = vpack.c.b16 %v6317, %v6309
        %v8006 = vpack.c.b16 %v6318, %v6310
        %v8007 = vpack.c.b16 %v6319, %v6311
        %v8008 = vpack.c.b16 %v6328, %v6320
        %v8009 = vpack.c.b16 %v6329, %v6321
        %v8010 = vpack.c.b16 %v6330, %v6322
        %v8011 = vpack.c.b16 %v6331, %v6323
        %v8012 = vpack.c.b16 %v6332, %v6324
        %v8013 = vpack.c.b16 %v6333, %v6325
        %v8014 = vpack.c.b16 %v6334, %v6326
        %v8015 = vpack.c.b16 %v6335, %v6327
        %v8016 = vpack.c.b16 %v6344, %v6336
        %v8017 = vpack.c.b16 %v6345, %v6337
        %v8018 = vpack.c.b16 %v6346, %v6338
        %v8019 = vpack.c.b16 %v6347, %v6339
        %v8020 = vpack.c.b16 %v6348, %v6340
        %v8021 = vpack.c.b16 %v6349, %v6341
        %v8022 = vpack.c.b16 %v6350, %v6342
        %v8023 = vpack.c.b16 %v6351, %v6343
        %v8024 = vpack.c.b16 %v6360, %v6352
        %v8025 = vpack.c.b16 %v6361, %v6353
        %v8026 = vpack.c.b16 %v6362, %v6354
        %v8027 = vpack.c.b16 %v6363, %v6355
        %v8028 = vpack.c.b16 %v6364, %v6356
        %v8029 = vpack.c.b16 %v6365, %v6357
        %v8030 = vpack.c.b16 %v6366, %v6358
        %v8031 = vpack.c.b16 %v6367, %v6359
        %v8032 = vpack.c.b16 %v6376, %v6368
        %v8033 = vpack.c.b16 %v6377, %v6369
        %v8034 = vpack.c.b16 %v6378, %v6370
        %v8035 = vpack.c.b16 %v6379, %v6371
        %v8036 = vpack.c.b16 %v6380, %v6372
        %v8037 = vpack.c.b16 %v6381, %v6373
        %v8038 = vpack.c.b16 %v6382, %v6374
        %v8039 = vpack.c.b16 %v6383, %v6375
        %v8040 = vpack.c.b16 %v6392, %v6384
        %v8041 = vpack.c.b16 %v6393, %v6385
        %v8042 = vpack.c.b16 %v6394, %v6386
        %v8043 = vpack.c.b16 %v6395, %v6387
        %v8044 = vpack.c.b16 %v6396, %v6388
        %v8045 = vpack.c.b16 %v6397, %v6389
        %v8046 = vpack.c.b16 %v6398, %v6390
        %v8047 = vpack.c.b16 %v6399, %v6391
        %v8048 = vpack.c.b16 %v6408, %v6400
        %v8049 = vpack.c.b16 %v6409, %v6401
        %v8050 = vpack.c.b16 %v6410, %v6402
        %v8051 = vpack.c.b16 %v6411, %v6403
        %v8052 = vpack.c.b16 %v6412, %v6404
        %v8053 = vpack.c.b16 %v6413, %v6405
        %v8054 = vpack.c.b16 %v6414, %v6406
        %v8055 = vpack.c.b16 %v6415, %v6407
        %v8056 = vpack.c.b16 %v6424, %v6416
        %v8057 = vpack.c.b16 %v6425, %v6417
        %v8058 = vpack.c.b16 %v6426, %v6418
        %v8059 = vpack.c.b16 %v6427, %v6419
        %v8060 = vpack.c.b16 %v6428, %v6420
        %v8061 = vpack.c.b16 %v6429, %v6421
        %v8062 = vpack.c.b16 %v6430, %v6422
        %v8063 = vpack.c.b16 %v6431, %v6423
        %v8064 = vpack.c.b16 %v6440, %v6432
        %v8065 = vpack.c.b16 %v6441, %v6433
        %v8066 = vpack.c.b16 %v6442, %v6434
        %v8067 = vpack.c.b16 %v6443, %v6435
        %v8068 = vpack.c.b16 %v6444, %v6436
        %v8069 = vpack.c.b16 %v6445, %v6437
        %v8070 = vpack.c.b16 %v6446, %v6438
        %v8071 = vpack.c.b16 %v6447, %v6439
        %v8072 = vpack.c.b16 %v6456, %v6448
        %v8073 = vpack.c.b16 %v6457, %v6449
        %v8074 = vpack.c.b16 %v6458, %v6450
        %v8075 = vpack.c.b16 %v6459, %v6451
        %v8076 = vpack.c.b16 %v6460, %v6452
        %v8077 = vpack.c.b16 %v6461, %v6453
        %v8078 = vpack.c.b16 %v6462, %v6454
        %v8079 = vpack.c.b16 %v6463, %v6455
        %v8080 = vpack.c.b16 %v6472, %v6464
        %v8081 = vpack.c.b16 %v6473, %v6465
        %v8082 = vpack.c.b16 %v6474, %v6466
        %v8083 = vpack.c.b16 %v6475, %v6467
        %v8084 = vpack.c.b16 %v6476, %v6468
        %v8085 = vpack.c.b16 %v6477, %v6469
        %v8086 = vpack.c.b16 %v6478, %v6470
        %v8087 = vpack.c.b16 %v6479, %v6471
        %v8088 = vpack.c.b16 %v6488, %v6480
        %v8089 = vpack.c.b16 %v6489, %v6481
        %v8090 = vpack.c.b16 %v6490, %v6482
        %v8091 = vpack.c.b16 %v6491, %v6483
        %v8092 = vpack.c.b16 %v6492, %v6484
        %v8093 = vpack.c.b16 %v6493, %v6485
        %v8094 = vpack.c.b16 %v6494, %v6486
        %v8095 = vpack.c.b16 %v6495, %v6487
        %v8096 = vpack.c.b16 %v6504, %v6496
        %v8097 = vpack.c.b16 %v6505, %v6497
        %v8098 = vpack.c.b16 %v6506, %v6498
        %v8099 = vpack.c.b16 %v6507, %v6499
        %v8100 = vpack.c.b16 %v6508, %v6500
        %v8101 = vpack.c.b16 %v6509, %v6501
        %v8102 = vpack.c.b16 %v6510, %v6502
        %v8103 = vpack.c.b16 %v6511, %v6503
        %v8104 = vpack.c.b16 %v6520, %v6512
        %v8105 = vpack.c.b16 %v6521, %v6513
        %v8106 = vpack.c.b16 %v6522, %v6514
        %v8107 = vpack.c.b16 %v6523, %v6515
        %v8108 = vpack.c.b16 %v6524, %v6516
        %v8109 = vpack.c.b16 %v6525, %v6517
        %v8110 = vpack.c.b16 %v6526, %v6518
        %v8111 = vpack.c.b16 %v6527, %v6519
        %v8112 = vpack.c.b16 %v6536, %v6528
        %v8113 = vpack.c.b16 %v6537, %v6529
        %v8114 = vpack.c.b16 %v6538, %v6530
        %v8115 = vpack.c.b16 %v6539, %v6531
        %v8116 = vpack.c.b16 %v6540, %v6532
        %v8117 = vpack.c.b16 %v6541, %v6533
        %v8118 = vpack.c.b16 %v6542, %v6534
        %v8119 = vpack.c.b16 %v6543, %v6535
        %v8120 = vpack.c.b16 %v6552, %v6544
        %v8121 = vpack.c.b16 %v6553, %v6545
        %v8122 = vpack.c.b16 %v6554, %v6546
        %v8123 = vpack.c.b16 %v6555, %v6547
        %v8124 = vpack.c.b16 %v6556, %v6548
        %v8125 = vpack.c.b16 %v6557, %v6549
        %v8126 = vpack.c.b16 %v6558, %v6550
        %v8127 = vpack.c.b16 %v6559, %v6551
        %v8128 = vpack.c.b16 %v6568, %v6560
        %v8129 = vpack.c.b16 %v6569, %v6561
        %v8130 = vpack.c.b16 %v6570, %v6562
        %v8131 = vpack.c.b16 %v6571, %v6563
        %v8132 = vpack.c.b16 %v6572, %v6564
        %v8133 = vpack.c.b16 %v6573, %v6565
        %v8134 = vpack.c.b16 %v6574, %v6566
        %v8135 = vpack.c.b16 %v6575, %v6567
        %v8136 = vpack.c.b16 %v6584, %v6576
        %v8137 = vpack.c.b16 %v6585, %v6577
        %v8138 = vpack.c.b16 %v6586, %v6578
        %v8139 = vpack.c.b16 %v6587, %v6579
        %v8140 = vpack.c.b16 %v6588, %v6580
        %v8141 = vpack.c.b16 %v6589, %v6581
        %v8142 = vpack.c.b16 %v6590, %v6582
        %v8143 = vpack.c.b16 %v6591, %v6583
        %v8144 = vpack.c.b16 %v6600, %v6592
        %v8145 = vpack.c.b16 %v6601, %v6593
        %v8146 = vpack.c.b16 %v6602, %v6594
        %v8147 = vpack.c.b16 %v6603, %v6595
        %v8148 = vpack.c.b16 %v6604, %v6596
        %v8149 = vpack.c.b16 %v6605, %v6597
        %v8150 = vpack.c.b16 %v6606, %v6598
        %v8151 = vpack.c.b16 %v6607, %v6599
        %v8152 = vpack.c.b16 %v6616, %v6608
        %v8153 = vpack.c.b16 %v6617, %v6609
        %v8154 = vpack.c.b16 %v6618, %v6610
        %v8155 = vpack.c.b16 %v6619, %v6611
        %v8156 = vpack.c.b16 %v6620, %v6612
        %v8157 = vpack.c.b16 %v6621, %v6613
        %v8158 = vpack.c.b16 %v6622, %v6614
        %v8159 = vpack.c.b16 %v6623, %v6615
        %9696 = vmatprep.subr.bf16.mxu0 %v6625
        %9697 = vmatpush1.bf16.msra.mxu0 %v6624
        %9698 = vmatprep.subr.bf16.mxu0 %v6633
        %9699 = vmatpush1.bf16.msra.mxu0 %v6632
        %9700 = vmatprep.subr.bf16.mxu0 %v6641
        %9701 = vmatpush1.bf16.msra.mxu0 %v6640
        %9702 = vmatprep.subr.bf16.mxu0 %v6649
        %9703 = vmatpush1.bf16.msra.mxu0 %v6648
        %9704 = vmatprep.subr.bf16.mxu0 %v6657
        %9705 = vmatpush1.bf16.msra.mxu0 %v6656
        %9706 = vmatprep.subr.bf16.mxu0 %v6665
        %9707 = vmatpush1.bf16.msra.mxu0 %v6664
        %9708 = vmatprep.subr.bf16.mxu0 %v6673
        %9709 = vmatpush1.bf16.msra.mxu0 %v6672
        %9710 = vmatprep.subr.bf16.mxu0 %v6681
        %9711 = vmatpush1.bf16.msra.mxu0 %v6680
        %9712 = vmatprep.subr.bf16.mxu0 %v6689
        %9713 = vmatpush1.bf16.msra.mxu0 %v6688
        %9714 = vmatprep.subr.bf16.mxu0 %v6697
        %9715 = vmatpush1.bf16.msra.mxu0 %v6696
        %9716 = vmatprep.subr.bf16.mxu0 %v6705
        %9717 = vmatpush1.bf16.msra.mxu0 %v6704
        %9718 = vmatprep.subr.bf16.mxu0 %v6713
        %9719 = vmatpush1.bf16.msra.mxu0 %v6712
        %9720 = vmatprep.subr.bf16.mxu0 %v6721
        %9721 = vmatpush1.bf16.msra.mxu0 %v6720
        %9722 = vmatprep.subr.bf16.mxu0 %v6729
        %9723 = vmatpush1.bf16.msra.mxu0 %v6728
        %9724 = vmatprep.subr.bf16.mxu0 %v6737
        %9725 = vmatpush1.bf16.msra.mxu0 %v6736
        %9726 = vmatprep.subr.bf16.mxu0 %v6745
        %9727 = vmatpush1.bf16.msra.mxu0 %v6744
        %9728 = vmatprep.mubr.bf16.mxu0 %v1969
        %9729 = vmatmul.mubr.bf16.gmra.mrb[0].mxu0 %v1968
        %v9730 = vpop.f32.mrb[0].mxu0
        %v9731 = vadd.f32 0.0, %v9730
        %v9732 = vpop.f32.mrb[0].mxu0
        %v9733 = vadd.f32 0.0, %v9732
        %v9734 = vpop.f32.mrb[0].mxu0
        %v9735 = vpop.f32.mrb[0].mxu0
        %9736 = vdwg.mxu0
        %9737 = vmatprep.subr.bf16.mxu0 %v6753
        %9738 = vmatpush1.bf16.msra.mxu0 %v6752
        %9739 = vmatprep.subr.bf16.mxu0 %v6761
        %9740 = vmatpush1.bf16.msra.mxu0 %v6760
        %9741 = vmatprep.subr.bf16.mxu0 %v6769
        %9742 = vmatpush1.bf16.msra.mxu0 %v6768
        %9743 = vmatprep.subr.bf16.mxu0 %v6777
        %9744 = vmatpush1.bf16.msra.mxu0 %v6776
        %9745 = vmatprep.subr.bf16.mxu0 %v6785
        %9746 = vmatpush1.bf16.msra.mxu0 %v6784
        %9747 = vmatprep.subr.bf16.mxu0 %v6793
        %9748 = vmatpush1.bf16.msra.mxu0 %v6792
        %9749 = vmatprep.subr.bf16.mxu0 %v6801
        %9750 = vmatpush1.bf16.msra.mxu0 %v6800
        %9751 = vmatprep.subr.bf16.mxu0 %v6809
        %9752 = vmatpush1.bf16.msra.mxu0 %v6808
        %9753 = vmatprep.subr.bf16.mxu0 %v6817
        %9754 = vmatpush1.bf16.msra.mxu0 %v6816
        %9755 = vmatprep.subr.bf16.mxu0 %v6825
        %9756 = vmatpush1.bf16.msra.mxu0 %v6824
        %9757 = vmatprep.subr.bf16.mxu0 %v6833
        %9758 = vmatpush1.bf16.msra.mxu0 %v6832
        %9759 = vmatprep.subr.bf16.mxu0 %v6841
        %9760 = vmatpush1.bf16.msra.mxu0 %v6840
        %9761 = vmatprep.subr.bf16.mxu0 %v6849
        %9762 = vmatpush1.bf16.msra.mxu0 %v6848
        %9763 = vmatprep.subr.bf16.mxu0 %v6857
        %9764 = vmatpush1.bf16.msra.mxu0 %v6856
        %9765 = vmatprep.subr.bf16.mxu0 %v6865
        %9766 = vmatpush1.bf16.msra.mxu0 %v6864
        %9767 = vmatprep.subr.bf16.mxu0 %v6873
        %9768 = vmatpush1.bf16.msra.mxu0 %v6872
        %9769 = vmatprep.mubr.bf16.mxu0 %v1971
        %9770 = vmatmul.mubr.bf16.gmra.mrb[0].mxu0 %v1970
        %v9771 = vpop.f32.mrb[0].mxu0
        %v9772 = vadd.f32 %v9731, %v9771
        %v9773 = vpop.f32.mrb[0].mxu0
        %v9774 = vadd.f32 %v9733, %v9773
        %v9775 = vpop.f32.mrb[0].mxu0
        %v9776 = vpop.f32.mrb[0].mxu0
        %9777 = vdwg.mxu0
        %9778 = vmatprep.subr.bf16.mxu0 %v6881
        %9779 = vmatpush1.bf16.msra.mxu0 %v6880
        %9780 = vmatprep.subr.bf16.mxu0 %v6889
        %9781 = vmatpush1.bf16.msra.mxu0 %v6888
        %9782 = vmatprep.subr.bf16.mxu0 %v6897
        %9783 = vmatpush1.bf16.msra.mxu0 %v6896
        %9784 = vmatprep.subr.bf16.mxu0 %v6905
        %9785 = vmatpush1.bf16.msra.mxu0 %v6904
        %9786 = vmatprep.subr.bf16.mxu0 %v6913
        %9787 = vmatpush1.bf16.msra.mxu0 %v6912
        %9788 = vmatprep.subr.bf16.mxu0 %v6921
        %9789 = vmatpush1.bf16.msra.mxu0 %v6920
        %9790 = vmatprep.subr.bf16.mxu0 %v6929
        %9791 = vmatpush1.bf16.msra.mxu0 %v6928
        %9792 = vmatprep.subr.bf16.mxu0 %v6937
        %9793 = vmatpush1.bf16.msra.mxu0 %v6936
        %9794 = vmatprep.subr.bf16.mxu0 %v6945
        %9795 = vmatpush1.bf16.msra.mxu0 %v6944
        %9796 = vmatprep.subr.bf16.mxu0 %v6953
        %9797 = vmatpush1.bf16.msra.mxu0 %v6952
        %9798 = vmatprep.subr.bf16.mxu0 %v6961
        %9799 = vmatpush1.bf16.msra.mxu0 %v6960
        %9800 = vmatprep.subr.bf16.mxu0 %v6969
        %9801 = vmatpush1.bf16.msra.mxu0 %v6968
        %9802 = vmatprep.subr.bf16.mxu0 %v6977
        %9803 = vmatpush1.bf16.msra.mxu0 %v6976
        %9804 = vmatprep.subr.bf16.mxu0 %v6985
        %9805 = vmatpush1.bf16.msra.mxu0 %v6984
        %9806 = vmatprep.subr.bf16.mxu0 %v6993
        %9807 = vmatpush1.bf16.msra.mxu0 %v6992
        %9808 = vmatprep.subr.bf16.mxu0 %v7001
        %9809 = vmatpush1.bf16.msra.mxu0 %v7000
        %9810 = vmatprep.mubr.bf16.mxu0 %v1973
        %9811 = vmatmul.mubr.bf16.gmra.mrb[0].mxu0 %v1972
        %v9812 = vpop.f32.mrb[0].mxu0
        %v9813 = vadd.f32 %v9772, %v9812
        %v9814 = vpop.f32.mrb[0].mxu0
        %v9815 = vadd.f32 %v9774, %v9814
        %v9816 = vpop.f32.mrb[0].mxu0
        %v9817 = vpop.f32.mrb[0].mxu0
        %9818 = vdwg.mxu0
        %9819 = vmatprep.subr.bf16.mxu0 %v7009
        %9820 = vmatpush1.bf16.msra.mxu0 %v7008
        %9821 = vmatprep.subr.bf16.mxu0 %v7017
        %9822 = vmatpush1.bf16.msra.mxu0 %v7016
        %9823 = vmatprep.subr.bf16.mxu0 %v7025
        %9824 = vmatpush1.bf16.msra.mxu0 %v7024
        %9825 = vmatprep.subr.bf16.mxu0 %v7033
        %9826 = vmatpush1.bf16.msra.mxu0 %v7032
        %9827 = vmatprep.subr.bf16.mxu0 %v7041
        %9828 = vmatpush1.bf16.msra.mxu0 %v7040
        %9829 = vmatprep.subr.bf16.mxu0 %v7049
        %9830 = vmatpush1.bf16.msra.mxu0 %v7048
        %9831 = vmatprep.subr.bf16.mxu0 %v7057
        %9832 = vmatpush1.bf16.msra.mxu0 %v7056
        %9833 = vmatprep.subr.bf16.mxu0 %v7065
        %9834 = vmatpush1.bf16.msra.mxu0 %v7064
        %9835 = vmatprep.subr.bf16.mxu0 %v7073
        %9836 = vmatpush1.bf16.msra.mxu0 %v7072
        %9837 = vmatprep.subr.bf16.mxu0 %v7081
        %9838 = vmatpush1.bf16.msra.mxu0 %v7080
        %9839 = vmatprep.subr.bf16.mxu0 %v7089
        %9840 = vmatpush1.bf16.msra.mxu0 %v7088
        %9841 = vmatprep.subr.bf16.mxu0 %v7097
        %9842 = vmatpush1.bf16.msra.mxu0 %v7096
        %9843 = vmatprep.subr.bf16.mxu0 %v7105
        %9844 = vmatpush1.bf16.msra.mxu0 %v7104
        %9845 = vmatprep.subr.bf16.mxu0 %v7113
        %9846 = vmatpush1.bf16.msra.mxu0 %v7112
        %9847 = vmatprep.subr.bf16.mxu0 %v7121
        %9848 = vmatpush1.bf16.msra.mxu0 %v7120
        %9849 = vmatprep.subr.bf16.mxu0 %v7129
        %9850 = vmatpush1.bf16.msra.mxu0 %v7128
        %9851 = vmatprep.mubr.bf16.mxu0 %v1975
        %9852 = vmatmul.mubr.bf16.gmra.mrb[0].mxu0 %v1974
        %v9853 = vpop.f32.mrb[0].mxu0
        %v9854 = vadd.f32 %v9813, %v9853
        %v9855 = vpop.f32.mrb[0].mxu0
        %v9856 = vadd.f32 %v9815, %v9855
        %v9857 = vpop.f32.mrb[0].mxu0
        %v9858 = vpop.f32.mrb[0].mxu0
        %9859 = vdwg.mxu0
        %9860 = vmatprep.subr.bf16.mxu0 %v7137
        %9861 = vmatpush1.bf16.msra.mxu0 %v7136
        %9862 = vmatprep.subr.bf16.mxu0 %v7145
        %9863 = vmatpush1.bf16.msra.mxu0 %v7144
        %9864 = vmatprep.subr.bf16.mxu0 %v7153
        %9865 = vmatpush1.bf16.msra.mxu0 %v7152
        %9866 = vmatprep.subr.bf16.mxu0 %v7161
        %9867 = vmatpush1.bf16.msra.mxu0 %v7160
        %9868 = vmatprep.subr.bf16.mxu0 %v7169
        %9869 = vmatpush1.bf16.msra.mxu0 %v7168
        %9870 = vmatprep.subr.bf16.mxu0 %v7177
        %9871 = vmatpush1.bf16.msra.mxu0 %v7176
        %9872 = vmatprep.subr.bf16.mxu0 %v7185
        %9873 = vmatpush1.bf16.msra.mxu0 %v7184
        %9874 = vmatprep.subr.bf16.mxu0 %v7193
        %9875 = vmatpush1.bf16.msra.mxu0 %v7192
        %9876 = vmatprep.subr.bf16.mxu0 %v7201
        %9877 = vmatpush1.bf16.msra.mxu0 %v7200
        %9878 = vmatprep.subr.bf16.mxu0 %v7209
        %9879 = vmatpush1.bf16.msra.mxu0 %v7208
        %9880 = vmatprep.subr.bf16.mxu0 %v7217
        %9881 = vmatpush1.bf16.msra.mxu0 %v7216
        %9882 = vmatprep.subr.bf16.mxu0 %v7225
        %9883 = vmatpush1.bf16.msra.mxu0 %v7224
        %9884 = vmatprep.subr.bf16.mxu0 %v7233
        %9885 = vmatpush1.bf16.msra.mxu0 %v7232
        %9886 = vmatprep.subr.bf16.mxu0 %v7241
        %9887 = vmatpush1.bf16.msra.mxu0 %v7240
        %9888 = vmatprep.subr.bf16.mxu0 %v7249
        %9889 = vmatpush1.bf16.msra.mxu0 %v7248
        %9890 = vmatprep.subr.bf16.mxu0 %v7257
        %9891 = vmatpush1.bf16.msra.mxu0 %v7256
        %9892 = vmatprep.mubr.bf16.mxu0 %v1977
        %9893 = vmatmul.mubr.bf16.gmra.mrb[0].mxu0 %v1976
        %v9894 = vpop.f32.mrb[0].mxu0
        %v9895 = vadd.f32 %v9854, %v9894
        %v9896 = vpop.f32.mrb[0].mxu0
        %v9897 = vadd.f32 %v9856, %v9896
        %v9898 = vpop.f32.mrb[0].mxu0
        %v9899 = vpop.f32.mrb[0].mxu0
        %9900 = vdwg.mxu0
        %9901 = vmatprep.subr.bf16.mxu0 %v7265
        %9902 = vmatpush1.bf16.msra.mxu0 %v7264
        %9903 = vmatprep.subr.bf16.mxu0 %v7273
        %9904 = vmatpush1.bf16.msra.mxu0 %v7272
        %9905 = vmatprep.subr.bf16.mxu0 %v7281
        %9906 = vmatpush1.bf16.msra.mxu0 %v7280
        %9907 = vmatprep.subr.bf16.mxu0 %v7289
        %9908 = vmatpush1.bf16.msra.mxu0 %v7288
        %9909 = vmatprep.subr.bf16.mxu0 %v7297
        %9910 = vmatpush1.bf16.msra.mxu0 %v7296
        %9911 = vmatprep.subr.bf16.mxu0 %v7305
        %9912 = vmatpush1.bf16.msra.mxu0 %v7304
        %9913 = vmatprep.subr.bf16.mxu0 %v7313
        %9914 = vmatpush1.bf16.msra.mxu0 %v7312
        %9915 = vmatprep.subr.bf16.mxu0 %v7321
        %9916 = vmatpush1.bf16.msra.mxu0 %v7320
        %9917 = vmatprep.subr.bf16.mxu0 %v7329
        %9918 = vmatpush1.bf16.msra.mxu0 %v7328
        %9919 = vmatprep.subr.bf16.mxu0 %v7337
        %9920 = vmatpush1.bf16.msra.mxu0 %v7336
        %9921 = vmatprep.subr.bf16.mxu0 %v7345
        %9922 = vmatpush1.bf16.msra.mxu0 %v7344
        %9923 = vmatprep.subr.bf16.mxu0 %v7353
        %9924 = vmatpush1.bf16.msra.mxu0 %v7352
        %9925 = vmatprep.subr.bf16.mxu0 %v7361
        %9926 = vmatpush1.bf16.msra.mxu0 %v7360
        %9927 = vmatprep.subr.bf16.mxu0 %v7369
        %9928 = vmatpush1.bf16.msra.mxu0 %v7368
        %9929 = vmatprep.subr.bf16.mxu0 %v7377
        %9930 = vmatpush1.bf16.msra.mxu0 %v7376
        %9931 = vmatprep.subr.bf16.mxu0 %v7385
        %9932 = vmatpush1.bf16.msra.mxu0 %v7384
        %9933 = vmatprep.mubr.bf16.mxu0 %v1979
        %9934 = vmatmul.mubr.bf16.gmra.mrb[0].mxu0 %v1978
        %v9935 = vpop.f32.mrb[0].mxu0
        %v9936 = vadd.f32 %v9895, %v9935
        %v9937 = vpop.f32.mrb[0].mxu0
        %v9938 = vadd.f32 %v9897, %v9937
        %v9939 = vpop.f32.mrb[0].mxu0
        %v9940 = vpop.f32.mrb[0].mxu0
        %9941 = vdwg.mxu0
        %9942 = vmatprep.subr.bf16.mxu0 %v7393
        %9943 = vmatpush1.bf16.msra.mxu0 %v7392
        %9944 = vmatprep.subr.bf16.mxu0 %v7401
        %9945 = vmatpush1.bf16.msra.mxu0 %v7400
        %9946 = vmatprep.subr.bf16.mxu0 %v7409
        %9947 = vmatpush1.bf16.msra.mxu0 %v7408
        %9948 = vmatprep.subr.bf16.mxu0 %v7417
        %9949 = vmatpush1.bf16.msra.mxu0 %v7416
        %9950 = vmatprep.subr.bf16.mxu0 %v7425
        %9951 = vmatpush1.bf16.msra.mxu0 %v7424
        %9952 = vmatprep.subr.bf16.mxu0 %v7433
        %9953 = vmatpush1.bf16.msra.mxu0 %v7432
        %9954 = vmatprep.subr.bf16.mxu0 %v7441
        %9955 = vmatpush1.bf16.msra.mxu0 %v7440
        %9956 = vmatprep.subr.bf16.mxu0 %v7449
        %9957 = vmatpush1.bf16.msra.mxu0 %v7448
        %9958 = vmatprep.subr.bf16.mxu0 %v7457
        %9959 = vmatpush1.bf16.msra.mxu0 %v7456
        %9960 = vmatprep.subr.bf16.mxu0 %v7465
        %9961 = vmatpush1.bf16.msra.mxu0 %v7464
        %9962 = vmatprep.subr.bf16.mxu0 %v7473
        %9963 = vmatpush1.bf16.msra.mxu0 %v7472
        %9964 = vmatprep.subr.bf16.mxu0 %v7481
        %9965 = vmatpush1.bf16.msra.mxu0 %v7480
        %9966 = vmatprep.subr.bf16.mxu0 %v7489
        %9967 = vmatpush1.bf16.msra.mxu0 %v7488
        %9968 = vmatprep.subr.bf16.mxu0 %v7497
        %9969 = vmatpush1.bf16.msra.mxu0 %v7496
        %9970 = vmatprep.subr.bf16.mxu0 %v7505
        %9971 = vmatpush1.bf16.msra.mxu0 %v7504
        %9972 = vmatprep.subr.bf16.mxu0 %v7513
        %9973 = vmatpush1.bf16.msra.mxu0 %v7512
        %9974 = vmatprep.mubr.bf16.mxu0 %v1981
        %9975 = vmatmul.mubr.bf16.gmra.mrb[0].mxu0 %v1980
        %v9976 = vpop.f32.mrb[0].mxu0
        %v9977 = vadd.f32 %v9936, %v9976
        %v9978 = vpop.f32.mrb[0].mxu0
        %v9979 = vadd.f32 %v9938, %v9978
        %v9980 = vpop.f32.mrb[0].mxu0
        %v9981 = vpop.f32.mrb[0].mxu0
        %9982 = vdwg.mxu0
        %9983 = vmatprep.subr.bf16.mxu0 %v7521
        %9984 = vmatpush1.bf16.msra.mxu0 %v7520
        %9985 = vmatprep.subr.bf16.mxu0 %v7529
        %9986 = vmatpush1.bf16.msra.mxu0 %v7528
        %9987 = vmatprep.subr.bf16.mxu0 %v7537
        %9988 = vmatpush1.bf16.msra.mxu0 %v7536
        %9989 = vmatprep.subr.bf16.mxu0 %v7545
        %9990 = vmatpush1.bf16.msra.mxu0 %v7544
        %9991 = vmatprep.subr.bf16.mxu0 %v7553
        %9992 = vmatpush1.bf16.msra.mxu0 %v7552
        %9993 = vmatprep.subr.bf16.mxu0 %v7561
        %9994 = vmatpush1.bf16.msra.mxu0 %v7560
        %9995 = vmatprep.subr.bf16.mxu0 %v7569
        %9996 = vmatpush1.bf16.msra.mxu0 %v7568
        %9997 = vmatprep.subr.bf16.mxu0 %v7577
        %9998 = vmatpush1.bf16.msra.mxu0 %v7576
        %9999 = vmatprep.subr.bf16.mxu0 %v7585
        %10000 = vmatpush1.bf16.msra.mxu0 %v7584
        %10001 = vmatprep.subr.bf16.mxu0 %v7593
        %10002 = vmatpush1.bf16.msra.mxu0 %v7592
        %10003 = vmatprep.subr.bf16.mxu0 %v7601
        %10004 = vmatpush1.bf16.msra.mxu0 %v7600
        %10005 = vmatprep.subr.bf16.mxu0 %v7609
        %10006 = vmatpush1.bf16.msra.mxu0 %v7608
        %10007 = vmatprep.subr.bf16.mxu0 %v7617
        %10008 = vmatpush1.bf16.msra.mxu0 %v7616
        %10009 = vmatprep.subr.bf16.mxu0 %v7625
        %10010 = vmatpush1.bf16.msra.mxu0 %v7624
        %10011 = vmatprep.subr.bf16.mxu0 %v7633
        %10012 = vmatpush1.bf16.msra.mxu0 %v7632
        %10013 = vmatprep.subr.bf16.mxu0 %v7641
        %10014 = vmatpush1.bf16.msra.mxu0 %v7640
        %10015 = vmatprep.mubr.bf16.mxu0 %v1983
        %10016 = vmatmul.mubr.bf16.gmra.mrb[0].mxu0 %v1982
        %v10017 = vpop.f32.mrb[0].mxu0
        %v10018 = vadd.f32 %v9977, %v10017
        %v10019 = vpop.f32.mrb[0].mxu0
        %v10020 = vadd.f32 %v9979, %v10019
        %v10021 = vpop.f32.mrb[0].mxu0
        %v10022 = vpop.f32.mrb[0].mxu0
        %10023 = vdwg.mxu0
        %10024 = vmatprep.subr.bf16.mxu0 %v7649
        %10025 = vmatpush1.bf16.msra.mxu0 %v7648
        %10026 = vmatprep.subr.bf16.mxu0 %v7657
        %10027 = vmatpush1.bf16.msra.mxu0 %v7656
        %10028 = vmatprep.subr.bf16.mxu0 %v7665
        %10029 = vmatpush1.bf16.msra.mxu0 %v7664
        %10030 = vmatprep.subr.bf16.mxu0 %v7673
        %10031 = vmatpush1.bf16.msra.mxu0 %v7672
        %10032 = vmatprep.subr.bf16.mxu0 %v7681
        %10033 = vmatpush1.bf16.msra.mxu0 %v7680
        %10034 = vmatprep.subr.bf16.mxu0 %v7689
        %10035 = vmatpush1.bf16.msra.mxu0 %v7688
        %10036 = vmatprep.subr.bf16.mxu0 %v7697
        %10037 = vmatpush1.bf16.msra.mxu0 %v7696
        %10038 = vmatprep.subr.bf16.mxu0 %v7705
        %10039 = vmatpush1.bf16.msra.mxu0 %v7704
        %10040 = vmatprep.subr.bf16.mxu0 %v7713
        %10041 = vmatpush1.bf16.msra.mxu0 %v7712
        %10042 = vmatprep.subr.bf16.mxu0 %v7721
        %10043 = vmatpush1.bf16.msra.mxu0 %v7720
        %10044 = vmatprep.subr.bf16.mxu0 %v7729
        %10045 = vmatpush1.bf16.msra.mxu0 %v7728
        %10046 = vmatprep.subr.bf16.mxu0 %v7737
        %10047 = vmatpush1.bf16.msra.mxu0 %v7736
        %10048 = vmatprep.subr.bf16.mxu0 %v7745
        %10049 = vmatpush1.bf16.msra.mxu0 %v7744
        %10050 = vmatprep.subr.bf16.mxu0 %v7753
        %10051 = vmatpush1.bf16.msra.mxu0 %v7752
        %10052 = vmatprep.subr.bf16.mxu0 %v7761
        %10053 = vmatpush1.bf16.msra.mxu0 %v7760
        %10054 = vmatprep.subr.bf16.mxu0 %v7769
        %10055 = vmatpush1.bf16.msra.mxu0 %v7768
        %10056 = vmatprep.mubr.bf16.mxu0 %v1985
        %10057 = vmatmul.mubr.bf16.gmra.mrb[0].mxu0 %v1984
        %v10058 = vpop.f32.mrb[0].mxu0
        %v10059 = vadd.f32 %v10018, %v10058
        %v10060 = vpop.f32.mrb[0].mxu0
        %v10061 = vadd.f32 %v10020, %v10060
        %v10062 = vpop.f32.mrb[0].mxu0
        %v10063 = vpop.f32.mrb[0].mxu0
        %10064 = vdwg.mxu0
        %10065 = vmatprep.subr.bf16.mxu0 %v7777
        %10066 = vmatpush1.bf16.msra.mxu0 %v7776
        %10067 = vmatprep.subr.bf16.mxu0 %v7785
        %10068 = vmatpush1.bf16.msra.mxu0 %v7784
        %10069 = vmatprep.subr.bf16.mxu0 %v7793
        %10070 = vmatpush1.bf16.msra.mxu0 %v7792
        %10071 = vmatprep.subr.bf16.mxu0 %v7801
        %10072 = vmatpush1.bf16.msra.mxu0 %v7800
        %10073 = vmatprep.subr.bf16.mxu0 %v7809
        %10074 = vmatpush1.bf16.msra.mxu0 %v7808
        %10075 = vmatprep.subr.bf16.mxu0 %v7817
        %10076 = vmatpush1.bf16.msra.mxu0 %v7816
        %10077 = vmatprep.subr.bf16.mxu0 %v7825
        %10078 = vmatpush1.bf16.msra.mxu0 %v7824
        %10079 = vmatprep.subr.bf16.mxu0 %v7833
        %10080 = vmatpush1.bf16.msra.mxu0 %v7832
        %10081 = vmatprep.subr.bf16.mxu0 %v7841
        %10082 = vmatpush1.bf16.msra.mxu0 %v7840
        %10083 = vmatprep.subr.bf16.mxu0 %v7849
        %10084 = vmatpush1.bf16.msra.mxu0 %v7848
        %10085 = vmatprep.subr.bf16.mxu0 %v7857
        %10086 = vmatpush1.bf16.msra.mxu0 %v7856
        %10087 = vmatprep.subr.bf16.mxu0 %v7865
        %10088 = vmatpush1.bf16.msra.mxu0 %v7864
        %10089 = vmatprep.subr.bf16.mxu0 %v7873
        %10090 = vmatpush1.bf16.msra.mxu0 %v7872
        %10091 = vmatprep.subr.bf16.mxu0 %v7881
        %10092 = vmatpush1.bf16.msra.mxu0 %v7880
        %10093 = vmatprep.subr.bf16.mxu0 %v7889
        %10094 = vmatpush1.bf16.msra.mxu0 %v7888
        %10095 = vmatprep.subr.bf16.mxu0 %v7897
        %10096 = vmatpush1.bf16.msra.mxu0 %v7896
        %10097 = vmatprep.mubr.bf16.mxu0 %v1987
        %10098 = vmatmul.mubr.bf16.gmra.mrb[0].mxu0 %v1986
        %v10099 = vpop.f32.mrb[0].mxu0
        %v10100 = vadd.f32 %v10059, %v10099
        %v10101 = vpop.f32.mrb[0].mxu0
        %v10102 = vadd.f32 %v10061, %v10101
        %v10103 = vpop.f32.mrb[0].mxu0
        %v10104 = vpop.f32.mrb[0].mxu0
        %10105 = vdwg.mxu0
        %10106 = vmatprep.subr.bf16.mxu0 %v7905
        %10107 = vmatpush1.bf16.msra.mxu0 %v7904
        %10108 = vmatprep.subr.bf16.mxu0 %v7913
        %10109 = vmatpush1.bf16.msra.mxu0 %v7912
        %10110 = vmatprep.subr.bf16.mxu0 %v7921
        %10111 = vmatpush1.bf16.msra.mxu0 %v7920
        %10112 = vmatprep.subr.bf16.mxu0 %v7929
        %10113 = vmatpush1.bf16.msra.mxu0 %v7928
        %10114 = vmatprep.subr.bf16.mxu0 %v7937
        %10115 = vmatpush1.bf16.msra.mxu0 %v7936
        %10116 = vmatprep.subr.bf16.mxu0 %v7945
        %10117 = vmatpush1.bf16.msra.mxu0 %v7944
        %10118 = vmatprep.subr.bf16.mxu0 %v7953
        %10119 = vmatpush1.bf16.msra.mxu0 %v7952
        %10120 = vmatprep.subr.bf16.mxu0 %v7961
        %10121 = vmatpush1.bf16.msra.mxu0 %v7960
        %10122 = vmatprep.subr.bf16.mxu0 %v7969
        %10123 = vmatpush1.bf16.msra.mxu0 %v7968
        %10124 = vmatprep.subr.bf16.mxu0 %v7977
        %10125 = vmatpush1.bf16.msra.mxu0 %v7976
        %10126 = vmatprep.subr.bf16.mxu0 %v7985
        %10127 = vmatpush1.bf16.msra.mxu0 %v7984
        %10128 = vmatprep.subr.bf16.mxu0 %v7993
        %10129 = vmatpush1.bf16.msra.mxu0 %v7992
        %10130 = vmatprep.subr.bf16.mxu0 %v8001
        %10131 = vmatpush1.bf16.msra.mxu0 %v8000
        %10132 = vmatprep.subr.bf16.mxu0 %v8009
        %10133 = vmatpush1.bf16.msra.mxu0 %v8008
        %10134 = vmatprep.subr.bf16.mxu0 %v8017
        %10135 = vmatpush1.bf16.msra.mxu0 %v8016
        %10136 = vmatprep.subr.bf16.mxu0 %v8025
        %10137 = vmatpush1.bf16.msra.mxu0 %v8024
        %10138 = vmatprep.mubr.bf16.mxu0 %v1989
        %10139 = vmatmul.mubr.bf16.gmra.mrb[0].mxu0 %v1988
        %v10140 = vpop.f32.mrb[0].mxu0
        %v10141 = vadd.f32 %v10100, %v10140
        %v10142 = vpop.f32.mrb[0].mxu0
        %v10143 = vadd.f32 %v10102, %v10142
        %v10144 = vpop.f32.mrb[0].mxu0
        %v10145 = vpop.f32.mrb[0].mxu0
        %10146 = vdwg.mxu0
        %10147 = vmatprep.subr.bf16.mxu0 %v8033
        %10148 = vmatpush1.bf16.msra.mxu0 %v8032
        %10149 = vmatprep.subr.bf16.mxu0 %v8041
        %10150 = vmatpush1.bf16.msra.mxu0 %v8040
        %10151 = vmatprep.subr.bf16.mxu0 %v8049
        %10152 = vmatpush1.bf16.msra.mxu0 %v8048
        %10153 = vmatprep.subr.bf16.mxu0 %v8057
        %10154 = vmatpush1.bf16.msra.mxu0 %v8056
        %10155 = vmatprep.subr.bf16.mxu0 %v8065
        %10156 = vmatpush1.bf16.msra.mxu0 %v8064
        %10157 = vmatprep.subr.bf16.mxu0 %v8073
        %10158 = vmatpush1.bf16.msra.mxu0 %v8072
        %10159 = vmatprep.subr.bf16.mxu0 %v8081
        %10160 = vmatpush1.bf16.msra.mxu0 %v8080
        %10161 = vmatprep.subr.bf16.mxu0 %v8089
        %10162 = vmatpush1.bf16.msra.mxu0 %v8088
        %10163 = vmatprep.subr.bf16.mxu0 %v8097
        %10164 = vmatpush1.bf16.msra.mxu0 %v8096
        %10165 = vmatprep.subr.bf16.mxu0 %v8105
        %10166 = vmatpush1.bf16.msra.mxu0 %v8104
        %10167 = vmatprep.subr.bf16.mxu0 %v8113
        %10168 = vmatpush1.bf16.msra.mxu0 %v8112
        %10169 = vmatprep.subr.bf16.mxu0 %v8121
        %10170 = vmatpush1.bf16.msra.mxu0 %v8120
        %10171 = vmatprep.subr.bf16.mxu0 %v8129
        %10172 = vmatpush1.bf16.msra.mxu0 %v8128
        %10173 = vmatprep.subr.bf16.mxu0 %v8137
        %10174 = vmatpush1.bf16.msra.mxu0 %v8136
        %10175 = vmatprep.subr.bf16.mxu0 %v8145
        %10176 = vmatpush1.bf16.msra.mxu0 %v8144
        %10177 = vmatprep.subr.bf16.mxu0 %v8153
        %10178 = vmatpush1.bf16.msra.mxu0 %v8152
        %10179 = vmatprep.mubr.bf16.mxu0 %v1991
        %10180 = vmatmul.mubr.bf16.gmra.mrb[0].mxu0 %v1990
        %v10181 = vpop.f32.mrb[0].mxu0
        %v10182 = vadd.f32 %v10141, %v10181
        %v10183 = vpop.f32.mrb[0].mxu0
        %v10184 = vadd.f32 %v10143, %v10183
        %v10185 = vpop.f32.mrb[0].mxu0
        %v10186 = vpop.f32.mrb[0].mxu0
        %10187 = vdwg.mxu0
        %10188 = vmatprep.subr.bf16.mxu0 %v6627
        %10189 = vmatpush1.bf16.msra.mxu0 %v6626
        %10190 = vmatprep.subr.bf16.mxu0 %v6635
        %10191 = vmatpush1.bf16.msra.mxu0 %v6634
        %10192 = vmatprep.subr.bf16.mxu0 %v6643
        %10193 = vmatpush1.bf16.msra.mxu0 %v6642
        %10194 = vmatprep.subr.bf16.mxu0 %v6651
        %10195 = vmatpush1.bf16.msra.mxu0 %v6650
        %10196 = vmatprep.subr.bf16.mxu0 %v6659
        %10197 = vmatpush1.bf16.msra.mxu0 %v6658
        %10198 = vmatprep.subr.bf16.mxu0 %v6667
        %10199 = vmatpush1.bf16.msra.mxu0 %v6666
        %10200 = vmatprep.subr.bf16.mxu0 %v6675
        %10201 = vmatpush1.bf16.msra.mxu0 %v6674
        %10202 = vmatprep.subr.bf16.mxu0 %v6683
        %10203 = vmatpush1.bf16.msra.mxu0 %v6682
        %10204 = vmatprep.subr.bf16.mxu0 %v6691
        %10205 = vmatpush1.bf16.msra.mxu0 %v6690
        %10206 = vmatprep.subr.bf16.mxu0 %v6699
        %10207 = vmatpush1.bf16.msra.mxu0 %v6698
        %10208 = vmatprep.subr.bf16.mxu0 %v6707
        %10209 = vmatpush1.bf16.msra.mxu0 %v6706
        %10210 = vmatprep.subr.bf16.mxu0 %v6715
        %10211 = vmatpush1.bf16.msra.mxu0 %v6714
        %10212 = vmatprep.subr.bf16.mxu0 %v6723
        %10213 = vmatpush1.bf16.msra.mxu0 %v6722
        %10214 = vmatprep.subr.bf16.mxu0 %v6731
        %10215 = vmatpush1.bf16.msra.mxu0 %v6730
        %10216 = vmatprep.subr.bf16.mxu0 %v6739
        %10217 = vmatpush1.bf16.msra.mxu0 %v6738
        %10218 = vmatprep.subr.bf16.mxu0 %v6747
        %10219 = vmatpush1.bf16.msra.mxu0 %v6746
        %10220 = vmatprep.mubr.bf16.mxu0 %v1969
        %10221 = vmatmul.mubr.bf16.gmra.mrb[0].mxu0 %v1968
        %v10222 = vpop.f32.mrb[0].mxu0
        %v10223 = vadd.f32 0.0, %v10222
        %v10224 = vpop.f32.mrb[0].mxu0
        %v10225 = vadd.f32 0.0, %v10224
        %v10226 = vpop.f32.mrb[0].mxu0
        %v10227 = vpop.f32.mrb[0].mxu0
        %10228 = vdwg.mxu0
        %10229 = vmatprep.subr.bf16.mxu0 %v6755
        %10230 = vmatpush1.bf16.msra.mxu0 %v6754
        %10231 = vmatprep.subr.bf16.mxu0 %v6763
        %10232 = vmatpush1.bf16.msra.mxu0 %v6762
        %10233 = vmatprep.subr.bf16.mxu0 %v6771
        %10234 = vmatpush1.bf16.msra.mxu0 %v6770
        %10235 = vmatprep.subr.bf16.mxu0 %v6779
        %10236 = vmatpush1.bf16.msra.mxu0 %v6778
        %10237 = vmatprep.subr.bf16.mxu0 %v6787
        %10238 = vmatpush1.bf16.msra.mxu0 %v6786
        %10239 = vmatprep.subr.bf16.mxu0 %v6795
        %10240 = vmatpush1.bf16.msra.mxu0 %v6794
        %10241 = vmatprep.subr.bf16.mxu0 %v6803
        %10242 = vmatpush1.bf16.msra.mxu0 %v6802
        %10243 = vmatprep.subr.bf16.mxu0 %v6811
        %10244 = vmatpush1.bf16.msra.mxu0 %v6810
        %10245 = vmatprep.subr.bf16.mxu0 %v6819
        %10246 = vmatpush1.bf16.msra.mxu0 %v6818
        %10247 = vmatprep.subr.bf16.mxu0 %v6827
        %10248 = vmatpush1.bf16.msra.mxu0 %v6826
        %10249 = vmatprep.subr.bf16.mxu0 %v6835
        %10250 = vmatpush1.bf16.msra.mxu0 %v6834
        %10251 = vmatprep.subr.bf16.mxu0 %v6843
        %10252 = vmatpush1.bf16.msra.mxu0 %v6842
        %10253 = vmatprep.subr.bf16.mxu0 %v6851
        %10254 = vmatpush1.bf16.msra.mxu0 %v6850
        %10255 = vmatprep.subr.bf16.mxu0 %v6859
        %10256 = vmatpush1.bf16.msra.mxu0 %v6858
        %10257 = vmatprep.subr.bf16.mxu0 %v6867
        %10258 = vmatpush1.bf16.msra.mxu0 %v6866
        %10259 = vmatprep.subr.bf16.mxu0 %v6875
        %10260 = vmatpush1.bf16.msra.mxu0 %v6874
        %10261 = vmatprep.mubr.bf16.mxu0 %v1971
        %10262 = vmatmul.mubr.bf16.gmra.mrb[0].mxu0 %v1970
        %v10263 = vpop.f32.mrb[0].mxu0
        %v10264 = vadd.f32 %v10223, %v10263
        %v10265 = vpop.f32.mrb[0].mxu0
        %v10266 = vadd.f32 %v10225, %v10265
        %v10267 = vpop.f32.mrb[0].mxu0
        %v10268 = vpop.f32.mrb[0].mxu0
        %10269 = vdwg.mxu0
        %10270 = vmatprep.subr.bf16.mxu0 %v6883
        %10271 = vmatpush1.bf16.msra.mxu0 %v6882
        %10272 = vmatprep.subr.bf16.mxu0 %v6891
        %10273 = vmatpush1.bf16.msra.mxu0 %v6890
        %10274 = vmatprep.subr.bf16.mxu0 %v6899
        %10275 = vmatpush1.bf16.msra.mxu0 %v6898
        %10276 = vmatprep.subr.bf16.mxu0 %v6907
        %10277 = vmatpush1.bf16.msra.mxu0 %v6906
        %10278 = vmatprep.subr.bf16.mxu0 %v6915
        %10279 = vmatpush1.bf16.msra.mxu0 %v6914
        %10280 = vmatprep.subr.bf16.mxu0 %v6923
        %10281 = vmatpush1.bf16.msra.mxu0 %v6922
        %10282 = vmatprep.subr.bf16.mxu0 %v6931
        %10283 = vmatpush1.bf16.msra.mxu0 %v6930
        %10284 = vmatprep.subr.bf16.mxu0 %v6939
        %10285 = vmatpush1.bf16.msra.mxu0 %v6938
        %10286 = vmatprep.subr.bf16.mxu0 %v6947
        %10287 = vmatpush1.bf16.msra.mxu0 %v6946
        %10288 = vmatprep.subr.bf16.mxu0 %v6955
        %10289 = vmatpush1.bf16.msra.mxu0 %v6954
        %10290 = vmatprep.subr.bf16.mxu0 %v6963
        %10291 = vmatpush1.bf16.msra.mxu0 %v6962
        %10292 = vmatprep.subr.bf16.mxu0 %v6971
        %10293 = vmatpush1.bf16.msra.mxu0 %v6970
        %10294 = vmatprep.subr.bf16.mxu0 %v6979
        %10295 = vmatpush1.bf16.msra.mxu0 %v6978
        %10296 = vmatprep.subr.bf16.mxu0 %v6987
        %10297 = vmatpush1.bf16.msra.mxu0 %v6986
        %10298 = vmatprep.subr.bf16.mxu0 %v6995
        %10299 = vmatpush1.bf16.msra.mxu0 %v6994
        %10300 = vmatprep.subr.bf16.mxu0 %v7003
        %10301 = vmatpush1.bf16.msra.mxu0 %v7002
        %10302 = vmatprep.mubr.bf16.mxu0 %v1973
        %10303 = vmatmul.mubr.bf16.gmra.mrb[0].mxu0 %v1972
        %v10304 = vpop.f32.mrb[0].mxu0
        %v10305 = vadd.f32 %v10264, %v10304
        %v10306 = vpop.f32.mrb[0].mxu0
        %v10307 = vadd.f32 %v10266, %v10306
        %v10308 = vpop.f32.mrb[0].mxu0
        %v10309 = vpop.f32.mrb[0].mxu0
        %10310 = vdwg.mxu0
        %10311 = vmatprep.subr.bf16.mxu0 %v7011
        %10312 = vmatpush1.bf16.msra.mxu0 %v7010
        %10313 = vmatprep.subr.bf16.mxu0 %v7019
        %10314 = vmatpush1.bf16.msra.mxu0 %v7018
        %10315 = vmatprep.subr.bf16.mxu0 %v7027
        %10316 = vmatpush1.bf16.msra.mxu0 %v7026
        %10317 = vmatprep.subr.bf16.mxu0 %v7035
        %10318 = vmatpush1.bf16.msra.mxu0 %v7034
        %10319 = vmatprep.subr.bf16.mxu0 %v7043
        %10320 = vmatpush1.bf16.msra.mxu0 %v7042
        %10321 = vmatprep.subr.bf16.mxu0 %v7051
        %10322 = vmatpush1.bf16.msra.mxu0 %v7050
        %10323 = vmatprep.subr.bf16.mxu0 %v7059
        %10324 = vmatpush1.bf16.msra.mxu0 %v7058
        %10325 = vmatprep.subr.bf16.mxu0 %v7067
        %10326 = vmatpush1.bf16.msra.mxu0 %v7066
        %10327 = vmatprep.subr.bf16.mxu0 %v7075
        %10328 = vmatpush1.bf16.msra.mxu0 %v7074
        %10329 = vmatprep.subr.bf16.mxu0 %v7083
        %10330 = vmatpush1.bf16.msra.mxu0 %v7082
        %10331 = vmatprep.subr.bf16.mxu0 %v7091
        %10332 = vmatpush1.bf16.msra.mxu0 %v7090
        %10333 = vmatprep.subr.bf16.mxu0 %v7099
        %10334 = vmatpush1.bf16.msra.mxu0 %v7098
        %10335 = vmatprep.subr.bf16.mxu0 %v7107
        %10336 = vmatpush1.bf16.msra.mxu0 %v7106
        %10337 = vmatprep.subr.bf16.mxu0 %v7115
        %10338 = vmatpush1.bf16.msra.mxu0 %v7114
        %10339 = vmatprep.subr.bf16.mxu0 %v7123
        %10340 = vmatpush1.bf16.msra.mxu0 %v7122
        %10341 = vmatprep.subr.bf16.mxu0 %v7131
        %10342 = vmatpush1.bf16.msra.mxu0 %v7130
        %10343 = vmatprep.mubr.bf16.mxu0 %v1975
        %10344 = vmatmul.mubr.bf16.gmra.mrb[0].mxu0 %v1974
        %v10345 = vpop.f32.mrb[0].mxu0
        %v10346 = vadd.f32 %v10305, %v10345
        %v10347 = vpop.f32.mrb[0].mxu0
        %v10348 = vadd.f32 %v10307, %v10347
        %v10349 = vpop.f32.mrb[0].mxu0
        %v10350 = vpop.f32.mrb[0].mxu0
        %10351 = vdwg.mxu0
        %10352 = vmatprep.subr.bf16.mxu0 %v7139
        %10353 = vmatpush1.bf16.msra.mxu0 %v7138
        %10354 = vmatprep.subr.bf16.mxu0 %v7147
        %10355 = vmatpush1.bf16.msra.mxu0 %v7146
        %10356 = vmatprep.subr.bf16.mxu0 %v7155
        %10357 = vmatpush1.bf16.msra.mxu0 %v7154
        %10358 = vmatprep.subr.bf16.mxu0 %v7163
        %10359 = vmatpush1.bf16.msra.mxu0 %v7162
        %10360 = vmatprep.subr.bf16.mxu0 %v7171
        %10361 = vmatpush1.bf16.msra.mxu0 %v7170
        %10362 = vmatprep.subr.bf16.mxu0 %v7179
        %10363 = vmatpush1.bf16.msra.mxu0 %v7178
        %10364 = vmatprep.subr.bf16.mxu0 %v7187
        %10365 = vmatpush1.bf16.msra.mxu0 %v7186
        %10366 = vmatprep.subr.bf16.mxu0 %v7195
        %10367 = vmatpush1.bf16.msra.mxu0 %v7194
        %10368 = vmatprep.subr.bf16.mxu0 %v7203
        %10369 = vmatpush1.bf16.msra.mxu0 %v7202
        %10370 = vmatprep.subr.bf16.mxu0 %v7211
        %10371 = vmatpush1.bf16.msra.mxu0 %v7210
        %10372 = vmatprep.subr.bf16.mxu0 %v7219
        %10373 = vmatpush1.bf16.msra.mxu0 %v7218
        %10374 = vmatprep.subr.bf16.mxu0 %v7227
        %10375 = vmatpush1.bf16.msra.mxu0 %v7226
        %10376 = vmatprep.subr.bf16.mxu0 %v7235
        %10377 = vmatpush1.bf16.msra.mxu0 %v7234
        %10378 = vmatprep.subr.bf16.mxu0 %v7243
        %10379 = vmatpush1.bf16.msra.mxu0 %v7242
        %10380 = vmatprep.subr.bf16.mxu0 %v7251
        %10381 = vmatpush1.bf16.msra.mxu0 %v7250
        %10382 = vmatprep.subr.bf16.mxu0 %v7259
        %10383 = vmatpush1.bf16.msra.mxu0 %v7258
        %10384 = vmatprep.mubr.bf16.mxu0 %v1977
        %10385 = vmatmul.mubr.bf16.gmra.mrb[0].mxu0 %v1976
        %v10386 = vpop.f32.mrb[0].mxu0
        %v10387 = vadd.f32 %v10346, %v10386
        %v10388 = vpop.f32.mrb[0].mxu0
        %v10389 = vadd.f32 %v10348, %v10388
        %v10390 = vpop.f32.mrb[0].mxu0
        %v10391 = vpop.f32.mrb[0].mxu0
        %10392 = vdwg.mxu0
        %10393 = vmatprep.subr.bf16.mxu0 %v7267
        %10394 = vmatpush1.bf16.msra.mxu0 %v7266
        %10395 = vmatprep.subr.bf16.mxu0 %v7275
        %10396 = vmatpush1.bf16.msra.mxu0 %v7274
        %10397 = vmatprep.subr.bf16.mxu0 %v7283
        %10398 = vmatpush1.bf16.msra.mxu0 %v7282
        %10399 = vmatprep.subr.bf16.mxu0 %v7291
        %10400 = vmatpush1.bf16.msra.mxu0 %v7290
        %10401 = vmatprep.subr.bf16.mxu0 %v7299
        %10402 = vmatpush1.bf16.msra.mxu0 %v7298
        %10403 = vmatprep.subr.bf16.mxu0 %v7307
        %10404 = vmatpush1.bf16.msra.mxu0 %v7306
        %10405 = vmatprep.subr.bf16.mxu0 %v7315
        %10406 = vmatpush1.bf16.msra.mxu0 %v7314
        %10407 = vmatprep.subr.bf16.mxu0 %v7323
        %10408 = vmatpush1.bf16.msra.mxu0 %v7322
        %10409 = vmatprep.subr.bf16.mxu0 %v7331
        %10410 = vmatpush1.bf16.msra.mxu0 %v7330
        %10411 = vmatprep.subr.bf16.mxu0 %v7339
        %10412 = vmatpush1.bf16.msra.mxu0 %v7338
        %10413 = vmatprep.subr.bf16.mxu0 %v7347
        %10414 = vmatpush1.bf16.msra.mxu0 %v7346
        %10415 = vmatprep.subr.bf16.mxu0 %v7355
        %10416 = vmatpush1.bf16.msra.mxu0 %v7354
        %10417 = vmatprep.subr.bf16.mxu0 %v7363
        %10418 = vmatpush1.bf16.msra.mxu0 %v7362
        %10419 = vmatprep.subr.bf16.mxu0 %v7371
        %10420 = vmatpush1.bf16.msra.mxu0 %v7370
        %10421 = vmatprep.subr.bf16.mxu0 %v7379
        %10422 = vmatpush1.bf16.msra.mxu0 %v7378
        %10423 = vmatprep.subr.bf16.mxu0 %v7387
        %10424 = vmatpush1.bf16.msra.mxu0 %v7386
        %10425 = vmatprep.mubr.bf16.mxu0 %v1979
        %10426 = vmatmul.mubr.bf16.gmra.mrb[0].mxu0 %v1978
        %v10427 = vpop.f32.mrb[0].mxu0
        %v10428 = vadd.f32 %v10387, %v10427
        %v10429 = vpop.f32.mrb[0].mxu0
        %v10430 = vadd.f32 %v10389, %v10429
        %v10431 = vpop.f32.mrb[0].mxu0
        %v10432 = vpop.f32.mrb[0].mxu0
        %10433 = vdwg.mxu0
        %10434 = vmatprep.subr.bf16.mxu0 %v7395
        %10435 = vmatpush1.bf16.msra.mxu0 %v7394
        %10436 = vmatprep.subr.bf16.mxu0 %v7403
        %10437 = vmatpush1.bf16.msra.mxu0 %v7402
        %10438 = vmatprep.subr.bf16.mxu0 %v7411
        %10439 = vmatpush1.bf16.msra.mxu0 %v7410
        %10440 = vmatprep.subr.bf16.mxu0 %v7419
        %10441 = vmatpush1.bf16.msra.mxu0 %v7418
        %10442 = vmatprep.subr.bf16.mxu0 %v7427
        %10443 = vmatpush1.bf16.msra.mxu0 %v7426
        %10444 = vmatprep.subr.bf16.mxu0 %v7435
        %10445 = vmatpush1.bf16.msra.mxu0 %v7434
        %10446 = vmatprep.subr.bf16.mxu0 %v7443
        %10447 = vmatpush1.bf16.msra.mxu0 %v7442
        %10448 = vmatprep.subr.bf16.mxu0 %v7451
        %10449 = vmatpush1.bf16.msra.mxu0 %v7450
        %10450 = vmatprep.subr.bf16.mxu0 %v7459
        %10451 = vmatpush1.bf16.msra.mxu0 %v7458
        %10452 = vmatprep.subr.bf16.mxu0 %v7467
        %10453 = vmatpush1.bf16.msra.mxu0 %v7466
        %10454 = vmatprep.subr.bf16.mxu0 %v7475
        %10455 = vmatpush1.bf16.msra.mxu0 %v7474
        %10456 = vmatprep.subr.bf16.mxu0 %v7483
        %10457 = vmatpush1.bf16.msra.mxu0 %v7482
        %10458 = vmatprep.subr.bf16.mxu0 %v7491
        %10459 = vmatpush1.bf16.msra.mxu0 %v7490
        %10460 = vmatprep.subr.bf16.mxu0 %v7499
        %10461 = vmatpush1.bf16.msra.mxu0 %v7498
        %10462 = vmatprep.subr.bf16.mxu0 %v7507
        %10463 = vmatpush1.bf16.msra.mxu0 %v7506
        %10464 = vmatprep.subr.bf16.mxu0 %v7515
        %10465 = vmatpush1.bf16.msra.mxu0 %v7514
        %10466 = vmatprep.mubr.bf16.mxu0 %v1981
        %10467 = vmatmul.mubr.bf16.gmra.mrb[0].mxu0 %v1980
        %v10468 = vpop.f32.mrb[0].mxu0
        %v10469 = vadd.f32 %v10428, %v10468
        %v10470 = vpop.f32.mrb[0].mxu0
        %v10471 = vadd.f32 %v10430, %v10470
        %v10472 = vpop.f32.mrb[0].mxu0
        %v10473 = vpop.f32.mrb[0].mxu0
        %10474 = vdwg.mxu0
        %10475 = vmatprep.subr.bf16.mxu0 %v7523
        %10476 = vmatpush1.bf16.msra.mxu0 %v7522
        %10477 = vmatprep.subr.bf16.mxu0 %v7531
        %10478 = vmatpush1.bf16.msra.mxu0 %v7530
        %10479 = vmatprep.subr.bf16.mxu0 %v7539
        %10480 = vmatpush1.bf16.msra.mxu0 %v7538
        %10481 = vmatprep.subr.bf16.mxu0 %v7547
        %10482 = vmatpush1.bf16.msra.mxu0 %v7546
        %10483 = vmatprep.subr.bf16.mxu0 %v7555
        %10484 = vmatpush1.bf16.msra.mxu0 %v7554
        %10485 = vmatprep.subr.bf16.mxu0 %v7563
        %10486 = vmatpush1.bf16.msra.mxu0 %v7562
        %10487 = vmatprep.subr.bf16.mxu0 %v7571
        %10488 = vmatpush1.bf16.msra.mxu0 %v7570
        %10489 = vmatprep.subr.bf16.mxu0 %v7579
        %10490 = vmatpush1.bf16.msra.mxu0 %v7578
        %10491 = vmatprep.subr.bf16.mxu0 %v7587
        %10492 = vmatpush1.bf16.msra.mxu0 %v7586
        %10493 = vmatprep.subr.bf16.mxu0 %v7595
        %10494 = vmatpush1.bf16.msra.mxu0 %v7594
        %10495 = vmatprep.subr.bf16.mxu0 %v7603
        %10496 = vmatpush1.bf16.msra.mxu0 %v7602
        %10497 = vmatprep.subr.bf16.mxu0 %v7611
        %10498 = vmatpush1.bf16.msra.mxu0 %v7610
        %10499 = vmatprep.subr.bf16.mxu0 %v7619
        %10500 = vmatpush1.bf16.msra.mxu0 %v7618
        %10501 = vmatprep.subr.bf16.mxu0 %v7627
        %10502 = vmatpush1.bf16.msra.mxu0 %v7626
        %10503 = vmatprep.subr.bf16.mxu0 %v7635
        %10504 = vmatpush1.bf16.msra.mxu0 %v7634
        %10505 = vmatprep.subr.bf16.mxu0 %v7643
        %10506 = vmatpush1.bf16.msra.mxu0 %v7642
        %10507 = vmatprep.mubr.bf16.mxu0 %v1983
        %10508 = vmatmul.mubr.bf16.gmra.mrb[0].mxu0 %v1982
        %v10509 = vpop.f32.mrb[0].mxu0
        %v10510 = vadd.f32 %v10469, %v10509
        %v10511 = vpop.f32.mrb[0].mxu0
        %v10512 = vadd.f32 %v10471, %v10511
        %v10513 = vpop.f32.mrb[0].mxu0
        %v10514 = vpop.f32.mrb[0].mxu0
        %10515 = vdwg.mxu0
        %10516 = vmatprep.subr.bf16.mxu0 %v7651
        %10517 = vmatpush1.bf16.msra.mxu0 %v7650
        %10518 = vmatprep.subr.bf16.mxu0 %v7659
        %10519 = vmatpush1.bf16.msra.mxu0 %v7658
        %10520 = vmatprep.subr.bf16.mxu0 %v7667
        %10521 = vmatpush1.bf16.msra.mxu0 %v7666
        %10522 = vmatprep.subr.bf16.mxu0 %v7675
        %10523 = vmatpush1.bf16.msra.mxu0 %v7674
        %10524 = vmatprep.subr.bf16.mxu0 %v7683
        %10525 = vmatpush1.bf16.msra.mxu0 %v7682
        %10526 = vmatprep.subr.bf16.mxu0 %v7691
        %10527 = vmatpush1.bf16.msra.mxu0 %v7690
        %10528 = vmatprep.subr.bf16.mxu0 %v7699
        %10529 = vmatpush1.bf16.msra.mxu0 %v7698
        %10530 = vmatprep.subr.bf16.mxu0 %v7707
        %10531 = vmatpush1.bf16.msra.mxu0 %v7706
        %10532 = vmatprep.subr.bf16.mxu0 %v7715
        %10533 = vmatpush1.bf16.msra.mxu0 %v7714
        %10534 = vmatprep.subr.bf16.mxu0 %v7723
        %10535 = vmatpush1.bf16.msra.mxu0 %v7722
        %10536 = vmatprep.subr.bf16.mxu0 %v7731
        %10537 = vmatpush1.bf16.msra.mxu0 %v7730
        %10538 = vmatprep.subr.bf16.mxu0 %v7739
        %10539 = vmatpush1.bf16.msra.mxu0 %v7738
        %10540 = vmatprep.subr.bf16.mxu0 %v7747
        %10541 = vmatpush1.bf16.msra.mxu0 %v7746
        %10542 = vmatprep.subr.bf16.mxu0 %v7755
        %10543 = vmatpush1.bf16.msra.mxu0 %v7754
        %10544 = vmatprep.subr.bf16.mxu0 %v7763
        %10545 = vmatpush1.bf16.msra.mxu0 %v7762
        %10546 = vmatprep.subr.bf16.mxu0 %v7771
        %10547 = vmatpush1.bf16.msra.mxu0 %v7770
        %10548 = vmatprep.mubr.bf16.mxu0 %v1985
        %10549 = vmatmul.mubr.bf16.gmra.mrb[0].mxu0 %v1984
        %v10550 = vpop.f32.mrb[0].mxu0
        %v10551 = vadd.f32 %v10510, %v10550
        %v10552 = vpop.f32.mrb[0].mxu0
        %v10553 = vadd.f32 %v10512, %v10552
        %v10554 = vpop.f32.mrb[0].mxu0
        %v10555 = vpop.f32.mrb[0].mxu0
        %10556 = vdwg.mxu0
        %10557 = vmatprep.subr.bf16.mxu0 %v7779
        %10558 = vmatpush1.bf16.msra.mxu0 %v7778
        %10559 = vmatprep.subr.bf16.mxu0 %v7787
        %10560 = vmatpush1.bf16.msra.mxu0 %v7786
        %10561 = vmatprep.subr.bf16.mxu0 %v7795
        %10562 = vmatpush1.bf16.msra.mxu0 %v7794
        %10563 = vmatprep.subr.bf16.mxu0 %v7803
        %10564 = vmatpush1.bf16.msra.mxu0 %v7802
        %10565 = vmatprep.subr.bf16.mxu0 %v7811
        %10566 = vmatpush1.bf16.msra.mxu0 %v7810
        %10567 = vmatprep.subr.bf16.mxu0 %v7819
        %10568 = vmatpush1.bf16.msra.mxu0 %v7818
        %10569 = vmatprep.subr.bf16.mxu0 %v7827
        %10570 = vmatpush1.bf16.msra.mxu0 %v7826
        %10571 = vmatprep.subr.bf16.mxu0 %v7835
        %10572 = vmatpush1.bf16.msra.mxu0 %v7834
        %10573 = vmatprep.subr.bf16.mxu0 %v7843
        %10574 = vmatpush1.bf16.msra.mxu0 %v7842
        %10575 = vmatprep.subr.bf16.mxu0 %v7851
        %10576 = vmatpush1.bf16.msra.mxu0 %v7850
        %10577 = vmatprep.subr.bf16.mxu0 %v7859
        %10578 = vmatpush1.bf16.msra.mxu0 %v7858
        %10579 = vmatprep.subr.bf16.mxu0 %v7867
        %10580 = vmatpush1.bf16.msra.mxu0 %v7866
        %10581 = vmatprep.subr.bf16.mxu0 %v7875
        %10582 = vmatpush1.bf16.msra.mxu0 %v7874
        %10583 = vmatprep.subr.bf16.mxu0 %v7883
        %10584 = vmatpush1.bf16.msra.mxu0 %v7882
        %10585 = vmatprep.subr.bf16.mxu0 %v7891
        %10586 = vmatpush1.bf16.msra.mxu0 %v7890
        %10587 = vmatprep.subr.bf16.mxu0 %v7899
        %10588 = vmatpush1.bf16.msra.mxu0 %v7898
        %10589 = vmatprep.mubr.bf16.mxu0 %v1987
        %10590 = vmatmul.mubr.bf16.gmra.mrb[0].mxu0 %v1986
        %v10591 = vpop.f32.mrb[0].mxu0
        %v10592 = vadd.f32 %v10551, %v10591
        %v10593 = vpop.f32.mrb[0].mxu0
        %v10594 = vadd.f32 %v10553, %v10593
        %v10595 = vpop.f32.mrb[0].mxu0
        %v10596 = vpop.f32.mrb[0].mxu0
        %10597 = vdwg.mxu0
        %10598 = vmatprep.subr.bf16.mxu0 %v7907
        %10599 = vmatpush1.bf16.msra.mxu0 %v7906
        %10600 = vmatprep.subr.bf16.mxu0 %v7915
        %10601 = vmatpush1.bf16.msra.mxu0 %v7914
        %10602 = vmatprep.subr.bf16.mxu0 %v7923
        %10603 = vmatpush1.bf16.msra.mxu0 %v7922
        %10604 = vmatprep.subr.bf16.mxu0 %v7931
        %10605 = vmatpush1.bf16.msra.mxu0 %v7930
        %10606 = vmatprep.subr.bf16.mxu0 %v7939
        %10607 = vmatpush1.bf16.msra.mxu0 %v7938
        %10608 = vmatprep.subr.bf16.mxu0 %v7947
        %10609 = vmatpush1.bf16.msra.mxu0 %v7946
        %10610 = vmatprep.subr.bf16.mxu0 %v7955
        %10611 = vmatpush1.bf16.msra.mxu0 %v7954
        %10612 = vmatprep.subr.bf16.mxu0 %v7963
        %10613 = vmatpush1.bf16.msra.mxu0 %v7962
        %10614 = vmatprep.subr.bf16.mxu0 %v7971
        %10615 = vmatpush1.bf16.msra.mxu0 %v7970
        %10616 = vmatprep.subr.bf16.mxu0 %v7979
        %10617 = vmatpush1.bf16.msra.mxu0 %v7978
        %10618 = vmatprep.subr.bf16.mxu0 %v7987
        %10619 = vmatpush1.bf16.msra.mxu0 %v7986
        %10620 = vmatprep.subr.bf16.mxu0 %v7995
        %10621 = vmatpush1.bf16.msra.mxu0 %v7994
        %10622 = vmatprep.subr.bf16.mxu0 %v8003
        %10623 = vmatpush1.bf16.msra.mxu0 %v8002
        %10624 = vmatprep.subr.bf16.mxu0 %v8011
        %10625 = vmatpush1.bf16.msra.mxu0 %v8010
        %10626 = vmatprep.subr.bf16.mxu0 %v8019
        %10627 = vmatpush1.bf16.msra.mxu0 %v8018
        %10628 = vmatprep.subr.bf16.mxu0 %v8027
        %10629 = vmatpush1.bf16.msra.mxu0 %v8026
        %10630 = vmatprep.mubr.bf16.mxu0 %v1989
        %10631 = vmatmul.mubr.bf16.gmra.mrb[0].mxu0 %v1988
        %v10632 = vpop.f32.mrb[0].mxu0
        %v10633 = vadd.f32 %v10592, %v10632
        %v10634 = vpop.f32.mrb[0].mxu0
        %v10635 = vadd.f32 %v10594, %v10634
        %v10636 = vpop.f32.mrb[0].mxu0
        %v10637 = vpop.f32.mrb[0].mxu0
        %10638 = vdwg.mxu0
        %10639 = vmatprep.subr.bf16.mxu0 %v8035
        %10640 = vmatpush1.bf16.msra.mxu0 %v8034
        %10641 = vmatprep.subr.bf16.mxu0 %v8043
        %10642 = vmatpush1.bf16.msra.mxu0 %v8042
        %10643 = vmatprep.subr.bf16.mxu0 %v8051
        %10644 = vmatpush1.bf16.msra.mxu0 %v8050
        %10645 = vmatprep.subr.bf16.mxu0 %v8059
        %10646 = vmatpush1.bf16.msra.mxu0 %v8058
        %10647 = vmatprep.subr.bf16.mxu0 %v8067
        %10648 = vmatpush1.bf16.msra.mxu0 %v8066
        %10649 = vmatprep.subr.bf16.mxu0 %v8075
        %10650 = vmatpush1.bf16.msra.mxu0 %v8074
        %10651 = vmatprep.subr.bf16.mxu0 %v8083
        %10652 = vmatpush1.bf16.msra.mxu0 %v8082
        %10653 = vmatprep.subr.bf16.mxu0 %v8091
        %10654 = vmatpush1.bf16.msra.mxu0 %v8090
        %10655 = vmatprep.subr.bf16.mxu0 %v8099
        %10656 = vmatpush1.bf16.msra.mxu0 %v8098
        %10657 = vmatprep.subr.bf16.mxu0 %v8107
        %10658 = vmatpush1.bf16.msra.mxu0 %v8106
        %10659 = vmatprep.subr.bf16.mxu0 %v8115
        %10660 = vmatpush1.bf16.msra.mxu0 %v8114
        %10661 = vmatprep.subr.bf16.mxu0 %v8123
        %10662 = vmatpush1.bf16.msra.mxu0 %v8122
        %10663 = vmatprep.subr.bf16.mxu0 %v8131
        %10664 = vmatpush1.bf16.msra.mxu0 %v8130
        %10665 = vmatprep.subr.bf16.mxu0 %v8139
        %10666 = vmatpush1.bf16.msra.mxu0 %v8138
        %10667 = vmatprep.subr.bf16.mxu0 %v8147
        %10668 = vmatpush1.bf16.msra.mxu0 %v8146
        %10669 = vmatprep.subr.bf16.mxu0 %v8155
        %10670 = vmatpush1.bf16.msra.mxu0 %v8154
        %10671 = vmatprep.mubr.bf16.mxu0 %v1991
        %10672 = vmatmul.mubr.bf16.gmra.mrb[0].mxu0 %v1990
        %v10673 = vpop.f32.mrb[0].mxu0
        %v10674 = vadd.f32 %v10633, %v10673
        %v10675 = vpop.f32.mrb[0].mxu0
        %v10676 = vadd.f32 %v10635, %v10675
        %v10677 = vpop.f32.mrb[0].mxu0
        %v10678 = vpop.f32.mrb[0].mxu0
        %10679 = vdwg.mxu0
        %10680 = vmatprep.subr.bf16.mxu0 %v6629
        %10681 = vmatpush1.bf16.msra.mxu0 %v6628
        %10682 = vmatprep.subr.bf16.mxu0 %v6637
        %10683 = vmatpush1.bf16.msra.mxu0 %v6636
        %10684 = vmatprep.subr.bf16.mxu0 %v6645
        %10685 = vmatpush1.bf16.msra.mxu0 %v6644
        %10686 = vmatprep.subr.bf16.mxu0 %v6653
        %10687 = vmatpush1.bf16.msra.mxu0 %v6652
        %10688 = vmatprep.subr.bf16.mxu0 %v6661
        %10689 = vmatpush1.bf16.msra.mxu0 %v6660
        %10690 = vmatprep.subr.bf16.mxu0 %v6669
        %10691 = vmatpush1.bf16.msra.mxu0 %v6668
        %10692 = vmatprep.subr.bf16.mxu0 %v6677
        %10693 = vmatpush1.bf16.msra.mxu0 %v6676
        %10694 = vmatprep.subr.bf16.mxu0 %v6685
        %10695 = vmatpush1.bf16.msra.mxu0 %v6684
        %10696 = vmatprep.subr.bf16.mxu0 %v6693
        %10697 = vmatpush1.bf16.msra.mxu0 %v6692
        %10698 = vmatprep.subr.bf16.mxu0 %v6701
        %10699 = vmatpush1.bf16.msra.mxu0 %v6700
        %10700 = vmatprep.subr.bf16.mxu0 %v6709
        %10701 = vmatpush1.bf16.msra.mxu0 %v6708
        %10702 = vmatprep.subr.bf16.mxu0 %v6717
        %10703 = vmatpush1.bf16.msra.mxu0 %v6716
        %10704 = vmatprep.subr.bf16.mxu0 %v6725
        %10705 = vmatpush1.bf16.msra.mxu0 %v6724
        %10706 = vmatprep.subr.bf16.mxu0 %v6733
        %10707 = vmatpush1.bf16.msra.mxu0 %v6732
        %10708 = vmatprep.subr.bf16.mxu0 %v6741
        %10709 = vmatpush1.bf16.msra.mxu0 %v6740
        %10710 = vmatprep.subr.bf16.mxu0 %v6749
        %10711 = vmatpush1.bf16.msra.mxu0 %v6748
        %10712 = vmatprep.mubr.bf16.mxu0 %v1969
        %10713 = vmatmul.mubr.bf16.gmra.mrb[0].mxu0 %v1968
        %v10714 = vpop.f32.mrb[0].mxu0
        %v10715 = vadd.f32 0.0, %v10714
        %v10716 = vpop.f32.mrb[0].mxu0
        %v10717 = vadd.f32 0.0, %v10716
        %v10718 = vpop.f32.mrb[0].mxu0
        %v10719 = vpop.f32.mrb[0].mxu0
        %10720 = vdwg.mxu0
        %10721 = vmatprep.subr.bf16.mxu0 %v6757
        %10722 = vmatpush1.bf16.msra.mxu0 %v6756
        %10723 = vmatprep.subr.bf16.mxu0 %v6765
        %10724 = vmatpush1.bf16.msra.mxu0 %v6764
        %10725 = vmatprep.subr.bf16.mxu0 %v6773
        %10726 = vmatpush1.bf16.msra.mxu0 %v6772
        %10727 = vmatprep.subr.bf16.mxu0 %v6781
        %10728 = vmatpush1.bf16.msra.mxu0 %v6780
        %10729 = vmatprep.subr.bf16.mxu0 %v6789
        %10730 = vmatpush1.bf16.msra.mxu0 %v6788
        %10731 = vmatprep.subr.bf16.mxu0 %v6797
        %10732 = vmatpush1.bf16.msra.mxu0 %v6796
        %10733 = vmatprep.subr.bf16.mxu0 %v6805
        %10734 = vmatpush1.bf16.msra.mxu0 %v6804
        %10735 = vmatprep.subr.bf16.mxu0 %v6813
        %10736 = vmatpush1.bf16.msra.mxu0 %v6812
        %10737 = vmatprep.subr.bf16.mxu0 %v6821
        %10738 = vmatpush1.bf16.msra.mxu0 %v6820
        %10739 = vmatprep.subr.bf16.mxu0 %v6829
        %10740 = vmatpush1.bf16.msra.mxu0 %v6828
        %10741 = vmatprep.subr.bf16.mxu0 %v6837
        %10742 = vmatpush1.bf16.msra.mxu0 %v6836
        %10743 = vmatprep.subr.bf16.mxu0 %v6845
        %10744 = vmatpush1.bf16.msra.mxu0 %v6844
        %10745 = vmatprep.subr.bf16.mxu0 %v6853
        %10746 = vmatpush1.bf16.msra.mxu0 %v6852
        %10747 = vmatprep.subr.bf16.mxu0 %v6861
        %10748 = vmatpush1.bf16.msra.mxu0 %v6860
        %10749 = vmatprep.subr.bf16.mxu0 %v6869
        %10750 = vmatpush1.bf16.msra.mxu0 %v6868
        %10751 = vmatprep.subr.bf16.mxu0 %v6877
        %10752 = vmatpush1.bf16.msra.mxu0 %v6876
        %10753 = vmatprep.mubr.bf16.mxu0 %v1971
        %10754 = vmatmul.mubr.bf16.gmra.mrb[0].mxu0 %v1970
        %v10755 = vpop.f32.mrb[0].mxu0
        %v10756 = vadd.f32 %v10715, %v10755
        %v10757 = vpop.f32.mrb[0].mxu0
        %v10758 = vadd.f32 %v10717, %v10757
        %v10759 = vpop.f32.mrb[0].mxu0
        %v10760 = vpop.f32.mrb[0].mxu0
        %10761 = vdwg.mxu0
        %10762 = vmatprep.subr.bf16.mxu0 %v6885
        %10763 = vmatpush1.bf16.msra.mxu0 %v6884
        %10764 = vmatprep.subr.bf16.mxu0 %v6893
        %10765 = vmatpush1.bf16.msra.mxu0 %v6892
        %10766 = vmatprep.subr.bf16.mxu0 %v6901
        %10767 = vmatpush1.bf16.msra.mxu0 %v6900
        %10768 = vmatprep.subr.bf16.mxu0 %v6909
        %10769 = vmatpush1.bf16.msra.mxu0 %v6908
        %10770 = vmatprep.subr.bf16.mxu0 %v6917
        %10771 = vmatpush1.bf16.msra.mxu0 %v6916
        %10772 = vmatprep.subr.bf16.mxu0 %v6925
        %10773 = vmatpush1.bf16.msra.mxu0 %v6924
        %10774 = vmatprep.subr.bf16.mxu0 %v6933
        %10775 = vmatpush1.bf16.msra.mxu0 %v6932
        %10776 = vmatprep.subr.bf16.mxu0 %v6941
        %10777 = vmatpush1.bf16.msra.mxu0 %v6940
        %10778 = vmatprep.subr.bf16.mxu0 %v6949
        %10779 = vmatpush1.bf16.msra.mxu0 %v6948
        %10780 = vmatprep.subr.bf16.mxu0 %v6957
        %10781 = vmatpush1.bf16.msra.mxu0 %v6956
        %10782 = vmatprep.subr.bf16.mxu0 %v6965
        %10783 = vmatpush1.bf16.msra.mxu0 %v6964
        %10784 = vmatprep.subr.bf16.mxu0 %v6973
        %10785 = vmatpush1.bf16.msra.mxu0 %v6972
        %10786 = vmatprep.subr.bf16.mxu0 %v6981
        %10787 = vmatpush1.bf16.msra.mxu0 %v6980
        %10788 = vmatprep.subr.bf16.mxu0 %v6989
        %10789 = vmatpush1.bf16.msra.mxu0 %v6988
        %10790 = vmatprep.subr.bf16.mxu0 %v6997
        %10791 = vmatpush1.bf16.msra.mxu0 %v6996
        %10792 = vmatprep.subr.bf16.mxu0 %v7005
        %10793 = vmatpush1.bf16.msra.mxu0 %v7004
        %10794 = vmatprep.mubr.bf16.mxu0 %v1973
        %10795 = vmatmul.mubr.bf16.gmra.mrb[0].mxu0 %v1972
        %v10796 = vpop.f32.mrb[0].mxu0
        %v10797 = vadd.f32 %v10756, %v10796
        %v10798 = vpop.f32.mrb[0].mxu0
        %v10799 = vadd.f32 %v10758, %v10798
        %v10800 = vpop.f32.mrb[0].mxu0
        %v10801 = vpop.f32.mrb[0].mxu0
        %10802 = vdwg.mxu0
        %10803 = vmatprep.subr.bf16.mxu0 %v7013
        %10804 = vmatpush1.bf16.msra.mxu0 %v7012
        %10805 = vmatprep.subr.bf16.mxu0 %v7021
        %10806 = vmatpush1.bf16.msra.mxu0 %v7020
        %10807 = vmatprep.subr.bf16.mxu0 %v7029
        %10808 = vmatpush1.bf16.msra.mxu0 %v7028
        %10809 = vmatprep.subr.bf16.mxu0 %v7037
        %10810 = vmatpush1.bf16.msra.mxu0 %v7036
        %10811 = vmatprep.subr.bf16.mxu0 %v7045
        %10812 = vmatpush1.bf16.msra.mxu0 %v7044
        %10813 = vmatprep.subr.bf16.mxu0 %v7053
        %10814 = vmatpush1.bf16.msra.mxu0 %v7052
        %10815 = vmatprep.subr.bf16.mxu0 %v7061
        %10816 = vmatpush1.bf16.msra.mxu0 %v7060
        %10817 = vmatprep.subr.bf16.mxu0 %v7069
        %10818 = vmatpush1.bf16.msra.mxu0 %v7068
        %10819 = vmatprep.subr.bf16.mxu0 %v7077
        %10820 = vmatpush1.bf16.msra.mxu0 %v7076
        %10821 = vmatprep.subr.bf16.mxu0 %v7085
        %10822 = vmatpush1.bf16.msra.mxu0 %v7084
        %10823 = vmatprep.subr.bf16.mxu0 %v7093
        %10824 = vmatpush1.bf16.msra.mxu0 %v7092
        %10825 = vmatprep.subr.bf16.mxu0 %v7101
        %10826 = vmatpush1.bf16.msra.mxu0 %v7100
        %10827 = vmatprep.subr.bf16.mxu0 %v7109
        %10828 = vmatpush1.bf16.msra.mxu0 %v7108
        %10829 = vmatprep.subr.bf16.mxu0 %v7117
        %10830 = vmatpush1.bf16.msra.mxu0 %v7116
        %10831 = vmatprep.subr.bf16.mxu0 %v7125
        %10832 = vmatpush1.bf16.msra.mxu0 %v7124
        %10833 = vmatprep.subr.bf16.mxu0 %v7133
        %10834 = vmatpush1.bf16.msra.mxu0 %v7132
        %10835 = vmatprep.mubr.bf16.mxu0 %v1975
        %10836 = vmatmul.mubr.bf16.gmra.mrb[0].mxu0 %v1974
        %v10837 = vpop.f32.mrb[0].mxu0
        %v10838 = vadd.f32 %v10797, %v10837
        %v10839 = vpop.f32.mrb[0].mxu0
        %v10840 = vadd.f32 %v10799, %v10839
        %v10841 = vpop.f32.mrb[0].mxu0
        %v10842 = vpop.f32.mrb[0].mxu0
        %10843 = vdwg.mxu0
        %10844 = vmatprep.subr.bf16.mxu0 %v7141
        %10845 = vmatpush1.bf16.msra.mxu0 %v7140
        %10846 = vmatprep.subr.bf16.mxu0 %v7149
        %10847 = vmatpush1.bf16.msra.mxu0 %v7148
        %10848 = vmatprep.subr.bf16.mxu0 %v7157
        %10849 = vmatpush1.bf16.msra.mxu0 %v7156
        %10850 = vmatprep.subr.bf16.mxu0 %v7165
        %10851 = vmatpush1.bf16.msra.mxu0 %v7164
        %10852 = vmatprep.subr.bf16.mxu0 %v7173
        %10853 = vmatpush1.bf16.msra.mxu0 %v7172
        %10854 = vmatprep.subr.bf16.mxu0 %v7181
        %10855 = vmatpush1.bf16.msra.mxu0 %v7180
        %10856 = vmatprep.subr.bf16.mxu0 %v7189
        %10857 = vmatpush1.bf16.msra.mxu0 %v7188
        %10858 = vmatprep.subr.bf16.mxu0 %v7197
        %10859 = vmatpush1.bf16.msra.mxu0 %v7196
        %10860 = vmatprep.subr.bf16.mxu0 %v7205
        %10861 = vmatpush1.bf16.msra.mxu0 %v7204
        %10862 = vmatprep.subr.bf16.mxu0 %v7213
        %10863 = vmatpush1.bf16.msra.mxu0 %v7212
        %10864 = vmatprep.subr.bf16.mxu0 %v7221
        %10865 = vmatpush1.bf16.msra.mxu0 %v7220
        %10866 = vmatprep.subr.bf16.mxu0 %v7229
        %10867 = vmatpush1.bf16.msra.mxu0 %v7228
        %10868 = vmatprep.subr.bf16.mxu0 %v7237
        %10869 = vmatpush1.bf16.msra.mxu0 %v7236
        %10870 = vmatprep.subr.bf16.mxu0 %v7245
        %10871 = vmatpush1.bf16.msra.mxu0 %v7244
        %10872 = vmatprep.subr.bf16.mxu0 %v7253
        %10873 = vmatpush1.bf16.msra.mxu0 %v7252
        %10874 = vmatprep.subr.bf16.mxu0 %v7261
        %10875 = vmatpush1.bf16.msra.mxu0 %v7260
        %10876 = vmatprep.mubr.bf16.mxu0 %v1977
        %10877 = vmatmul.mubr.bf16.gmra.mrb[0].mxu0 %v1976
        %v10878 = vpop.f32.mrb[0].mxu0
        %v10879 = vadd.f32 %v10838, %v10878
        %v10880 = vpop.f32.mrb[0].mxu0
        %v10881 = vadd.f32 %v10840, %v10880
        %v10882 = vpop.f32.mrb[0].mxu0
        %v10883 = vpop.f32.mrb[0].mxu0
        %10884 = vdwg.mxu0
        %10885 = vmatprep.subr.bf16.mxu0 %v7269
        %10886 = vmatpush1.bf16.msra.mxu0 %v7268
        %10887 = vmatprep.subr.bf16.mxu0 %v7277
        %10888 = vmatpush1.bf16.msra.mxu0 %v7276
        %10889 = vmatprep.subr.bf16.mxu0 %v7285
        %10890 = vmatpush1.bf16.msra.mxu0 %v7284
        %10891 = vmatprep.subr.bf16.mxu0 %v7293
        %10892 = vmatpush1.bf16.msra.mxu0 %v7292
        %10893 = vmatprep.subr.bf16.mxu0 %v7301
        %10894 = vmatpush1.bf16.msra.mxu0 %v7300
        %10895 = vmatprep.subr.bf16.mxu0 %v7309
        %10896 = vmatpush1.bf16.msra.mxu0 %v7308
        %10897 = vmatprep.subr.bf16.mxu0 %v7317
        %10898 = vmatpush1.bf16.msra.mxu0 %v7316
        %10899 = vmatprep.subr.bf16.mxu0 %v7325
        %10900 = vmatpush1.bf16.msra.mxu0 %v7324
        %10901 = vmatprep.subr.bf16.mxu0 %v7333
        %10902 = vmatpush1.bf16.msra.mxu0 %v7332
        %10903 = vmatprep.subr.bf16.mxu0 %v7341
        %10904 = vmatpush1.bf16.msra.mxu0 %v7340
        %10905 = vmatprep.subr.bf16.mxu0 %v7349
        %10906 = vmatpush1.bf16.msra.mxu0 %v7348
        %10907 = vmatprep.subr.bf16.mxu0 %v7357
        %10908 = vmatpush1.bf16.msra.mxu0 %v7356
        %10909 = vmatprep.subr.bf16.mxu0 %v7365
        %10910 = vmatpush1.bf16.msra.mxu0 %v7364
        %10911 = vmatprep.subr.bf16.mxu0 %v7373
        %10912 = vmatpush1.bf16.msra.mxu0 %v7372
        %10913 = vmatprep.subr.bf16.mxu0 %v7381
        %10914 = vmatpush1.bf16.msra.mxu0 %v7380
        %10915 = vmatprep.subr.bf16.mxu0 %v7389
        %10916 = vmatpush1.bf16.msra.mxu0 %v7388
        %10917 = vmatprep.mubr.bf16.mxu0 %v1979
        %10918 = vmatmul.mubr.bf16.gmra.mrb[0].mxu0 %v1978
        %v10919 = vpop.f32.mrb[0].mxu0
        %v10920 = vadd.f32 %v10879, %v10919
        %v10921 = vpop.f32.mrb[0].mxu0
        %v10922 = vadd.f32 %v10881, %v10921
        %v10923 = vpop.f32.mrb[0].mxu0
        %v10924 = vpop.f32.mrb[0].mxu0
        %10925 = vdwg.mxu0
        %10926 = vmatprep.subr.bf16.mxu0 %v7397
        %10927 = vmatpush1.bf16.msra.mxu0 %v7396
        %10928 = vmatprep.subr.bf16.mxu0 %v7405
        %10929 = vmatpush1.bf16.msra.mxu0 %v7404
        %10930 = vmatprep.subr.bf16.mxu0 %v7413
        %10931 = vmatpush1.bf16.msra.mxu0 %v7412
        %10932 = vmatprep.subr.bf16.mxu0 %v7421
        %10933 = vmatpush1.bf16.msra.mxu0 %v7420
        %10934 = vmatprep.subr.bf16.mxu0 %v7429
        %10935 = vmatpush1.bf16.msra.mxu0 %v7428
        %10936 = vmatprep.subr.bf16.mxu0 %v7437
        %10937 = vmatpush1.bf16.msra.mxu0 %v7436
        %10938 = vmatprep.subr.bf16.mxu0 %v7445
        %10939 = vmatpush1.bf16.msra.mxu0 %v7444
        %10940 = vmatprep.subr.bf16.mxu0 %v7453
        %10941 = vmatpush1.bf16.msra.mxu0 %v7452
        %10942 = vmatprep.subr.bf16.mxu0 %v7461
        %10943 = vmatpush1.bf16.msra.mxu0 %v7460
        %10944 = vmatprep.subr.bf16.mxu0 %v7469
        %10945 = vmatpush1.bf16.msra.mxu0 %v7468
        %10946 = vmatprep.subr.bf16.mxu0 %v7477
        %10947 = vmatpush1.bf16.msra.mxu0 %v7476
        %10948 = vmatprep.subr.bf16.mxu0 %v7485
        %10949 = vmatpush1.bf16.msra.mxu0 %v7484
        %10950 = vmatprep.subr.bf16.mxu0 %v7493
        %10951 = vmatpush1.bf16.msra.mxu0 %v7492
        %10952 = vmatprep.subr.bf16.mxu0 %v7501
        %10953 = vmatpush1.bf16.msra.mxu0 %v7500
        %10954 = vmatprep.subr.bf16.mxu0 %v7509
        %10955 = vmatpush1.bf16.msra.mxu0 %v7508
        %10956 = vmatprep.subr.bf16.mxu0 %v7517
        %10957 = vmatpush1.bf16.msra.mxu0 %v7516
        %10958 = vmatprep.mubr.bf16.mxu0 %v1981
        %10959 = vmatmul.mubr.bf16.gmra.mrb[0].mxu0 %v1980
        %v10960 = vpop.f32.mrb[0].mxu0
        %v10961 = vadd.f32 %v10920, %v10960
        %v10962 = vpop.f32.mrb[0].mxu0
        %v10963 = vadd.f32 %v10922, %v10962
        %v10964 = vpop.f32.mrb[0].mxu0
        %v10965 = vpop.f32.mrb[0].mxu0
        %10966 = vdwg.mxu0
        %10967 = vmatprep.subr.bf16.mxu0 %v7525
        %10968 = vmatpush1.bf16.msra.mxu0 %v7524
        %10969 = vmatprep.subr.bf16.mxu0 %v7533
        %10970 = vmatpush1.bf16.msra.mxu0 %v7532
        %10971 = vmatprep.subr.bf16.mxu0 %v7541
        %10972 = vmatpush1.bf16.msra.mxu0 %v7540
        %10973 = vmatprep.subr.bf16.mxu0 %v7549
        %10974 = vmatpush1.bf16.msra.mxu0 %v7548
        %10975 = vmatprep.subr.bf16.mxu0 %v7557
        %10976 = vmatpush1.bf16.msra.mxu0 %v7556
        %10977 = vmatprep.subr.bf16.mxu0 %v7565
        %10978 = vmatpush1.bf16.msra.mxu0 %v7564
        %10979 = vmatprep.subr.bf16.mxu0 %v7573
        %10980 = vmatpush1.bf16.msra.mxu0 %v7572
        %10981 = vmatprep.subr.bf16.mxu0 %v7581
        %10982 = vmatpush1.bf16.msra.mxu0 %v7580
        %10983 = vmatprep.subr.bf16.mxu0 %v7589
        %10984 = vmatpush1.bf16.msra.mxu0 %v7588
        %10985 = vmatprep.subr.bf16.mxu0 %v7597
        %10986 = vmatpush1.bf16.msra.mxu0 %v7596
        %10987 = vmatprep.subr.bf16.mxu0 %v7605
        %10988 = vmatpush1.bf16.msra.mxu0 %v7604
        %10989 = vmatprep.subr.bf16.mxu0 %v7613
        %10990 = vmatpush1.bf16.msra.mxu0 %v7612
        %10991 = vmatprep.subr.bf16.mxu0 %v7621
        %10992 = vmatpush1.bf16.msra.mxu0 %v7620
        %10993 = vmatprep.subr.bf16.mxu0 %v7629
        %10994 = vmatpush1.bf16.msra.mxu0 %v7628
        %10995 = vmatprep.subr.bf16.mxu0 %v7637
        %10996 = vmatpush1.bf16.msra.mxu0 %v7636
        %10997 = vmatprep.subr.bf16.mxu0 %v7645
        %10998 = vmatpush1.bf16.msra.mxu0 %v7644
        %10999 = vmatprep.mubr.bf16.mxu0 %v1983
        %11000 = vmatmul.mubr.bf16.gmra.mrb[0].mxu0 %v1982
        %v11001 = vpop.f32.mrb[0].mxu0
        %v11002 = vadd.f32 %v10961, %v11001
        %v11003 = vpop.f32.mrb[0].mxu0
        %v11004 = vadd.f32 %v10963, %v11003
        %v11005 = vpop.f32.mrb[0].mxu0
        %v11006 = vpop.f32.mrb[0].mxu0
        %11007 = vdwg.mxu0
        %11008 = vmatprep.subr.bf16.mxu0 %v7653
        %11009 = vmatpush1.bf16.msra.mxu0 %v7652
        %11010 = vmatprep.subr.bf16.mxu0 %v7661
        %11011 = vmatpush1.bf16.msra.mxu0 %v7660
        %11012 = vmatprep.subr.bf16.mxu0 %v7669
        %11013 = vmatpush1.bf16.msra.mxu0 %v7668
        %11014 = vmatprep.subr.bf16.mxu0 %v7677
        %11015 = vmatpush1.bf16.msra.mxu0 %v7676
        %11016 = vmatprep.subr.bf16.mxu0 %v7685
        %11017 = vmatpush1.bf16.msra.mxu0 %v7684
        %11018 = vmatprep.subr.bf16.mxu0 %v7693
        %11019 = vmatpush1.bf16.msra.mxu0 %v7692
        %11020 = vmatprep.subr.bf16.mxu0 %v7701
        %11021 = vmatpush1.bf16.msra.mxu0 %v7700
        %11022 = vmatprep.subr.bf16.mxu0 %v7709
        %11023 = vmatpush1.bf16.msra.mxu0 %v7708
        %11024 = vmatprep.subr.bf16.mxu0 %v7717
        %11025 = vmatpush1.bf16.msra.mxu0 %v7716
        %11026 = vmatprep.subr.bf16.mxu0 %v7725
        %11027 = vmatpush1.bf16.msra.mxu0 %v7724
        %11028 = vmatprep.subr.bf16.mxu0 %v7733
        %11029 = vmatpush1.bf16.msra.mxu0 %v7732
        %11030 = vmatprep.subr.bf16.mxu0 %v7741
        %11031 = vmatpush1.bf16.msra.mxu0 %v7740
        %11032 = vmatprep.subr.bf16.mxu0 %v7749
        %11033 = vmatpush1.bf16.msra.mxu0 %v7748
        %11034 = vmatprep.subr.bf16.mxu0 %v7757
        %11035 = vmatpush1.bf16.msra.mxu0 %v7756
        %11036 = vmatprep.subr.bf16.mxu0 %v7765
        %11037 = vmatpush1.bf16.msra.mxu0 %v7764
        %11038 = vmatprep.subr.bf16.mxu0 %v7773
        %11039 = vmatpush1.bf16.msra.mxu0 %v7772
        %11040 = vmatprep.mubr.bf16.mxu0 %v1985
        %11041 = vmatmul.mubr.bf16.gmra.mrb[0].mxu0 %v1984
        %v11042 = vpop.f32.mrb[0].mxu0
        %v11043 = vadd.f32 %v11002, %v11042
        %v11044 = vpop.f32.mrb[0].mxu0
        %v11045 = vadd.f32 %v11004, %v11044
        %v11046 = vpop.f32.mrb[0].mxu0
        %v11047 = vpop.f32.mrb[0].mxu0
        %11048 = vdwg.mxu0
        %11049 = vmatprep.subr.bf16.mxu0 %v7781
        %11050 = vmatpush1.bf16.msra.mxu0 %v7780
        %11051 = vmatprep.subr.bf16.mxu0 %v7789
        %11052 = vmatpush1.bf16.msra.mxu0 %v7788
        %11053 = vmatprep.subr.bf16.mxu0 %v7797
        %11054 = vmatpush1.bf16.msra.mxu0 %v7796
        %11055 = vmatprep.subr.bf16.mxu0 %v7805
        %11056 = vmatpush1.bf16.msra.mxu0 %v7804
        %11057 = vmatprep.subr.bf16.mxu0 %v7813
        %11058 = vmatpush1.bf16.msra.mxu0 %v7812
        %11059 = vmatprep.subr.bf16.mxu0 %v7821
        %11060 = vmatpush1.bf16.msra.mxu0 %v7820
        %11061 = vmatprep.subr.bf16.mxu0 %v7829
        %11062 = vmatpush1.bf16.msra.mxu0 %v7828
        %11063 = vmatprep.subr.bf16.mxu0 %v7837
        %11064 = vmatpush1.bf16.msra.mxu0 %v7836
        %11065 = vmatprep.subr.bf16.mxu0 %v7845
        %11066 = vmatpush1.bf16.msra.mxu0 %v7844
        %11067 = vmatprep.subr.bf16.mxu0 %v7853
        %11068 = vmatpush1.bf16.msra.mxu0 %v7852
        %11069 = vmatprep.subr.bf16.mxu0 %v7861
        %11070 = vmatpush1.bf16.msra.mxu0 %v7860
        %11071 = vmatprep.subr.bf16.mxu0 %v7869
        %11072 = vmatpush1.bf16.msra.mxu0 %v7868
        %11073 = vmatprep.subr.bf16.mxu0 %v7877
        %11074 = vmatpush1.bf16.msra.mxu0 %v7876
        %11075 = vmatprep.subr.bf16.mxu0 %v7885
        %11076 = vmatpush1.bf16.msra.mxu0 %v7884
        %11077 = vmatprep.subr.bf16.mxu0 %v7893
        %11078 = vmatpush1.bf16.msra.mxu0 %v7892
        %11079 = vmatprep.subr.bf16.mxu0 %v7901
        %11080 = vmatpush1.bf16.msra.mxu0 %v7900
        %11081 = vmatprep.mubr.bf16.mxu0 %v1987
        %11082 = vmatmul.mubr.bf16.gmra.mrb[0].mxu0 %v1986
        %v11083 = vpop.f32.mrb[0].mxu0
        %v11084 = vadd.f32 %v11043, %v11083
        %v11085 = vpop.f32.mrb[0].mxu0
        %v11086 = vadd.f32 %v11045, %v11085
        %v11087 = vpop.f32.mrb[0].mxu0
        %v11088 = vpop.f32.mrb[0].mxu0
        %11089 = vdwg.mxu0
        %11090 = vmatprep.subr.bf16.mxu0 %v7909
        %11091 = vmatpush1.bf16.msra.mxu0 %v7908
        %11092 = vmatprep.subr.bf16.mxu0 %v7917
        %11093 = vmatpush1.bf16.msra.mxu0 %v7916
        %11094 = vmatprep.subr.bf16.mxu0 %v7925
        %11095 = vmatpush1.bf16.msra.mxu0 %v7924
        %11096 = vmatprep.subr.bf16.mxu0 %v7933
        %11097 = vmatpush1.bf16.msra.mxu0 %v7932
        %11098 = vmatprep.subr.bf16.mxu0 %v7941
        %11099 = vmatpush1.bf16.msra.mxu0 %v7940
        %11100 = vmatprep.subr.bf16.mxu0 %v7949
        %11101 = vmatpush1.bf16.msra.mxu0 %v7948
        %11102 = vmatprep.subr.bf16.mxu0 %v7957
        %11103 = vmatpush1.bf16.msra.mxu0 %v7956
        %11104 = vmatprep.subr.bf16.mxu0 %v7965
        %11105 = vmatpush1.bf16.msra.mxu0 %v7964
        %11106 = vmatprep.subr.bf16.mxu0 %v7973
        %11107 = vmatpush1.bf16.msra.mxu0 %v7972
        %11108 = vmatprep.subr.bf16.mxu0 %v7981
        %11109 = vmatpush1.bf16.msra.mxu0 %v7980
        %11110 = vmatprep.subr.bf16.mxu0 %v7989
        %11111 = vmatpush1.bf16.msra.mxu0 %v7988
        %11112 = vmatprep.subr.bf16.mxu0 %v7997
        %11113 = vmatpush1.bf16.msra.mxu0 %v7996
        %11114 = vmatprep.subr.bf16.mxu0 %v8005
        %11115 = vmatpush1.bf16.msra.mxu0 %v8004
        %11116 = vmatprep.subr.bf16.mxu0 %v8013
        %11117 = vmatpush1.bf16.msra.mxu0 %v8012
        %11118 = vmatprep.subr.bf16.mxu0 %v8021
        %11119 = vmatpush1.bf16.msra.mxu0 %v8020
        %11120 = vmatprep.subr.bf16.mxu0 %v8029
        %11121 = vmatpush1.bf16.msra.mxu0 %v8028
        %11122 = vmatprep.mubr.bf16.mxu0 %v1989
        %11123 = vmatmul.mubr.bf16.gmra.mrb[0].mxu0 %v1988
        %v11124 = vpop.f32.mrb[0].mxu0
        %v11125 = vadd.f32 %v11084, %v11124
        %v11126 = vpop.f32.mrb[0].mxu0
        %v11127 = vadd.f32 %v11086, %v11126
        %v11128 = vpop.f32.mrb[0].mxu0
        %v11129 = vpop.f32.mrb[0].mxu0
        %11130 = vdwg.mxu0
        %11131 = vmatprep.subr.bf16.mxu0 %v8037
        %11132 = vmatpush1.bf16.msra.mxu0 %v8036
        %11133 = vmatprep.subr.bf16.mxu0 %v8045
        %11134 = vmatpush1.bf16.msra.mxu0 %v8044
        %11135 = vmatprep.subr.bf16.mxu0 %v8053
        %11136 = vmatpush1.bf16.msra.mxu0 %v8052
        %11137 = vmatprep.subr.bf16.mxu0 %v8061
        %11138 = vmatpush1.bf16.msra.mxu0 %v8060
        %11139 = vmatprep.subr.bf16.mxu0 %v8069
        %11140 = vmatpush1.bf16.msra.mxu0 %v8068
        %11141 = vmatprep.subr.bf16.mxu0 %v8077
        %11142 = vmatpush1.bf16.msra.mxu0 %v8076
        %11143 = vmatprep.subr.bf16.mxu0 %v8085
        %11144 = vmatpush1.bf16.msra.mxu0 %v8084
        %11145 = vmatprep.subr.bf16.mxu0 %v8093
        %11146 = vmatpush1.bf16.msra.mxu0 %v8092
        %11147 = vmatprep.subr.bf16.mxu0 %v8101
        %11148 = vmatpush1.bf16.msra.mxu0 %v8100
        %11149 = vmatprep.subr.bf16.mxu0 %v8109
        %11150 = vmatpush1.bf16.msra.mxu0 %v8108
        %11151 = vmatprep.subr.bf16.mxu0 %v8117
        %11152 = vmatpush1.bf16.msra.mxu0 %v8116
        %11153 = vmatprep.subr.bf16.mxu0 %v8125
        %11154 = vmatpush1.bf16.msra.mxu0 %v8124
        %11155 = vmatprep.subr.bf16.mxu0 %v8133
        %11156 = vmatpush1.bf16.msra.mxu0 %v8132
        %11157 = vmatprep.subr.bf16.mxu0 %v8141
        %11158 = vmatpush1.bf16.msra.mxu0 %v8140
        %11159 = vmatprep.subr.bf16.mxu0 %v8149
        %11160 = vmatpush1.bf16.msra.mxu0 %v8148
        %11161 = vmatprep.subr.bf16.mxu0 %v8157
        %11162 = vmatpush1.bf16.msra.mxu0 %v8156
        %11163 = vmatprep.mubr.bf16.mxu0 %v1991
        %11164 = vmatmul.mubr.bf16.gmra.mrb[0].mxu0 %v1990
        %v11165 = vpop.f32.mrb[0].mxu0
        %v11166 = vadd.f32 %v11125, %v11165
        %v11167 = vpop.f32.mrb[0].mxu0
        %v11168 = vadd.f32 %v11127, %v11167
        %v11169 = vpop.f32.mrb[0].mxu0
        %v11170 = vpop.f32.mrb[0].mxu0
        %11171 = vdwg.mxu0
        %11172 = vmatprep.subr.bf16.mxu0 %v6631
        %11173 = vmatpush1.bf16.msra.mxu0 %v6630
        %11174 = vmatprep.subr.bf16.mxu0 %v6639
        %11175 = vmatpush1.bf16.msra.mxu0 %v6638
        %11176 = vmatprep.subr.bf16.mxu0 %v6647
        %11177 = vmatpush1.bf16.msra.mxu0 %v6646
        %11178 = vmatprep.subr.bf16.mxu0 %v6655
        %11179 = vmatpush1.bf16.msra.mxu0 %v6654
        %11180 = vmatprep.subr.bf16.mxu0 %v6663
        %11181 = vmatpush1.bf16.msra.mxu0 %v6662
        %11182 = vmatprep.subr.bf16.mxu0 %v6671
        %11183 = vmatpush1.bf16.msra.mxu0 %v6670
        %11184 = vmatprep.subr.bf16.mxu0 %v6679
        %11185 = vmatpush1.bf16.msra.mxu0 %v6678
        %11186 = vmatprep.subr.bf16.mxu0 %v6687
        %11187 = vmatpush1.bf16.msra.mxu0 %v6686
        %11188 = vmatprep.subr.bf16.mxu0 %v6695
        %11189 = vmatpush1.bf16.msra.mxu0 %v6694
        %11190 = vmatprep.subr.bf16.mxu0 %v6703
        %11191 = vmatpush1.bf16.msra.mxu0 %v6702
        %11192 = vmatprep.subr.bf16.mxu0 %v6711
        %11193 = vmatpush1.bf16.msra.mxu0 %v6710
        %11194 = vmatprep.subr.bf16.mxu0 %v6719
        %11195 = vmatpush1.bf16.msra.mxu0 %v6718
        %11196 = vmatprep.subr.bf16.mxu0 %v6727
        %11197 = vmatpush1.bf16.msra.mxu0 %v6726
        %11198 = vmatprep.subr.bf16.mxu0 %v6735
        %11199 = vmatpush1.bf16.msra.mxu0 %v6734
        %11200 = vmatprep.subr.bf16.mxu0 %v6743
        %11201 = vmatpush1.bf16.msra.mxu0 %v6742
        %11202 = vmatprep.subr.bf16.mxu0 %v6751
        %11203 = vmatpush1.bf16.msra.mxu0 %v6750
        %11204 = vmatprep.mubr.bf16.mxu0 %v1969
        %11205 = vmatmul.mubr.bf16.gmra.mrb[0].mxu0 %v1968
        %v11206 = vpop.f32.mrb[0].mxu0
        %v11207 = vadd.f32 0.0, %v11206
        %v11208 = vpop.f32.mrb[0].mxu0
        %v11209 = vadd.f32 0.0, %v11208
        %v11210 = vpop.f32.mrb[0].mxu0
        %v11211 = vpop.f32.mrb[0].mxu0
        %11212 = vdwg.mxu0
        %11213 = vmatprep.subr.bf16.mxu0 %v6759
        %11214 = vmatpush1.bf16.msra.mxu0 %v6758
        %11215 = vmatprep.subr.bf16.mxu0 %v6767
        %11216 = vmatpush1.bf16.msra.mxu0 %v6766
        %11217 = vmatprep.subr.bf16.mxu0 %v6775
        %11218 = vmatpush1.bf16.msra.mxu0 %v6774
        %11219 = vmatprep.subr.bf16.mxu0 %v6783
        %11220 = vmatpush1.bf16.msra.mxu0 %v6782
        %11221 = vmatprep.subr.bf16.mxu0 %v6791
        %11222 = vmatpush1.bf16.msra.mxu0 %v6790
        %11223 = vmatprep.subr.bf16.mxu0 %v6799
        %11224 = vmatpush1.bf16.msra.mxu0 %v6798
        %11225 = vmatprep.subr.bf16.mxu0 %v6807
        %11226 = vmatpush1.bf16.msra.mxu0 %v6806
        %11227 = vmatprep.subr.bf16.mxu0 %v6815
        %11228 = vmatpush1.bf16.msra.mxu0 %v6814
        %11229 = vmatprep.subr.bf16.mxu0 %v6823
        %11230 = vmatpush1.bf16.msra.mxu0 %v6822
        %11231 = vmatprep.subr.bf16.mxu0 %v6831
        %11232 = vmatpush1.bf16.msra.mxu0 %v6830
        %11233 = vmatprep.subr.bf16.mxu0 %v6839
        %11234 = vmatpush1.bf16.msra.mxu0 %v6838
        %11235 = vmatprep.subr.bf16.mxu0 %v6847
        %11236 = vmatpush1.bf16.msra.mxu0 %v6846
        %11237 = vmatprep.subr.bf16.mxu0 %v6855
        %11238 = vmatpush1.bf16.msra.mxu0 %v6854
        %11239 = vmatprep.subr.bf16.mxu0 %v6863
        %11240 = vmatpush1.bf16.msra.mxu0 %v6862
        %11241 = vmatprep.subr.bf16.mxu0 %v6871
        %11242 = vmatpush1.bf16.msra.mxu0 %v6870
        %11243 = vmatprep.subr.bf16.mxu0 %v6879
        %11244 = vmatpush1.bf16.msra.mxu0 %v6878
        %11245 = vmatprep.mubr.bf16.mxu0 %v1971
        %11246 = vmatmul.mubr.bf16.gmra.mrb[0].mxu0 %v1970
        %v11247 = vpop.f32.mrb[0].mxu0
        %v11248 = vadd.f32 %v11207, %v11247
        %v11249 = vpop.f32.mrb[0].mxu0
        %v11250 = vadd.f32 %v11209, %v11249
        %v11251 = vpop.f32.mrb[0].mxu0
        %v11252 = vpop.f32.mrb[0].mxu0
        %11253 = vdwg.mxu0
        %11254 = vmatprep.subr.bf16.mxu0 %v6887
        %11255 = vmatpush1.bf16.msra.mxu0 %v6886
        %11256 = vmatprep.subr.bf16.mxu0 %v6895
        %11257 = vmatpush1.bf16.msra.mxu0 %v6894
        %11258 = vmatprep.subr.bf16.mxu0 %v6903
        %11259 = vmatpush1.bf16.msra.mxu0 %v6902
        %11260 = vmatprep.subr.bf16.mxu0 %v6911
        %11261 = vmatpush1.bf16.msra.mxu0 %v6910
        %11262 = vmatprep.subr.bf16.mxu0 %v6919
        %11263 = vmatpush1.bf16.msra.mxu0 %v6918
        %11264 = vmatprep.subr.bf16.mxu0 %v6927
        %11265 = vmatpush1.bf16.msra.mxu0 %v6926
        %11266 = vmatprep.subr.bf16.mxu0 %v6935
        %11267 = vmatpush1.bf16.msra.mxu0 %v6934
        %11268 = vmatprep.subr.bf16.mxu0 %v6943
        %11269 = vmatpush1.bf16.msra.mxu0 %v6942
        %11270 = vmatprep.subr.bf16.mxu0 %v6951
        %11271 = vmatpush1.bf16.msra.mxu0 %v6950
        %11272 = vmatprep.subr.bf16.mxu0 %v6959
        %11273 = vmatpush1.bf16.msra.mxu0 %v6958
        %11274 = vmatprep.subr.bf16.mxu0 %v6967
        %11275 = vmatpush1.bf16.msra.mxu0 %v6966
        %11276 = vmatprep.subr.bf16.mxu0 %v6975
        %11277 = vmatpush1.bf16.msra.mxu0 %v6974
        %11278 = vmatprep.subr.bf16.mxu0 %v6983
        %11279 = vmatpush1.bf16.msra.mxu0 %v6982
        %11280 = vmatprep.subr.bf16.mxu0 %v6991
        %11281 = vmatpush1.bf16.msra.mxu0 %v6990
        %11282 = vmatprep.subr.bf16.mxu0 %v6999
        %11283 = vmatpush1.bf16.msra.mxu0 %v6998
        %11284 = vmatprep.subr.bf16.mxu0 %v7007
        %11285 = vmatpush1.bf16.msra.mxu0 %v7006
        %11286 = vmatprep.mubr.bf16.mxu0 %v1973
        %11287 = vmatmul.mubr.bf16.gmra.mrb[0].mxu0 %v1972
        %v11288 = vpop.f32.mrb[0].mxu0
        %v11289 = vadd.f32 %v11248, %v11288
        %v11290 = vpop.f32.mrb[0].mxu0
        %v11291 = vadd.f32 %v11250, %v11290
        %v11292 = vpop.f32.mrb[0].mxu0
        %v11293 = vpop.f32.mrb[0].mxu0
        %11294 = vdwg.mxu0
        %11295 = vmatprep.subr.bf16.mxu0 %v7015
        %11296 = vmatpush1.bf16.msra.mxu0 %v7014
        %11297 = vmatprep.subr.bf16.mxu0 %v7023
        %11298 = vmatpush1.bf16.msra.mxu0 %v7022
        %11299 = vmatprep.subr.bf16.mxu0 %v7031
        %11300 = vmatpush1.bf16.msra.mxu0 %v7030
        %11301 = vmatprep.subr.bf16.mxu0 %v7039
        %11302 = vmatpush1.bf16.msra.mxu0 %v7038
        %11303 = vmatprep.subr.bf16.mxu0 %v7047
        %11304 = vmatpush1.bf16.msra.mxu0 %v7046
        %11305 = vmatprep.subr.bf16.mxu0 %v7055
        %11306 = vmatpush1.bf16.msra.mxu0 %v7054
        %11307 = vmatprep.subr.bf16.mxu0 %v7063
        %11308 = vmatpush1.bf16.msra.mxu0 %v7062
        %11309 = vmatprep.subr.bf16.mxu0 %v7071
        %11310 = vmatpush1.bf16.msra.mxu0 %v7070
        %11311 = vmatprep.subr.bf16.mxu0 %v7079
        %11312 = vmatpush1.bf16.msra.mxu0 %v7078
        %11313 = vmatprep.subr.bf16.mxu0 %v7087
        %11314 = vmatpush1.bf16.msra.mxu0 %v7086
        %11315 = vmatprep.subr.bf16.mxu0 %v7095
        %11316 = vmatpush1.bf16.msra.mxu0 %v7094
        %11317 = vmatprep.subr.bf16.mxu0 %v7103
        %11318 = vmatpush1.bf16.msra.mxu0 %v7102
        %11319 = vmatprep.subr.bf16.mxu0 %v7111
        %11320 = vmatpush1.bf16.msra.mxu0 %v7110
        %11321 = vmatprep.subr.bf16.mxu0 %v7119
        %11322 = vmatpush1.bf16.msra.mxu0 %v7118
        %11323 = vmatprep.subr.bf16.mxu0 %v7127
        %11324 = vmatpush1.bf16.msra.mxu0 %v7126
        %11325 = vmatprep.subr.bf16.mxu0 %v7135
        %11326 = vmatpush1.bf16.msra.mxu0 %v7134
        %11327 = vmatprep.mubr.bf16.mxu0 %v1975
        %11328 = vmatmul.mubr.bf16.gmra.mrb[0].mxu0 %v1974
        %v11329 = vpop.f32.mrb[0].mxu0
        %v11330 = vadd.f32 %v11289, %v11329
        %v11331 = vpop.f32.mrb[0].mxu0
        %v11332 = vadd.f32 %v11291, %v11331
        %v11333 = vpop.f32.mrb[0].mxu0
        %v11334 = vpop.f32.mrb[0].mxu0
        %11335 = vdwg.mxu0
        %11336 = vmatprep.subr.bf16.mxu0 %v7143
        %11337 = vmatpush1.bf16.msra.mxu0 %v7142
        %11338 = vmatprep.subr.bf16.mxu0 %v7151
        %11339 = vmatpush1.bf16.msra.mxu0 %v7150
        %11340 = vmatprep.subr.bf16.mxu0 %v7159
        %11341 = vmatpush1.bf16.msra.mxu0 %v7158
        %11342 = vmatprep.subr.bf16.mxu0 %v7167
        %11343 = vmatpush1.bf16.msra.mxu0 %v7166
        %11344 = vmatprep.subr.bf16.mxu0 %v7175
        %11345 = vmatpush1.bf16.msra.mxu0 %v7174
        %11346 = vmatprep.subr.bf16.mxu0 %v7183
        %11347 = vmatpush1.bf16.msra.mxu0 %v7182
        %11348 = vmatprep.subr.bf16.mxu0 %v7191
        %11349 = vmatpush1.bf16.msra.mxu0 %v7190
        %11350 = vmatprep.subr.bf16.mxu0 %v7199
        %11351 = vmatpush1.bf16.msra.mxu0 %v7198
        %11352 = vmatprep.subr.bf16.mxu0 %v7207
        %11353 = vmatpush1.bf16.msra.mxu0 %v7206
        %11354 = vmatprep.subr.bf16.mxu0 %v7215
        %11355 = vmatpush1.bf16.msra.mxu0 %v7214
        %11356 = vmatprep.subr.bf16.mxu0 %v7223
        %11357 = vmatpush1.bf16.msra.mxu0 %v7222
        %11358 = vmatprep.subr.bf16.mxu0 %v7231
        %11359 = vmatpush1.bf16.msra.mxu0 %v7230
        %11360 = vmatprep.subr.bf16.mxu0 %v7239
        %11361 = vmatpush1.bf16.msra.mxu0 %v7238
        %11362 = vmatprep.subr.bf16.mxu0 %v7247
        %11363 = vmatpush1.bf16.msra.mxu0 %v7246
        %11364 = vmatprep.subr.bf16.mxu0 %v7255
        %11365 = vmatpush1.bf16.msra.mxu0 %v7254
        %11366 = vmatprep.subr.bf16.mxu0 %v7263
        %11367 = vmatpush1.bf16.msra.mxu0 %v7262
        %11368 = vmatprep.mubr.bf16.mxu0 %v1977
        %11369 = vmatmul.mubr.bf16.gmra.mrb[0].mxu0 %v1976
        %v11370 = vpop.f32.mrb[0].mxu0
        %v11371 = vadd.f32 %v11330, %v11370
        %v11372 = vpop.f32.mrb[0].mxu0
        %v11373 = vadd.f32 %v11332, %v11372
        %v11374 = vpop.f32.mrb[0].mxu0
        %v11375 = vpop.f32.mrb[0].mxu0
        %11376 = vdwg.mxu0
        %11377 = vmatprep.subr.bf16.mxu0 %v7271
        %11378 = vmatpush1.bf16.msra.mxu0 %v7270
        %11379 = vmatprep.subr.bf16.mxu0 %v7279
        %11380 = vmatpush1.bf16.msra.mxu0 %v7278
        %11381 = vmatprep.subr.bf16.mxu0 %v7287
        %11382 = vmatpush1.bf16.msra.mxu0 %v7286
        %11383 = vmatprep.subr.bf16.mxu0 %v7295
        %11384 = vmatpush1.bf16.msra.mxu0 %v7294
        %11385 = vmatprep.subr.bf16.mxu0 %v7303
        %11386 = vmatpush1.bf16.msra.mxu0 %v7302
        %11387 = vmatprep.subr.bf16.mxu0 %v7311
        %11388 = vmatpush1.bf16.msra.mxu0 %v7310
        %11389 = vmatprep.subr.bf16.mxu0 %v7319
        %11390 = vmatpush1.bf16.msra.mxu0 %v7318
        %11391 = vmatprep.subr.bf16.mxu0 %v7327
        %11392 = vmatpush1.bf16.msra.mxu0 %v7326
        %11393 = vmatprep.subr.bf16.mxu0 %v7335
        %11394 = vmatpush1.bf16.msra.mxu0 %v7334
        %11395 = vmatprep.subr.bf16.mxu0 %v7343
        %11396 = vmatpush1.bf16.msra.mxu0 %v7342
        %11397 = vmatprep.subr.bf16.mxu0 %v7351
        %11398 = vmatpush1.bf16.msra.mxu0 %v7350
        %11399 = vmatprep.subr.bf16.mxu0 %v7359
        %11400 = vmatpush1.bf16.msra.mxu0 %v7358
        %11401 = vmatprep.subr.bf16.mxu0 %v7367
        %11402 = vmatpush1.bf16.msra.mxu0 %v7366
        %11403 = vmatprep.subr.bf16.mxu0 %v7375
        %11404 = vmatpush1.bf16.msra.mxu0 %v7374
        %11405 = vmatprep.subr.bf16.mxu0 %v7383
        %11406 = vmatpush1.bf16.msra.mxu0 %v7382
        %11407 = vmatprep.subr.bf16.mxu0 %v7391
        %11408 = vmatpush1.bf16.msra.mxu0 %v7390
        %11409 = vmatprep.mubr.bf16.mxu0 %v1979
        %11410 = vmatmul.mubr.bf16.gmra.mrb[0].mxu0 %v1978
        %v11411 = vpop.f32.mrb[0].mxu0
        %v11412 = vadd.f32 %v11371, %v11411
        %v11413 = vpop.f32.mrb[0].mxu0
        %v11414 = vadd.f32 %v11373, %v11413
        %v11415 = vpop.f32.mrb[0].mxu0
        %v11416 = vpop.f32.mrb[0].mxu0
        %11417 = vdwg.mxu0
        %11418 = vmatprep.subr.bf16.mxu0 %v7399
        %11419 = vmatpush1.bf16.msra.mxu0 %v7398
        %11420 = vmatprep.subr.bf16.mxu0 %v7407
        %11421 = vmatpush1.bf16.msra.mxu0 %v7406
        %11422 = vmatprep.subr.bf16.mxu0 %v7415
        %11423 = vmatpush1.bf16.msra.mxu0 %v7414
        %11424 = vmatprep.subr.bf16.mxu0 %v7423
        %11425 = vmatpush1.bf16.msra.mxu0 %v7422
        %11426 = vmatprep.subr.bf16.mxu0 %v7431
        %11427 = vmatpush1.bf16.msra.mxu0 %v7430
        %11428 = vmatprep.subr.bf16.mxu0 %v7439
        %11429 = vmatpush1.bf16.msra.mxu0 %v7438
        %11430 = vmatprep.subr.bf16.mxu0 %v7447
        %11431 = vmatpush1.bf16.msra.mxu0 %v7446
        %11432 = vmatprep.subr.bf16.mxu0 %v7455
        %11433 = vmatpush1.bf16.msra.mxu0 %v7454
        %11434 = vmatprep.subr.bf16.mxu0 %v7463
        %11435 = vmatpush1.bf16.msra.mxu0 %v7462
        %11436 = vmatprep.subr.bf16.mxu0 %v7471
        %11437 = vmatpush1.bf16.msra.mxu0 %v7470
        %11438 = vmatprep.subr.bf16.mxu0 %v7479
        %11439 = vmatpush1.bf16.msra.mxu0 %v7478
        %11440 = vmatprep.subr.bf16.mxu0 %v7487
        %11441 = vmatpush1.bf16.msra.mxu0 %v7486
        %11442 = vmatprep.subr.bf16.mxu0 %v7495
        %11443 = vmatpush1.bf16.msra.mxu0 %v7494
        %11444 = vmatprep.subr.bf16.mxu0 %v7503
        %11445 = vmatpush1.bf16.msra.mxu0 %v7502
        %11446 = vmatprep.subr.bf16.mxu0 %v7511
        %11447 = vmatpush1.bf16.msra.mxu0 %v7510
        %11448 = vmatprep.subr.bf16.mxu0 %v7519
        %11449 = vmatpush1.bf16.msra.mxu0 %v7518
        %11450 = vmatprep.mubr.bf16.mxu0 %v1981
        %11451 = vmatmul.mubr.bf16.gmra.mrb[0].mxu0 %v1980
        %v11452 = vpop.f32.mrb[0].mxu0
        %v11453 = vadd.f32 %v11412, %v11452
        %v11454 = vpop.f32.mrb[0].mxu0
        %v11455 = vadd.f32 %v11414, %v11454
        %v11456 = vpop.f32.mrb[0].mxu0
        %v11457 = vpop.f32.mrb[0].mxu0
        %11458 = vdwg.mxu0
        %11459 = vmatprep.subr.bf16.mxu0 %v7527
        %11460 = vmatpush1.bf16.msra.mxu0 %v7526
        %11461 = vmatprep.subr.bf16.mxu0 %v7535
        %11462 = vmatpush1.bf16.msra.mxu0 %v7534
        %11463 = vmatprep.subr.bf16.mxu0 %v7543
        %11464 = vmatpush1.bf16.msra.mxu0 %v7542
        %11465 = vmatprep.subr.bf16.mxu0 %v7551
        %11466 = vmatpush1.bf16.msra.mxu0 %v7550
        %11467 = vmatprep.subr.bf16.mxu0 %v7559
        %11468 = vmatpush1.bf16.msra.mxu0 %v7558
        %11469 = vmatprep.subr.bf16.mxu0 %v7567
        %11470 = vmatpush1.bf16.msra.mxu0 %v7566
        %11471 = vmatprep.subr.bf16.mxu0 %v7575
        %11472 = vmatpush1.bf16.msra.mxu0 %v7574
        %11473 = vmatprep.subr.bf16.mxu0 %v7583
        %11474 = vmatpush1.bf16.msra.mxu0 %v7582
        %11475 = vmatprep.subr.bf16.mxu0 %v7591
        %11476 = vmatpush1.bf16.msra.mxu0 %v7590
        %11477 = vmatprep.subr.bf16.mxu0 %v7599
        %11478 = vmatpush1.bf16.msra.mxu0 %v7598
        %11479 = vmatprep.subr.bf16.mxu0 %v7607
        %11480 = vmatpush1.bf16.msra.mxu0 %v7606
        %11481 = vmatprep.subr.bf16.mxu0 %v7615
        %11482 = vmatpush1.bf16.msra.mxu0 %v7614
        %11483 = vmatprep.subr.bf16.mxu0 %v7623
        %11484 = vmatpush1.bf16.msra.mxu0 %v7622
        %11485 = vmatprep.subr.bf16.mxu0 %v7631
        %11486 = vmatpush1.bf16.msra.mxu0 %v7630
        %11487 = vmatprep.subr.bf16.mxu0 %v7639
        %11488 = vmatpush1.bf16.msra.mxu0 %v7638
        %11489 = vmatprep.subr.bf16.mxu0 %v7647
        %11490 = vmatpush1.bf16.msra.mxu0 %v7646
        %11491 = vmatprep.mubr.bf16.mxu0 %v1983
        %11492 = vmatmul.mubr.bf16.gmra.mrb[0].mxu0 %v1982
        %v11493 = vpop.f32.mrb[0].mxu0
        %v11494 = vadd.f32 %v11453, %v11493
        %v11495 = vpop.f32.mrb[0].mxu0
        %v11496 = vadd.f32 %v11455, %v11495
        %v11497 = vpop.f32.mrb[0].mxu0
        %v11498 = vpop.f32.mrb[0].mxu0
        %11499 = vdwg.mxu0
        %11500 = vmatprep.subr.bf16.mxu0 %v7655
        %11501 = vmatpush1.bf16.msra.mxu0 %v7654
        %11502 = vmatprep.subr.bf16.mxu0 %v7663
        %11503 = vmatpush1.bf16.msra.mxu0 %v7662
        %11504 = vmatprep.subr.bf16.mxu0 %v7671
        %11505 = vmatpush1.bf16.msra.mxu0 %v7670
        %11506 = vmatprep.subr.bf16.mxu0 %v7679
        %11507 = vmatpush1.bf16.msra.mxu0 %v7678
        %11508 = vmatprep.subr.bf16.mxu0 %v7687
        %11509 = vmatpush1.bf16.msra.mxu0 %v7686
        %11510 = vmatprep.subr.bf16.mxu0 %v7695
        %11511 = vmatpush1.bf16.msra.mxu0 %v7694
        %11512 = vmatprep.subr.bf16.mxu0 %v7703
        %11513 = vmatpush1.bf16.msra.mxu0 %v7702
        %11514 = vmatprep.subr.bf16.mxu0 %v7711
        %11515 = vmatpush1.bf16.msra.mxu0 %v7710
        %11516 = vmatprep.subr.bf16.mxu0 %v7719
        %11517 = vmatpush1.bf16.msra.mxu0 %v7718
        %11518 = vmatprep.subr.bf16.mxu0 %v7727
        %11519 = vmatpush1.bf16.msra.mxu0 %v7726
        %11520 = vmatprep.subr.bf16.mxu0 %v7735
        %11521 = vmatpush1.bf16.msra.mxu0 %v7734
        %11522 = vmatprep.subr.bf16.mxu0 %v7743
        %11523 = vmatpush1.bf16.msra.mxu0 %v7742
        %11524 = vmatprep.subr.bf16.mxu0 %v7751
        %11525 = vmatpush1.bf16.msra.mxu0 %v7750
        %11526 = vmatprep.subr.bf16.mxu0 %v7759
        %11527 = vmatpush1.bf16.msra.mxu0 %v7758
        %11528 = vmatprep.subr.bf16.mxu0 %v7767
        %11529 = vmatpush1.bf16.msra.mxu0 %v7766
        %11530 = vmatprep.subr.bf16.mxu0 %v7775
        %11531 = vmatpush1.bf16.msra.mxu0 %v7774
        %11532 = vmatprep.mubr.bf16.mxu0 %v1985
        %11533 = vmatmul.mubr.bf16.gmra.mrb[0].mxu0 %v1984
        %v11534 = vpop.f32.mrb[0].mxu0
        %v11535 = vadd.f32 %v11494, %v11534
        %v11536 = vpop.f32.mrb[0].mxu0
        %v11537 = vadd.f32 %v11496, %v11536
        %v11538 = vpop.f32.mrb[0].mxu0
        %v11539 = vpop.f32.mrb[0].mxu0
        %11540 = vdwg.mxu0
        %11541 = vmatprep.subr.bf16.mxu0 %v7783
        %11542 = vmatpush1.bf16.msra.mxu0 %v7782
        %11543 = vmatprep.subr.bf16.mxu0 %v7791
        %11544 = vmatpush1.bf16.msra.mxu0 %v7790
        %11545 = vmatprep.subr.bf16.mxu0 %v7799
        %11546 = vmatpush1.bf16.msra.mxu0 %v7798
        %11547 = vmatprep.subr.bf16.mxu0 %v7807
        %11548 = vmatpush1.bf16.msra.mxu0 %v7806
        %11549 = vmatprep.subr.bf16.mxu0 %v7815
        %11550 = vmatpush1.bf16.msra.mxu0 %v7814
        %11551 = vmatprep.subr.bf16.mxu0 %v7823
        %11552 = vmatpush1.bf16.msra.mxu0 %v7822
        %11553 = vmatprep.subr.bf16.mxu0 %v7831
        %11554 = vmatpush1.bf16.msra.mxu0 %v7830
        %11555 = vmatprep.subr.bf16.mxu0 %v7839
        %11556 = vmatpush1.bf16.msra.mxu0 %v7838
        %11557 = vmatprep.subr.bf16.mxu0 %v7847
        %11558 = vmatpush1.bf16.msra.mxu0 %v7846
        %11559 = vmatprep.subr.bf16.mxu0 %v7855
        %11560 = vmatpush1.bf16.msra.mxu0 %v7854
        %11561 = vmatprep.subr.bf16.mxu0 %v7863
        %11562 = vmatpush1.bf16.msra.mxu0 %v7862
        %11563 = vmatprep.subr.bf16.mxu0 %v7871
        %11564 = vmatpush1.bf16.msra.mxu0 %v7870
        %11565 = vmatprep.subr.bf16.mxu0 %v7879
        %11566 = vmatpush1.bf16.msra.mxu0 %v7878
        %11567 = vmatprep.subr.bf16.mxu0 %v7887
        %11568 = vmatpush1.bf16.msra.mxu0 %v7886
        %11569 = vmatprep.subr.bf16.mxu0 %v7895
        %11570 = vmatpush1.bf16.msra.mxu0 %v7894
        %11571 = vmatprep.subr.bf16.mxu0 %v7903
        %11572 = vmatpush1.bf16.msra.mxu0 %v7902
        %11573 = vmatprep.mubr.bf16.mxu0 %v1987
        %11574 = vmatmul.mubr.bf16.gmra.mrb[0].mxu0 %v1986
        %v11575 = vpop.f32.mrb[0].mxu0
        %v11576 = vadd.f32 %v11535, %v11575
        %v11577 = vpop.f32.mrb[0].mxu0
        %v11578 = vadd.f32 %v11537, %v11577
        %v11579 = vpop.f32.mrb[0].mxu0
        %v11580 = vpop.f32.mrb[0].mxu0
        %11581 = vdwg.mxu0
        %11582 = vmatprep.subr.bf16.mxu0 %v7911
        %11583 = vmatpush1.bf16.msra.mxu0 %v7910
        %11584 = vmatprep.subr.bf16.mxu0 %v7919
        %11585 = vmatpush1.bf16.msra.mxu0 %v7918
        %11586 = vmatprep.subr.bf16.mxu0 %v7927
        %11587 = vmatpush1.bf16.msra.mxu0 %v7926
        %11588 = vmatprep.subr.bf16.mxu0 %v7935
        %11589 = vmatpush1.bf16.msra.mxu0 %v7934
        %11590 = vmatprep.subr.bf16.mxu0 %v7943
        %11591 = vmatpush1.bf16.msra.mxu0 %v7942
        %11592 = vmatprep.subr.bf16.mxu0 %v7951
        %11593 = vmatpush1.bf16.msra.mxu0 %v7950
        %11594 = vmatprep.subr.bf16.mxu0 %v7959
        %11595 = vmatpush1.bf16.msra.mxu0 %v7958
        %11596 = vmatprep.subr.bf16.mxu0 %v7967
        %11597 = vmatpush1.bf16.msra.mxu0 %v7966
        %11598 = vmatprep.subr.bf16.mxu0 %v7975
        %11599 = vmatpush1.bf16.msra.mxu0 %v7974
        %11600 = vmatprep.subr.bf16.mxu0 %v7983
        %11601 = vmatpush1.bf16.msra.mxu0 %v7982
        %11602 = vmatprep.subr.bf16.mxu0 %v7991
        %11603 = vmatpush1.bf16.msra.mxu0 %v7990
        %11604 = vmatprep.subr.bf16.mxu0 %v7999
        %11605 = vmatpush1.bf16.msra.mxu0 %v7998
        %11606 = vmatprep.subr.bf16.mxu0 %v8007
        %11607 = vmatpush1.bf16.msra.mxu0 %v8006
        %11608 = vmatprep.subr.bf16.mxu0 %v8015
        %11609 = vmatpush1.bf16.msra.mxu0 %v8014
        %11610 = vmatprep.subr.bf16.mxu0 %v8023
        %11611 = vmatpush1.bf16.msra.mxu0 %v8022
        %11612 = vmatprep.subr.bf16.mxu0 %v8031
        %11613 = vmatpush1.bf16.msra.mxu0 %v8030
        %11614 = vmatprep.mubr.bf16.mxu0 %v1989
        %11615 = vmatmul.mubr.bf16.gmra.mrb[0].mxu0 %v1988
        %v11616 = vpop.f32.mrb[0].mxu0
        %v11617 = vadd.f32 %v11576, %v11616
        %v11618 = vpop.f32.mrb[0].mxu0
        %v11619 = vadd.f32 %v11578, %v11618
        %v11620 = vpop.f32.mrb[0].mxu0
        %v11621 = vpop.f32.mrb[0].mxu0
        %11622 = vdwg.mxu0
        %11623 = vmatprep.subr.bf16.mxu0 %v8039
        %11624 = vmatpush1.bf16.msra.mxu0 %v8038
        %11625 = vmatprep.subr.bf16.mxu0 %v8047
        %11626 = vmatpush1.bf16.msra.mxu0 %v8046
        %11627 = vmatprep.subr.bf16.mxu0 %v8055
        %11628 = vmatpush1.bf16.msra.mxu0 %v8054
        %11629 = vmatprep.subr.bf16.mxu0 %v8063
        %11630 = vmatpush1.bf16.msra.mxu0 %v8062
        %11631 = vmatprep.subr.bf16.mxu0 %v8071
        %11632 = vmatpush1.bf16.msra.mxu0 %v8070
        %11633 = vmatprep.subr.bf16.mxu0 %v8079
        %11634 = vmatpush1.bf16.msra.mxu0 %v8078
        %11635 = vmatprep.subr.bf16.mxu0 %v8087
        %11636 = vmatpush1.bf16.msra.mxu0 %v8086
        %11637 = vmatprep.subr.bf16.mxu0 %v8095
        %11638 = vmatpush1.bf16.msra.mxu0 %v8094
        %11639 = vmatprep.subr.bf16.mxu0 %v8103
        %11640 = vmatpush1.bf16.msra.mxu0 %v8102
        %11641 = vmatprep.subr.bf16.mxu0 %v8111
        %11642 = vmatpush1.bf16.msra.mxu0 %v8110
        %11643 = vmatprep.subr.bf16.mxu0 %v8119
        %11644 = vmatpush1.bf16.msra.mxu0 %v8118
        %11645 = vmatprep.subr.bf16.mxu0 %v8127
        %11646 = vmatpush1.bf16.msra.mxu0 %v8126
        %11647 = vmatprep.subr.bf16.mxu0 %v8135
        %11648 = vmatpush1.bf16.msra.mxu0 %v8134
        %11649 = vmatprep.subr.bf16.mxu0 %v8143
        %11650 = vmatpush1.bf16.msra.mxu0 %v8142
        %11651 = vmatprep.subr.bf16.mxu0 %v8151
        %11652 = vmatpush1.bf16.msra.mxu0 %v8150
        %11653 = vmatprep.subr.bf16.mxu0 %v8159
        %11654 = vmatpush1.bf16.msra.mxu0 %v8158
        %11655 = vmatprep.mubr.bf16.mxu0 %v1991
        %11656 = vmatmul.mubr.bf16.gmra.mrb[0].mxu0 %v1990
        %v11657 = vpop.f32.mrb[0].mxu0
        %v11658 = vadd.f32 %v11617, %v11657
        %v11659 = vpop.f32.mrb[0].mxu0
        %v11660 = vadd.f32 %v11619, %v11659
        %v11661 = vpop.f32.mrb[0].mxu0
        %v11662 = vpop.f32.mrb[0].mxu0
        %11663 = vdwg.mxu0
        %v11664 = vld [vmem:[%s319] sm:$0xff]
        %v11666 = vlaneseq
        %v11667 = vshrl.u32 %v11666, 7
        %v11668 = vsub.s32 0, %v11667
        %v11669 = vrot.slane %v11664, %v11668
        %v11670 = vlaneseq
        %v11671 = vshrl.u32 %v11670, 7
        %v11672 = vsub.s32 1, %v11671
        %v11673 = vrot.slane %v11664, %v11672
        %v11674 = vlaneseq
        %v11675 = vshrl.u32 %v11674, 7
        %v11676 = vsub.s32 2, %v11675
        %v11677 = vrot.slane %v11664, %v11676
        %v11678 = vlaneseq
        %v11679 = vshrl.u32 %v11678, 7
        %v11680 = vsub.s32 3, %v11679
        %v11681 = vrot.slane %v11664, %v11680
        %v11682 = vlaneseq
        %v11683 = vshrl.u32 %v11682, 7
        %v11684 = vsub.s32 4, %v11683
        %v11685 = vrot.slane %v11664, %v11684
        %v11686 = vlaneseq
        %v11687 = vshrl.u32 %v11686, 7
        %v11688 = vsub.s32 5, %v11687
        %v11689 = vrot.slane %v11664, %v11688
        %v11690 = vlaneseq
        %v11691 = vshrl.u32 %v11690, 7
        %v11692 = vsub.s32 6, %v11691
        %v11693 = vrot.slane %v11664, %v11692
        %v11694 = vlaneseq
        %v11695 = vshrl.u32 %v11694, 7
        %v11696 = vsub.s32 7, %v11695
        %v11697 = vrot.slane %v11664, %v11696
        %v11706 = vmul.f32 %v10182, %v11669
        %v11707 = vmul.f32 %v10184, %v11673
        %v11708 = vmul.f32 %v10674, %v11677
        %v11709 = vmul.f32 %v10676, %v11681
        %v11710 = vmul.f32 %v11166, %v11685
        %v11711 = vmul.f32 %v11168, %v11689
        %v11712 = vmul.f32 %v11658, %v11693
        %v11713 = vmul.f32 %v11660, %v11697
        %v11714 = vld [vmem:[%s328] sm:$0xff]
        %v11716 = vlaneseq
        %v11717 = vshrl.u32 %v11716, 7
        %v11718 = vsub.s32 0, %v11717
        %v11719 = vrot.slane %v11714, %v11718
        %v11720 = vlaneseq
        %v11721 = vshrl.u32 %v11720, 7
        %v11722 = vsub.s32 1, %v11721
        %v11723 = vrot.slane %v11714, %v11722
        %v11724 = vlaneseq
        %v11725 = vshrl.u32 %v11724, 7
        %v11726 = vsub.s32 2, %v11725
        %v11727 = vrot.slane %v11714, %v11726
        %v11728 = vlaneseq
        %v11729 = vshrl.u32 %v11728, 7
        %v11730 = vsub.s32 3, %v11729
        %v11731 = vrot.slane %v11714, %v11730
        %v11732 = vlaneseq
        %v11733 = vshrl.u32 %v11732, 7
        %v11734 = vsub.s32 4, %v11733
        %v11735 = vrot.slane %v11714, %v11734
        %v11736 = vlaneseq
        %v11737 = vshrl.u32 %v11736, 7
        %v11738 = vsub.s32 5, %v11737
        %v11739 = vrot.slane %v11714, %v11738
        %v11740 = vlaneseq
        %v11741 = vshrl.u32 %v11740, 7
        %v11742 = vsub.s32 6, %v11741
        %v11743 = vrot.slane %v11714, %v11742
        %v11744 = vlaneseq
        %v11745 = vshrl.u32 %v11744, 7
        %v11746 = vsub.s32 7, %v11745
        %v11747 = vrot.slane %v11714, %v11746
        %v11756 = vadd.f32 %v11706, %v11719
        %v11757 = vadd.f32 %v11707, %v11723
        %v11758 = vadd.f32 %v11708, %v11727
        %v11759 = vadd.f32 %v11709, %v11731
        %v11760 = vadd.f32 %v11710, %v11735
        %v11761 = vadd.f32 %v11711, %v11739
        %v11762 = vadd.f32 %v11712, %v11743
        %v11763 = vadd.f32 %v11713, %v11747
        %v11764 = vmax.f32 %v11756, 0.0
        %v11765 = vmax.f32 %v11757, 0.0
        %v11766 = vmax.f32 %v11758, 0.0
        %v11767 = vmax.f32 %v11759, 0.0
        %v11768 = vmax.f32 %v11760, 0.0
        %v11769 = vmax.f32 %v11761, 0.0
        %v11770 = vmax.f32 %v11762, 0.0
        %v11771 = vmax.f32 %v11763, 0.0
        %v11772 = vpack.c.bf16 %v11764, %v11764
        %v11773 = vpack.c.bf16 %v11765, %v11765
        %v11774 = vpack.c.bf16 %v11766, %v11766
        %v11775 = vpack.c.bf16 %v11767, %v11767
        %v11776 = vpack.c.bf16 %v11768, %v11768
        %v11777 = vpack.c.bf16 %v11769, %v11769
        %v11778 = vpack.c.bf16 %v11770, %v11770
        %v11779 = vpack.c.bf16 %v11771, %v11771
        %v11780 = vld [vmem:[%s380] sm:$0xf]
        %v11781 = vld [vmem:[%s380 + $0x4] sm:$0xf]
        %v11782 = vld [vmem:[%s380 + $0x8] sm:$0xf]
        %v11783 = vld [vmem:[%s380 + $0xc] sm:$0xf]
        %v11784 = vld [vmem:[%s380 + $0x10] sm:$0xf]
        %v11785 = vld [vmem:[%s380 + $0x14] sm:$0xf]
        %v11786 = vld [vmem:[%s380 + $0x18] sm:$0xf]
        %v11787 = vld [vmem:[%s380 + $0x1c] sm:$0xf]
        %v11788 = vld [vmem:[%s380 + $0x20] sm:$0xf]
        %v11789 = vld [vmem:[%s380 + $0x24] sm:$0xf]
        %v11790 = vld [vmem:[%s380 + $0x28] sm:$0xf]
        %v11791 = vld [vmem:[%s380 + $0x2c] sm:$0xf]
        %v11792 = vld [vmem:[%s380 + $0x30] sm:$0xf]
        %v11793 = vld [vmem:[%s380 + $0x34] sm:$0xf]
        %v11794 = vld [vmem:[%s380 + $0x38] sm:$0xf]
        %v11795 = vld [vmem:[%s380 + $0x3c] sm:$0xf]
        %v11796 = vld [vmem:[%s380 + $0x40] sm:$0xf]
        %v11797 = vld [vmem:[%s380 + $0x44] sm:$0xf]
        %v11798 = vld [vmem:[%s380 + $0x48] sm:$0xf]
        %v11799 = vld [vmem:[%s380 + $0x4c] sm:$0xf]
        %v11800 = vld [vmem:[%s380 + $0x50] sm:$0xf]
        %v11801 = vld [vmem:[%s380 + $0x54] sm:$0xf]
        %v11802 = vld [vmem:[%s380 + $0x58] sm:$0xf]
        %v11803 = vld [vmem:[%s380 + $0x5c] sm:$0xf]
        %v11804 = vld [vmem:[%s380 + $0x60] sm:$0xf]
        %v11805 = vld [vmem:[%s380 + $0x64] sm:$0xf]
        %v11806 = vld [vmem:[%s380 + $0x68] sm:$0xf]
        %v11807 = vld [vmem:[%s380 + $0x6c] sm:$0xf]
        %v11808 = vld [vmem:[%s380 + $0x70] sm:$0xf]
        %v11809 = vld [vmem:[%s380 + $0x74] sm:$0xf]
        %v11810 = vld [vmem:[%s380 + $0x78] sm:$0xf]
        %v11811 = vld [vmem:[%s380 + $0x7c] sm:$0xf]
        %v11812 = vld [vmem:[%s380 + $0x80] sm:$0xf]
        %v11813 = vld [vmem:[%s380 + $0x84] sm:$0xf]
        %v11814 = vld [vmem:[%s380 + $0x88] sm:$0xf]
        %v11815 = vld [vmem:[%s380 + $0x8c] sm:$0xf]
        %v11816 = vld [vmem:[%s380 + $0x90] sm:$0xf]
        %v11817 = vld [vmem:[%s380 + $0x94] sm:$0xf]
        %v11818 = vld [vmem:[%s380 + $0x98] sm:$0xf]
        %v11819 = vld [vmem:[%s380 + $0x9c] sm:$0xf]
        %v11820 = vld [vmem:[%s380 + $0xa0] sm:$0xf]
        %v11821 = vld [vmem:[%s380 + $0xa4] sm:$0xf]
        %v11822 = vld [vmem:[%s380 + $0xa8] sm:$0xf]
        %v11823 = vld [vmem:[%s380 + $0xac] sm:$0xf]
        %v11824 = vld [vmem:[%s380 + $0xb0] sm:$0xf]
        %v11825 = vld [vmem:[%s380 + $0xb4] sm:$0xf]
        %v11826 = vld [vmem:[%s380 + $0xb8] sm:$0xf]
        %v11827 = vld [vmem:[%s380 + $0xbc] sm:$0xf]
        %v11828 = vld [vmem:[%s380 + $0xc0] sm:$0xf]
        %v11829 = vld [vmem:[%s380 + $0xc4] sm:$0xf]
        %v11830 = vld [vmem:[%s380 + $0xc8] sm:$0xf]
        %v11831 = vld [vmem:[%s380 + $0xcc] sm:$0xf]
        %v11832 = vld [vmem:[%s380 + $0xd0] sm:$0xf]
        %v11833 = vld [vmem:[%s380 + $0xd4] sm:$0xf]
        %v11834 = vld [vmem:[%s380 + $0xd8] sm:$0xf]
        %v11835 = vld [vmem:[%s380 + $0xdc] sm:$0xf]
        %v11836 = vld [vmem:[%s380 + $0xe0] sm:$0xf]
        %v11837 = vld [vmem:[%s380 + $0xe4] sm:$0xf]
        %v11838 = vld [vmem:[%s380 + $0xe8] sm:$0xf]
        %v11839 = vld [vmem:[%s380 + $0xec] sm:$0xf]
        %v11840 = vld [vmem:[%s380 + $0xf0] sm:$0xf]
        %v11841 = vld [vmem:[%s380 + $0xf4] sm:$0xf]
        %v11842 = vld [vmem:[%s380 + $0xf8] sm:$0xf]
        %v11843 = vld [vmem:[%s380 + $0xfc] sm:$0xf]
        %v11844 = vld [vmem:[%s380 + $0x100] sm:$0xf]
        %v11845 = vld [vmem:[%s380 + $0x104] sm:$0xf]
        %v11846 = vld [vmem:[%s380 + $0x108] sm:$0xf]
        %v11847 = vld [vmem:[%s380 + $0x10c] sm:$0xf]
        %v11848 = vld [vmem:[%s380 + $0x110] sm:$0xf]
        %v11849 = vld [vmem:[%s380 + $0x114] sm:$0xf]
        %v11850 = vld [vmem:[%s380 + $0x118] sm:$0xf]
        %v11851 = vld [vmem:[%s380 + $0x11c] sm:$0xf]
        %v11852 = vld [vmem:[%s380 + $0x120] sm:$0xf]
        %v11853 = vld [vmem:[%s380 + $0x124] sm:$0xf]
        %v11854 = vld [vmem:[%s380 + $0x128] sm:$0xf]
        %v11855 = vld [vmem:[%s380 + $0x12c] sm:$0xf]
        %v11856 = vld [vmem:[%s380 + $0x130] sm:$0xf]
        %v11857 = vld [vmem:[%s380 + $0x134] sm:$0xf]
        %v11858 = vld [vmem:[%s380 + $0x138] sm:$0xf]
        %v11859 = vld [vmem:[%s380 + $0x13c] sm:$0xf]
        %v11860 = vld [vmem:[%s380 + $0x140] sm:$0xf]
        %v11861 = vld [vmem:[%s380 + $0x144] sm:$0xf]
        %v11862 = vld [vmem:[%s380 + $0x148] sm:$0xf]
        %v11863 = vld [vmem:[%s380 + $0x14c] sm:$0xf]
        %v11864 = vld [vmem:[%s380 + $0x150] sm:$0xf]
        %v11865 = vld [vmem:[%s380 + $0x154] sm:$0xf]
        %v11866 = vld [vmem:[%s380 + $0x158] sm:$0xf]
        %v11867 = vld [vmem:[%s380 + $0x15c] sm:$0xf]
        %v11868 = vld [vmem:[%s380 + $0x160] sm:$0xf]
        %v11869 = vld [vmem:[%s380 + $0x164] sm:$0xf]
        %v11870 = vld [vmem:[%s380 + $0x168] sm:$0xf]
        %v11871 = vld [vmem:[%s380 + $0x16c] sm:$0xf]
        %v11872 = vld [vmem:[%s380 + $0x170] sm:$0xf]
        %v11873 = vld [vmem:[%s380 + $0x174] sm:$0xf]
        %v11874 = vld [vmem:[%s380 + $0x178] sm:$0xf]
        %v11875 = vld [vmem:[%s380 + $0x17c] sm:$0xf]
        %v11876 = vld [vmem:[%s380 + $0x180] sm:$0xf]
        %v11877 = vld [vmem:[%s380 + $0x184] sm:$0xf]
        %v11878 = vld [vmem:[%s380 + $0x188] sm:$0xf]
        %v11879 = vld [vmem:[%s380 + $0x18c] sm:$0xf]
        %v11880 = vld [vmem:[%s380 + $0x190] sm:$0xf]
        %v11881 = vld [vmem:[%s380 + $0x194] sm:$0xf]
        %v11882 = vld [vmem:[%s380 + $0x198] sm:$0xf]
        %v11883 = vld [vmem:[%s380 + $0x19c] sm:$0xf]
        %v11884 = vld [vmem:[%s380 + $0x1a0] sm:$0xf]
        %v11885 = vld [vmem:[%s380 + $0x1a4] sm:$0xf]
        %v11886 = vld [vmem:[%s380 + $0x1a8] sm:$0xf]
        %v11887 = vld [vmem:[%s380 + $0x1ac] sm:$0xf]
        %v11888 = vld [vmem:[%s380 + $0x1b0] sm:$0xf]
        %v11889 = vld [vmem:[%s380 + $0x1b4] sm:$0xf]
        %v11890 = vld [vmem:[%s380 + $0x1b8] sm:$0xf]
        %v11891 = vld [vmem:[%s380 + $0x1bc] sm:$0xf]
        %v11892 = vld [vmem:[%s380 + $0x1c0] sm:$0xf]
        %v11893 = vld [vmem:[%s380 + $0x1c4] sm:$0xf]
        %v11894 = vld [vmem:[%s380 + $0x1c8] sm:$0xf]
        %v11895 = vld [vmem:[%s380 + $0x1cc] sm:$0xf]
        %v11896 = vld [vmem:[%s380 + $0x1d0] sm:$0xf]
        %v11897 = vld [vmem:[%s380 + $0x1d4] sm:$0xf]
        %v11898 = vld [vmem:[%s380 + $0x1d8] sm:$0xf]
        %v11899 = vld [vmem:[%s380 + $0x1dc] sm:$0xf]
        %v11900 = vld [vmem:[%s380 + $0x1e0] sm:$0xf]
        %v11901 = vld [vmem:[%s380 + $0x1e4] sm:$0xf]
        %v11902 = vld [vmem:[%s380 + $0x1e8] sm:$0xf]
        %v11903 = vld [vmem:[%s380 + $0x1ec] sm:$0xf]
        %v11904 = vld [vmem:[%s380 + $0x1f0] sm:$0xf]
        %v11905 = vld [vmem:[%s380 + $0x1f4] sm:$0xf]
        %v11906 = vld [vmem:[%s380 + $0x1f8] sm:$0xf]
        %v11907 = vld [vmem:[%s380 + $0x1fc] sm:$0xf]
        %v12036 = vunpack.c.l.b16 %v11780
        %v12037 = vunpack.c.l.b16 %v11781
        %v12038 = vunpack.c.l.b16 %v11782
        %v12039 = vunpack.c.l.b16 %v11783
        %v12040 = vunpack.c.l.b16 %v11784
        %v12041 = vunpack.c.l.b16 %v11785
        %v12042 = vunpack.c.l.b16 %v11786
        %v12043 = vunpack.c.l.b16 %v11787
        %v12044 = vunpack.c.l.b16 %v11788
        %v12045 = vunpack.c.l.b16 %v11789
        %v12046 = vunpack.c.l.b16 %v11790
        %v12047 = vunpack.c.l.b16 %v11791
        %v12048 = vunpack.c.l.b16 %v11792
        %v12049 = vunpack.c.l.b16 %v11793
        %v12050 = vunpack.c.l.b16 %v11794
        %v12051 = vunpack.c.l.b16 %v11795
        %v12052 = vunpack.c.l.b16 %v11796
        %v12053 = vunpack.c.l.b16 %v11797
        %v12054 = vunpack.c.l.b16 %v11798
        %v12055 = vunpack.c.l.b16 %v11799
        %v12056 = vunpack.c.l.b16 %v11800
        %v12057 = vunpack.c.l.b16 %v11801
        %v12058 = vunpack.c.l.b16 %v11802
        %v12059 = vunpack.c.l.b16 %v11803
        %v12060 = vunpack.c.l.b16 %v11804
        %v12061 = vunpack.c.l.b16 %v11805
        %v12062 = vunpack.c.l.b16 %v11806
        %v12063 = vunpack.c.l.b16 %v11807
        %v12064 = vunpack.c.l.b16 %v11808
        %v12065 = vunpack.c.l.b16 %v11809
        %v12066 = vunpack.c.l.b16 %v11810
        %v12067 = vunpack.c.l.b16 %v11811
        %v12068 = vunpack.c.l.b16 %v11812
        %v12069 = vunpack.c.l.b16 %v11813
        %v12070 = vunpack.c.l.b16 %v11814
        %v12071 = vunpack.c.l.b16 %v11815
        %v12072 = vunpack.c.l.b16 %v11816
        %v12073 = vunpack.c.l.b16 %v11817
        %v12074 = vunpack.c.l.b16 %v11818
        %v12075 = vunpack.c.l.b16 %v11819
        %v12076 = vunpack.c.l.b16 %v11820
        %v12077 = vunpack.c.l.b16 %v11821
        %v12078 = vunpack.c.l.b16 %v11822
        %v12079 = vunpack.c.l.b16 %v11823
        %v12080 = vunpack.c.l.b16 %v11824
        %v12081 = vunpack.c.l.b16 %v11825
        %v12082 = vunpack.c.l.b16 %v11826
        %v12083 = vunpack.c.l.b16 %v11827
        %v12084 = vunpack.c.l.b16 %v11828
        %v12085 = vunpack.c.l.b16 %v11829
        %v12086 = vunpack.c.l.b16 %v11830
        %v12087 = vunpack.c.l.b16 %v11831
        %v12088 = vunpack.c.l.b16 %v11832
        %v12089 = vunpack.c.l.b16 %v11833
        %v12090 = vunpack.c.l.b16 %v11834
        %v12091 = vunpack.c.l.b16 %v11835
        %v12092 = vunpack.c.l.b16 %v11836
        %v12093 = vunpack.c.l.b16 %v11837
        %v12094 = vunpack.c.l.b16 %v11838
        %v12095 = vunpack.c.l.b16 %v11839
        %v12096 = vunpack.c.l.b16 %v11840
        %v12097 = vunpack.c.l.b16 %v11841
        %v12098 = vunpack.c.l.b16 %v11842
        %v12099 = vunpack.c.l.b16 %v11843
        %v12100 = vunpack.c.l.b16 %v11844
        %v12101 = vunpack.c.l.b16 %v11845
        %v12102 = vunpack.c.l.b16 %v11846
        %v12103 = vunpack.c.l.b16 %v11847
        %v12104 = vunpack.c.l.b16 %v11848
        %v12105 = vunpack.c.l.b16 %v11849
        %v12106 = vunpack.c.l.b16 %v11850
        %v12107 = vunpack.c.l.b16 %v11851
        %v12108 = vunpack.c.l.b16 %v11852
        %v12109 = vunpack.c.l.b16 %v11853
        %v12110 = vunpack.c.l.b16 %v11854
        %v12111 = vunpack.c.l.b16 %v11855
        %v12112 = vunpack.c.l.b16 %v11856
        %v12113 = vunpack.c.l.b16 %v11857
        %v12114 = vunpack.c.l.b16 %v11858
        %v12115 = vunpack.c.l.b16 %v11859
        %v12116 = vunpack.c.l.b16 %v11860
        %v12117 = vunpack.c.l.b16 %v11861
        %v12118 = vunpack.c.l.b16 %v11862
        %v12119 = vunpack.c.l.b16 %v11863
        %v12120 = vunpack.c.l.b16 %v11864
        %v12121 = vunpack.c.l.b16 %v11865
        %v12122 = vunpack.c.l.b16 %v11866
        %v12123 = vunpack.c.l.b16 %v11867
        %v12124 = vunpack.c.l.b16 %v11868
        %v12125 = vunpack.c.l.b16 %v11869
        %v12126 = vunpack.c.l.b16 %v11870
        %v12127 = vunpack.c.l.b16 %v11871
        %v12128 = vunpack.c.l.b16 %v11872
        %v12129 = vunpack.c.l.b16 %v11873
        %v12130 = vunpack.c.l.b16 %v11874
        %v12131 = vunpack.c.l.b16 %v11875
        %v12132 = vunpack.c.l.b16 %v11876
        %v12133 = vunpack.c.l.b16 %v11877
        %v12134 = vunpack.c.l.b16 %v11878
        %v12135 = vunpack.c.l.b16 %v11879
        %v12136 = vunpack.c.l.b16 %v11880
        %v12137 = vunpack.c.l.b16 %v11881
        %v12138 = vunpack.c.l.b16 %v11882
        %v12139 = vunpack.c.l.b16 %v11883
        %v12140 = vunpack.c.l.b16 %v11884
        %v12141 = vunpack.c.l.b16 %v11885
        %v12142 = vunpack.c.l.b16 %v11886
        %v12143 = vunpack.c.l.b16 %v11887
        %v12144 = vunpack.c.l.b16 %v11888
        %v12145 = vunpack.c.l.b16 %v11889
        %v12146 = vunpack.c.l.b16 %v11890
        %v12147 = vunpack.c.l.b16 %v11891
        %v12148 = vunpack.c.l.b16 %v11892
        %v12149 = vunpack.c.l.b16 %v11893
        %v12150 = vunpack.c.l.b16 %v11894
        %v12151 = vunpack.c.l.b16 %v11895
        %v12152 = vunpack.c.l.b16 %v11896
        %v12153 = vunpack.c.l.b16 %v11897
        %v12154 = vunpack.c.l.b16 %v11898
        %v12155 = vunpack.c.l.b16 %v11899
        %v12156 = vunpack.c.l.b16 %v11900
        %v12157 = vunpack.c.l.b16 %v11901
        %v12158 = vunpack.c.l.b16 %v11902
        %v12159 = vunpack.c.l.b16 %v11903
        %v12160 = vunpack.c.l.b16 %v11904
        %v12161 = vunpack.c.l.b16 %v11905
        %v12162 = vunpack.c.l.b16 %v11906
        %v12163 = vunpack.c.l.b16 %v11907
        %v12164 = vpack.c.b16 %v12037, %v12036
        %v12165 = vpack.c.b16 %v12039, %v12038
        %v12166 = vpack.c.b16 %v12041, %v12040
        %v12167 = vpack.c.b16 %v12043, %v12042
        %v12168 = vpack.c.b16 %v12045, %v12044
        %v12169 = vpack.c.b16 %v12047, %v12046
        %v12170 = vpack.c.b16 %v12049, %v12048
        %v12171 = vpack.c.b16 %v12051, %v12050
        %v12172 = vpack.c.b16 %v12053, %v12052
        %v12173 = vpack.c.b16 %v12055, %v12054
        %v12174 = vpack.c.b16 %v12057, %v12056
        %v12175 = vpack.c.b16 %v12059, %v12058
        %v12176 = vpack.c.b16 %v12061, %v12060
        %v12177 = vpack.c.b16 %v12063, %v12062
        %v12178 = vpack.c.b16 %v12065, %v12064
        %v12179 = vpack.c.b16 %v12067, %v12066
        %v12180 = vpack.c.b16 %v12069, %v12068
        %v12181 = vpack.c.b16 %v12071, %v12070
        %v12182 = vpack.c.b16 %v12073, %v12072
        %v12183 = vpack.c.b16 %v12075, %v12074
        %v12184 = vpack.c.b16 %v12077, %v12076
        %v12185 = vpack.c.b16 %v12079, %v12078
        %v12186 = vpack.c.b16 %v12081, %v12080
        %v12187 = vpack.c.b16 %v12083, %v12082
        %v12188 = vpack.c.b16 %v12085, %v12084
        %v12189 = vpack.c.b16 %v12087, %v12086
        %v12190 = vpack.c.b16 %v12089, %v12088
        %v12191 = vpack.c.b16 %v12091, %v12090
        %v12192 = vpack.c.b16 %v12093, %v12092
        %v12193 = vpack.c.b16 %v12095, %v12094
        %v12194 = vpack.c.b16 %v12097, %v12096
        %v12195 = vpack.c.b16 %v12099, %v12098
        %v12196 = vpack.c.b16 %v12101, %v12100
        %v12197 = vpack.c.b16 %v12103, %v12102
        %v12198 = vpack.c.b16 %v12105, %v12104
        %v12199 = vpack.c.b16 %v12107, %v12106
        %v12200 = vpack.c.b16 %v12109, %v12108
        %v12201 = vpack.c.b16 %v12111, %v12110
        %v12202 = vpack.c.b16 %v12113, %v12112
        %v12203 = vpack.c.b16 %v12115, %v12114
        %v12204 = vpack.c.b16 %v12117, %v12116
        %v12205 = vpack.c.b16 %v12119, %v12118
        %v12206 = vpack.c.b16 %v12121, %v12120
        %v12207 = vpack.c.b16 %v12123, %v12122
        %v12208 = vpack.c.b16 %v12125, %v12124
        %v12209 = vpack.c.b16 %v12127, %v12126
        %v12210 = vpack.c.b16 %v12129, %v12128
        %v12211 = vpack.c.b16 %v12131, %v12130
        %v12212 = vpack.c.b16 %v12133, %v12132
        %v12213 = vpack.c.b16 %v12135, %v12134
        %v12214 = vpack.c.b16 %v12137, %v12136
        %v12215 = vpack.c.b16 %v12139, %v12138
        %v12216 = vpack.c.b16 %v12141, %v12140
        %v12217 = vpack.c.b16 %v12143, %v12142
        %v12218 = vpack.c.b16 %v12145, %v12144
        %v12219 = vpack.c.b16 %v12147, %v12146
        %v12220 = vpack.c.b16 %v12149, %v12148
        %v12221 = vpack.c.b16 %v12151, %v12150
        %v12222 = vpack.c.b16 %v12153, %v12152
        %v12223 = vpack.c.b16 %v12155, %v12154
        %v12224 = vpack.c.b16 %v12157, %v12156
        %v12225 = vpack.c.b16 %v12159, %v12158
        %v12226 = vpack.c.b16 %v12161, %v12160
        %v12227 = vpack.c.b16 %v12163, %v12162
        %12292 = vmatprep.subr.bf16.mxu0 0
        %12293 = vmatpush1.bf16.msra.mxu0 %v12164
        %12294 = vmatprep.subr.bf16.mxu0 0
        %12295 = vmatpush1.bf16.msra.mxu0 %v12165
        %12296 = vmatprep.subr.bf16.mxu0 0
        %12297 = vmatpush1.bf16.msra.mxu0 %v12166
        %12298 = vmatprep.subr.bf16.mxu0 0
        %12299 = vmatpush1.bf16.msra.mxu0 %v12167
        %12300 = vmatprep.subr.bf16.mxu0 0
        %12301 = vmatpush1.bf16.msra.mxu0 %v12168
        %12302 = vmatprep.subr.bf16.mxu0 0
        %12303 = vmatpush1.bf16.msra.mxu0 %v12169
        %12304 = vmatprep.subr.bf16.mxu0 0
        %12305 = vmatpush1.bf16.msra.mxu0 %v12170
        %12306 = vmatprep.subr.bf16.mxu0 0
        %12307 = vmatpush1.bf16.msra.mxu0 %v12171
        %12308 = vmatprep.subr.bf16.mxu0 0
        %12309 = vmatpush1.bf16.msra.mxu0 %v12172
        %12310 = vmatprep.subr.bf16.mxu0 0
        %12311 = vmatpush1.bf16.msra.mxu0 %v12173
        %12312 = vmatprep.subr.bf16.mxu0 0
        %12313 = vmatpush1.bf16.msra.mxu0 %v12174
        %12314 = vmatprep.subr.bf16.mxu0 0
        %12315 = vmatpush1.bf16.msra.mxu0 %v12175
        %12316 = vmatprep.subr.bf16.mxu0 0
        %12317 = vmatpush1.bf16.msra.mxu0 %v12176
        %12318 = vmatprep.subr.bf16.mxu0 0
        %12319 = vmatpush1.bf16.msra.mxu0 %v12177
        %12320 = vmatprep.subr.bf16.mxu0 0
        %12321 = vmatpush1.bf16.msra.mxu0 %v12178
        %12322 = vmatprep.subr.bf16.mxu0 0
        %12323 = vmatpush1.bf16.msra.mxu0 %v12179
        %12324 = vmatprep.mubr.bf16.mxu0 %v11773
        %12325 = vmatmul.mubr.bf16.gmra.mrb[0].mxu0 %v11772
        %v12326 = vpop.f32.mrb[0].mxu0
        %v12327 = vadd.f32 0.0, %v12326
        %v12328 = vpop.f32.mrb[0].mxu0
        %v12329 = vpop.f32.mrb[0].mxu0
        %v12330 = vpop.f32.mrb[0].mxu0
        %12331 = vdwg.mxu0
        %12332 = vmatprep.subr.bf16.mxu0 0
        %12333 = vmatpush1.bf16.msra.mxu0 %v12180
        %12334 = vmatprep.subr.bf16.mxu0 0
        %12335 = vmatpush1.bf16.msra.mxu0 %v12181
        %12336 = vmatprep.subr.bf16.mxu0 0
        %12337 = vmatpush1.bf16.msra.mxu0 %v12182
        %12338 = vmatprep.subr.bf16.mxu0 0
        %12339 = vmatpush1.bf16.msra.mxu0 %v12183
        %12340 = vmatprep.subr.bf16.mxu0 0
        %12341 = vmatpush1.bf16.msra.mxu0 %v12184
        %12342 = vmatprep.subr.bf16.mxu0 0
        %12343 = vmatpush1.bf16.msra.mxu0 %v12185
        %12344 = vmatprep.subr.bf16.mxu0 0
        %12345 = vmatpush1.bf16.msra.mxu0 %v12186
        %12346 = vmatprep.subr.bf16.mxu0 0
        %12347 = vmatpush1.bf16.msra.mxu0 %v12187
        %12348 = vmatprep.subr.bf16.mxu0 0
        %12349 = vmatpush1.bf16.msra.mxu0 %v12188
        %12350 = vmatprep.subr.bf16.mxu0 0
        %12351 = vmatpush1.bf16.msra.mxu0 %v12189
        %12352 = vmatprep.subr.bf16.mxu0 0
        %12353 = vmatpush1.bf16.msra.mxu0 %v12190
        %12354 = vmatprep.subr.bf16.mxu0 0
        %12355 = vmatpush1.bf16.msra.mxu0 %v12191
        %12356 = vmatprep.subr.bf16.mxu0 0
        %12357 = vmatpush1.bf16.msra.mxu0 %v12192
        %12358 = vmatprep.subr.bf16.mxu0 0
        %12359 = vmatpush1.bf16.msra.mxu0 %v12193
        %12360 = vmatprep.subr.bf16.mxu0 0
        %12361 = vmatpush1.bf16.msra.mxu0 %v12194
        %12362 = vmatprep.subr.bf16.mxu0 0
        %12363 = vmatpush1.bf16.msra.mxu0 %v12195
        %12364 = vmatprep.mubr.bf16.mxu0 %v11775
        %12365 = vmatmul.mubr.bf16.gmra.mrb[0].mxu0 %v11774
        %v12366 = vpop.f32.mrb[0].mxu0
        %v12367 = vadd.f32 %v12327, %v12366
        %v12368 = vpop.f32.mrb[0].mxu0
        %v12369 = vpop.f32.mrb[0].mxu0
        %v12370 = vpop.f32.mrb[0].mxu0
        %12371 = vdwg.mxu0
        %12372 = vmatprep.subr.bf16.mxu0 0
        %12373 = vmatpush1.bf16.msra.mxu0 %v12196
        %12374 = vmatprep.subr.bf16.mxu0 0
        %12375 = vmatpush1.bf16.msra.mxu0 %v12197
        %12376 = vmatprep.subr.bf16.mxu0 0
        %12377 = vmatpush1.bf16.msra.mxu0 %v12198
        %12378 = vmatprep.subr.bf16.mxu0 0
        %12379 = vmatpush1.bf16.msra.mxu0 %v12199
        %12380 = vmatprep.subr.bf16.mxu0 0
        %12381 = vmatpush1.bf16.msra.mxu0 %v12200
        %12382 = vmatprep.subr.bf16.mxu0 0
        %12383 = vmatpush1.bf16.msra.mxu0 %v12201
        %12384 = vmatprep.subr.bf16.mxu0 0
        %12385 = vmatpush1.bf16.msra.mxu0 %v12202
        %12386 = vmatprep.subr.bf16.mxu0 0
        %12387 = vmatpush1.bf16.msra.mxu0 %v12203
        %12388 = vmatprep.subr.bf16.mxu0 0
        %12389 = vmatpush1.bf16.msra.mxu0 %v12204
        %12390 = vmatprep.subr.bf16.mxu0 0
        %12391 = vmatpush1.bf16.msra.mxu0 %v12205
        %12392 = vmatprep.subr.bf16.mxu0 0
        %12393 = vmatpush1.bf16.msra.mxu0 %v12206
        %12394 = vmatprep.subr.bf16.mxu0 0
        %12395 = vmatpush1.bf16.msra.mxu0 %v12207
        %12396 = vmatprep.subr.bf16.mxu0 0
        %12397 = vmatpush1.bf16.msra.mxu0 %v12208
        %12398 = vmatprep.subr.bf16.mxu0 0
        %12399 = vmatpush1.bf16.msra.mxu0 %v12209
        %12400 = vmatprep.subr.bf16.mxu0 0
        %12401 = vmatpush1.bf16.msra.mxu0 %v12210
        %12402 = vmatprep.subr.bf16.mxu0 0
        %12403 = vmatpush1.bf16.msra.mxu0 %v12211
        %12404 = vmatprep.mubr.bf16.mxu0 %v11777
        %12405 = vmatmul.mubr.bf16.gmra.mrb[0].mxu0 %v11776
        %v12406 = vpop.f32.mrb[0].mxu0
        %v12407 = vadd.f32 %v12367, %v12406
        %v12408 = vpop.f32.mrb[0].mxu0
        %v12409 = vpop.f32.mrb[0].mxu0
        %v12410 = vpop.f32.mrb[0].mxu0
        %12411 = vdwg.mxu0
        %12412 = vmatprep.subr.bf16.mxu0 0
        %12413 = vmatpush1.bf16.msra.mxu0 %v12212
        %12414 = vmatprep.subr.bf16.mxu0 0
        %12415 = vmatpush1.bf16.msra.mxu0 %v12213
        %12416 = vmatprep.subr.bf16.mxu0 0
        %12417 = vmatpush1.bf16.msra.mxu0 %v12214
        %12418 = vmatprep.subr.bf16.mxu0 0
        %12419 = vmatpush1.bf16.msra.mxu0 %v12215
        %12420 = vmatprep.subr.bf16.mxu0 0
        %12421 = vmatpush1.bf16.msra.mxu0 %v12216
        %12422 = vmatprep.subr.bf16.mxu0 0
        %12423 = vmatpush1.bf16.msra.mxu0 %v12217
        %12424 = vmatprep.subr.bf16.mxu0 0
        %12425 = vmatpush1.bf16.msra.mxu0 %v12218
        %12426 = vmatprep.subr.bf16.mxu0 0
        %12427 = vmatpush1.bf16.msra.mxu0 %v12219
        %12428 = vmatprep.subr.bf16.mxu0 0
        %12429 = vmatpush1.bf16.msra.mxu0 %v12220
        %12430 = vmatprep.subr.bf16.mxu0 0
        %12431 = vmatpush1.bf16.msra.mxu0 %v12221
        %12432 = vmatprep.subr.bf16.mxu0 0
        %12433 = vmatpush1.bf16.msra.mxu0 %v12222
        %12434 = vmatprep.subr.bf16.mxu0 0
        %12435 = vmatpush1.bf16.msra.mxu0 %v12223
        %12436 = vmatprep.subr.bf16.mxu0 0
        %12437 = vmatpush1.bf16.msra.mxu0 %v12224
        %12438 = vmatprep.subr.bf16.mxu0 0
        %12439 = vmatpush1.bf16.msra.mxu0 %v12225
        %12440 = vmatprep.subr.bf16.mxu0 0
        %12441 = vmatpush1.bf16.msra.mxu0 %v12226
        %12442 = vmatprep.subr.bf16.mxu0 0
        %12443 = vmatpush1.bf16.msra.mxu0 %v12227
        %12444 = vmatprep.mubr.bf16.mxu0 %v11779
        %12445 = vmatmul.mubr.bf16.gmra.mrb[0].mxu0 %v11778
        %v12446 = vpop.f32.mrb[0].mxu0
        %v12447 = vadd.f32 %v12407, %v12446
        %v12448 = vpop.f32.mrb[0].mxu0
        %v12449 = vpop.f32.mrb[0].mxu0
        %v12450 = vpop.f32.mrb[0].mxu0
        %12451 = vdwg.mxu0
        %p12452 = scmp.eq.s32.totalorder %s31, 0
        // Predicated region
        $region57: #{tpu_custom_call.1} parent=39 // pred_check
          %p12453 = pneg %p12452
        $region58: #{tpu_custom_call.1} parent=39 // pred_check_branch
          %12455 = sbr.rel (%p12453) target = $region60
        $region59: #{tpu_custom_call.1} parent=39 // pred_region
          %vm12456 = vcmask 80896
          %12457 = vst.msk [vmem:[%s370] sm:$0xff] %vm12456, %v12447
        $region60: #{tpu_custom_call.1} parent=39 // pred_fallthru
          _
        %p12458 = scmp.gt.s32.totalorder %s31, 0
        // Predicated region
        $region61: #{tpu_custom_call.1} parent=39 // pred_check
          %p12459 = pneg %p12458
        $region62: #{tpu_custom_call.1} parent=39 // pred_check_branch
          %12461 = sbr.rel (%p12459) target = $region64
        $region63: #{tpu_custom_call.1} parent=39 // pred_region
          %v12462 = vld [vmem:[%s370] sm:$0xff]
          %v12463 = vadd.f32 %v12462, %v12447
          %vm12464 = vcmask 80896
          %12465 = vst.msk [vmem:[%s370] sm:$0xff] %vm12464, %v12463
        $region64: #{tpu_custom_call.1} parent=39 // pred_fallthru
          _
        %s12466 = sand.u32 %s179, 1
        %s12467 = scalar_lea.sflag [#allocation4], %s12466
        %s12468 = sand.u32 %s179, 1
        %s12469 = smul.addr %s12468, 8
        %s12470 = scalar_lea.vmem [#allocation10], %s12469
        // Predicated region
        $region65: #{tpu_custom_call.1} parent=39 // pred_check
          %p12471 = pneg %p189
        $region66: #{tpu_custom_call.1} parent=39 // pred_check_branch
          %12473 = sbr.rel (%p12471) target = $region68
        $region67: #{tpu_custom_call.1} parent=39 // pred_region
          %s12475 = ssub.s32 128, 128
          %12476 = vsyncadd %s12467, %s12475
          %s12477 = smul.addr %s30, 128
          %s12478 = scalar_lea.hbm %s5, %s12477
          %s12480 = sshll.u32 %s12470, 4
          %s12481 = int_to_ptr.vmem [resolvable:$true] %s12480
          %12483 = dma.vmem_to_hbm [thread:$0]  %s12481, 128, %s12478, %s12467
        $region68: #{tpu_custom_call.1} parent=39 // pred_fallthru
          _
      $region40: #{tpu_custom_call.1} parent=5 // pred_fallthru
        _
      %p12484 = scmp.le.s32.totalorder 2, %s21
      // Predicated region
      $region69: #{tpu_custom_call.1} parent=5 // pred_check
        %p12485 = pneg %p12484
      $region70: #{tpu_custom_call.1} parent=5 // pred_check_branch
        %12487 = sbr.rel (%p12485) target = $region72
      $region71: #{tpu_custom_call.1} parent=5 // pred_region
        %s12488 = ssub.s32 %s21, 2
        // Predicated region
        $region73: #{tpu_custom_call.1} parent=71 // pred_check
          %p12489 = pneg %p195
        $region74: #{tpu_custom_call.1} parent=71 // pred_check_branch
          %12491 = sbr.rel (%p12489) target = $region76
        $region75: #{tpu_custom_call.1} parent=71 // pred_region
          %s12492 = sand.u32 %s180, 1
          %s12493 = scalar_lea.sflag [#allocation4], %s12492
          %s12494 = sand.u32 %s180, 1
          %s12495 = smul.addr %s12494, 8
          %s12496 = scalar_lea.vmem [#allocation10], %s12495
          %12497 = dma.done %s12493, 128
        $region76: #{tpu_custom_call.1} parent=71 // pred_fallthru
          _
      $region72: #{tpu_custom_call.1} parent=5 // pred_fallthru
        _
    $region6: #{tpu_custom_call.1} parent=1 // loop_footer
      %s25 = sadd.s32 1, %s21
    $region7: #{tpu_custom_call.1} parent=1 // loop_footer_branch
      %20 = sbr.rel target = $region3
    $region8: #{tpu_custom_call.1} parent=1 // loop_exit
      _
    %12498 = vsyncpa [#allocation3], 1
    %s12499 = scalar_lea.sflag [#allocation3], 1
    %12500 = vsyncpa %s12499, 1
    %12501 = vsyncpa [#allocation6], 1
    %s12502 = scalar_lea.sflag [#allocation6], 1
    %12503 = vsyncpa %s12502, 1
    %12504 = vsyncpa [#allocation9], 1
    %s12505 = scalar_lea.sflag [#allocation9], 1
    %12506 = vsyncpa %s12505, 1
    %12507 = vsyncpa [#allocation4], 1
    %s12508 = scalar_lea.sflag [#allocation4], 1
    %12509 = vsyncpa %s12508, 1

</llo_original>
